<compile_context>
chip_gen: v7x
topology: tpu7x:2x2x1
jax: 0.10.0
libtpu: 0.0.40
codegen_flags: <defaults>
</compile_context>

<pallas_src>
import jax
import jax.numpy as jnp
import numpy as np
from jax.experimental import pallas as pl
from jax.experimental.pallas import tpu as pltpu

EPS = 1e-5
LANES = 128


def _round_up(v, m):
    return (v + m - 1) // m * m


# ---------------------------------------------------------------------------
# In-kernel helpers
# ---------------------------------------------------------------------------
def _fill_padded(pad_ref, img_bf16, H, W, Wp):
    """Prepare the zero-padded image scratch.

    Layout: image interior lives at pad_ref[1:H+1, 8:8+W, :] so the big
    interior store is sublane-aligned (offset 8, width W % 8 == 0). The 3x3
    taps only read rows [0, H+1] and cols [7, W+8], so only that halo is
    zeroed each step (scratch contents persist across grid steps, so we
    cannot rely on a one-time init under megacore sharding).
    """
    C = pad_ref.shape[-1]
    zrow = jnp.zeros((Wp, C), jnp.bfloat16)
    pad_ref[0] = zrow                                                   # top halo row
    pad_ref[H + 1] = zrow                                               # bottom halo row
    pad_ref[:, 0:8, :] = jnp.zeros((H + 2, 8, C), jnp.bfloat16)         # covers left halo col 7
    pad_ref[:, W + 8:Wp, :] = jnp.zeros((H + 2, Wp - W - 8, C), jnp.bfloat16)  # right halo col W+8
    pad_ref[1:H + 1, 8:8 + W, :] = img_bf16                             # aligned interior store


def _conv3x3_acc(pad_ref, w_ref, H, W, C, Cout):
    """3x3 stride-1 conv over the padded scratch.

    Tap (kh, kw) for output (h, w) reads pad_ref[h+kh, w+kw+7]. Per kh the
    three kw taps are concatenated along channels so each jnp.dot has
    K = 3*C (3 MXU matmuls per conv instead of 9 shallow ones). Accumulate
    in f32; bf16 operands feed the MXU fast path.
    """
    N = H * W
    acc = jnp.zeros((N, Cout), jnp.float32)
    for kh in range(3):
        taps = [pad_ref[kh:kh + H, kw + 7:kw + 7 + W, :] for kw in range(3)]
        patch = jnp.concatenate(taps, axis=-1).reshape(N, 3 * C)
        acc = acc + jnp.dot(patch, w_ref[kh], preferred_element_type=jnp.float32)
    return acc


def _channel_stats(v):
    """Per-channel (sum, sum-of-squares) partials for two-pass BatchNorm."""
    return jnp.concatenate(
        [jnp.sum(v, axis=0, keepdims=True),
         jnp.sum(v * v, axis=0, keepdims=True)], axis=0)


# ---------------------------------------------------------------------------
# Kernel factories
# ---------------------------------------------------------------------------
def _make_stage1_kernel(H, W, Cp_in, Cp_out, Wp, has_ds):
    """conv1 (3x3, pad=1) raw output + BN1 partials; optional 1x1 downsample
    conv raw output + BN_ds partials. One image per grid step."""
    N = H * W

    def kernel(*refs):
        if has_ds:
            (x_ref, w1_ref, wd_ref,
             y1_ref, st1_ref, ds_ref, std_ref, pad_ref) = refs
        else:
            x_ref, w1_ref, y1_ref, st1_ref, pad_ref = refs

        x = x_ref[0]                                        # (H, W, Cp_in) bf16
        _fill_padded(pad_ref, x, H, W, Wp)

        acc = _conv3x3_acc(pad_ref, w1_ref, H, W, Cp_in, Cp_out)   # f32
        y1_ref[0] = acc.reshape(H, W, Cp_out)
        st1_ref[0] = _channel_stats(acc)

        if has_ds:
            d = jnp.dot(x.reshape(N, Cp_in), wd_ref[...],
                        preferred_element_type=jnp.float32)
            ds_ref[0] = d.reshape(H, W, Cp_out)
            std_ref[0] = _channel_stats(d)

    return kernel


def _make_stage2_kernel(H, W, Cp_out, Wp):
    """Apply folded BN1 + ReLU, then conv2 (3x3, pad=1) raw output + BN2
    partials. One image per grid step."""

    def kernel(y1_ref, s1_ref, t1_ref, w2_ref, y2_ref, st2_ref, pad_ref):
        s1 = s1_ref[...].reshape(1, 1, Cp_out)
        t1 = t1_ref[...].reshape(1, 1, Cp_out)
        a = jnp.maximum(y1_ref[0] * s1 + t1, 0.0)           # BN1 + ReLU, f32
        _fill_padded(pad_ref, a.astype(jnp.bfloat16), H, W, Wp)

        acc = _conv3x3_acc(pad_ref, w2_ref, H, W, Cp_out, Cp_out)
        y2_ref[0] = acc.reshape(H, W, Cp_out)
        st2_ref[0] = _channel_stats(acc)

    return kernel


def _make_stage3_kernel(Cp_out, has_ds):
    """Apply folded BN2 (+ folded BN_ds on the downsample branch), residual
    add, final ReLU. One image per grid step."""

    def kernel(*refs):
        if has_ds:
            y2_ref, s2_ref, t2_ref, ds_ref, sd_ref, td_ref, out_ref = refs
            ident = (ds_ref[0] * sd_ref[...].reshape(1, 1, Cp_out)
                     + td_ref[...].reshape(1, 1, Cp_out))
        else:
            y2_ref, s2_ref, t2_ref, xid_ref, out_ref = refs
            ident = xid_ref[0]
        z = (y2_ref[0] * s2_ref[...].reshape(1, 1, Cp_out)
             + t2_ref[...].reshape(1, 1, Cp_out))
        out_ref[0] = jnp.maximum(z + ident, 0.0)

    return kernel


# ---------------------------------------------------------------------------
# Wrapper
# ---------------------------------------------------------------------------
def basic_block_forward(x_nchw, params, stride=1):
    """BasicBlock forward. x_nchw: (B, Cin, H, W) f32 -> (B, Cout, H, W) f32."""
    if stride != 1:
        # TODO(synk): stride > 1 requires strided-row gathering at the
        # DMA/index_map level; not implemented in this Pallas path.
        raise NotImplementedError("stride > 1 not supported by this Pallas kernel")

    B, Cin, H, W = x_nchw.shape
    Cout = params["w1"].shape[0]
    has_ds = (stride != 1) or (Cin != Cout)

    f32, bf16 = jnp.float32, jnp.bfloat16
    Cp_in = _round_up(Cin, LANES)
    Cp_out = _round_up(Cout, LANES)
    Wp = _round_up(W + 9, 8)            # padded scratch width (halo cols 7 and W+8)
    count = float(B * H * W)

    # ---- layout glue: NCHW -> NHWC, pad channels to lane width, bf16 operands
    x_nhwc = jnp.transpose(x_nchw, (0, 2, 3, 1)).astype(f32)
    x_b = jnp.pad(x_nhwc, ((0, 0), (0, 0), (0, 0), (0, Cp_in - Cin))).astype(bf16)

    def conv_w(w, cpi, cpo):            # OIHW -> (3, 3*cpi, cpo) bf16
        hwio = jnp.transpose(w, (2, 3, 1, 0)).astype(f32)
        hwio = jnp.pad(hwio, ((0, 0), (0, 0),
                              (0, cpi - hwio.shape[2]), (0, cpo - hwio.shape[3])))
        return hwio.reshape(3, 3 * cpi, cpo).astype(bf16)

    def pad_vec(v, cp):
        return jnp.pad(v.astype(f32), (0, cp - v.shape[0]))

    w1 = conv_w(params["w1"], Cp_in, Cp_out)
    w2 = conv_w(params["w2"], Cp_out, Cp_out)
    g1, b1 = pad_vec(params["g1"], Cp_out), pad_vec(params["b1"], Cp_out)
    g2, b2 = pad_vec(params["g2"], Cp_out), pad_vec(params["b2"], Cp_out)

    cparams = pltpu.CompilerParams(
        dimension_semantics=("parallel",),      # shard batch across TCs (v7x)
        vmem_limit_bytes=32 * 1024 * 1024)

    def img_spec(C):
        return pl.BlockSpec((1, H, W, C), lambda i: (i, 0, 0, 0))

    def stat_spec(C):
        return pl.BlockSpec((1, 2, C), lambda i: (i, 0, 0))

    def full_spec(shape):
        nd = len(shape)
        return pl.BlockSpec(shape, lambda i, _nd=nd: (0,) * _nd)

    def bn_fold(stats, gamma, beta):
        # Reduce per-image partials -> exact batch statistics -> scale/shift.
        tot = jnp.sum(stats, axis=0)
        mean = tot[0] / count
        var = tot[1] / count - mean * mean
        s = gamma * jax.lax.rsqrt(var + EPS)
        t = beta - mean * s
        return s.reshape(1, Cp_out), t.reshape(1, Cp_out)

    # ---- stage 1: conv1 (+ optional 1x1 downsample conv) + BN partials ----
    in1 = [x_b, w1]
    in1_specs = [img_spec(Cp_in), full_spec(w1.shape)]
    out1_shape = [jax.ShapeDtypeStruct((B, H, W, Cp_out), f32),
                  jax.ShapeDtypeStruct((B, 2, Cp_out), f32)]
    out1_specs = [img_spec(Cp_out), stat_spec(Cp_out)]
    if has_ds:
        wd = jnp.transpose(params["wd"].reshape(Cout, Cin), (1, 0)).astype(f32)
        wd = jnp.pad(wd, ((0, Cp_in - Cin), (0, Cp_out - Cout))).astype(bf16)
        in1.append(wd)
        in1_specs.append(full_spec(wd.shape))
        out1_shape += [jax.ShapeDtypeStruct((B, H, W, Cp_out), f32),
                       jax.ShapeDtypeStruct((B, 2, Cp_out), f32)]
        out1_specs += [img_spec(Cp_out), stat_spec(Cp_out)]

    res1 = pl.pallas_call(
        _make_stage1_kernel(H, W, Cp_in, Cp_out, Wp, has_ds),
        grid=(B,),
        in_specs=in1_specs,
        out_specs=out1_specs,
        out_shape=out1_shape,
        scratch_shapes=[pltpu.VMEM((H + 2, Wp, Cp_in), bf16)],
        compiler_params=cparams,
    )(*in1)
    if has_ds:
        y1, st1, ds_raw, std = res1
    else:
        y1, st1 = res1

    s1, t1 = bn_fold(st1, g1, b1)

    # ---- stage 2: BN1 + ReLU + conv2 + BN2 partials ----
    y2, st2 = pl.pallas_call(
        _make_stage2_kernel(H, W, Cp_out, Wp),
        grid=(B,),
        in_specs=[img_spec(Cp_out), full_spec((1, Cp_out)),
                  full_spec((1, Cp_out)), full_spec(w2.shape)],
        out_specs=[img_spec(Cp_out), stat_spec(Cp_out)],
        out_shape=[jax.ShapeDtypeStruct((B, H, W, Cp_out), f32),
                   jax.ShapeDtypeStruct((B, 2, Cp_out), f32)],
        scratch_shapes=[pltpu.VMEM((H + 2, Wp, Cp_out), bf16)],
        compiler_params=cparams,
    )(y1, s1, t1, w2)

    s2, t2 = bn_fold(st2, g2, b2)

    # ---- stage 3: BN2 + (BN_ds | identity) + residual add + ReLU ----
    if has_ds:
        gd, bd = pad_vec(params["gd"], Cp_out), pad_vec(params["bd"], Cp_out)
        sd, td = bn_fold(std, gd, bd)
        in3 = (y2, s2, t2, ds_raw, sd, td)
        in3_specs = [img_spec(Cp_out), full_spec((1, Cp_out)), full_spec((1, Cp_out)),
                     img_spec(Cp_out), full_spec((1, Cp_out)), full_spec((1, Cp_out))]
    else:
        x_id = jnp.pad(x_nhwc, ((0, 0), (0, 0), (0, 0), (0, Cp_out - Cin)))  # f32 identity
        in3 = (y2, s2, t2, x_id)
        in3_specs = [img_spec(Cp_out), full_spec((1, Cp_out)),
                     full_spec((1, Cp_out)), img_spec(Cp_out)]

    out = pl.pallas_call(
        _make_stage3_kernel(Cp_out, has_ds),
        grid=(B,),
        in_specs=in3_specs,
        out_specs=img_spec(Cp_out),
        out_shape=jax.ShapeDtypeStruct((B, H, W, Cp_out), f32),
        compiler_params=cparams,
    )(*in3)

    out = out[..., :Cout]                        # drop lane padding
    return jnp.transpose(out, (0, 3, 1, 2))      # NHWC -> NCHW


# ---------------------------------------------------------------------------
# Pure-JAX reference (XLA, f32) for validation
# ---------------------------------------------------------------------------
def reference_forward(x, params, stride=1):
    Cout, Cin = params["w1"].shape[0], params["w1"].shape[1]
    has_ds = (stride != 1) or (Cin != Cout)

    def conv(x, w, s, pad):
        return jax.lax.conv_general_dilated(
            x, w, (s, s), [(pad, pad), (pad, pad)],
            dimension_numbers=("NCHW", "OIHW", "NCHW"),
            precision=jax.lax.Precision.HIGHEST)

    def bn(y, g, b):
        mean = jnp.mean(y, axis=(0, 2, 3), keepdims=True)
        var = jnp.mean(jnp.square(y - mean), axis=(0, 2, 3), keepdims=True)
        return ((y - mean) * jax.lax.rsqrt(var + EPS) * g.reshape(1, -1, 1, 1)
                + b.reshape(1, -1, 1, 1))

    out = jnp.maximum(bn(conv(x, params["w1"], stride, 1), params["g1"], params["b1"]), 0.0)
    out = bn(conv(out, params["w2"], 1, 1), params["g2"], params["b2"])
    identity = x
    if has_ds:
        identity = bn(conv(x, params["wd"], stride, 0), params["gd"], params["bd"])
    return jnp.maximum(out + identity, 0.0)


def _make_params(key, Cin, Cout, has_ds):
    ks = jax.random.split(key, 9)
    p = {
        "w1": jax.random.normal(ks[0], (Cout, Cin, 3, 3), jnp.float32) * 0.1,
        "g1": 1.0 + 0.1 * jax.random.normal(ks[1], (Cout,), jnp.float32),
        "b1": 0.1 * jax.random.normal(ks[2], (Cout,), jnp.float32),
        "w2": jax.random.normal(ks[3], (Cout, Cout, 3, 3), jnp.float32) * 0.1,
        "g2": 1.0 + 0.1 * jax.random.normal(ks[4], (Cout,), jnp.float32),
        "b2": 0.1 * jax.random.normal(ks[5], (Cout,), jnp.float32),
    }
    if has_ds:
        p["wd"] = jax.random.normal(ks[6], (Cout, Cin, 1, 1), jnp.float32) * 0.1
        p["gd"] = 1.0 + 0.1 * jax.random.normal(ks[7], (Cout,), jnp.float32)
        p["bd"] = 0.1 * jax.random.normal(ks[8], (Cout,), jnp.float32)
    return p


if __name__ == "__main__":
    fwd = jax.jit(basic_block_forward, static_argnames=("stride",))

    key = jax.random.PRNGKey(0)
    cases = [
        dict(name="downsample (Cin != Cout)", B=2, Cin=4, Cout=8, H=16, W=16),
        dict(name="identity   (Cin == Cout)", B=2, Cin=8, Cout=8, H=16, W=16),
    ]
    for c in cases:
        kp, kx, key = jax.random.split(key, 3)
        has_ds = c["Cin"] != c["Cout"]
        params = _make_params(kp, c["Cin"], c["Cout"], has_ds)
        x = jax.random.normal(kx, (c["B"], c["Cin"], c["H"], c["W"]), jnp.float32)

        out = jax.block_until_ready(fwd(x, params, stride=1))
        ref = jax.block_until_ready(reference_forward(x, params, stride=1))

        assert out.shape == (c["B"], c["Cout"], c["H"], c["W"])
        max_err = float(jnp.max(jnp.abs(out - ref)))
        mean_err = float(jnp.mean(jnp.abs(out - ref)))
        # bf16 MXU operands (per perf review) loosen the tolerance vs. the
        # f32 HIGHEST-precision XLA reference.
        assert np.isfinite(max_err) and max_err < 0.25 and mean_err < 0.03, (
            f"{c['name']}: max_err={max_err:.4f} mean_err={mean_err:.4f}")

    print("KERNEL_OK")
</pallas_src>

<mosaic_0001>
module attributes {stable_mosaic.version = 11 : i64} {
  func.func @kernel(%arg0: i32, %arg1: memref<1x16x16x128xbf16, #tpu.memory_space<vmem>>, %arg2: memref<3x384x128xbf16, #tpu.memory_space<vmem>>, %arg3: memref<128x128xbf16, #tpu.memory_space<vmem>>, %arg4: memref<1x16x16x128xf32, #tpu.memory_space<vmem>>, %arg5: memref<1x2x128xf32, #tpu.memory_space<vmem>>, %arg6: memref<1x16x16x128xf32, #tpu.memory_space<vmem>>, %arg7: memref<1x2x128xf32, #tpu.memory_space<vmem>>, %arg8: memref<18x32x128xbf16, #tpu.memory_space<vmem>>) attributes {dimension_semantics = [#tpu.dimension_semantics<parallel>], iteration_bounds = array<i64: 2>, scalar_prefetch = 0 : i64, scratch_operands = 1 : i64, tpu.core_type = #tpu.core_type<tc>, window_params = [{transform_indices = @transform_0, window_bounds = array<i64: 1, 16, 16, 128>}, {pipeline_mode = #tpu.pipeline_mode<synchronous>, transform_indices = @transform_1, window_bounds = array<i64: 3, 384, 128>}, {pipeline_mode = #tpu.pipeline_mode<synchronous>, transform_indices = @transform_2, window_bounds = array<i64: 128, 128>}, {transform_indices = @transform_3, window_bounds = array<i64: 1, 16, 16, 128>}, {transform_indices = @transform_4, window_bounds = array<i64: 1, 2, 128>}, {transform_indices = @transform_5, window_bounds = array<i64: 1, 16, 16, 128>}, {transform_indices = @transform_6, window_bounds = array<i64: 1, 2, 128>}]} {
    %c0 = arith.constant 0 : index
    %c0_0 = arith.constant 0 : index
    %c0_1 = arith.constant 0 : index
    %c0_2 = arith.constant 0 : index
    %0 = vector.load %arg1[%c0, %c0_0, %c0_1, %c0_2] : memref<1x16x16x128xbf16, #tpu.memory_space<vmem>>, vector<1x16x16x128xbf16>
    %1 = vector.shape_cast %0 : vector<1x16x16x128xbf16> to vector<16x16x128xbf16>
    %cst = arith.constant 0.000000e+00 : bf16
    %2 = vector.broadcast %cst : bf16 to vector<32x128xbf16>
    %c0_3 = arith.constant 0 : index
    %c0_4 = arith.constant 0 : index
    %c0_5 = arith.constant 0 : index
    %3 = vector.load %arg8[%c0_3, %c0_4, %c0_5] : memref<18x32x128xbf16, #tpu.memory_space<vmem>>, vector<1x32x128xbf16>
    %4 = vector.shape_cast %3 : vector<1x32x128xbf16> to vector<32x128xbf16>
    %5 = vector.shape_cast %2 : vector<32x128xbf16> to vector<1x32x128xbf16>
    tpu.vector_store %arg8[%c0_3, %c0_4, %c0_5], %5 {strides = array<i32>} : memref<18x32x128xbf16, #tpu.memory_space<vmem>>, vector<1x32x128xbf16>,
    %c17 = arith.constant 17 : index
    %c0_6 = arith.constant 0 : index
    %c0_7 = arith.constant 0 : index
    %6 = vector.load %arg8[%c17, %c0_6, %c0_7] : memref<18x32x128xbf16, #tpu.memory_space<vmem>>, vector<1x32x128xbf16>
    %7 = vector.shape_cast %6 : vector<1x32x128xbf16> to vector<32x128xbf16>
    %8 = vector.shape_cast %2 : vector<32x128xbf16> to vector<1x32x128xbf16>
    tpu.vector_store %arg8[%c17, %c0_6, %c0_7], %8 {strides = array<i32>} : memref<18x32x128xbf16, #tpu.memory_space<vmem>>, vector<1x32x128xbf16>,
    %cst_8 = arith.constant 0.000000e+00 : bf16
    %9 = vector.broadcast %cst_8 : bf16 to vector<18x8x128xbf16>
    %c0_9 = arith.constant 0 : index
    %c0_10 = arith.constant 0 : index
    %c0_11 = arith.constant 0 : index
    %10 = vector.load %arg8[%c0_9, %c0_10, %c0_11] : memref<18x32x128xbf16, #tpu.memory_space<vmem>>, vector<18x8x128xbf16>
    tpu.vector_store %arg8[%c0_9, %c0_10, %c0_11], %9 {strides = array<i32>} : memref<18x32x128xbf16, #tpu.memory_space<vmem>>, vector<18x8x128xbf16>,
    %cst_12 = arith.constant 0.000000e+00 : bf16
    %11 = vector.broadcast %cst_12 : bf16 to vector<18x8x128xbf16>
    %c0_13 = arith.constant 0 : index
    %c24 = arith.constant 24 : index
    %c0_14 = arith.constant 0 : index
    %12 = vector.load %arg8[%c0_13, %c24, %c0_14] : memref<18x32x128xbf16, #tpu.memory_space<vmem>>, vector<18x8x128xbf16>
    tpu.vector_store %arg8[%c0_13, %c24, %c0_14], %11 {strides = array<i32>} : memref<18x32x128xbf16, #tpu.memory_space<vmem>>, vector<18x8x128xbf16>,
    %c1 = arith.constant 1 : index
    %c8 = arith.constant 8 : index
    %c0_15 = arith.constant 0 : index
    %13 = vector.load %arg8[%c1, %c8, %c0_15] : memref<18x32x128xbf16, #tpu.memory_space<vmem>>, vector<16x16x128xbf16>
    tpu.vector_store %arg8[%c1, %c8, %c0_15], %1 {strides = array<i32>} : memref<18x32x128xbf16, #tpu.memory_space<vmem>>, vector<16x16x128xbf16>,
    %cst_16 = arith.constant 0.000000e+00 : f32
    %14 = vector.broadcast %cst_16 : f32 to vector<256x128xf32>
    %c0_17 = arith.constant 0 : index
    %c7 = arith.constant 7 : index
    %c0_18 = arith.constant 0 : index
    %15 = vector.load %arg8[%c0_17, %c7, %c0_18] : memref<18x32x128xbf16, #tpu.memory_space<vmem>>, vector<16x16x128xbf16>
    %c0_19 = arith.constant 0 : index
    %c8_20 = arith.constant 8 : index
    %c0_21 = arith.constant 0 : index
    %16 = vector.load %arg8[%c0_19, %c8_20, %c0_21] : memref<18x32x128xbf16, #tpu.memory_space<vmem>>, vector<16x16x128xbf16>
    %c0_22 = arith.constant 0 : index
    %c9 = arith.constant 9 : index
    %c0_23 = arith.constant 0 : index
    %17 = vector.load %arg8[%c0_22, %c9, %c0_23] : memref<18x32x128xbf16, #tpu.memory_space<vmem>>, vector<16x16x128xbf16>
    %18 = tpu.concatenate %15, %16, %17 in 2 : vector<16x16x128xbf16>, vector<16x16x128xbf16>, vector<16x16x128xbf16> -> vector<16x16x384xbf16>
    %19 = vector.shape_cast %18 : vector<16x16x384xbf16> to vector<256x384xbf16>
    %c0_24 = arith.constant 0 : index
    %c0_25 = arith.constant 0 : index
    %c0_26 = arith.constant 0 : index
    %20 = vector.load %arg2[%c0_24, %c0_25, %c0_26] : memref<3x384x128xbf16, #tpu.memory_space<vmem>>, vector<1x384x128xbf16>
    %21 = vector.shape_cast %20 : vector<1x384x128xbf16> to vector<384x128xbf16>
    %cst_27 = arith.constant dense<0.000000e+00> : vector<256x128xf32>
    %22 = tpu.matmul %19, %21, %cst_27 {dimension_numbers = #tpu.dot_dimension_numbers<[1], [0], [0], [1], [0, 0, 1, 1], [], []>} : vector<256x384xbf16>, vector<384x128xbf16>, vector<256x128xf32> -> vector<256x128xf32>
    %23 = arith.addf %14, %22 : vector<256x128xf32>
    %c1_28 = arith.constant 1 : index
    %c7_29 = arith.constant 7 : index
    %c0_30 = arith.constant 0 : index
    %24 = vector.load %arg8[%c1_28, %c7_29, %c0_30] : memref<18x32x128xbf16, #tpu.memory_space<vmem>>, vector<16x16x128xbf16>
    %c1_31 = arith.constant 1 : index
    %c8_32 = arith.constant 8 : index
    %c0_33 = arith.constant 0 : index
    %25 = vector.load %arg8[%c1_31, %c8_32, %c0_33] : memref<18x32x128xbf16, #tpu.memory_space<vmem>>, vector<16x16x128xbf16>
    %c1_34 = arith.constant 1 : index
    %c9_35 = arith.constant 9 : index
    %c0_36 = arith.constant 0 : index
    %26 = vector.load %arg8[%c1_34, %c9_35, %c0_36] : memref<18x32x128xbf16, #tpu.memory_space<vmem>>, vector<16x16x128xbf16>
    %27 = tpu.concatenate %24, %25, %26 in 2 : vector<16x16x128xbf16>, vector<16x16x128xbf16>, vector<16x16x128xbf16> -> vector<16x16x384xbf16>
    %28 = vector.shape_cast %27 : vector<16x16x384xbf16> to vector<256x384xbf16>
    %c1_37 = arith.constant 1 : index
    %c0_38 = arith.constant 0 : index
    %c0_39 = arith.constant 0 : index
    %29 = vector.load %arg2[%c1_37, %c0_38, %c0_39] : memref<3x384x128xbf16, #tpu.memory_space<vmem>>, vector<1x384x128xbf16>
    %30 = vector.shape_cast %29 : vector<1x384x128xbf16> to vector<384x128xbf16>
    %cst_40 = arith.constant dense<0.000000e+00> : vector<256x128xf32>
    %31 = tpu.matmul %28, %30, %cst_40 {dimension_numbers = #tpu.dot_dimension_numbers<[1], [0], [0], [1], [0, 0, 1, 1], [], []>} : vector<256x384xbf16>, vector<384x128xbf16>, vector<256x128xf32> -> vector<256x128xf32>
    %32 = arith.addf %23, %31 : vector<256x128xf32>
    %c2 = arith.constant 2 : index
    %c7_41 = arith.constant 7 : index
    %c0_42 = arith.constant 0 : index
    %33 = vector.load %arg8[%c2, %c7_41, %c0_42] : memref<18x32x128xbf16, #tpu.memory_space<vmem>>, vector<16x16x128xbf16>
    %c2_43 = arith.constant 2 : index
    %c8_44 = arith.constant 8 : index
    %c0_45 = arith.constant 0 : index
    %34 = vector.load %arg8[%c2_43, %c8_44, %c0_45] : memref<18x32x128xbf16, #tpu.memory_space<vmem>>, vector<16x16x128xbf16>
    %c2_46 = arith.constant 2 : index
    %c9_47 = arith.constant 9 : index
    %c0_48 = arith.constant 0 : index
    %35 = vector.load %arg8[%c2_46, %c9_47, %c0_48] : memref<18x32x128xbf16, #tpu.memory_space<vmem>>, vector<16x16x128xbf16>
    %36 = tpu.concatenate %33, %34, %35 in 2 : vector<16x16x128xbf16>, vector<16x16x128xbf16>, vector<16x16x128xbf16> -> vector<16x16x384xbf16>
    %37 = vector.shape_cast %36 : vector<16x16x384xbf16> to vector<256x384xbf16>
    %c2_49 = arith.constant 2 : index
    %c0_50 = arith.constant 0 : index
    %c0_51 = arith.constant 0 : index
    %38 = vector.load %arg2[%c2_49, %c0_50, %c0_51] : memref<3x384x128xbf16, #tpu.memory_space<vmem>>, vector<1x384x128xbf16>
    %39 = vector.shape_cast %38 : vector<1x384x128xbf16> to vector<384x128xbf16>
    %cst_52 = arith.constant dense<0.000000e+00> : vector<256x128xf32>
    %40 = tpu.matmul %37, %39, %cst_52 {dimension_numbers = #tpu.dot_dimension_numbers<[1], [0], [0], [1], [0, 0, 1, 1], [], []>} : vector<256x384xbf16>, vector<384x128xbf16>, vector<256x128xf32> -> vector<256x128xf32>
    %41 = arith.addf %32, %40 : vector<256x128xf32>
    %42 = vector.shape_cast %41 : vector<256x128xf32> to vector<16x16x128xf32>
    %c0_53 = arith.constant 0 : index
    %c0_54 = arith.constant 0 : index
    %c0_55 = arith.constant 0 : index
    %c0_56 = arith.constant 0 : index
    %43 = vector.load %arg4[%c0_53, %c0_54, %c0_55, %c0_56] : memref<1x16x16x128xf32, #tpu.memory_space<vmem>>, vector<1x16x16x128xf32>
    %44 = vector.shape_cast %43 : vector<1x16x16x128xf32> to vector<16x16x128xf32>
    %45 = vector.shape_cast %42 : vector<16x16x128xf32> to vector<1x16x16x128xf32>
    tpu.vector_store %arg4[%c0_53, %c0_54, %c0_55, %c0_56], %45 {strides = array<i32>} : memref<1x16x16x128xf32, #tpu.memory_space<vmem>>, vector<1x16x16x128xf32>,
    %cst_57 = arith.constant dense<0.000000e+00> : vector<128xf32>
    %46 = vector.multi_reduction <add>, %41, %cst_57 [0] : vector<256x128xf32> to vector<128xf32>
    %47 = vector.shape_cast %46 : vector<128xf32> to vector<1x128xf32>
    %48 = arith.mulf %41, %41 : vector<256x128xf32>
    %cst_58 = arith.constant dense<0.000000e+00> : vector<128xf32>
    %49 = vector.multi_reduction <add>, %48, %cst_58 [0] : vector<256x128xf32> to vector<128xf32>
    %50 = vector.shape_cast %49 : vector<128xf32> to vector<1x128xf32>
    %51 = tpu.concatenate %47, %50 in 0 : vector<1x128xf32>, vector<1x128xf32> -> vector<2x128xf32>
    %c0_59 = arith.constant 0 : index
    %c0_60 = arith.constant 0 : index
    %c0_61 = arith.constant 0 : index
    %52 = vector.load %arg5[%c0_59, %c0_60, %c0_61] : memref<1x2x128xf32, #tpu.memory_space<vmem>>, vector<1x2x128xf32>
    %53 = vector.shape_cast %52 : vector<1x2x128xf32> to vector<2x128xf32>
    %54 = vector.shape_cast %51 : vector<2x128xf32> to vector<1x2x128xf32>
    tpu.vector_store %arg5[%c0_59, %c0_60, %c0_61], %54 {strides = array<i32>} : memref<1x2x128xf32, #tpu.memory_space<vmem>>, vector<1x2x128xf32>,
    %55 = vector.shape_cast %1 : vector<16x16x128xbf16> to vector<256x128xbf16>
    %c0_62 = arith.constant 0 : index
    %c0_63 = arith.constant 0 : index
    %56 = vector.load %arg3[%c0_62, %c0_63] : memref<128x128xbf16, #tpu.memory_space<vmem>>, vector<128x128xbf16>
    %cst_64 = arith.constant dense<0.000000e+00> : vector<256x128xf32>
    %57 = tpu.matmul %55, %56, %cst_64 {dimension_numbers = #tpu.dot_dimension_numbers<[1], [0], [0], [1], [0, 0, 1, 1], [], []>} : vector<256x128xbf16>, vector<128x128xbf16>, vector<256x128xf32> -> vector<256x128xf32>
    %58 = vector.shape_cast %57 : vector<256x128xf32> to vector<16x16x128xf32>
    %c0_65 = arith.constant 0 : index
    %c0_66 = arith.constant 0 : index
    %c0_67 = arith.constant 0 : index
    %c0_68 = arith.constant 0 : index
    %59 = vector.load %arg6[%c0_65, %c0_66, %c0_67, %c0_68] : memref<1x16x16x128xf32, #tpu.memory_space<vmem>>, vector<1x16x16x128xf32>
    %60 = vector.shape_cast %59 : vector<1x16x16x128xf32> to vector<16x16x128xf32>
    %61 = vector.shape_cast %58 : vector<16x16x128xf32> to vector<1x16x16x128xf32>
    tpu.vector_store %arg6[%c0_65, %c0_66, %c0_67, %c0_68], %61 {strides = array<i32>} : memref<1x16x16x128xf32, #tpu.memory_space<vmem>>, vector<1x16x16x128xf32>,
    %cst_69 = arith.constant dense<0.000000e+00> : vector<128xf32>
    %62 = vector.multi_reduction <add>, %57, %cst_69 [0] : vector<256x128xf32> to vector<128xf32>
    %63 = vector.shape_cast %62 : vector<128xf32> to vector<1x128xf32>
    %64 = arith.mulf %57, %57 : vector<256x128xf32>
    %cst_70 = arith.constant dense<0.000000e+00> : vector<128xf32>
    %65 = vector.multi_reduction <add>, %64, %cst_70 [0] : vector<256x128xf32> to vector<128xf32>
    %66 = vector.shape_cast %65 : vector<128xf32> to vector<1x128xf32>
    %67 = tpu.concatenate %63, %66 in 0 : vector<1x128xf32>, vector<1x128xf32> -> vector<2x128xf32>
    %c0_71 = arith.constant 0 : index
    %c0_72 = arith.constant 0 : index
    %c0_73 = arith.constant 0 : index
    %68 = vector.load %arg7[%c0_71, %c0_72, %c0_73] : memref<1x2x128xf32, #tpu.memory_space<vmem>>, vector<1x2x128xf32>
    %69 = vector.shape_cast %68 : vector<1x2x128xf32> to vector<2x128xf32>
    %70 = vector.shape_cast %67 : vector<2x128xf32> to vector<1x2x128xf32>
    tpu.vector_store %arg7[%c0_71, %c0_72, %c0_73], %70 {strides = array<i32>} : memref<1x2x128xf32, #tpu.memory_space<vmem>>, vector<1x2x128xf32>,
    return
  }
  func.func @transform_0(%arg0: i32) -> (i32, i32, i32, i32) {
    %c0_i32 = arith.constant 0 : i32
    %c0_i32_0 = arith.constant 0 : i32
    %c0_i32_1 = arith.constant 0 : i32
    %c0_i32_2 = arith.constant 0 : i32
    return %arg0, %c0_i32, %c0_i32_0, %c0_i32_1 : i32, i32, i32, i32
  }
  func.func @transform_1(%arg0: i32) -> (i32, i32, i32) {
    %c0_i32 = arith.constant 0 : i32
    %c0_i32_0 = arith.constant 0 : i32
    %c0_i32_1 = arith.constant 0 : i32
    %c0_i32_2 = arith.constant 0 : i32
    return %c0_i32, %c0_i32_0, %c0_i32_1 : i32, i32, i32
  }
  func.func @transform_2(%arg0: i32) -> (i32, i32) {
    %c0_i32 = arith.constant 0 : i32
    %c0_i32_0 = arith.constant 0 : i32
    %c0_i32_1 = arith.constant 0 : i32
    return %c0_i32, %c0_i32_0 : i32, i32
  }
  func.func @transform_3(%arg0: i32) -> (i32, i32, i32, i32) {
    %c0_i32 = arith.constant 0 : i32
    %c0_i32_0 = arith.constant 0 : i32
    %c0_i32_1 = arith.constant 0 : i32
    %c0_i32_2 = arith.constant 0 : i32
    return %arg0, %c0_i32, %c0_i32_0, %c0_i32_1 : i32, i32, i32, i32
  }
  func.func @transform_4(%arg0: i32) -> (i32, i32, i32) {
    %c0_i32 = arith.constant 0 : i32
    %c0_i32_0 = arith.constant 0 : i32
    %c0_i32_1 = arith.constant 0 : i32
    return %arg0, %c0_i32, %c0_i32_0 : i32, i32, i32
  }
  func.func @transform_5(%arg0: i32) -> (i32, i32, i32, i32) {
    %c0_i32 = arith.constant 0 : i32
    %c0_i32_0 = arith.constant 0 : i32
    %c0_i32_1 = arith.constant 0 : i32
    %c0_i32_2 = arith.constant 0 : i32
    return %arg0, %c0_i32, %c0_i32_0, %c0_i32_1 : i32, i32, i32, i32
  }
  func.func @transform_6(%arg0: i32) -> (i32, i32, i32) {
    %c0_i32 = arith.constant 0 : i32
    %c0_i32_0 = arith.constant 0 : i32
    %c0_i32_1 = arith.constant 0 : i32
    return %arg0, %c0_i32, %c0_i32_0 : i32, i32, i32
  }
}

module attributes {stable_mosaic.version = 11 : i64} {
  func.func @kernel(%arg0: i32, %arg1: memref<1x16x16x128xf32, #tpu.memory_space<vmem>>, %arg2: memref<1x128xf32, #tpu.memory_space<vmem>>, %arg3: memref<1x128xf32, #tpu.memory_space<vmem>>, %arg4: memref<3x384x128xbf16, #tpu.memory_space<vmem>>, %arg5: memref<1x16x16x128xf32, #tpu.memory_space<vmem>>, %arg6: memref<1x2x128xf32, #tpu.memory_space<vmem>>, %arg7: memref<18x32x128xbf16, #tpu.memory_space<vmem>>) attributes {dimension_semantics = [#tpu.dimension_semantics<parallel>], iteration_bounds = array<i64: 2>, scalar_prefetch = 0 : i64, scratch_operands = 1 : i64, tpu.core_type = #tpu.core_type<tc>, window_params = [{transform_indices = @transform_0, window_bounds = array<i64: 1, 16, 16, 128>}, {pipeline_mode = #tpu.pipeline_mode<synchronous>, transform_indices = @transform_1, window_bounds = array<i64: 1, 128>}, {pipeline_mode = #tpu.pipeline_mode<synchronous>, transform_indices = @transform_2, window_bounds = array<i64: 1, 128>}, {pipeline_mode = #tpu.pipeline_mode<synchronous>, transform_indices = @transform_3, window_bounds = array<i64: 3, 384, 128>}, {transform_indices = @transform_4, window_bounds = array<i64: 1, 16, 16, 128>}, {transform_indices = @transform_5, window_bounds = array<i64: 1, 2, 128>}]} {
    %c0 = arith.constant 0 : index
    %c0_0 = arith.constant 0 : index
    %0 = vector.load %arg2[%c0, %c0_0] : memref<1x128xf32, #tpu.memory_space<vmem>>, vector<1x128xf32>
    %1 = vector.shape_cast %0 : vector<1x128xf32> to vector<1x1x128xf32>
    %c0_1 = arith.constant 0 : index
    %c0_2 = arith.constant 0 : index
    %2 = vector.load %arg3[%c0_1, %c0_2] : memref<1x128xf32, #tpu.memory_space<vmem>>, vector<1x128xf32>
    %3 = vector.shape_cast %2 : vector<1x128xf32> to vector<1x1x128xf32>
    %c0_3 = arith.constant 0 : index
    %c0_4 = arith.constant 0 : index
    %c0_5 = arith.constant 0 : index
    %c0_6 = arith.constant 0 : index
    %4 = vector.load %arg1[%c0_3, %c0_4, %c0_5, %c0_6] : memref<1x16x16x128xf32, #tpu.memory_space<vmem>>, vector<1x16x16x128xf32>
    %5 = vector.shape_cast %4 : vector<1x16x16x128xf32> to vector<16x16x128xf32>
    %6 = vector.broadcast %1 : vector<1x1x128xf32> to vector<16x16x128xf32>
    %7 = arith.mulf %5, %6 : vector<16x16x128xf32>
    %8 = vector.broadcast %3 : vector<1x1x128xf32> to vector<16x16x128xf32>
    %9 = arith.addf %7, %8 : vector<16x16x128xf32>
    %cst = arith.constant 0.000000e+00 : f32
    %10 = vector.broadcast %cst : f32 to vector<16x16x128xf32>
    %11 = arith.maximumf %9, %10 : vector<16x16x128xf32>
    %12 = arith.truncf %11 : vector<16x16x128xf32> to vector<16x16x128xbf16>
    %cst_7 = arith.constant 0.000000e+00 : bf16
    %13 = vector.broadcast %cst_7 : bf16 to vector<32x128xbf16>
    %c0_8 = arith.constant 0 : index
    %c0_9 = arith.constant 0 : index
    %c0_10 = arith.constant 0 : index
    %14 = vector.load %arg7[%c0_8, %c0_9, %c0_10] : memref<18x32x128xbf16, #tpu.memory_space<vmem>>, vector<1x32x128xbf16>
    %15 = vector.shape_cast %14 : vector<1x32x128xbf16> to vector<32x128xbf16>
    %16 = vector.shape_cast %13 : vector<32x128xbf16> to vector<1x32x128xbf16>
    tpu.vector_store %arg7[%c0_8, %c0_9, %c0_10], %16 {strides = array<i32>} : memref<18x32x128xbf16, #tpu.memory_space<vmem>>, vector<1x32x128xbf16>,
    %c17 = arith.constant 17 : index
    %c0_11 = arith.constant 0 : index
    %c0_12 = arith.constant 0 : index
    %17 = vector.load %arg7[%c17, %c0_11, %c0_12] : memref<18x32x128xbf16, #tpu.memory_space<vmem>>, vector<1x32x128xbf16>
    %18 = vector.shape_cast %17 : vector<1x32x128xbf16> to vector<32x128xbf16>
    %19 = vector.shape_cast %13 : vector<32x128xbf16> to vector<1x32x128xbf16>
    tpu.vector_store %arg7[%c17, %c0_11, %c0_12], %19 {strides = array<i32>} : memref<18x32x128xbf16, #tpu.memory_space<vmem>>, vector<1x32x128xbf16>,
    %cst_13 = arith.constant 0.000000e+00 : bf16
    %20 = vector.broadcast %cst_13 : bf16 to vector<18x8x128xbf16>
    %c0_14 = arith.constant 0 : index
    %c0_15 = arith.constant 0 : index
    %c0_16 = arith.constant 0 : index
    %21 = vector.load %arg7[%c0_14, %c0_15, %c0_16] : memref<18x32x128xbf16, #tpu.memory_space<vmem>>, vector<18x8x128xbf16>
    tpu.vector_store %arg7[%c0_14, %c0_15, %c0_16], %20 {strides = array<i32>} : memref<18x32x128xbf16, #tpu.memory_space<vmem>>, vector<18x8x128xbf16>,
    %cst_17 = arith.constant 0.000000e+00 : bf16
    %22 = vector.broadcast %cst_17 : bf16 to vector<18x8x128xbf16>
    %c0_18 = arith.constant 0 : index
    %c24 = arith.constant 24 : index
    %c0_19 = arith.constant 0 : index
    %23 = vector.load %arg7[%c0_18, %c24, %c0_19] : memref<18x32x128xbf16, #tpu.memory_space<vmem>>, vector<18x8x128xbf16>
    tpu.vector_store %arg7[%c0_18, %c24, %c0_19], %22 {strides = array<i32>} : memref<18x32x128xbf16, #tpu.memory_space<vmem>>, vector<18x8x128xbf16>,
    %c1 = arith.constant 1 : index
    %c8 = arith.constant 8 : index
    %c0_20 = arith.constant 0 : index
    %24 = vector.load %arg7[%c1, %c8, %c0_20] : memref<18x32x128xbf16, #tpu.memory_space<vmem>>, vector<16x16x128xbf16>
    tpu.vector_store %arg7[%c1, %c8, %c0_20], %12 {strides = array<i32>} : memref<18x32x128xbf16, #tpu.memory_space<vmem>>, vector<16x16x128xbf16>,
    %cst_21 = arith.constant 0.000000e+00 : f32
    %25 = vector.broadcast %cst_21 : f32 to vector<256x128xf32>
    %c0_22 = arith.constant 0 : index
    %c7 = arith.constant 7 : index
    %c0_23 = arith.constant 0 : index
    %26 = vector.load %arg7[%c0_22, %c7, %c0_23] : memref<18x32x128xbf16, #tpu.memory_space<vmem>>, vector<16x16x128xbf16>
    %c0_24 = arith.constant 0 : index
    %c8_25 = arith.constant 8 : index
    %c0_26 = arith.constant 0 : index
    %27 = vector.load %arg7[%c0_24, %c8_25, %c0_26] : memref<18x32x128xbf16, #tpu.memory_space<vmem>>, vector<16x16x128xbf16>
    %c0_27 = arith.constant 0 : index
    %c9 = arith.constant 9 : index
    %c0_28 = arith.constant 0 : index
    %28 = vector.load %arg7[%c0_27, %c9, %c0_28] : memref<18x32x128xbf16, #tpu.memory_space<vmem>>, vector<16x16x128xbf16>
    %29 = tpu.concatenate %26, %27, %28 in 2 : vector<16x16x128xbf16>, vector<16x16x128xbf16>, vector<16x16x128xbf16> -> vector<16x16x384xbf16>
    %30 = vector.shape_cast %29 : vector<16x16x384xbf16> to vector<256x384xbf16>
    %c0_29 = arith.constant 0 : index
    %c0_30 = arith.constant 0 : index
    %c0_31 = arith.constant 0 : index
    %31 = vector.load %arg4[%c0_29, %c0_30, %c0_31] : memref<3x384x128xbf16, #tpu.memory_space<vmem>>, vector<1x384x128xbf16>
    %32 = vector.shape_cast %31 : vector<1x384x128xbf16> to vector<384x128xbf16>
    %cst_32 = arith.constant dense<0.000000e+00> : vector<256x128xf32>
    %33 = tpu.matmul %30, %32, %cst_32 {dimension_numbers = #tpu.dot_dimension_numbers<[1], [0], [0], [1], [0, 0, 1, 1], [], []>} : vector<256x384xbf16>, vector<384x128xbf16>, vector<256x128xf32> -> vector<256x128xf32>
    %34 = arith.addf %25, %33 : vector<256x128xf32>
    %c1_33 = arith.constant 1 : index
    %c7_34 = arith.constant 7 : index
    %c0_35 = arith.constant 0 : index
    %35 = vector.load %arg7[%c1_33, %c7_34, %c0_35] : memref<18x32x128xbf16, #tpu.memory_space<vmem>>, vector<16x16x128xbf16>
    %c1_36 = arith.constant 1 : index
    %c8_37 = arith.constant 8 : index
    %c0_38 = arith.constant 0 : index
    %36 = vector.load %arg7[%c1_36, %c8_37, %c0_38] : memref<18x32x128xbf16, #tpu.memory_space<vmem>>, vector<16x16x128xbf16>
    %c1_39 = arith.constant 1 : index
    %c9_40 = arith.constant 9 : index
    %c0_41 = arith.constant 0 : index
    %37 = vector.load %arg7[%c1_39, %c9_40, %c0_41] : memref<18x32x128xbf16, #tpu.memory_space<vmem>>, vector<16x16x128xbf16>
    %38 = tpu.concatenate %35, %36, %37 in 2 : vector<16x16x128xbf16>, vector<16x16x128xbf16>, vector<16x16x128xbf16> -> vector<16x16x384xbf16>
    %39 = vector.shape_cast %38 : vector<16x16x384xbf16> to vector<256x384xbf16>
    %c1_42 = arith.constant 1 : index
    %c0_43 = arith.constant 0 : index
    %c0_44 = arith.constant 0 : index
    %40 = vector.load %arg4[%c1_42, %c0_43, %c0_44] : memref<3x384x128xbf16, #tpu.memory_space<vmem>>, vector<1x384x128xbf16>
    %41 = vector.shape_cast %40 : vector<1x384x128xbf16> to vector<384x128xbf16>
    %cst_45 = arith.constant dense<0.000000e+00> : vector<256x128xf32>
    %42 = tpu.matmul %39, %41, %cst_45 {dimension_numbers = #tpu.dot_dimension_numbers<[1], [0], [0], [1], [0, 0, 1, 1], [], []>} : vector<256x384xbf16>, vector<384x128xbf16>, vector<256x128xf32> -> vector<256x128xf32>
    %43 = arith.addf %34, %42 : vector<256x128xf32>
    %c2 = arith.constant 2 : index
    %c7_46 = arith.constant 7 : index
    %c0_47 = arith.constant 0 : index
    %44 = vector.load %arg7[%c2, %c7_46, %c0_47] : memref<18x32x128xbf16, #tpu.memory_space<vmem>>, vector<16x16x128xbf16>
    %c2_48 = arith.constant 2 : index
    %c8_49 = arith.constant 8 : index
    %c0_50 = arith.constant 0 : index
    %45 = vector.load %arg7[%c2_48, %c8_49, %c0_50] : memref<18x32x128xbf16, #tpu.memory_space<vmem>>, vector<16x16x128xbf16>
    %c2_51 = arith.constant 2 : index
    %c9_52 = arith.constant 9 : index
    %c0_53 = arith.constant 0 : index
    %46 = vector.load %arg7[%c2_51, %c9_52, %c0_53] : memref<18x32x128xbf16, #tpu.memory_space<vmem>>, vector<16x16x128xbf16>
    %47 = tpu.concatenate %44, %45, %46 in 2 : vector<16x16x128xbf16>, vector<16x16x128xbf16>, vector<16x16x128xbf16> -> vector<16x16x384xbf16>
    %48 = vector.shape_cast %47 : vector<16x16x384xbf16> to vector<256x384xbf16>
    %c2_54 = arith.constant 2 : index
    %c0_55 = arith.constant 0 : index
    %c0_56 = arith.constant 0 : index
    %49 = vector.load %arg4[%c2_54, %c0_55, %c0_56] : memref<3x384x128xbf16, #tpu.memory_space<vmem>>, vector<1x384x128xbf16>
    %50 = vector.shape_cast %49 : vector<1x384x128xbf16> to vector<384x128xbf16>
    %cst_57 = arith.constant dense<0.000000e+00> : vector<256x128xf32>
    %51 = tpu.matmul %48, %50, %cst_57 {dimension_numbers = #tpu.dot_dimension_numbers<[1], [0], [0], [1], [0, 0, 1, 1], [], []>} : vector<256x384xbf16>, vector<384x128xbf16>, vector<256x128xf32> -> vector<256x128xf32>
    %52 = arith.addf %43, %51 : vector<256x128xf32>
    %53 = vector.shape_cast %52 : vector<256x128xf32> to vector<16x16x128xf32>
    %c0_58 = arith.constant 0 : index
    %c0_59 = arith.constant 0 : index
    %c0_60 = arith.constant 0 : index
    %c0_61 = arith.constant 0 : index
    %54 = vector.load %arg5[%c0_58, %c0_59, %c0_60, %c0_61] : memref<1x16x16x128xf32, #tpu.memory_space<vmem>>, vector<1x16x16x128xf32>
    %55 = vector.shape_cast %54 : vector<1x16x16x128xf32> to vector<16x16x128xf32>
    %56 = vector.shape_cast %53 : vector<16x16x128xf32> to vector<1x16x16x128xf32>
    tpu.vector_store %arg5[%c0_58, %c0_59, %c0_60, %c0_61], %56 {strides = array<i32>} : memref<1x16x16x128xf32, #tpu.memory_space<vmem>>, vector<1x16x16x128xf32>,
    %cst_62 = arith.constant dense<0.000000e+00> : vector<128xf32>
    %57 = vector.multi_reduction <add>, %52, %cst_62 [0] : vector<256x128xf32> to vector<128xf32>
    %58 = vector.shape_cast %57 : vector<128xf32> to vector<1x128xf32>
    %59 = arith.mulf %52, %52 : vector<256x128xf32>
    %cst_63 = arith.constant dense<0.000000e+00> : vector<128xf32>
    %60 = vector.multi_reduction <add>, %59, %cst_63 [0] : vector<256x128xf32> to vector<128xf32>
    %61 = vector.shape_cast %60 : vector<128xf32> to vector<1x128xf32>
    %62 = tpu.concatenate %58, %61 in 0 : vector<1x128xf32>, vector<1x128xf32> -> vector<2x128xf32>
    %c0_64 = arith.constant 0 : index
    %c0_65 = arith.constant 0 : index
    %c0_66 = arith.constant 0 : index
    %63 = vector.load %arg6[%c0_64, %c0_65, %c0_66] : memref<1x2x128xf32, #tpu.memory_space<vmem>>, vector<1x2x128xf32>
    %64 = vector.shape_cast %63 : vector<1x2x128xf32> to vector<2x128xf32>
    %65 = vector.shape_cast %62 : vector<2x128xf32> to vector<1x2x128xf32>
    tpu.vector_store %arg6[%c0_64, %c0_65, %c0_66], %65 {strides = array<i32>} : memref<1x2x128xf32, #tpu.memory_space<vmem>>, vector<1x2x128xf32>,
    return
  }
  func.func @transform_0(%arg0: i32) -> (i32, i32, i32, i32) {
    %c0_i32 = arith.constant 0 : i32
    %c0_i32_0 = arith.constant 0 : i32
    %c0_i32_1 = arith.constant 0 : i32
    %c0_i32_2 = arith.constant 0 : i32
    return %arg0, %c0_i32, %c0_i32_0, %c0_i32_1 : i32, i32, i32, i32
  }
  func.func @transform_1(%arg0: i32) -> (i32, i32) {
    %c0_i32 = arith.constant 0 : i32
    %c0_i32_0 = arith.constant 0 : i32
    %c0_i32_1 = arith.constant 0 : i32
    return %c0_i32, %c0_i32_0 : i32, i32
  }
  func.func @transform_2(%arg0: i32) -> (i32, i32) {
    %c0_i32 = arith.constant 0 : i32
    %c0_i32_0 = arith.constant 0 : i32
    %c0_i32_1 = arith.constant 0 : i32
    return %c0_i32, %c0_i32_0 : i32, i32
  }
  func.func @transform_3(%arg0: i32) -> (i32, i32, i32) {
    %c0_i32 = arith.constant 0 : i32
    %c0_i32_0 = arith.constant 0 : i32
    %c0_i32_1 = arith.constant 0 : i32
    %c0_i32_2 = arith.constant 0 : i32
    return %c0_i32, %c0_i32_0, %c0_i32_1 : i32, i32, i32
  }
  func.func @transform_4(%arg0: i32) -> (i32, i32, i32, i32) {
    %c0_i32 = arith.constant 0 : i32
    %c0_i32_0 = arith.constant 0 : i32
    %c0_i32_1 = arith.constant 0 : i32
    %c0_i32_2 = arith.constant 0 : i32
    return %arg0, %c0_i32, %c0_i32_0, %c0_i32_1 : i32, i32, i32, i32
  }
  func.func @transform_5(%arg0: i32) -> (i32, i32, i32) {
    %c0_i32 = arith.constant 0 : i32
    %c0_i32_0 = arith.constant 0 : i32
    %c0_i32_1 = arith.constant 0 : i32
    return %arg0, %c0_i32, %c0_i32_0 : i32, i32, i32
  }
}

module attributes {stable_mosaic.version = 11 : i64} {
  func.func @kernel(%arg0: i32, %arg1: memref<1x16x16x128xf32, #tpu.memory_space<vmem>>, %arg2: memref<1x128xf32, #tpu.memory_space<vmem>>, %arg3: memref<1x128xf32, #tpu.memory_space<vmem>>, %arg4: memref<1x16x16x128xf32, #tpu.memory_space<vmem>>, %arg5: memref<1x128xf32, #tpu.memory_space<vmem>>, %arg6: memref<1x128xf32, #tpu.memory_space<vmem>>, %arg7: memref<1x16x16x128xf32, #tpu.memory_space<vmem>>) attributes {dimension_semantics = [#tpu.dimension_semantics<parallel>], iteration_bounds = array<i64: 2>, scalar_prefetch = 0 : i64, scratch_operands = 0 : i64, tpu.core_type = #tpu.core_type<tc>, window_params = [{transform_indices = @transform_0, window_bounds = array<i64: 1, 16, 16, 128>}, {pipeline_mode = #tpu.pipeline_mode<synchronous>, transform_indices = @transform_1, window_bounds = array<i64: 1, 128>}, {pipeline_mode = #tpu.pipeline_mode<synchronous>, transform_indices = @transform_2, window_bounds = array<i64: 1, 128>}, {transform_indices = @transform_3, window_bounds = array<i64: 1, 16, 16, 128>}, {pipeline_mode = #tpu.pipeline_mode<synchronous>, transform_indices = @transform_4, window_bounds = array<i64: 1, 128>}, {pipeline_mode = #tpu.pipeline_mode<synchronous>, transform_indices = @transform_5, window_bounds = array<i64: 1, 128>}, {transform_indices = @transform_6, window_bounds = array<i64: 1, 16, 16, 128>}]} {
    %c0 = arith.constant 0 : index
    %c0_0 = arith.constant 0 : index
    %c0_1 = arith.constant 0 : index
    %c0_2 = arith.constant 0 : index
    %0 = vector.load %arg4[%c0, %c0_0, %c0_1, %c0_2] : memref<1x16x16x128xf32, #tpu.memory_space<vmem>>, vector<1x16x16x128xf32>
    %1 = vector.shape_cast %0 : vector<1x16x16x128xf32> to vector<16x16x128xf32>
    %c0_3 = arith.constant 0 : index
    %c0_4 = arith.constant 0 : index
    %2 = vector.load %arg5[%c0_3, %c0_4] : memref<1x128xf32, #tpu.memory_space<vmem>>, vector<1x128xf32>
    %3 = vector.shape_cast %2 : vector<1x128xf32> to vector<1x1x128xf32>
    %4 = vector.broadcast %3 : vector<1x1x128xf32> to vector<16x16x128xf32>
    %5 = arith.mulf %1, %4 : vector<16x16x128xf32>
    %c0_5 = arith.constant 0 : index
    %c0_6 = arith.constant 0 : index
    %6 = vector.load %arg6[%c0_5, %c0_6] : memref<1x128xf32, #tpu.memory_space<vmem>>, vector<1x128xf32>
    %7 = vector.shape_cast %6 : vector<1x128xf32> to vector<1x1x128xf32>
    %8 = vector.broadcast %7 : vector<1x1x128xf32> to vector<16x16x128xf32>
    %9 = arith.addf %5, %8 : vector<16x16x128xf32>
    %c0_7 = arith.constant 0 : index
    %c0_8 = arith.constant 0 : index
    %c0_9 = arith.constant 0 : index
    %c0_10 = arith.constant 0 : index
    %10 = vector.load %arg1[%c0_7, %c0_8, %c0_9, %c0_10] : memref<1x16x16x128xf32, #tpu.memory_space<vmem>>, vector<1x16x16x128xf32>
    %11 = vector.shape_cast %10 : vector<1x16x16x128xf32> to vector<16x16x128xf32>
    %c0_11 = arith.constant 0 : index
    %c0_12 = arith.constant 0 : index
    %12 = vector.load %arg2[%c0_11, %c0_12] : memref<1x128xf32, #tpu.memory_space<vmem>>, vector<1x128xf32>
    %13 = vector.shape_cast %12 : vector<1x128xf32> to vector<1x1x128xf32>
    %14 = vector.broadcast %13 : vector<1x1x128xf32> to vector<16x16x128xf32>
    %15 = arith.mulf %11, %14 : vector<16x16x128xf32>
    %c0_13 = arith.constant 0 : index
    %c0_14 = arith.constant 0 : index
    %16 = vector.load %arg3[%c0_13, %c0_14] : memref<1x128xf32, #tpu.memory_space<vmem>>, vector<1x128xf32>
    %17 = vector.shape_cast %16 : vector<1x128xf32> to vector<1x1x128xf32>
    %18 = vector.broadcast %17 : vector<1x1x128xf32> to vector<16x16x128xf32>
    %19 = arith.addf %15, %18 : vector<16x16x128xf32>
    %20 = arith.addf %19, %9 : vector<16x16x128xf32>
    %cst = arith.constant 0.000000e+00 : f32
    %21 = vector.broadcast %cst : f32 to vector<16x16x128xf32>
    %22 = arith.maximumf %20, %21 : vector<16x16x128xf32>
    %c0_15 = arith.constant 0 : index
    %c0_16 = arith.constant 0 : index
    %c0_17 = arith.constant 0 : index
    %c0_18 = arith.constant 0 : index
    %23 = vector.load %arg7[%c0_15, %c0_16, %c0_17, %c0_18] : memref<1x16x16x128xf32, #tpu.memory_space<vmem>>, vector<1x16x16x128xf32>
    %24 = vector.shape_cast %23 : vector<1x16x16x128xf32> to vector<16x16x128xf32>
    %25 = vector.shape_cast %22 : vector<16x16x128xf32> to vector<1x16x16x128xf32>
    tpu.vector_store %arg7[%c0_15, %c0_16, %c0_17, %c0_18], %25 {strides = array<i32>} : memref<1x16x16x128xf32, #tpu.memory_space<vmem>>, vector<1x16x16x128xf32>,
    return
  }
  func.func @transform_0(%arg0: i32) -> (i32, i32, i32, i32) {
    %c0_i32 = arith.constant 0 : i32
    %c0_i32_0 = arith.constant 0 : i32
    %c0_i32_1 = arith.constant 0 : i32
    %c0_i32_2 = arith.constant 0 : i32
    return %arg0, %c0_i32, %c0_i32_0, %c0_i32_1 : i32, i32, i32, i32
  }
  func.func @transform_1(%arg0: i32) -> (i32, i32) {
    %c0_i32 = arith.constant 0 : i32
    %c0_i32_0 = arith.constant 0 : i32
    %c0_i32_1 = arith.constant 0 : i32
    return %c0_i32, %c0_i32_0 : i32, i32
  }
  func.func @transform_2(%arg0: i32) -> (i32, i32) {
    %c0_i32 = arith.constant 0 : i32
    %c0_i32_0 = arith.constant 0 : i32
    %c0_i32_1 = arith.constant 0 : i32
    return %c0_i32, %c0_i32_0 : i32, i32
  }
  func.func @transform_3(%arg0: i32) -> (i32, i32, i32, i32) {
    %c0_i32 = arith.constant 0 : i32
    %c0_i32_0 = arith.constant 0 : i32
    %c0_i32_1 = arith.constant 0 : i32
    %c0_i32_2 = arith.constant 0 : i32
    return %arg0, %c0_i32, %c0_i32_0, %c0_i32_1 : i32, i32, i32, i32
  }
  func.func @transform_4(%arg0: i32) -> (i32, i32) {
    %c0_i32 = arith.constant 0 : i32
    %c0_i32_0 = arith.constant 0 : i32
    %c0_i32_1 = arith.constant 0 : i32
    return %c0_i32, %c0_i32_0 : i32, i32
  }
  func.func @transform_5(%arg0: i32) -> (i32, i32) {
    %c0_i32 = arith.constant 0 : i32
    %c0_i32_0 = arith.constant 0 : i32
    %c0_i32_1 = arith.constant 0 : i32
    return %c0_i32, %c0_i32_0 : i32, i32
  }
  func.func @transform_6(%arg0: i32) -> (i32, i32, i32, i32) {
    %c0_i32 = arith.constant 0 : i32
    %c0_i32_0 = arith.constant 0 : i32
    %c0_i32_1 = arith.constant 0 : i32
    %c0_i32_2 = arith.constant 0 : i32
    return %arg0, %c0_i32, %c0_i32_0, %c0_i32_1 : i32, i32, i32, i32
  }
}

</mosaic_0001>

<llo_original>
// kernel: basic_block_forward.5
$region0: #{basic_block_forward.5}
  #allocation0 [shape = 'u32[]', space=smem, size = 0x4, offset = 0x4, fixed_abs, tag = 'smem constant byte address 0x4 - core index']
  #allocation1 [shape = 'u32[144,128]{1,0:T(1,128)}', space=vmem, size = 0x12000, scoped, tag = 'internal scratch']
  %s0 = inlined_call_operand.vmem [shape: f32[2,16,16,128], index: 0, kind: input, shape index: {}]
  %s1 = inlined_call_operand.vmem [shape: f32[1,128], index: 1, kind: input, shape index: {}]
  %s2 = inlined_call_operand.vmem [shape: f32[1,128], index: 2, kind: input, shape index: {}]
  %s3 = inlined_call_operand.vmem [shape: f32[2,16,16,128], index: 3, kind: input, shape index: {}]
  %s4 = inlined_call_operand.vmem [shape: f32[1,128], index: 4, kind: input, shape index: {}]
  %s5 = inlined_call_operand.vmem [shape: f32[1,128], index: 5, kind: input, shape index: {}]
  %s6 = inlined_call_operand.vmem [shape: f32[2,16,16,128], index: 6, kind: output, shape index: {}]
  %s7 = sld [smem:[#allocation0]]
  $region57: #{basic_block_forward.5} parent=0
    _
  %s9 = ssub.s32 1, %s7
  %s10 = scalar_select 0, %s9, %s7
  loop: start=0, step=1, limit=4
  $region2: #{basic_block_forward.5} parent=0 // loop_pre_header
    _
  $region3: #{basic_block_forward.5} parent=0 // loop_header
    %s12 = sphi 0, %s16
    %p13 = scmp.ge.s32.totalorder %s12, 4
    %s22 = sphi 0, %s24
    %s25 = sphi 0, %s22
    %s26 = sphi 0, %s25
    %s42 = sphi 0, %s26
    %s46 = sphi 0, %s46
    %s48 = sphi 0, %s46
    %s49 = sphi 0, %s48
    %s63 = sphi 0, %s49
    %s67 = sphi 0, %s67
    %s69 = sphi 0, %s67
    %s70 = sphi 0, %s69
    %s84 = sphi 0, %s70
    %s90 = sphi 0, %s92
    %s93 = sphi 0, %s90
    %s94 = sphi 0, %s93
    %s110 = sphi 0, %s94
    %s114 = sphi 0, %s114
    %s116 = sphi 0, %s114
    %s117 = sphi 0, %s116
    %s131 = sphi 0, %s117
    %s135 = sphi 0, %s135
    %s137 = sphi 0, %s135
    %s138 = sphi 0, %s137
    %s152 = sphi 0, %s138
    %s158 = sphi 0, %s160
    %s161 = sphi 0, %s158
    %s162 = sphi 0, %s161
    %s178 = sphi 0, %s162
  $region4: #{basic_block_forward.5} parent=0 // loop_header_branch
    %15 = sbr.rel (%p13) target = $region8
  $region5: #{basic_block_forward.5} parent=0 // loop_body
    %s17 = ssub.s32 %s12, 1
    %s18 = ssub.s32 %s12, 2
    %s19 = sadd.s32 %s12, 1
    %s20 = ssub.s32 %s12, %s19
    %p21 = scmp.eq.s32.totalorder %s20, 0
    %s23 = sadd.s32 %s22, 1
    %s24 = scalar_select %p21, %s22, %s23
    %p27 = pneg %p21
    %p28 = scmp.eq.s32.totalorder %s12, 1
    %p29 = por %p27, %p28
    %p30 = scmp.ne.s32.totalorder %s22, %s25
    %p31 = scmp.eq.s32.totalorder %s12, 0
    %p32 = por %p30, %p31
    %p33 = scmp.ne.s32.totalorder %s22, %s25
    %p34 = scmp.eq.s32.totalorder %s17, 1
    %p35 = por %p33, %p34
    %p36 = scmp.ne.s32.totalorder %s25, %s26
    %p37 = scmp.eq.s32.totalorder %s17, 0
    %p38 = por %p36, %p37
    %p39 = scmp.ne.s32.totalorder %s25, %s26
    %p40 = scmp.eq.s32.totalorder %s18, 1
    %p41 = por %p39, %p40
    %p43 = scmp.ne.s32.totalorder %s26, %s42
    %p44 = scmp.eq.s32.totalorder %s18, 0
    %p45 = por %p43, %p44
    %s47 = sadd.s32 %s46, 1
    %p50 = scmp.eq.s32.totalorder %s12, 1
    %p51 = scmp.ne.s32.totalorder %s46, %s48
    %p52 = scmp.eq.s32.totalorder %s12, 0
    %p53 = por %p51, %p52
    %p54 = scmp.ne.s32.totalorder %s46, %s48
    %p55 = scmp.eq.s32.totalorder %s17, 1
    %p56 = por %p54, %p55
    %p57 = scmp.ne.s32.totalorder %s48, %s49
    %p58 = scmp.eq.s32.totalorder %s17, 0
    %p59 = por %p57, %p58
    %p60 = scmp.ne.s32.totalorder %s48, %s49
    %p61 = scmp.eq.s32.totalorder %s18, 1
    %p62 = por %p60, %p61
    %p64 = scmp.ne.s32.totalorder %s49, %s63
    %p65 = scmp.eq.s32.totalorder %s18, 0
    %p66 = por %p64, %p65
    %s68 = sadd.s32 %s67, 1
    %p71 = scmp.eq.s32.totalorder %s12, 1
    %p72 = scmp.ne.s32.totalorder %s67, %s69
    %p73 = scmp.eq.s32.totalorder %s12, 0
    %p74 = por %p72, %p73
    %p75 = scmp.ne.s32.totalorder %s67, %s69
    %p76 = scmp.eq.s32.totalorder %s17, 1
    %p77 = por %p75, %p76
    %p78 = scmp.ne.s32.totalorder %s69, %s70
    %p79 = scmp.eq.s32.totalorder %s17, 0
    %p80 = por %p78, %p79
    %p81 = scmp.ne.s32.totalorder %s69, %s70
    %p82 = scmp.eq.s32.totalorder %s18, 1
    %p83 = por %p81, %p82
    %p85 = scmp.ne.s32.totalorder %s70, %s84
    %p86 = scmp.eq.s32.totalorder %s18, 0
    %p87 = por %p85, %p86
    %s88 = ssub.s32 %s12, %s19
    %p89 = scmp.eq.s32.totalorder %s88, 0
    %s91 = sadd.s32 %s90, 1
    %s92 = scalar_select %p89, %s90, %s91
    %p95 = pneg %p89
    %p96 = scmp.eq.s32.totalorder %s12, 1
    %p97 = por %p95, %p96
    %p98 = scmp.ne.s32.totalorder %s90, %s93
    %p99 = scmp.eq.s32.totalorder %s12, 0
    %p100 = por %p98, %p99
    %p101 = scmp.ne.s32.totalorder %s90, %s93
    %p102 = scmp.eq.s32.totalorder %s17, 1
    %p103 = por %p101, %p102
    %p104 = scmp.ne.s32.totalorder %s93, %s94
    %p105 = scmp.eq.s32.totalorder %s17, 0
    %p106 = por %p104, %p105
    %p107 = scmp.ne.s32.totalorder %s93, %s94
    %p108 = scmp.eq.s32.totalorder %s18, 1
    %p109 = por %p107, %p108
    %p111 = scmp.ne.s32.totalorder %s94, %s110
    %p112 = scmp.eq.s32.totalorder %s18, 0
    %p113 = por %p111, %p112
    %s115 = sadd.s32 %s114, 1
    %p118 = scmp.eq.s32.totalorder %s12, 1
    %p119 = scmp.ne.s32.totalorder %s114, %s116
    %p120 = scmp.eq.s32.totalorder %s12, 0
    %p121 = por %p119, %p120
    %p122 = scmp.ne.s32.totalorder %s114, %s116
    %p123 = scmp.eq.s32.totalorder %s17, 1
    %p124 = por %p122, %p123
    %p125 = scmp.ne.s32.totalorder %s116, %s117
    %p126 = scmp.eq.s32.totalorder %s17, 0
    %p127 = por %p125, %p126
    %p128 = scmp.ne.s32.totalorder %s116, %s117
    %p129 = scmp.eq.s32.totalorder %s18, 1
    %p130 = por %p128, %p129
    %p132 = scmp.ne.s32.totalorder %s117, %s131
    %p133 = scmp.eq.s32.totalorder %s18, 0
    %p134 = por %p132, %p133
    %s136 = sadd.s32 %s135, 1
    %p139 = scmp.eq.s32.totalorder %s12, 1
    %p140 = scmp.ne.s32.totalorder %s135, %s137
    %p141 = scmp.eq.s32.totalorder %s12, 0
    %p142 = por %p140, %p141
    %p143 = scmp.ne.s32.totalorder %s135, %s137
    %p144 = scmp.eq.s32.totalorder %s17, 1
    %p145 = por %p143, %p144
    %p146 = scmp.ne.s32.totalorder %s137, %s138
    %p147 = scmp.eq.s32.totalorder %s17, 0
    %p148 = por %p146, %p147
    %p149 = scmp.ne.s32.totalorder %s137, %s138
    %p150 = scmp.eq.s32.totalorder %s18, 1
    %p151 = por %p149, %p150
    %p153 = scmp.ne.s32.totalorder %s138, %s152
    %p154 = scmp.eq.s32.totalorder %s18, 0
    %p155 = por %p153, %p154
    %s156 = ssub.s32 %s12, %s19
    %p157 = scmp.eq.s32.totalorder %s156, 0
    %s159 = sadd.s32 %s158, 1
    %s160 = scalar_select %p157, %s158, %s159
    %p163 = pneg %p157
    %p164 = scmp.eq.s32.totalorder %s12, 1
    %p165 = por %p163, %p164
    %p166 = scmp.ne.s32.totalorder %s158, %s161
    %p167 = scmp.eq.s32.totalorder %s12, 0
    %p168 = por %p166, %p167
    %p169 = scmp.ne.s32.totalorder %s158, %s161
    %p170 = scmp.eq.s32.totalorder %s17, 1
    %p171 = por %p169, %p170
    %p172 = scmp.ne.s32.totalorder %s161, %s162
    %p173 = scmp.eq.s32.totalorder %s17, 0
    %p174 = por %p172, %p173
    %p175 = scmp.ne.s32.totalorder %s161, %s162
    %p176 = scmp.eq.s32.totalorder %s18, 1
    %p177 = por %p175, %p176
    %p179 = scmp.ne.s32.totalorder %s162, %s178
    %p180 = scmp.eq.s32.totalorder %s18, 0
    %p181 = por %p179, %p180
    %p182 = scmp.le.s32.totalorder 1, %s12
    %p183 = scmp.lt.s32.totalorder %s12, 3
    %p184 = pnand %p182, %p183
    %p185 = pneg %p184
    // Predicated region
    $region9: #{basic_block_forward.5} parent=5 // pred_check
      _
    $region10: #{basic_block_forward.5} parent=5 // pred_check_branch
      %187 = sbr.rel (%p184) target = $region12
    $region11: #{basic_block_forward.5} parent=5 // pred_region
      %s188 = ssub.s32 %s12, 1
      // Predicated region
      $region13: #{basic_block_forward.5} parent=11 // pred_check
        %p189 = pneg %p59
      $region14: #{basic_block_forward.5} parent=11 // pred_check_branch
        %191 = sbr.rel (%p189) target = $region16
      $region15: #{basic_block_forward.5} parent=11 // pred_region
        _
      $region16: #{basic_block_forward.5} parent=11 // pred_fallthru
        _
      // Predicated region
      $region17: #{basic_block_forward.5} parent=11 // pred_check
        %p192 = pneg %p80
      $region18: #{basic_block_forward.5} parent=11 // pred_check_branch
        %194 = sbr.rel (%p192) target = $region20
      $region19: #{basic_block_forward.5} parent=11 // pred_region
        _
      $region20: #{basic_block_forward.5} parent=11 // pred_fallthru
        _
      // Predicated region
      $region21: #{basic_block_forward.5} parent=11 // pred_check
        %p195 = pneg %p127
      $region22: #{basic_block_forward.5} parent=11 // pred_check_branch
        %197 = sbr.rel (%p195) target = $region24
      $region23: #{basic_block_forward.5} parent=11 // pred_region
        _
      $region24: #{basic_block_forward.5} parent=11 // pred_fallthru
        _
      // Predicated region
      $region25: #{basic_block_forward.5} parent=11 // pred_check
        %p198 = pneg %p148
      $region26: #{basic_block_forward.5} parent=11 // pred_check_branch
        %200 = sbr.rel (%p198) target = $region28
      $region27: #{basic_block_forward.5} parent=11 // pred_region
        _
      $region28: #{basic_block_forward.5} parent=11 // pred_fallthru
        _
    $region12: #{basic_block_forward.5} parent=5 // pred_fallthru
      _
    %p201 = scmp.lt.s32.totalorder %s12, 2
    // Predicated region
    $region29: #{basic_block_forward.5} parent=5 // pred_check
      %p202 = pneg %p201
    $region30: #{basic_block_forward.5} parent=5 // pred_check_branch
      %204 = sbr.rel (%p202) target = $region32
    $region31: #{basic_block_forward.5} parent=5 // pred_region
      // Predicated region
      $region33: #{basic_block_forward.5} parent=31 // pred_check
        %p205 = pneg %p32
      $region34: #{basic_block_forward.5} parent=31 // pred_check_branch
        %207 = sbr.rel (%p205) target = $region36
      $region35: #{basic_block_forward.5} parent=31 // pred_region
        %p208 = scmp.lt.s32.totalorder %s12, 1
        %s209 = scalar_select %p208, %s12, 1
        %s210 = smul.addr %s209, 32
        %s211 = smul.addr %s210, 8
        %s212 = scalar_lea.vmem %s0, %s211
      $region36: #{basic_block_forward.5} parent=31 // pred_fallthru
        _
      // Predicated region
      $region37: #{basic_block_forward.5} parent=31 // pred_check
        %p213 = pneg %p100
      $region38: #{basic_block_forward.5} parent=31 // pred_check_branch
        %215 = sbr.rel (%p213) target = $region40
      $region39: #{basic_block_forward.5} parent=31 // pred_region
        %p216 = scmp.lt.s32.totalorder %s12, 1
        %s217 = scalar_select %p216, %s12, 1
        %s218 = smul.addr %s217, 32
        %s219 = smul.addr %s218, 8
        %s220 = scalar_lea.vmem %s3, %s219
      $region40: #{basic_block_forward.5} parent=31 // pred_fallthru
        _
    $region32: #{basic_block_forward.5} parent=5 // pred_fallthru
      _
    %p221 = scmp.le.s32.totalorder 1, %s12
    %p222 = scmp.lt.s32.totalorder %s12, 3
    %p223 = pnand %p221, %p222
    %p224 = pneg %p223
    // Predicated region
    $region41: #{basic_block_forward.5} parent=5 // pred_check
      _
    $region42: #{basic_block_forward.5} parent=5 // pred_check_branch
      %226 = sbr.rel (%p223) target = $region44
    $region43: #{basic_block_forward.5} parent=5 // pred_region
      %s227 = ssub.s32 %s12, 1
      %p228 = scmp.lt.s32.totalorder %s17, 1
      %s229 = scalar_select %p228, %s17, 1
      %s230 = smul.addr %s229, 32
      %s231 = smul.addr %s230, 8
      %s232 = scalar_lea.vmem %s0, %s231
      %p233 = pneg %p38
      %p234 = pneg %p35
      %p235 = pneg %p59
      %p236 = pneg %p56
      %p237 = pneg %p80
      %p238 = pneg %p77
      %p239 = scmp.lt.s32.totalorder %s17, 1
      %s240 = scalar_select %p239, %s17, 1
      %s241 = smul.addr %s240, 32
      %s242 = smul.addr %s241, 8
      %s243 = scalar_lea.vmem %s3, %s242
      %p244 = pneg %p106
      %p245 = pneg %p103
      %p246 = pneg %p127
      %p247 = pneg %p124
      %p248 = pneg %p148
      %p249 = pneg %p145
      %p250 = pneg %p174
      %p251 = pneg %p171
      %p252 = scmp.lt.s32.totalorder %s17, 1
      %s253 = scalar_select %p252, %s17, 1
      %s254 = smul.addr %s253, 32
      %s255 = smul.addr %s254, 8
      %s256 = scalar_lea.vmem %s6, %s255
      %p257 = scmp.lt.s32.totalorder %s17, 1
      %s258 = scalar_select %p257, %s17, 1
      %s259 = smul.addr %s258, 32
      %s260 = smul.addr %s259, 8
      %s261 = scalar_lea.vmem %s0, %s260
      %p262 = scmp.lt.s32.totalorder %s17, 1
      %s263 = scalar_select %p262, %s17, 1
      %s264 = smul.addr %s263, 32
      %s265 = smul.addr %s264, 8
      %s266 = scalar_lea.vmem %s3, %s265
      %p267 = scmp.lt.s32.totalorder %s17, 1
      %s268 = scalar_select %p267, %s17, 1
      %s269 = smul.addr %s268, 32
      %s270 = smul.addr %s269, 8
      %s271 = scalar_lea.vmem %s6, %s270
      %v272 = vld [vmem:[%s266] sm:$0xff]
      %v273 = vld [vmem:[%s266 + $0x8] sm:$0xff]
      %v274 = vld [vmem:[%s266 + $0x10] sm:$0xff]
      %v275 = vld [vmem:[%s266 + $0x18] sm:$0xff]
      %v276 = vld [vmem:[%s266 + $0x20] sm:$0xff]
      %v277 = vld [vmem:[%s266 + $0x28] sm:$0xff]
      %v278 = vld [vmem:[%s266 + $0x30] sm:$0xff]
      %v279 = vld [vmem:[%s266 + $0x38] sm:$0xff]
      %v280 = vld [vmem:[%s266 + $0x40] sm:$0xff]
      %v281 = vld [vmem:[%s266 + $0x48] sm:$0xff]
      %v282 = vld [vmem:[%s266 + $0x50] sm:$0xff]
      %v283 = vld [vmem:[%s266 + $0x58] sm:$0xff]
      %v284 = vld [vmem:[%s266 + $0x60] sm:$0xff]
      %v285 = vld [vmem:[%s266 + $0x68] sm:$0xff]
      %v286 = vld [vmem:[%s266 + $0x70] sm:$0xff]
      %v287 = vld [vmem:[%s266 + $0x78] sm:$0xff]
      %v288 = vld [vmem:[%s266 + $0x80] sm:$0xff]
      %v289 = vld [vmem:[%s266 + $0x88] sm:$0xff]
      %v290 = vld [vmem:[%s266 + $0x90] sm:$0xff]
      %v291 = vld [vmem:[%s266 + $0x98] sm:$0xff]
      %v292 = vld [vmem:[%s266 + $0xa0] sm:$0xff]
      %v293 = vld [vmem:[%s266 + $0xa8] sm:$0xff]
      %v294 = vld [vmem:[%s266 + $0xb0] sm:$0xff]
      %v295 = vld [vmem:[%s266 + $0xb8] sm:$0xff]
      %v296 = vld [vmem:[%s266 + $0xc0] sm:$0xff]
      %v297 = vld [vmem:[%s266 + $0xc8] sm:$0xff]
      %v298 = vld [vmem:[%s266 + $0xd0] sm:$0xff]
      %v299 = vld [vmem:[%s266 + $0xd8] sm:$0xff]
      %v300 = vld [vmem:[%s266 + $0xe0] sm:$0xff]
      %v301 = vld [vmem:[%s266 + $0xe8] sm:$0xff]
      %v302 = vld [vmem:[%s266 + $0xf0] sm:$0xff]
      %v303 = vld [vmem:[%s266 + $0xf8] sm:$0xff]
      %v304 = vld [vmem:[%s4] sm:$0x1]
      %v306 = vlaneseq
      %v307 = vshrl.u32 %v306, 7
      %v308 = vsub.s32 0, %v307
      %v309 = vrot.slane %v304, %v308
      %v311 = vmul.f32 %v272, %v309
      %v312 = vmul.f32 %v273, %v309
      %v313 = vmul.f32 %v274, %v309
      %v314 = vmul.f32 %v275, %v309
      %v315 = vmul.f32 %v276, %v309
      %v316 = vmul.f32 %v277, %v309
      %v317 = vmul.f32 %v278, %v309
      %v318 = vmul.f32 %v279, %v309
      %v319 = vmul.f32 %v280, %v309
      %v320 = vmul.f32 %v281, %v309
      %v321 = vmul.f32 %v282, %v309
      %v322 = vmul.f32 %v283, %v309
      %v323 = vmul.f32 %v284, %v309
      %v324 = vmul.f32 %v285, %v309
      %v325 = vmul.f32 %v286, %v309
      %v326 = vmul.f32 %v287, %v309
      %v327 = vmul.f32 %v288, %v309
      %v328 = vmul.f32 %v289, %v309
      %v329 = vmul.f32 %v290, %v309
      %v330 = vmul.f32 %v291, %v309
      %v331 = vmul.f32 %v292, %v309
      %v332 = vmul.f32 %v293, %v309
      %v333 = vmul.f32 %v294, %v309
      %v334 = vmul.f32 %v295, %v309
      %v335 = vmul.f32 %v296, %v309
      %v336 = vmul.f32 %v297, %v309
      %v337 = vmul.f32 %v298, %v309
      %v338 = vmul.f32 %v299, %v309
      %v339 = vmul.f32 %v300, %v309
      %v340 = vmul.f32 %v301, %v309
      %v341 = vmul.f32 %v302, %v309
      %v342 = vmul.f32 %v303, %v309
      %v343 = vld [vmem:[%s5] sm:$0x1]
      %v345 = vlaneseq
      %v346 = vshrl.u32 %v345, 7
      %v347 = vsub.s32 0, %v346
      %v348 = vrot.slane %v343, %v347
      %v350 = vadd.f32 %v311, %v348
      %v351 = vadd.f32 %v312, %v348
      %v352 = vadd.f32 %v313, %v348
      %v353 = vadd.f32 %v314, %v348
      %v354 = vadd.f32 %v315, %v348
      %v355 = vadd.f32 %v316, %v348
      %v356 = vadd.f32 %v317, %v348
      %v357 = vadd.f32 %v318, %v348
      %v358 = vadd.f32 %v319, %v348
      %v359 = vadd.f32 %v320, %v348
      %v360 = vadd.f32 %v321, %v348
      %v361 = vadd.f32 %v322, %v348
      %v362 = vadd.f32 %v323, %v348
      %v363 = vadd.f32 %v324, %v348
      %v364 = vadd.f32 %v325, %v348
      %v365 = vadd.f32 %v326, %v348
      %v366 = vadd.f32 %v327, %v348
      %v367 = vadd.f32 %v328, %v348
      %v368 = vadd.f32 %v329, %v348
      %v369 = vadd.f32 %v330, %v348
      %v370 = vadd.f32 %v331, %v348
      %v371 = vadd.f32 %v332, %v348
      %v372 = vadd.f32 %v333, %v348
      %v373 = vadd.f32 %v334, %v348
      %v374 = vadd.f32 %v335, %v348
      %v375 = vadd.f32 %v336, %v348
      %v376 = vadd.f32 %v337, %v348
      %v377 = vadd.f32 %v338, %v348
      %v378 = vadd.f32 %v339, %v348
      %v379 = vadd.f32 %v340, %v348
      %v380 = vadd.f32 %v341, %v348
      %v381 = vadd.f32 %v342, %v348
      %v382 = vld [vmem:[%s261] sm:$0xff]
      %v383 = vld [vmem:[%s261 + $0x8] sm:$0xff]
      %v384 = vld [vmem:[%s261 + $0x10] sm:$0xff]
      %v385 = vld [vmem:[%s261 + $0x18] sm:$0xff]
      %v386 = vld [vmem:[%s261 + $0x20] sm:$0xff]
      %v387 = vld [vmem:[%s261 + $0x28] sm:$0xff]
      %v388 = vld [vmem:[%s261 + $0x30] sm:$0xff]
      %v389 = vld [vmem:[%s261 + $0x38] sm:$0xff]
      %v390 = vld [vmem:[%s261 + $0x40] sm:$0xff]
      %v391 = vld [vmem:[%s261 + $0x48] sm:$0xff]
      %v392 = vld [vmem:[%s261 + $0x50] sm:$0xff]
      %v393 = vld [vmem:[%s261 + $0x58] sm:$0xff]
      %v394 = vld [vmem:[%s261 + $0x60] sm:$0xff]
      %v395 = vld [vmem:[%s261 + $0x68] sm:$0xff]
      %v396 = vld [vmem:[%s261 + $0x70] sm:$0xff]
      %v397 = vld [vmem:[%s261 + $0x78] sm:$0xff]
      %v398 = vld [vmem:[%s261 + $0x80] sm:$0xff]
      %v399 = vld [vmem:[%s261 + $0x88] sm:$0xff]
      %v400 = vld [vmem:[%s261 + $0x90] sm:$0xff]
      %v401 = vld [vmem:[%s261 + $0x98] sm:$0xff]
      %v402 = vld [vmem:[%s261 + $0xa0] sm:$0xff]
      %v403 = vld [vmem:[%s261 + $0xa8] sm:$0xff]
      %v404 = vld [vmem:[%s261 + $0xb0] sm:$0xff]
      %v405 = vld [vmem:[%s261 + $0xb8] sm:$0xff]
      %v406 = vld [vmem:[%s261 + $0xc0] sm:$0xff]
      %v407 = vld [vmem:[%s261 + $0xc8] sm:$0xff]
      %v408 = vld [vmem:[%s261 + $0xd0] sm:$0xff]
      %v409 = vld [vmem:[%s261 + $0xd8] sm:$0xff]
      %v410 = vld [vmem:[%s261 + $0xe0] sm:$0xff]
      %v411 = vld [vmem:[%s261 + $0xe8] sm:$0xff]
      %v412 = vld [vmem:[%s261 + $0xf0] sm:$0xff]
      %v413 = vld [vmem:[%s261 + $0xf8] sm:$0xff]
      %v414 = vld [vmem:[%s1] sm:$0x1]
      %v416 = vlaneseq
      %v417 = vshrl.u32 %v416, 7
      %v418 = vsub.s32 0, %v417
      %v419 = vrot.slane %v414, %v418
      %v421 = vmul.f32 %v382, %v419
      %v422 = vmul.f32 %v383, %v419
      %v423 = vmul.f32 %v384, %v419
      %v424 = vmul.f32 %v385, %v419
      %v425 = vmul.f32 %v386, %v419
      %v426 = vmul.f32 %v387, %v419
      %v427 = vmul.f32 %v388, %v419
      %v428 = vmul.f32 %v389, %v419
      %v429 = vmul.f32 %v390, %v419
      %v430 = vmul.f32 %v391, %v419
      %v431 = vmul.f32 %v392, %v419
      %v432 = vmul.f32 %v393, %v419
      %v433 = vmul.f32 %v394, %v419
      %v434 = vmul.f32 %v395, %v419
      %v435 = vmul.f32 %v396, %v419
      %v436 = vmul.f32 %v397, %v419
      %v437 = vmul.f32 %v398, %v419
      %v438 = vmul.f32 %v399, %v419
      %v439 = vmul.f32 %v400, %v419
      %v440 = vmul.f32 %v401, %v419
      %v441 = vmul.f32 %v402, %v419
      %v442 = vmul.f32 %v403, %v419
      %v443 = vmul.f32 %v404, %v419
      %v444 = vmul.f32 %v405, %v419
      %v445 = vmul.f32 %v406, %v419
      %v446 = vmul.f32 %v407, %v419
      %v447 = vmul.f32 %v408, %v419
      %v448 = vmul.f32 %v409, %v419
      %v449 = vmul.f32 %v410, %v419
      %v450 = vmul.f32 %v411, %v419
      %v451 = vmul.f32 %v412, %v419
      %v452 = vmul.f32 %v413, %v419
      %v453 = vld [vmem:[%s2] sm:$0x1]
      %v455 = vlaneseq
      %v456 = vshrl.u32 %v455, 7
      %v457 = vsub.s32 0, %v456
      %v458 = vrot.slane %v453, %v457
      %v460 = vadd.f32 %v421, %v458
      %v461 = vadd.f32 %v422, %v458
      %v462 = vadd.f32 %v423, %v458
      %v463 = vadd.f32 %v424, %v458
      %v464 = vadd.f32 %v425, %v458
      %v465 = vadd.f32 %v426, %v458
      %v466 = vadd.f32 %v427, %v458
      %v467 = vadd.f32 %v428, %v458
      %v468 = vadd.f32 %v429, %v458
      %v469 = vadd.f32 %v430, %v458
      %v470 = vadd.f32 %v431, %v458
      %v471 = vadd.f32 %v432, %v458
      %v472 = vadd.f32 %v433, %v458
      %v473 = vadd.f32 %v434, %v458
      %v474 = vadd.f32 %v435, %v458
      %v475 = vadd.f32 %v436, %v458
      %v476 = vadd.f32 %v437, %v458
      %v477 = vadd.f32 %v438, %v458
      %v478 = vadd.f32 %v439, %v458
      %v479 = vadd.f32 %v440, %v458
      %v480 = vadd.f32 %v441, %v458
      %v481 = vadd.f32 %v442, %v458
      %v482 = vadd.f32 %v443, %v458
      %v483 = vadd.f32 %v444, %v458
      %v484 = vadd.f32 %v445, %v458
      %v485 = vadd.f32 %v446, %v458
      %v486 = vadd.f32 %v447, %v458
      %v487 = vadd.f32 %v448, %v458
      %v488 = vadd.f32 %v449, %v458
      %v489 = vadd.f32 %v450, %v458
      %v490 = vadd.f32 %v451, %v458
      %v491 = vadd.f32 %v452, %v458
      %v492 = vadd.f32 %v460, %v350
      %v493 = vadd.f32 %v461, %v351
      %v494 = vadd.f32 %v462, %v352
      %v495 = vadd.f32 %v463, %v353
      %v496 = vadd.f32 %v464, %v354
      %v497 = vadd.f32 %v465, %v355
      %v498 = vadd.f32 %v466, %v356
      %v499 = vadd.f32 %v467, %v357
      %v500 = vadd.f32 %v468, %v358
      %v501 = vadd.f32 %v469, %v359
      %v502 = vadd.f32 %v470, %v360
      %v503 = vadd.f32 %v471, %v361
      %v504 = vadd.f32 %v472, %v362
      %v505 = vadd.f32 %v473, %v363
      %v506 = vadd.f32 %v474, %v364
      %v507 = vadd.f32 %v475, %v365
      %v508 = vadd.f32 %v476, %v366
      %v509 = vadd.f32 %v477, %v367
      %v510 = vadd.f32 %v478, %v368
      %v511 = vadd.f32 %v479, %v369
      %v512 = vadd.f32 %v480, %v370
      %v513 = vadd.f32 %v481, %v371
      %v514 = vadd.f32 %v482, %v372
      %v515 = vadd.f32 %v483, %v373
      %v516 = vadd.f32 %v484, %v374
      %v517 = vadd.f32 %v485, %v375
      %v518 = vadd.f32 %v486, %v376
      %v519 = vadd.f32 %v487, %v377
      %v520 = vadd.f32 %v488, %v378
      %v521 = vadd.f32 %v489, %v379
      %v522 = vadd.f32 %v490, %v380
      %v523 = vadd.f32 %v491, %v381
      %v524 = vmax.f32 %v492, 0.0
      %v525 = vmax.f32 %v493, 0.0
      %v526 = vmax.f32 %v494, 0.0
      %v527 = vmax.f32 %v495, 0.0
      %v528 = vmax.f32 %v496, 0.0
      %v529 = vmax.f32 %v497, 0.0
      %v530 = vmax.f32 %v498, 0.0
      %v531 = vmax.f32 %v499, 0.0
      %v532 = vmax.f32 %v500, 0.0
      %v533 = vmax.f32 %v501, 0.0
      %v534 = vmax.f32 %v502, 0.0
      %v535 = vmax.f32 %v503, 0.0
      %v536 = vmax.f32 %v504, 0.0
      %v537 = vmax.f32 %v505, 0.0
      %v538 = vmax.f32 %v506, 0.0
      %v539 = vmax.f32 %v507, 0.0
      %v540 = vmax.f32 %v508, 0.0
      %v541 = vmax.f32 %v509, 0.0
      %v542 = vmax.f32 %v510, 0.0
      %v543 = vmax.f32 %v511, 0.0
      %v544 = vmax.f32 %v512, 0.0
      %v545 = vmax.f32 %v513, 0.0
      %v546 = vmax.f32 %v514, 0.0
      %v547 = vmax.f32 %v515, 0.0
      %v548 = vmax.f32 %v516, 0.0
      %v549 = vmax.f32 %v517, 0.0
      %v550 = vmax.f32 %v518, 0.0
      %v551 = vmax.f32 %v519, 0.0
      %v552 = vmax.f32 %v520, 0.0
      %v553 = vmax.f32 %v521, 0.0
      %v554 = vmax.f32 %v522, 0.0
      %v555 = vmax.f32 %v523, 0.0
      %556 = vst [vmem:[%s271] sm:$0xff] %v524
      %557 = vst [vmem:[%s271 + $0x8] sm:$0xff] %v525
      %558 = vst [vmem:[%s271 + $0x10] sm:$0xff] %v526
      %559 = vst [vmem:[%s271 + $0x18] sm:$0xff] %v527
      %560 = vst [vmem:[%s271 + $0x20] sm:$0xff] %v528
      %561 = vst [vmem:[%s271 + $0x28] sm:$0xff] %v529
      %562 = vst [vmem:[%s271 + $0x30] sm:$0xff] %v530
      %563 = vst [vmem:[%s271 + $0x38] sm:$0xff] %v531
      %564 = vst [vmem:[%s271 + $0x40] sm:$0xff] %v532
      %565 = vst [vmem:[%s271 + $0x48] sm:$0xff] %v533
      %566 = vst [vmem:[%s271 + $0x50] sm:$0xff] %v534
      %567 = vst [vmem:[%s271 + $0x58] sm:$0xff] %v535
      %568 = vst [vmem:[%s271 + $0x60] sm:$0xff] %v536
      %569 = vst [vmem:[%s271 + $0x68] sm:$0xff] %v537
      %570 = vst [vmem:[%s271 + $0x70] sm:$0xff] %v538
      %571 = vst [vmem:[%s271 + $0x78] sm:$0xff] %v539
      %572 = vst [vmem:[%s271 + $0x80] sm:$0xff] %v540
      %573 = vst [vmem:[%s271 + $0x88] sm:$0xff] %v541
      %574 = vst [vmem:[%s271 + $0x90] sm:$0xff] %v542
      %575 = vst [vmem:[%s271 + $0x98] sm:$0xff] %v543
      %576 = vst [vmem:[%s271 + $0xa0] sm:$0xff] %v544
      %577 = vst [vmem:[%s271 + $0xa8] sm:$0xff] %v545
      %578 = vst [vmem:[%s271 + $0xb0] sm:$0xff] %v546
      %579 = vst [vmem:[%s271 + $0xb8] sm:$0xff] %v547
      %580 = vst [vmem:[%s271 + $0xc0] sm:$0xff] %v548
      %581 = vst [vmem:[%s271 + $0xc8] sm:$0xff] %v549
      %582 = vst [vmem:[%s271 + $0xd0] sm:$0xff] %v550
      %583 = vst [vmem:[%s271 + $0xd8] sm:$0xff] %v551
      %584 = vst [vmem:[%s271 + $0xe0] sm:$0xff] %v552
      %585 = vst [vmem:[%s271 + $0xe8] sm:$0xff] %v553
      %586 = vst [vmem:[%s271 + $0xf0] sm:$0xff] %v554
      %587 = vst [vmem:[%s271 + $0xf8] sm:$0xff] %v555
      %p588 = scmp.lt.s32.totalorder %s17, 1
      %s589 = scalar_select %p588, %s17, 1
      %s590 = smul.addr %s589, 32
      %s591 = smul.addr %s590, 8
      %s592 = scalar_lea.vmem %s6, %s591
      // Predicated region
      $region45: #{basic_block_forward.5} parent=43 // pred_check
        %p593 = pneg %p171
      $region46: #{basic_block_forward.5} parent=43 // pred_check_branch
        %595 = sbr.rel (%p593) target = $region48
      $region47: #{basic_block_forward.5} parent=43 // pred_region
        _
      $region48: #{basic_block_forward.5} parent=43 // pred_fallthru
        _
    $region44: #{basic_block_forward.5} parent=5 // pred_fallthru
      _
    %p596 = scmp.le.s32.totalorder 2, %s12
    // Predicated region
    $region49: #{basic_block_forward.5} parent=5 // pred_check
      %p597 = pneg %p596
    $region50: #{basic_block_forward.5} parent=5 // pred_check_branch
      %599 = sbr.rel (%p597) target = $region52
    $region51: #{basic_block_forward.5} parent=5 // pred_region
      %s600 = ssub.s32 %s12, 2
      // Predicated region
      $region53: #{basic_block_forward.5} parent=51 // pred_check
        %p601 = pneg %p177
      $region54: #{basic_block_forward.5} parent=51 // pred_check_branch
        %603 = sbr.rel (%p601) target = $region56
      $region55: #{basic_block_forward.5} parent=51 // pred_region
        %p604 = scmp.lt.s32.totalorder %s18, 1
        %s605 = scalar_select %p604, %s18, 1
        %s606 = smul.addr %s605, 32
        %s607 = smul.addr %s606, 8
        %s608 = scalar_lea.vmem %s6, %s607
      $region56: #{basic_block_forward.5} parent=51 // pred_fallthru
        _
    $region52: #{basic_block_forward.5} parent=5 // pred_fallthru
      _
  $region6: #{basic_block_forward.5} parent=0 // loop_footer
    %s16 = sadd.s32 1, %s12
  $region7: #{basic_block_forward.5} parent=0 // loop_footer_branch
    %11 = sbr.rel target = $region3
  $region8: #{basic_block_forward.5} parent=0 // loop_exit
    _

// kernel: basic_block_forward.4
$region0: #{basic_block_forward.4}
  #allocation0 [shape = 'u32[]', space=smem, size = 0x4, offset = 0x4, fixed_abs, tag = 'smem constant byte address 0x4 - core index']
  #allocation1 [shape = 'u32[144,128]{1,0:T(1,128)}', space=vmem, size = 0x12000, scoped, tag = 'internal scratch']
  #allocation2 [shape = 'bf16[18,32,128]{2,1,0:T(16,128)(2,1)}', space=vmem, size = 0x24000, scoped, tag = 'scratch operand']
  %s0 = inlined_call_operand.vmem [shape: f32[2,16,16,128], index: 0, kind: input, shape index: {}]
  %s1 = inlined_call_operand.vmem [shape: f32[1,128], index: 1, kind: input, shape index: {}]
  %s2 = inlined_call_operand.vmem [shape: f32[1,128], index: 2, kind: input, shape index: {}]
  %s3 = inlined_call_operand.vmem [shape: bf16[3,384,128], index: 3, kind: input, shape index: {}]
  %s4 = inlined_call_operand.vmem [shape: f32[2,16,16,128], index: 4, kind: output, shape index: {0}]
  %s5 = inlined_call_operand.vmem [shape: f32[2,2,128], index: 5, kind: output, shape index: {1}]
  %6 = xla_tuple %s4, %s5
  %s7 = sld [smem:[#allocation0]]
  $region57: #{basic_block_forward.4} parent=0
    _
  %s9 = ssub.s32 1, %s7
  %s10 = scalar_select 0, %s9, %s7
  loop: start=0, step=1, limit=4
  $region2: #{basic_block_forward.4} parent=0 // loop_pre_header
    _
  $region3: #{basic_block_forward.4} parent=0 // loop_header
    %s12 = sphi 0, %s16
    %p13 = scmp.ge.s32.totalorder %s12, 4
    %s22 = sphi 0, %s24
    %s25 = sphi 0, %s22
    %s26 = sphi 0, %s25
    %s42 = sphi 0, %s26
    %s46 = sphi 0, %s46
    %s48 = sphi 0, %s46
    %s49 = sphi 0, %s48
    %s63 = sphi 0, %s49
    %s67 = sphi 0, %s67
    %s69 = sphi 0, %s67
    %s70 = sphi 0, %s69
    %s84 = sphi 0, %s70
    %s88 = sphi 0, %s88
    %s90 = sphi 0, %s88
    %s91 = sphi 0, %s90
    %s105 = sphi 0, %s91
    %s111 = sphi 0, %s113
    %s114 = sphi 0, %s111
    %s115 = sphi 0, %s114
    %s131 = sphi 0, %s115
    %s137 = sphi 0, %s139
    %s140 = sphi 0, %s137
    %s141 = sphi 0, %s140
    %s157 = sphi 0, %s141
  $region4: #{basic_block_forward.4} parent=0 // loop_header_branch
    %15 = sbr.rel (%p13) target = $region8
  $region5: #{basic_block_forward.4} parent=0 // loop_body
    %s17 = ssub.s32 %s12, 1
    %s18 = ssub.s32 %s12, 2
    %s19 = sadd.s32 %s12, 1
    %s20 = ssub.s32 %s12, %s19
    %p21 = scmp.eq.s32.totalorder %s20, 0
    %s23 = sadd.s32 %s22, 1
    %s24 = scalar_select %p21, %s22, %s23
    %p27 = pneg %p21
    %p28 = scmp.eq.s32.totalorder %s12, 1
    %p29 = por %p27, %p28
    %p30 = scmp.ne.s32.totalorder %s22, %s25
    %p31 = scmp.eq.s32.totalorder %s12, 0
    %p32 = por %p30, %p31
    %p33 = scmp.ne.s32.totalorder %s22, %s25
    %p34 = scmp.eq.s32.totalorder %s17, 1
    %p35 = por %p33, %p34
    %p36 = scmp.ne.s32.totalorder %s25, %s26
    %p37 = scmp.eq.s32.totalorder %s17, 0
    %p38 = por %p36, %p37
    %p39 = scmp.ne.s32.totalorder %s25, %s26
    %p40 = scmp.eq.s32.totalorder %s18, 1
    %p41 = por %p39, %p40
    %p43 = scmp.ne.s32.totalorder %s26, %s42
    %p44 = scmp.eq.s32.totalorder %s18, 0
    %p45 = por %p43, %p44
    %s47 = sadd.s32 %s46, 1
    %p50 = scmp.eq.s32.totalorder %s12, 1
    %p51 = scmp.ne.s32.totalorder %s46, %s48
    %p52 = scmp.eq.s32.totalorder %s12, 0
    %p53 = por %p51, %p52
    %p54 = scmp.ne.s32.totalorder %s46, %s48
    %p55 = scmp.eq.s32.totalorder %s17, 1
    %p56 = por %p54, %p55
    %p57 = scmp.ne.s32.totalorder %s48, %s49
    %p58 = scmp.eq.s32.totalorder %s17, 0
    %p59 = por %p57, %p58
    %p60 = scmp.ne.s32.totalorder %s48, %s49
    %p61 = scmp.eq.s32.totalorder %s18, 1
    %p62 = por %p60, %p61
    %p64 = scmp.ne.s32.totalorder %s49, %s63
    %p65 = scmp.eq.s32.totalorder %s18, 0
    %p66 = por %p64, %p65
    %s68 = sadd.s32 %s67, 1
    %p71 = scmp.eq.s32.totalorder %s12, 1
    %p72 = scmp.ne.s32.totalorder %s67, %s69
    %p73 = scmp.eq.s32.totalorder %s12, 0
    %p74 = por %p72, %p73
    %p75 = scmp.ne.s32.totalorder %s67, %s69
    %p76 = scmp.eq.s32.totalorder %s17, 1
    %p77 = por %p75, %p76
    %p78 = scmp.ne.s32.totalorder %s69, %s70
    %p79 = scmp.eq.s32.totalorder %s17, 0
    %p80 = por %p78, %p79
    %p81 = scmp.ne.s32.totalorder %s69, %s70
    %p82 = scmp.eq.s32.totalorder %s18, 1
    %p83 = por %p81, %p82
    %p85 = scmp.ne.s32.totalorder %s70, %s84
    %p86 = scmp.eq.s32.totalorder %s18, 0
    %p87 = por %p85, %p86
    %s89 = sadd.s32 %s88, 1
    %p92 = scmp.eq.s32.totalorder %s12, 1
    %p93 = scmp.ne.s32.totalorder %s88, %s90
    %p94 = scmp.eq.s32.totalorder %s12, 0
    %p95 = por %p93, %p94
    %p96 = scmp.ne.s32.totalorder %s88, %s90
    %p97 = scmp.eq.s32.totalorder %s17, 1
    %p98 = por %p96, %p97
    %p99 = scmp.ne.s32.totalorder %s90, %s91
    %p100 = scmp.eq.s32.totalorder %s17, 0
    %p101 = por %p99, %p100
    %p102 = scmp.ne.s32.totalorder %s90, %s91
    %p103 = scmp.eq.s32.totalorder %s18, 1
    %p104 = por %p102, %p103
    %p106 = scmp.ne.s32.totalorder %s91, %s105
    %p107 = scmp.eq.s32.totalorder %s18, 0
    %p108 = por %p106, %p107
    %s109 = ssub.s32 %s12, %s19
    %p110 = scmp.eq.s32.totalorder %s109, 0
    %s112 = sadd.s32 %s111, 1
    %s113 = scalar_select %p110, %s111, %s112
    %p116 = pneg %p110
    %p117 = scmp.eq.s32.totalorder %s12, 1
    %p118 = por %p116, %p117
    %p119 = scmp.ne.s32.totalorder %s111, %s114
    %p120 = scmp.eq.s32.totalorder %s12, 0
    %p121 = por %p119, %p120
    %p122 = scmp.ne.s32.totalorder %s111, %s114
    %p123 = scmp.eq.s32.totalorder %s17, 1
    %p124 = por %p122, %p123
    %p125 = scmp.ne.s32.totalorder %s114, %s115
    %p126 = scmp.eq.s32.totalorder %s17, 0
    %p127 = por %p125, %p126
    %p128 = scmp.ne.s32.totalorder %s114, %s115
    %p129 = scmp.eq.s32.totalorder %s18, 1
    %p130 = por %p128, %p129
    %p132 = scmp.ne.s32.totalorder %s115, %s131
    %p133 = scmp.eq.s32.totalorder %s18, 0
    %p134 = por %p132, %p133
    %s135 = ssub.s32 %s12, %s19
    %p136 = scmp.eq.s32.totalorder %s135, 0
    %s138 = sadd.s32 %s137, 1
    %s139 = scalar_select %p136, %s137, %s138
    %p142 = pneg %p136
    %p143 = scmp.eq.s32.totalorder %s12, 1
    %p144 = por %p142, %p143
    %p145 = scmp.ne.s32.totalorder %s137, %s140
    %p146 = scmp.eq.s32.totalorder %s12, 0
    %p147 = por %p145, %p146
    %p148 = scmp.ne.s32.totalorder %s137, %s140
    %p149 = scmp.eq.s32.totalorder %s17, 1
    %p150 = por %p148, %p149
    %p151 = scmp.ne.s32.totalorder %s140, %s141
    %p152 = scmp.eq.s32.totalorder %s17, 0
    %p153 = por %p151, %p152
    %p154 = scmp.ne.s32.totalorder %s140, %s141
    %p155 = scmp.eq.s32.totalorder %s18, 1
    %p156 = por %p154, %p155
    %p158 = scmp.ne.s32.totalorder %s141, %s157
    %p159 = scmp.eq.s32.totalorder %s18, 0
    %p160 = por %p158, %p159
    %p161 = scmp.le.s32.totalorder 1, %s12
    %p162 = scmp.lt.s32.totalorder %s12, 3
    %p163 = pnand %p161, %p162
    %p164 = pneg %p163
    // Predicated region
    $region9: #{basic_block_forward.4} parent=5 // pred_check
      _
    $region10: #{basic_block_forward.4} parent=5 // pred_check_branch
      %166 = sbr.rel (%p163) target = $region12
    $region11: #{basic_block_forward.4} parent=5 // pred_region
      %s167 = ssub.s32 %s12, 1
      // Predicated region
      $region13: #{basic_block_forward.4} parent=11 // pred_check
        %p168 = pneg %p59
      $region14: #{basic_block_forward.4} parent=11 // pred_check_branch
        %170 = sbr.rel (%p168) target = $region16
      $region15: #{basic_block_forward.4} parent=11 // pred_region
        _
      $region16: #{basic_block_forward.4} parent=11 // pred_fallthru
        _
      // Predicated region
      $region17: #{basic_block_forward.4} parent=11 // pred_check
        %p171 = pneg %p80
      $region18: #{basic_block_forward.4} parent=11 // pred_check_branch
        %173 = sbr.rel (%p171) target = $region20
      $region19: #{basic_block_forward.4} parent=11 // pred_region
        _
      $region20: #{basic_block_forward.4} parent=11 // pred_fallthru
        _
      // Predicated region
      $region21: #{basic_block_forward.4} parent=11 // pred_check
        %p174 = pneg %p101
      $region22: #{basic_block_forward.4} parent=11 // pred_check_branch
        %176 = sbr.rel (%p174) target = $region24
      $region23: #{basic_block_forward.4} parent=11 // pred_region
        _
      $region24: #{basic_block_forward.4} parent=11 // pred_fallthru
        _
    $region12: #{basic_block_forward.4} parent=5 // pred_fallthru
      _
    %p177 = scmp.lt.s32.totalorder %s12, 2
    // Predicated region
    $region25: #{basic_block_forward.4} parent=5 // pred_check
      %p178 = pneg %p177
    $region26: #{basic_block_forward.4} parent=5 // pred_check_branch
      %180 = sbr.rel (%p178) target = $region28
    $region27: #{basic_block_forward.4} parent=5 // pred_region
      // Predicated region
      $region29: #{basic_block_forward.4} parent=27 // pred_check
        %p181 = pneg %p32
      $region30: #{basic_block_forward.4} parent=27 // pred_check_branch
        %183 = sbr.rel (%p181) target = $region32
      $region31: #{basic_block_forward.4} parent=27 // pred_region
        %p184 = scmp.lt.s32.totalorder %s12, 1
        %s185 = scalar_select %p184, %s12, 1
        %s186 = smul.addr %s185, 32
        %s187 = smul.addr %s186, 8
        %s188 = scalar_lea.vmem %s0, %s187
      $region32: #{basic_block_forward.4} parent=27 // pred_fallthru
        _
    $region28: #{basic_block_forward.4} parent=5 // pred_fallthru
      _
    %p189 = scmp.le.s32.totalorder 1, %s12
    %p190 = scmp.lt.s32.totalorder %s12, 3
    %p191 = pnand %p189, %p190
    %p192 = pneg %p191
    // Predicated region
    $region33: #{basic_block_forward.4} parent=5 // pred_check
      _
    $region34: #{basic_block_forward.4} parent=5 // pred_check_branch
      %194 = sbr.rel (%p191) target = $region36
    $region35: #{basic_block_forward.4} parent=5 // pred_region
      %s195 = ssub.s32 %s12, 1
      %p196 = scmp.lt.s32.totalorder %s17, 1
      %s197 = scalar_select %p196, %s17, 1
      %s198 = smul.addr %s197, 32
      %s199 = smul.addr %s198, 8
      %s200 = scalar_lea.vmem %s0, %s199
      %p201 = pneg %p38
      %p202 = pneg %p35
      %p203 = pneg %p59
      %p204 = pneg %p56
      %p205 = pneg %p80
      %p206 = pneg %p77
      %p207 = pneg %p101
      %p208 = pneg %p98
      %p209 = pneg %p127
      %p210 = pneg %p124
      %p211 = scmp.lt.s32.totalorder %s17, 1
      %s212 = scalar_select %p211, %s17, 1
      %s213 = smul.addr %s212, 32
      %s214 = smul.addr %s213, 8
      %s215 = scalar_lea.vmem %s4, %s214
      %p216 = pneg %p153
      %p217 = pneg %p150
      %p218 = scmp.lt.s32.totalorder %s17, 1
      %s219 = scalar_select %p218, %s17, 1
      %s220 = smul.addr %s219, 2
      %s221 = scalar_lea.vmem %s5, %s220
      %p222 = scmp.lt.s32.totalorder %s17, 1
      %s223 = scalar_select %p222, %s17, 1
      %s224 = smul.addr %s223, 32
      %s225 = smul.addr %s224, 8
      %s226 = scalar_lea.vmem %s0, %s225
      %p227 = scmp.lt.s32.totalorder %s17, 1
      %s228 = scalar_select %p227, %s17, 1
      %s229 = smul.addr %s228, 32
      %s230 = smul.addr %s229, 8
      %s231 = scalar_lea.vmem %s4, %s230
      %p232 = scmp.lt.s32.totalorder %s17, 1
      %s233 = scalar_select %p232, %s17, 1
      %s234 = smul.addr %s233, 2
      %s235 = scalar_lea.vmem %s5, %s234
      %v237 = vld [vmem:[%s1] sm:$0x1]
      %v238 = vld [vmem:[%s2] sm:$0x1]
      %v239 = vld [vmem:[%s226] sm:$0xff]
      %v240 = vld [vmem:[%s226 + $0x8] sm:$0xff]
      %v241 = vld [vmem:[%s226 + $0x10] sm:$0xff]
      %v242 = vld [vmem:[%s226 + $0x18] sm:$0xff]
      %v243 = vld [vmem:[%s226 + $0x20] sm:$0xff]
      %v244 = vld [vmem:[%s226 + $0x28] sm:$0xff]
      %v245 = vld [vmem:[%s226 + $0x30] sm:$0xff]
      %v246 = vld [vmem:[%s226 + $0x38] sm:$0xff]
      %v247 = vld [vmem:[%s226 + $0x40] sm:$0xff]
      %v248 = vld [vmem:[%s226 + $0x48] sm:$0xff]
      %v249 = vld [vmem:[%s226 + $0x50] sm:$0xff]
      %v250 = vld [vmem:[%s226 + $0x58] sm:$0xff]
      %v251 = vld [vmem:[%s226 + $0x60] sm:$0xff]
      %v252 = vld [vmem:[%s226 + $0x68] sm:$0xff]
      %v253 = vld [vmem:[%s226 + $0x70] sm:$0xff]
      %v254 = vld [vmem:[%s226 + $0x78] sm:$0xff]
      %v255 = vld [vmem:[%s226 + $0x80] sm:$0xff]
      %v256 = vld [vmem:[%s226 + $0x88] sm:$0xff]
      %v257 = vld [vmem:[%s226 + $0x90] sm:$0xff]
      %v258 = vld [vmem:[%s226 + $0x98] sm:$0xff]
      %v259 = vld [vmem:[%s226 + $0xa0] sm:$0xff]
      %v260 = vld [vmem:[%s226 + $0xa8] sm:$0xff]
      %v261 = vld [vmem:[%s226 + $0xb0] sm:$0xff]
      %v262 = vld [vmem:[%s226 + $0xb8] sm:$0xff]
      %v263 = vld [vmem:[%s226 + $0xc0] sm:$0xff]
      %v264 = vld [vmem:[%s226 + $0xc8] sm:$0xff]
      %v265 = vld [vmem:[%s226 + $0xd0] sm:$0xff]
      %v266 = vld [vmem:[%s226 + $0xd8] sm:$0xff]
      %v267 = vld [vmem:[%s226 + $0xe0] sm:$0xff]
      %v268 = vld [vmem:[%s226 + $0xe8] sm:$0xff]
      %v269 = vld [vmem:[%s226 + $0xf0] sm:$0xff]
      %v270 = vld [vmem:[%s226 + $0xf8] sm:$0xff]
      %v272 = vlaneseq
      %v273 = vshrl.u32 %v272, 7
      %v274 = vsub.s32 0, %v273
      %v275 = vrot.slane %v237, %v274
      %v277 = vmul.f32 %v239, %v275
      %v278 = vmul.f32 %v240, %v275
      %v279 = vmul.f32 %v241, %v275
      %v280 = vmul.f32 %v242, %v275
      %v281 = vmul.f32 %v243, %v275
      %v282 = vmul.f32 %v244, %v275
      %v283 = vmul.f32 %v245, %v275
      %v284 = vmul.f32 %v246, %v275
      %v285 = vmul.f32 %v247, %v275
      %v286 = vmul.f32 %v248, %v275
      %v287 = vmul.f32 %v249, %v275
      %v288 = vmul.f32 %v250, %v275
      %v289 = vmul.f32 %v251, %v275
      %v290 = vmul.f32 %v252, %v275
      %v291 = vmul.f32 %v253, %v275
      %v292 = vmul.f32 %v254, %v275
      %v293 = vmul.f32 %v255, %v275
      %v294 = vmul.f32 %v256, %v275
      %v295 = vmul.f32 %v257, %v275
      %v296 = vmul.f32 %v258, %v275
      %v297 = vmul.f32 %v259, %v275
      %v298 = vmul.f32 %v260, %v275
      %v299 = vmul.f32 %v261, %v275
      %v300 = vmul.f32 %v262, %v275
      %v301 = vmul.f32 %v263, %v275
      %v302 = vmul.f32 %v264, %v275
      %v303 = vmul.f32 %v265, %v275
      %v304 = vmul.f32 %v266, %v275
      %v305 = vmul.f32 %v267, %v275
      %v306 = vmul.f32 %v268, %v275
      %v307 = vmul.f32 %v269, %v275
      %v308 = vmul.f32 %v270, %v275
      %v310 = vlaneseq
      %v311 = vshrl.u32 %v310, 7
      %v312 = vsub.s32 0, %v311
      %v313 = vrot.slane %v238, %v312
      %v315 = vadd.f32 %v277, %v313
      %v316 = vadd.f32 %v278, %v313
      %v317 = vadd.f32 %v279, %v313
      %v318 = vadd.f32 %v280, %v313
      %v319 = vadd.f32 %v281, %v313
      %v320 = vadd.f32 %v282, %v313
      %v321 = vadd.f32 %v283, %v313
      %v322 = vadd.f32 %v284, %v313
      %v323 = vadd.f32 %v285, %v313
      %v324 = vadd.f32 %v286, %v313
      %v325 = vadd.f32 %v287, %v313
      %v326 = vadd.f32 %v288, %v313
      %v327 = vadd.f32 %v289, %v313
      %v328 = vadd.f32 %v290, %v313
      %v329 = vadd.f32 %v291, %v313
      %v330 = vadd.f32 %v292, %v313
      %v331 = vadd.f32 %v293, %v313
      %v332 = vadd.f32 %v294, %v313
      %v333 = vadd.f32 %v295, %v313
      %v334 = vadd.f32 %v296, %v313
      %v335 = vadd.f32 %v297, %v313
      %v336 = vadd.f32 %v298, %v313
      %v337 = vadd.f32 %v299, %v313
      %v338 = vadd.f32 %v300, %v313
      %v339 = vadd.f32 %v301, %v313
      %v340 = vadd.f32 %v302, %v313
      %v341 = vadd.f32 %v303, %v313
      %v342 = vadd.f32 %v304, %v313
      %v343 = vadd.f32 %v305, %v313
      %v344 = vadd.f32 %v306, %v313
      %v345 = vadd.f32 %v307, %v313
      %v346 = vadd.f32 %v308, %v313
      %v347 = vmax.f32 %v315, 0.0
      %v348 = vmax.f32 %v316, 0.0
      %v349 = vmax.f32 %v317, 0.0
      %v350 = vmax.f32 %v318, 0.0
      %v351 = vmax.f32 %v319, 0.0
      %v352 = vmax.f32 %v320, 0.0
      %v353 = vmax.f32 %v321, 0.0
      %v354 = vmax.f32 %v322, 0.0
      %v355 = vmax.f32 %v323, 0.0
      %v356 = vmax.f32 %v324, 0.0
      %v357 = vmax.f32 %v325, 0.0
      %v358 = vmax.f32 %v326, 0.0
      %v359 = vmax.f32 %v327, 0.0
      %v360 = vmax.f32 %v328, 0.0
      %v361 = vmax.f32 %v329, 0.0
      %v362 = vmax.f32 %v330, 0.0
      %v363 = vmax.f32 %v331, 0.0
      %v364 = vmax.f32 %v332, 0.0
      %v365 = vmax.f32 %v333, 0.0
      %v366 = vmax.f32 %v334, 0.0
      %v367 = vmax.f32 %v335, 0.0
      %v368 = vmax.f32 %v336, 0.0
      %v369 = vmax.f32 %v337, 0.0
      %v370 = vmax.f32 %v338, 0.0
      %v371 = vmax.f32 %v339, 0.0
      %v372 = vmax.f32 %v340, 0.0
      %v373 = vmax.f32 %v341, 0.0
      %v374 = vmax.f32 %v342, 0.0
      %v375 = vmax.f32 %v343, 0.0
      %v376 = vmax.f32 %v344, 0.0
      %v377 = vmax.f32 %v345, 0.0
      %v378 = vmax.f32 %v346, 0.0
      %v379 = vpack.c.bf16 %v348, %v347
      %v380 = vpack.c.bf16 %v350, %v349
      %v381 = vpack.c.bf16 %v352, %v351
      %v382 = vpack.c.bf16 %v354, %v353
      %v383 = vpack.c.bf16 %v356, %v355
      %v384 = vpack.c.bf16 %v358, %v357
      %v385 = vpack.c.bf16 %v360, %v359
      %v386 = vpack.c.bf16 %v362, %v361
      %v387 = vpack.c.bf16 %v364, %v363
      %v388 = vpack.c.bf16 %v366, %v365
      %v389 = vpack.c.bf16 %v368, %v367
      %v390 = vpack.c.bf16 %v370, %v369
      %v391 = vpack.c.bf16 %v372, %v371
      %v392 = vpack.c.bf16 %v374, %v373
      %v393 = vpack.c.bf16 %v376, %v375
      %v394 = vpack.c.bf16 %v378, %v377
      %395 = vst [vmem:[#allocation2] sm:$0xff] 0
      %396 = vst [vmem:[#allocation2 + $0x8] sm:$0xff] 0
      %s397 = scalar_lea.vmem [#allocation2], 272
      %398 = vst [vmem:[%s397] sm:$0xff] 0
      %399 = vst [vmem:[%s397 + $0x8] sm:$0xff] 0
      %400 = vst [vmem:[#allocation2] sm:$0xf] 0
      %401 = vst [vmem:[#allocation2 + $0x10] sm:$0xf] 0
      %402 = vst [vmem:[#allocation2 + $0x20] sm:$0xf] 0
      %403 = vst [vmem:[#allocation2 + $0x30] sm:$0xf] 0
      %404 = vst [vmem:[#allocation2 + $0x40] sm:$0xf] 0
      %405 = vst [vmem:[#allocation2 + $0x50] sm:$0xf] 0
      %406 = vst [vmem:[#allocation2 + $0x60] sm:$0xf] 0
      %407 = vst [vmem:[#allocation2 + $0x70] sm:$0xf] 0
      %408 = vst [vmem:[#allocation2 + $0x80] sm:$0xf] 0
      %409 = vst [vmem:[#allocation2 + $0x90] sm:$0xf] 0
      %410 = vst [vmem:[#allocation2 + $0xa0] sm:$0xf] 0
      %411 = vst [vmem:[#allocation2 + $0xb0] sm:$0xf] 0
      %412 = vst [vmem:[#allocation2 + $0xc0] sm:$0xf] 0
      %413 = vst [vmem:[#allocation2 + $0xd0] sm:$0xf] 0
      %414 = vst [vmem:[#allocation2 + $0xe0] sm:$0xf] 0
      %415 = vst [vmem:[#allocation2 + $0xf0] sm:$0xf] 0
      %416 = vst [vmem:[#allocation2 + $0x100] sm:$0xf] 0
      %417 = vst [vmem:[#allocation2 + $0x110] sm:$0xf] 0
      %418 = vst [vmem:[#allocation2 + $0x8] sm:$0xf0] 0
      %419 = vst [vmem:[#allocation2 + $0x18] sm:$0xf0] 0
      %420 = vst [vmem:[#allocation2 + $0x28] sm:$0xf0] 0
      %421 = vst [vmem:[#allocation2 + $0x38] sm:$0xf0] 0
      %422 = vst [vmem:[#allocation2 + $0x48] sm:$0xf0] 0
      %423 = vst [vmem:[#allocation2 + $0x58] sm:$0xf0] 0
      %424 = vst [vmem:[#allocation2 + $0x68] sm:$0xf0] 0
      %425 = vst [vmem:[#allocation2 + $0x78] sm:$0xf0] 0
      %426 = vst [vmem:[#allocation2 + $0x88] sm:$0xf0] 0
      %427 = vst [vmem:[#allocation2 + $0x98] sm:$0xf0] 0
      %428 = vst [vmem:[#allocation2 + $0xa8] sm:$0xf0] 0
      %429 = vst [vmem:[#allocation2 + $0xb8] sm:$0xf0] 0
      %430 = vst [vmem:[#allocation2 + $0xc8] sm:$0xf0] 0
      %431 = vst [vmem:[#allocation2 + $0xd8] sm:$0xf0] 0
      %432 = vst [vmem:[#allocation2 + $0xe8] sm:$0xf0] 0
      %433 = vst [vmem:[#allocation2 + $0xf8] sm:$0xf0] 0
      %434 = vst [vmem:[#allocation2 + $0x108] sm:$0xf0] 0
      %435 = vst [vmem:[#allocation2 + $0x118] sm:$0xf0] 0
      %v452 = vrot.slane %v379, 4
      %v453 = vrot.slane %v380, 4
      %v454 = vrot.slane %v381, 4
      %v455 = vrot.slane %v382, 4
      %v456 = vrot.slane %v383, 4
      %v457 = vrot.slane %v384, 4
      %v458 = vrot.slane %v385, 4
      %v459 = vrot.slane %v386, 4
      %v460 = vrot.slane %v387, 4
      %v461 = vrot.slane %v388, 4
      %v462 = vrot.slane %v389, 4
      %v463 = vrot.slane %v390, 4
      %v464 = vrot.slane %v391, 4
      %v465 = vrot.slane %v392, 4
      %v466 = vrot.slane %v393, 4
      %v467 = vrot.slane %v394, 4
      %s484 = scalar_lea.vmem [#allocation2], 16
      %485 = vst [vmem:[%s484] sm:$0xf0] %v452
      %486 = vst [vmem:[%s484 + $0x8] sm:$0xf] %v452
      %487 = vst [vmem:[%s484 + $0x10] sm:$0xf0] %v453
      %488 = vst [vmem:[%s484 + $0x18] sm:$0xf] %v453
      %489 = vst [vmem:[%s484 + $0x20] sm:$0xf0] %v454
      %490 = vst [vmem:[%s484 + $0x28] sm:$0xf] %v454
      %491 = vst [vmem:[%s484 + $0x30] sm:$0xf0] %v455
      %492 = vst [vmem:[%s484 + $0x38] sm:$0xf] %v455
      %493 = vst [vmem:[%s484 + $0x40] sm:$0xf0] %v456
      %494 = vst [vmem:[%s484 + $0x48] sm:$0xf] %v456
      %495 = vst [vmem:[%s484 + $0x50] sm:$0xf0] %v457
      %496 = vst [vmem:[%s484 + $0x58] sm:$0xf] %v457
      %497 = vst [vmem:[%s484 + $0x60] sm:$0xf0] %v458
      %498 = vst [vmem:[%s484 + $0x68] sm:$0xf] %v458
      %499 = vst [vmem:[%s484 + $0x70] sm:$0xf0] %v459
      %500 = vst [vmem:[%s484 + $0x78] sm:$0xf] %v459
      %501 = vst [vmem:[%s484 + $0x80] sm:$0xf0] %v460
      %502 = vst [vmem:[%s484 + $0x88] sm:$0xf] %v460
      %503 = vst [vmem:[%s484 + $0x90] sm:$0xf0] %v461
      %504 = vst [vmem:[%s484 + $0x98] sm:$0xf] %v461
      %505 = vst [vmem:[%s484 + $0xa0] sm:$0xf0] %v462
      %506 = vst [vmem:[%s484 + $0xa8] sm:$0xf] %v462
      %507 = vst [vmem:[%s484 + $0xb0] sm:$0xf0] %v463
      %508 = vst [vmem:[%s484 + $0xb8] sm:$0xf] %v463
      %509 = vst [vmem:[%s484 + $0xc0] sm:$0xf0] %v464
      %510 = vst [vmem:[%s484 + $0xc8] sm:$0xf] %v464
      %511 = vst [vmem:[%s484 + $0xd0] sm:$0xf0] %v465
      %512 = vst [vmem:[%s484 + $0xd8] sm:$0xf] %v465
      %513 = vst [vmem:[%s484 + $0xe0] sm:$0xf0] %v466
      %514 = vst [vmem:[%s484 + $0xe8] sm:$0xf] %v466
      %515 = vst [vmem:[%s484 + $0xf0] sm:$0xf0] %v467
      %516 = vst [vmem:[%s484 + $0xf8] sm:$0xf] %v467
      %v517 = vld [vmem:[#allocation2] sm:$0xf8]
      %v518 = vld [vmem:[#allocation2 + $0x8] sm:$0xf]
      %v519 = vld [vmem:[#allocation2 + $0x10] sm:$0xf8]
      %v520 = vld [vmem:[#allocation2 + $0x18] sm:$0xf]
      %v521 = vld [vmem:[#allocation2 + $0x20] sm:$0xf8]
      %v522 = vld [vmem:[#allocation2 + $0x28] sm:$0xf]
      %v523 = vld [vmem:[#allocation2 + $0x30] sm:$0xf8]
      %v524 = vld [vmem:[#allocation2 + $0x38] sm:$0xf]
      %v525 = vld [vmem:[#allocation2 + $0x40] sm:$0xf8]
      %v526 = vld [vmem:[#allocation2 + $0x48] sm:$0xf]
      %v527 = vld [vmem:[#allocation2 + $0x50] sm:$0xf8]
      %v528 = vld [vmem:[#allocation2 + $0x58] sm:$0xf]
      %v529 = vld [vmem:[#allocation2 + $0x60] sm:$0xf8]
      %v530 = vld [vmem:[#allocation2 + $0x68] sm:$0xf]
      %v531 = vld [vmem:[#allocation2 + $0x70] sm:$0xf8]
      %v532 = vld [vmem:[#allocation2 + $0x78] sm:$0xf]
      %v533 = vld [vmem:[#allocation2 + $0x80] sm:$0xf8]
      %v534 = vld [vmem:[#allocation2 + $0x88] sm:$0xf]
      %v535 = vld [vmem:[#allocation2 + $0x90] sm:$0xf8]
      %v536 = vld [vmem:[#allocation2 + $0x98] sm:$0xf]
      %v537 = vld [vmem:[#allocation2 + $0xa0] sm:$0xf8]
      %v538 = vld [vmem:[#allocation2 + $0xa8] sm:$0xf]
      %v539 = vld [vmem:[#allocation2 + $0xb0] sm:$0xf8]
      %v540 = vld [vmem:[#allocation2 + $0xb8] sm:$0xf]
      %v541 = vld [vmem:[#allocation2 + $0xc0] sm:$0xf8]
      %v542 = vld [vmem:[#allocation2 + $0xc8] sm:$0xf]
      %v543 = vld [vmem:[#allocation2 + $0xd0] sm:$0xf8]
      %v544 = vld [vmem:[#allocation2 + $0xd8] sm:$0xf]
      %v545 = vld [vmem:[#allocation2 + $0xe0] sm:$0xf8]
      %v546 = vld [vmem:[#allocation2 + $0xe8] sm:$0xf]
      %v547 = vld [vmem:[#allocation2 + $0xf0] sm:$0xf8]
      %v548 = vld [vmem:[#allocation2 + $0xf8] sm:$0xf]
      %v549 = vld [vmem:[#allocation2] sm:$0xf0]
      %v550 = vld [vmem:[#allocation2 + $0x10] sm:$0xf0]
      %v551 = vld [vmem:[#allocation2 + $0x20] sm:$0xf0]
      %v552 = vld [vmem:[#allocation2 + $0x30] sm:$0xf0]
      %v553 = vld [vmem:[#allocation2 + $0x40] sm:$0xf0]
      %v554 = vld [vmem:[#allocation2 + $0x50] sm:$0xf0]
      %v555 = vld [vmem:[#allocation2 + $0x60] sm:$0xf0]
      %v556 = vld [vmem:[#allocation2 + $0x70] sm:$0xf0]
      %v557 = vld [vmem:[#allocation2 + $0x80] sm:$0xf0]
      %v558 = vld [vmem:[#allocation2 + $0x90] sm:$0xf0]
      %v559 = vld [vmem:[#allocation2 + $0xa0] sm:$0xf0]
      %v560 = vld [vmem:[#allocation2 + $0xb0] sm:$0xf0]
      %v561 = vld [vmem:[#allocation2 + $0xc0] sm:$0xf0]
      %v562 = vld [vmem:[#allocation2 + $0xd0] sm:$0xf0]
      %v563 = vld [vmem:[#allocation2 + $0xe0] sm:$0xf0]
      %v564 = vld [vmem:[#allocation2 + $0xf0] sm:$0xf0]
      %v565 = vld [vmem:[#allocation2 + $0x8] sm:$0x1f]
      %v566 = vld [vmem:[#allocation2 + $0x18] sm:$0x1f]
      %v567 = vld [vmem:[#allocation2 + $0x28] sm:$0x1f]
      %v568 = vld [vmem:[#allocation2 + $0x38] sm:$0x1f]
      %v569 = vld [vmem:[#allocation2 + $0x48] sm:$0x1f]
      %v570 = vld [vmem:[#allocation2 + $0x58] sm:$0x1f]
      %v571 = vld [vmem:[#allocation2 + $0x68] sm:$0x1f]
      %v572 = vld [vmem:[#allocation2 + $0x78] sm:$0x1f]
      %v573 = vld [vmem:[#allocation2 + $0x88] sm:$0x1f]
      %v574 = vld [vmem:[#allocation2 + $0x98] sm:$0x1f]
      %v575 = vld [vmem:[#allocation2 + $0xa8] sm:$0x1f]
      %v576 = vld [vmem:[#allocation2 + $0xb8] sm:$0x1f]
      %v577 = vld [vmem:[#allocation2 + $0xc8] sm:$0x1f]
      %v578 = vld [vmem:[#allocation2 + $0xd8] sm:$0x1f]
      %v579 = vld [vmem:[#allocation2 + $0xe8] sm:$0x1f]
      %v580 = vld [vmem:[#allocation2 + $0xf8] sm:$0x1f]
      %vm581 = vsmask.f32 7424
      %v583 = vshrl.u32 %v549, 16
      %v585 = vshll.u32 %v549, 16
      %v587 = vrot.slane %v585, 1
      %v588 = vor.u32 %v583, %v587
      %v590 = vshll.u32 %v518, 16
      %v592 = vrot.slane %v590, 1
      %v593 = vsel %vm581, %v588, %v592
      %v594 = vshrl.u32 %v518, 16
      %v596 = vor.u32 %v594, %v592
      %v598 = vshrl.u32 %v550, 16
      %v600 = vshll.u32 %v550, 16
      %v602 = vrot.slane %v600, 1
      %v603 = vor.u32 %v598, %v602
      %v605 = vshll.u32 %v520, 16
      %v607 = vrot.slane %v605, 1
      %v608 = vsel %vm581, %v603, %v607
      %v609 = vshrl.u32 %v520, 16
      %v611 = vor.u32 %v609, %v607
      %v613 = vshrl.u32 %v551, 16
      %v615 = vshll.u32 %v551, 16
      %v617 = vrot.slane %v615, 1
      %v618 = vor.u32 %v613, %v617
      %v620 = vshll.u32 %v522, 16
      %v622 = vrot.slane %v620, 1
      %v623 = vsel %vm581, %v618, %v622
      %v624 = vshrl.u32 %v522, 16
      %v626 = vor.u32 %v624, %v622
      %v628 = vshrl.u32 %v552, 16
      %v630 = vshll.u32 %v552, 16
      %v632 = vrot.slane %v630, 1
      %v633 = vor.u32 %v628, %v632
      %v635 = vshll.u32 %v524, 16
      %v637 = vrot.slane %v635, 1
      %v638 = vsel %vm581, %v633, %v637
      %v639 = vshrl.u32 %v524, 16
      %v641 = vor.u32 %v639, %v637
      %v643 = vshrl.u32 %v553, 16
      %v645 = vshll.u32 %v553, 16
      %v647 = vrot.slane %v645, 1
      %v648 = vor.u32 %v643, %v647
      %v650 = vshll.u32 %v526, 16
      %v652 = vrot.slane %v650, 1
      %v653 = vsel %vm581, %v648, %v652
      %v654 = vshrl.u32 %v526, 16
      %v656 = vor.u32 %v654, %v652
      %v658 = vshrl.u32 %v554, 16
      %v660 = vshll.u32 %v554, 16
      %v662 = vrot.slane %v660, 1
      %v663 = vor.u32 %v658, %v662
      %v665 = vshll.u32 %v528, 16
      %v667 = vrot.slane %v665, 1
      %v668 = vsel %vm581, %v663, %v667
      %v669 = vshrl.u32 %v528, 16
      %v671 = vor.u32 %v669, %v667
      %v673 = vshrl.u32 %v555, 16
      %v675 = vshll.u32 %v555, 16
      %v677 = vrot.slane %v675, 1
      %v678 = vor.u32 %v673, %v677
      %v680 = vshll.u32 %v530, 16
      %v682 = vrot.slane %v680, 1
      %v683 = vsel %vm581, %v678, %v682
      %v684 = vshrl.u32 %v530, 16
      %v686 = vor.u32 %v684, %v682
      %v688 = vshrl.u32 %v556, 16
      %v690 = vshll.u32 %v556, 16
      %v692 = vrot.slane %v690, 1
      %v693 = vor.u32 %v688, %v692
      %v695 = vshll.u32 %v532, 16
      %v697 = vrot.slane %v695, 1
      %v698 = vsel %vm581, %v693, %v697
      %v699 = vshrl.u32 %v532, 16
      %v701 = vor.u32 %v699, %v697
      %v703 = vshrl.u32 %v557, 16
      %v705 = vshll.u32 %v557, 16
      %v707 = vrot.slane %v705, 1
      %v708 = vor.u32 %v703, %v707
      %v710 = vshll.u32 %v534, 16
      %v712 = vrot.slane %v710, 1
      %v713 = vsel %vm581, %v708, %v712
      %v714 = vshrl.u32 %v534, 16
      %v716 = vor.u32 %v714, %v712
      %v718 = vshrl.u32 %v558, 16
      %v720 = vshll.u32 %v558, 16
      %v722 = vrot.slane %v720, 1
      %v723 = vor.u32 %v718, %v722
      %v725 = vshll.u32 %v536, 16
      %v727 = vrot.slane %v725, 1
      %v728 = vsel %vm581, %v723, %v727
      %v729 = vshrl.u32 %v536, 16
      %v731 = vor.u32 %v729, %v727
      %v733 = vshrl.u32 %v559, 16
      %v735 = vshll.u32 %v559, 16
      %v737 = vrot.slane %v735, 1
      %v738 = vor.u32 %v733, %v737
      %v740 = vshll.u32 %v538, 16
      %v742 = vrot.slane %v740, 1
      %v743 = vsel %vm581, %v738, %v742
      %v744 = vshrl.u32 %v538, 16
      %v746 = vor.u32 %v744, %v742
      %v748 = vshrl.u32 %v560, 16
      %v750 = vshll.u32 %v560, 16
      %v752 = vrot.slane %v750, 1
      %v753 = vor.u32 %v748, %v752
      %v755 = vshll.u32 %v540, 16
      %v757 = vrot.slane %v755, 1
      %v758 = vsel %vm581, %v753, %v757
      %v759 = vshrl.u32 %v540, 16
      %v761 = vor.u32 %v759, %v757
      %v763 = vshrl.u32 %v561, 16
      %v765 = vshll.u32 %v561, 16
      %v767 = vrot.slane %v765, 1
      %v768 = vor.u32 %v763, %v767
      %v770 = vshll.u32 %v542, 16
      %v772 = vrot.slane %v770, 1
      %v773 = vsel %vm581, %v768, %v772
      %v774 = vshrl.u32 %v542, 16
      %v776 = vor.u32 %v774, %v772
      %v778 = vshrl.u32 %v562, 16
      %v780 = vshll.u32 %v562, 16
      %v782 = vrot.slane %v780, 1
      %v783 = vor.u32 %v778, %v782
      %v785 = vshll.u32 %v544, 16
      %v787 = vrot.slane %v785, 1
      %v788 = vsel %vm581, %v783, %v787
      %v789 = vshrl.u32 %v544, 16
      %v791 = vor.u32 %v789, %v787
      %v793 = vshrl.u32 %v563, 16
      %v795 = vshll.u32 %v563, 16
      %v797 = vrot.slane %v795, 1
      %v798 = vor.u32 %v793, %v797
      %v800 = vshll.u32 %v546, 16
      %v802 = vrot.slane %v800, 1
      %v803 = vsel %vm581, %v798, %v802
      %v804 = vshrl.u32 %v546, 16
      %v806 = vor.u32 %v804, %v802
      %v808 = vshrl.u32 %v564, 16
      %v810 = vshll.u32 %v564, 16
      %v812 = vrot.slane %v810, 1
      %v813 = vor.u32 %v808, %v812
      %v815 = vshll.u32 %v548, 16
      %v817 = vrot.slane %v815, 1
      %v818 = vsel %vm581, %v813, %v817
      %v819 = vshrl.u32 %v548, 16
      %v821 = vor.u32 %v819, %v817
      %vm854 = vcmask 1046528
      %v855 = vrot.slane %v549, 1
      %v856 = vrot.slane %v565, 1
      %v857 = vsel %vm854, %v855, %v856
      %v858 = vrot.slane %v550, 1
      %v859 = vrot.slane %v566, 1
      %v860 = vsel %vm854, %v858, %v859
      %v861 = vrot.slane %v551, 1
      %v862 = vrot.slane %v567, 1
      %v863 = vsel %vm854, %v861, %v862
      %v864 = vrot.slane %v552, 1
      %v865 = vrot.slane %v568, 1
      %v866 = vsel %vm854, %v864, %v865
      %v867 = vrot.slane %v553, 1
      %v868 = vrot.slane %v569, 1
      %v869 = vsel %vm854, %v867, %v868
      %v870 = vrot.slane %v554, 1
      %v871 = vrot.slane %v570, 1
      %v872 = vsel %vm854, %v870, %v871
      %v873 = vrot.slane %v555, 1
      %v874 = vrot.slane %v571, 1
      %v875 = vsel %vm854, %v873, %v874
      %v876 = vrot.slane %v556, 1
      %v877 = vrot.slane %v572, 1
      %v878 = vsel %vm854, %v876, %v877
      %v879 = vrot.slane %v557, 1
      %v880 = vrot.slane %v573, 1
      %v881 = vsel %vm854, %v879, %v880
      %v882 = vrot.slane %v558, 1
      %v883 = vrot.slane %v574, 1
      %v884 = vsel %vm854, %v882, %v883
      %v885 = vrot.slane %v559, 1
      %v886 = vrot.slane %v575, 1
      %v887 = vsel %vm854, %v885, %v886
      %v888 = vrot.slane %v560, 1
      %v889 = vrot.slane %v576, 1
      %v890 = vsel %vm854, %v888, %v889
      %v891 = vrot.slane %v561, 1
      %v892 = vrot.slane %v577, 1
      %v893 = vsel %vm854, %v891, %v892
      %v894 = vrot.slane %v562, 1
      %v895 = vrot.slane %v578, 1
      %v896 = vsel %vm854, %v894, %v895
      %v897 = vrot.slane %v563, 1
      %v898 = vrot.slane %v579, 1
      %v899 = vsel %vm854, %v897, %v898
      %v900 = vrot.slane %v564, 1
      %v901 = vrot.slane %v580, 1
      %v902 = vsel %vm854, %v900, %v901
      %vm903 = vsmask.f32 4352
      %v905 = vshrl.u32 %v517, 16
      %v907 = vrot.slane %v905, 3
      %v908 = vshll.u32 %v517, 16
      %v910 = vrot.slane %v908, 4
      %v911 = vor.u32 %v907, %v910
      %v912 = vrot.slane %v594, 3
      %v913 = vrot.slane %v590, 4
      %v914 = vor.u32 %v912, %v913
      %v915 = vsel %vm903, %v911, %v914
      %v917 = vshrl.u32 %v593, 16
      %v919 = vrot.slane %v917, 3
      %v920 = vshll.u32 %v593, 16
      %v922 = vrot.slane %v920, 4
      %v923 = vor.u32 %v919, %v922
      %v925 = vshrl.u32 %v596, 16
      %v927 = vrot.slane %v925, 3
      %v928 = vshll.u32 %v596, 16
      %v930 = vrot.slane %v928, 4
      %v931 = vor.u32 %v927, %v930
      %v932 = vsel %vm903, %v923, %v931
      %v934 = vshrl.u32 %v857, 16
      %v936 = vrot.slane %v934, 3
      %v937 = vshll.u32 %v857, 16
      %v939 = vrot.slane %v937, 4
      %v940 = vor.u32 %v936, %v939
      %v942 = vshrl.u32 %v856, 16
      %v944 = vrot.slane %v942, 3
      %v945 = vshll.u32 %v856, 16
      %v947 = vrot.slane %v945, 4
      %v948 = vor.u32 %v944, %v947
      %v949 = vsel %vm903, %v940, %v948
      %v951 = vshrl.u32 %v519, 16
      %v953 = vrot.slane %v951, 3
      %v954 = vshll.u32 %v519, 16
      %v956 = vrot.slane %v954, 4
      %v957 = vor.u32 %v953, %v956
      %v958 = vrot.slane %v609, 3
      %v959 = vrot.slane %v605, 4
      %v960 = vor.u32 %v958, %v959
      %v961 = vsel %vm903, %v957, %v960
      %v963 = vshrl.u32 %v608, 16
      %v965 = vrot.slane %v963, 3
      %v966 = vshll.u32 %v608, 16
      %v968 = vrot.slane %v966, 4
      %v969 = vor.u32 %v965, %v968
      %v971 = vshrl.u32 %v611, 16
      %v973 = vrot.slane %v971, 3
      %v974 = vshll.u32 %v611, 16
      %v976 = vrot.slane %v974, 4
      %v977 = vor.u32 %v973, %v976
      %v978 = vsel %vm903, %v969, %v977
      %v980 = vshrl.u32 %v860, 16
      %v982 = vrot.slane %v980, 3
      %v983 = vshll.u32 %v860, 16
      %v985 = vrot.slane %v983, 4
      %v986 = vor.u32 %v982, %v985
      %v988 = vshrl.u32 %v859, 16
      %v990 = vrot.slane %v988, 3
      %v991 = vshll.u32 %v859, 16
      %v993 = vrot.slane %v991, 4
      %v994 = vor.u32 %v990, %v993
      %v995 = vsel %vm903, %v986, %v994
      %v997 = vshrl.u32 %v521, 16
      %v999 = vrot.slane %v997, 3
      %v1000 = vshll.u32 %v521, 16
      %v1002 = vrot.slane %v1000, 4
      %v1003 = vor.u32 %v999, %v1002
      %v1004 = vrot.slane %v624, 3
      %v1005 = vrot.slane %v620, 4
      %v1006 = vor.u32 %v1004, %v1005
      %v1007 = vsel %vm903, %v1003, %v1006
      %v1009 = vshrl.u32 %v623, 16
      %v1011 = vrot.slane %v1009, 3
      %v1012 = vshll.u32 %v623, 16
      %v1014 = vrot.slane %v1012, 4
      %v1015 = vor.u32 %v1011, %v1014
      %v1017 = vshrl.u32 %v626, 16
      %v1019 = vrot.slane %v1017, 3
      %v1020 = vshll.u32 %v626, 16
      %v1022 = vrot.slane %v1020, 4
      %v1023 = vor.u32 %v1019, %v1022
      %v1024 = vsel %vm903, %v1015, %v1023
      %v1026 = vshrl.u32 %v863, 16
      %v1028 = vrot.slane %v1026, 3
      %v1029 = vshll.u32 %v863, 16
      %v1031 = vrot.slane %v1029, 4
      %v1032 = vor.u32 %v1028, %v1031
      %v1034 = vshrl.u32 %v862, 16
      %v1036 = vrot.slane %v1034, 3
      %v1037 = vshll.u32 %v862, 16
      %v1039 = vrot.slane %v1037, 4
      %v1040 = vor.u32 %v1036, %v1039
      %v1041 = vsel %vm903, %v1032, %v1040
      %v1043 = vshrl.u32 %v523, 16
      %v1045 = vrot.slane %v1043, 3
      %v1046 = vshll.u32 %v523, 16
      %v1048 = vrot.slane %v1046, 4
      %v1049 = vor.u32 %v1045, %v1048
      %v1050 = vrot.slane %v639, 3
      %v1051 = vrot.slane %v635, 4
      %v1052 = vor.u32 %v1050, %v1051
      %v1053 = vsel %vm903, %v1049, %v1052
      %v1055 = vshrl.u32 %v638, 16
      %v1057 = vrot.slane %v1055, 3
      %v1058 = vshll.u32 %v638, 16
      %v1060 = vrot.slane %v1058, 4
      %v1061 = vor.u32 %v1057, %v1060
      %v1063 = vshrl.u32 %v641, 16
      %v1065 = vrot.slane %v1063, 3
      %v1066 = vshll.u32 %v641, 16
      %v1068 = vrot.slane %v1066, 4
      %v1069 = vor.u32 %v1065, %v1068
      %v1070 = vsel %vm903, %v1061, %v1069
      %v1072 = vshrl.u32 %v866, 16
      %v1074 = vrot.slane %v1072, 3
      %v1075 = vshll.u32 %v866, 16
      %v1077 = vrot.slane %v1075, 4
      %v1078 = vor.u32 %v1074, %v1077
      %v1080 = vshrl.u32 %v865, 16
      %v1082 = vrot.slane %v1080, 3
      %v1083 = vshll.u32 %v865, 16
      %v1085 = vrot.slane %v1083, 4
      %v1086 = vor.u32 %v1082, %v1085
      %v1087 = vsel %vm903, %v1078, %v1086
      %v1089 = vshrl.u32 %v525, 16
      %v1091 = vrot.slane %v1089, 3
      %v1092 = vshll.u32 %v525, 16
      %v1094 = vrot.slane %v1092, 4
      %v1095 = vor.u32 %v1091, %v1094
      %v1096 = vrot.slane %v654, 3
      %v1097 = vrot.slane %v650, 4
      %v1098 = vor.u32 %v1096, %v1097
      %v1099 = vsel %vm903, %v1095, %v1098
      %v1101 = vshrl.u32 %v653, 16
      %v1103 = vrot.slane %v1101, 3
      %v1104 = vshll.u32 %v653, 16
      %v1106 = vrot.slane %v1104, 4
      %v1107 = vor.u32 %v1103, %v1106
      %v1109 = vshrl.u32 %v656, 16
      %v1111 = vrot.slane %v1109, 3
      %v1112 = vshll.u32 %v656, 16
      %v1114 = vrot.slane %v1112, 4
      %v1115 = vor.u32 %v1111, %v1114
      %v1116 = vsel %vm903, %v1107, %v1115
      %v1118 = vshrl.u32 %v869, 16
      %v1120 = vrot.slane %v1118, 3
      %v1121 = vshll.u32 %v869, 16
      %v1123 = vrot.slane %v1121, 4
      %v1124 = vor.u32 %v1120, %v1123
      %v1126 = vshrl.u32 %v868, 16
      %v1128 = vrot.slane %v1126, 3
      %v1129 = vshll.u32 %v868, 16
      %v1131 = vrot.slane %v1129, 4
      %v1132 = vor.u32 %v1128, %v1131
      %v1133 = vsel %vm903, %v1124, %v1132
      %v1135 = vshrl.u32 %v527, 16
      %v1137 = vrot.slane %v1135, 3
      %v1138 = vshll.u32 %v527, 16
      %v1140 = vrot.slane %v1138, 4
      %v1141 = vor.u32 %v1137, %v1140
      %v1142 = vrot.slane %v669, 3
      %v1143 = vrot.slane %v665, 4
      %v1144 = vor.u32 %v1142, %v1143
      %v1145 = vsel %vm903, %v1141, %v1144
      %v1147 = vshrl.u32 %v668, 16
      %v1149 = vrot.slane %v1147, 3
      %v1150 = vshll.u32 %v668, 16
      %v1152 = vrot.slane %v1150, 4
      %v1153 = vor.u32 %v1149, %v1152
      %v1155 = vshrl.u32 %v671, 16
      %v1157 = vrot.slane %v1155, 3
      %v1158 = vshll.u32 %v671, 16
      %v1160 = vrot.slane %v1158, 4
      %v1161 = vor.u32 %v1157, %v1160
      %v1162 = vsel %vm903, %v1153, %v1161
      %v1164 = vshrl.u32 %v872, 16
      %v1166 = vrot.slane %v1164, 3
      %v1167 = vshll.u32 %v872, 16
      %v1169 = vrot.slane %v1167, 4
      %v1170 = vor.u32 %v1166, %v1169
      %v1172 = vshrl.u32 %v871, 16
      %v1174 = vrot.slane %v1172, 3
      %v1175 = vshll.u32 %v871, 16
      %v1177 = vrot.slane %v1175, 4
      %v1178 = vor.u32 %v1174, %v1177
      %v1179 = vsel %vm903, %v1170, %v1178
      %v1181 = vshrl.u32 %v529, 16
      %v1183 = vrot.slane %v1181, 3
      %v1184 = vshll.u32 %v529, 16
      %v1186 = vrot.slane %v1184, 4
      %v1187 = vor.u32 %v1183, %v1186
      %v1188 = vrot.slane %v684, 3
      %v1189 = vrot.slane %v680, 4
      %v1190 = vor.u32 %v1188, %v1189
      %v1191 = vsel %vm903, %v1187, %v1190
      %v1193 = vshrl.u32 %v683, 16
      %v1195 = vrot.slane %v1193, 3
      %v1196 = vshll.u32 %v683, 16
      %v1198 = vrot.slane %v1196, 4
      %v1199 = vor.u32 %v1195, %v1198
      %v1201 = vshrl.u32 %v686, 16
      %v1203 = vrot.slane %v1201, 3
      %v1204 = vshll.u32 %v686, 16
      %v1206 = vrot.slane %v1204, 4
      %v1207 = vor.u32 %v1203, %v1206
      %v1208 = vsel %vm903, %v1199, %v1207
      %v1210 = vshrl.u32 %v875, 16
      %v1212 = vrot.slane %v1210, 3
      %v1213 = vshll.u32 %v875, 16
      %v1215 = vrot.slane %v1213, 4
      %v1216 = vor.u32 %v1212, %v1215
      %v1218 = vshrl.u32 %v874, 16
      %v1220 = vrot.slane %v1218, 3
      %v1221 = vshll.u32 %v874, 16
      %v1223 = vrot.slane %v1221, 4
      %v1224 = vor.u32 %v1220, %v1223
      %v1225 = vsel %vm903, %v1216, %v1224
      %v1227 = vshrl.u32 %v531, 16
      %v1229 = vrot.slane %v1227, 3
      %v1230 = vshll.u32 %v531, 16
      %v1232 = vrot.slane %v1230, 4
      %v1233 = vor.u32 %v1229, %v1232
      %v1234 = vrot.slane %v699, 3
      %v1235 = vrot.slane %v695, 4
      %v1236 = vor.u32 %v1234, %v1235
      %v1237 = vsel %vm903, %v1233, %v1236
      %v1239 = vshrl.u32 %v698, 16
      %v1241 = vrot.slane %v1239, 3
      %v1242 = vshll.u32 %v698, 16
      %v1244 = vrot.slane %v1242, 4
      %v1245 = vor.u32 %v1241, %v1244
      %v1247 = vshrl.u32 %v701, 16
      %v1249 = vrot.slane %v1247, 3
      %v1250 = vshll.u32 %v701, 16
      %v1252 = vrot.slane %v1250, 4
      %v1253 = vor.u32 %v1249, %v1252
      %v1254 = vsel %vm903, %v1245, %v1253
      %v1256 = vshrl.u32 %v878, 16
      %v1258 = vrot.slane %v1256, 3
      %v1259 = vshll.u32 %v878, 16
      %v1261 = vrot.slane %v1259, 4
      %v1262 = vor.u32 %v1258, %v1261
      %v1264 = vshrl.u32 %v877, 16
      %v1266 = vrot.slane %v1264, 3
      %v1267 = vshll.u32 %v877, 16
      %v1269 = vrot.slane %v1267, 4
      %v1270 = vor.u32 %v1266, %v1269
      %v1271 = vsel %vm903, %v1262, %v1270
      %v1273 = vshrl.u32 %v533, 16
      %v1275 = vrot.slane %v1273, 3
      %v1276 = vshll.u32 %v533, 16
      %v1278 = vrot.slane %v1276, 4
      %v1279 = vor.u32 %v1275, %v1278
      %v1280 = vrot.slane %v714, 3
      %v1281 = vrot.slane %v710, 4
      %v1282 = vor.u32 %v1280, %v1281
      %v1283 = vsel %vm903, %v1279, %v1282
      %v1285 = vshrl.u32 %v713, 16
      %v1287 = vrot.slane %v1285, 3
      %v1288 = vshll.u32 %v713, 16
      %v1290 = vrot.slane %v1288, 4
      %v1291 = vor.u32 %v1287, %v1290
      %v1293 = vshrl.u32 %v716, 16
      %v1295 = vrot.slane %v1293, 3
      %v1296 = vshll.u32 %v716, 16
      %v1298 = vrot.slane %v1296, 4
      %v1299 = vor.u32 %v1295, %v1298
      %v1300 = vsel %vm903, %v1291, %v1299
      %v1302 = vshrl.u32 %v881, 16
      %v1304 = vrot.slane %v1302, 3
      %v1305 = vshll.u32 %v881, 16
      %v1307 = vrot.slane %v1305, 4
      %v1308 = vor.u32 %v1304, %v1307
      %v1310 = vshrl.u32 %v880, 16
      %v1312 = vrot.slane %v1310, 3
      %v1313 = vshll.u32 %v880, 16
      %v1315 = vrot.slane %v1313, 4
      %v1316 = vor.u32 %v1312, %v1315
      %v1317 = vsel %vm903, %v1308, %v1316
      %v1319 = vshrl.u32 %v535, 16
      %v1321 = vrot.slane %v1319, 3
      %v1322 = vshll.u32 %v535, 16
      %v1324 = vrot.slane %v1322, 4
      %v1325 = vor.u32 %v1321, %v1324
      %v1326 = vrot.slane %v729, 3
      %v1327 = vrot.slane %v725, 4
      %v1328 = vor.u32 %v1326, %v1327
      %v1329 = vsel %vm903, %v1325, %v1328
      %v1331 = vshrl.u32 %v728, 16
      %v1333 = vrot.slane %v1331, 3
      %v1334 = vshll.u32 %v728, 16
      %v1336 = vrot.slane %v1334, 4
      %v1337 = vor.u32 %v1333, %v1336
      %v1339 = vshrl.u32 %v731, 16
      %v1341 = vrot.slane %v1339, 3
      %v1342 = vshll.u32 %v731, 16
      %v1344 = vrot.slane %v1342, 4
      %v1345 = vor.u32 %v1341, %v1344
      %v1346 = vsel %vm903, %v1337, %v1345
      %v1348 = vshrl.u32 %v884, 16
      %v1350 = vrot.slane %v1348, 3
      %v1351 = vshll.u32 %v884, 16
      %v1353 = vrot.slane %v1351, 4
      %v1354 = vor.u32 %v1350, %v1353
      %v1356 = vshrl.u32 %v883, 16
      %v1358 = vrot.slane %v1356, 3
      %v1359 = vshll.u32 %v883, 16
      %v1361 = vrot.slane %v1359, 4
      %v1362 = vor.u32 %v1358, %v1361
      %v1363 = vsel %vm903, %v1354, %v1362
      %v1365 = vshrl.u32 %v537, 16
      %v1367 = vrot.slane %v1365, 3
      %v1368 = vshll.u32 %v537, 16
      %v1370 = vrot.slane %v1368, 4
      %v1371 = vor.u32 %v1367, %v1370
      %v1372 = vrot.slane %v744, 3
      %v1373 = vrot.slane %v740, 4
      %v1374 = vor.u32 %v1372, %v1373
      %v1375 = vsel %vm903, %v1371, %v1374
      %v1377 = vshrl.u32 %v743, 16
      %v1379 = vrot.slane %v1377, 3
      %v1380 = vshll.u32 %v743, 16
      %v1382 = vrot.slane %v1380, 4
      %v1383 = vor.u32 %v1379, %v1382
      %v1385 = vshrl.u32 %v746, 16
      %v1387 = vrot.slane %v1385, 3
      %v1388 = vshll.u32 %v746, 16
      %v1390 = vrot.slane %v1388, 4
      %v1391 = vor.u32 %v1387, %v1390
      %v1392 = vsel %vm903, %v1383, %v1391
      %v1394 = vshrl.u32 %v887, 16
      %v1396 = vrot.slane %v1394, 3
      %v1397 = vshll.u32 %v887, 16
      %v1399 = vrot.slane %v1397, 4
      %v1400 = vor.u32 %v1396, %v1399
      %v1402 = vshrl.u32 %v886, 16
      %v1404 = vrot.slane %v1402, 3
      %v1405 = vshll.u32 %v886, 16
      %v1407 = vrot.slane %v1405, 4
      %v1408 = vor.u32 %v1404, %v1407
      %v1409 = vsel %vm903, %v1400, %v1408
      %v1411 = vshrl.u32 %v539, 16
      %v1413 = vrot.slane %v1411, 3
      %v1414 = vshll.u32 %v539, 16
      %v1416 = vrot.slane %v1414, 4
      %v1417 = vor.u32 %v1413, %v1416
      %v1418 = vrot.slane %v759, 3
      %v1419 = vrot.slane %v755, 4
      %v1420 = vor.u32 %v1418, %v1419
      %v1421 = vsel %vm903, %v1417, %v1420
      %v1423 = vshrl.u32 %v758, 16
      %v1425 = vrot.slane %v1423, 3
      %v1426 = vshll.u32 %v758, 16
      %v1428 = vrot.slane %v1426, 4
      %v1429 = vor.u32 %v1425, %v1428
      %v1431 = vshrl.u32 %v761, 16
      %v1433 = vrot.slane %v1431, 3
      %v1434 = vshll.u32 %v761, 16
      %v1436 = vrot.slane %v1434, 4
      %v1437 = vor.u32 %v1433, %v1436
      %v1438 = vsel %vm903, %v1429, %v1437
      %v1440 = vshrl.u32 %v890, 16
      %v1442 = vrot.slane %v1440, 3
      %v1443 = vshll.u32 %v890, 16
      %v1445 = vrot.slane %v1443, 4
      %v1446 = vor.u32 %v1442, %v1445
      %v1448 = vshrl.u32 %v889, 16
      %v1450 = vrot.slane %v1448, 3
      %v1451 = vshll.u32 %v889, 16
      %v1453 = vrot.slane %v1451, 4
      %v1454 = vor.u32 %v1450, %v1453
      %v1455 = vsel %vm903, %v1446, %v1454
      %v1457 = vshrl.u32 %v541, 16
      %v1459 = vrot.slane %v1457, 3
      %v1460 = vshll.u32 %v541, 16
      %v1462 = vrot.slane %v1460, 4
      %v1463 = vor.u32 %v1459, %v1462
      %v1464 = vrot.slane %v774, 3
      %v1465 = vrot.slane %v770, 4
      %v1466 = vor.u32 %v1464, %v1465
      %v1467 = vsel %vm903, %v1463, %v1466
      %v1469 = vshrl.u32 %v773, 16
      %v1471 = vrot.slane %v1469, 3
      %v1472 = vshll.u32 %v773, 16
      %v1474 = vrot.slane %v1472, 4
      %v1475 = vor.u32 %v1471, %v1474
      %v1477 = vshrl.u32 %v776, 16
      %v1479 = vrot.slane %v1477, 3
      %v1480 = vshll.u32 %v776, 16
      %v1482 = vrot.slane %v1480, 4
      %v1483 = vor.u32 %v1479, %v1482
      %v1484 = vsel %vm903, %v1475, %v1483
      %v1486 = vshrl.u32 %v893, 16
      %v1488 = vrot.slane %v1486, 3
      %v1489 = vshll.u32 %v893, 16
      %v1491 = vrot.slane %v1489, 4
      %v1492 = vor.u32 %v1488, %v1491
      %v1494 = vshrl.u32 %v892, 16
      %v1496 = vrot.slane %v1494, 3
      %v1497 = vshll.u32 %v892, 16
      %v1499 = vrot.slane %v1497, 4
      %v1500 = vor.u32 %v1496, %v1499
      %v1501 = vsel %vm903, %v1492, %v1500
      %v1503 = vshrl.u32 %v543, 16
      %v1505 = vrot.slane %v1503, 3
      %v1506 = vshll.u32 %v543, 16
      %v1508 = vrot.slane %v1506, 4
      %v1509 = vor.u32 %v1505, %v1508
      %v1510 = vrot.slane %v789, 3
      %v1511 = vrot.slane %v785, 4
      %v1512 = vor.u32 %v1510, %v1511
      %v1513 = vsel %vm903, %v1509, %v1512
      %v1515 = vshrl.u32 %v788, 16
      %v1517 = vrot.slane %v1515, 3
      %v1518 = vshll.u32 %v788, 16
      %v1520 = vrot.slane %v1518, 4
      %v1521 = vor.u32 %v1517, %v1520
      %v1523 = vshrl.u32 %v791, 16
      %v1525 = vrot.slane %v1523, 3
      %v1526 = vshll.u32 %v791, 16
      %v1528 = vrot.slane %v1526, 4
      %v1529 = vor.u32 %v1525, %v1528
      %v1530 = vsel %vm903, %v1521, %v1529
      %v1532 = vshrl.u32 %v896, 16
      %v1534 = vrot.slane %v1532, 3
      %v1535 = vshll.u32 %v896, 16
      %v1537 = vrot.slane %v1535, 4
      %v1538 = vor.u32 %v1534, %v1537
      %v1540 = vshrl.u32 %v895, 16
      %v1542 = vrot.slane %v1540, 3
      %v1543 = vshll.u32 %v895, 16
      %v1545 = vrot.slane %v1543, 4
      %v1546 = vor.u32 %v1542, %v1545
      %v1547 = vsel %vm903, %v1538, %v1546
      %v1549 = vshrl.u32 %v545, 16
      %v1551 = vrot.slane %v1549, 3
      %v1552 = vshll.u32 %v545, 16
      %v1554 = vrot.slane %v1552, 4
      %v1555 = vor.u32 %v1551, %v1554
      %v1556 = vrot.slane %v804, 3
      %v1557 = vrot.slane %v800, 4
      %v1558 = vor.u32 %v1556, %v1557
      %v1559 = vsel %vm903, %v1555, %v1558
      %v1561 = vshrl.u32 %v803, 16
      %v1563 = vrot.slane %v1561, 3
      %v1564 = vshll.u32 %v803, 16
      %v1566 = vrot.slane %v1564, 4
      %v1567 = vor.u32 %v1563, %v1566
      %v1569 = vshrl.u32 %v806, 16
      %v1571 = vrot.slane %v1569, 3
      %v1572 = vshll.u32 %v806, 16
      %v1574 = vrot.slane %v1572, 4
      %v1575 = vor.u32 %v1571, %v1574
      %v1576 = vsel %vm903, %v1567, %v1575
      %v1578 = vshrl.u32 %v899, 16
      %v1580 = vrot.slane %v1578, 3
      %v1581 = vshll.u32 %v899, 16
      %v1583 = vrot.slane %v1581, 4
      %v1584 = vor.u32 %v1580, %v1583
      %v1586 = vshrl.u32 %v898, 16
      %v1588 = vrot.slane %v1586, 3
      %v1589 = vshll.u32 %v898, 16
      %v1591 = vrot.slane %v1589, 4
      %v1592 = vor.u32 %v1588, %v1591
      %v1593 = vsel %vm903, %v1584, %v1592
      %v1595 = vshrl.u32 %v547, 16
      %v1597 = vrot.slane %v1595, 3
      %v1598 = vshll.u32 %v547, 16
      %v1600 = vrot.slane %v1598, 4
      %v1601 = vor.u32 %v1597, %v1600
      %v1602 = vrot.slane %v819, 3
      %v1603 = vrot.slane %v815, 4
      %v1604 = vor.u32 %v1602, %v1603
      %v1605 = vsel %vm903, %v1601, %v1604
      %v1607 = vshrl.u32 %v818, 16
      %v1609 = vrot.slane %v1607, 3
      %v1610 = vshll.u32 %v818, 16
      %v1612 = vrot.slane %v1610, 4
      %v1613 = vor.u32 %v1609, %v1612
      %v1615 = vshrl.u32 %v821, 16
      %v1617 = vrot.slane %v1615, 3
      %v1618 = vshll.u32 %v821, 16
      %v1620 = vrot.slane %v1618, 4
      %v1621 = vor.u32 %v1617, %v1620
      %v1622 = vsel %vm903, %v1613, %v1621
      %v1624 = vshrl.u32 %v902, 16
      %v1626 = vrot.slane %v1624, 3
      %v1627 = vshll.u32 %v902, 16
      %v1629 = vrot.slane %v1627, 4
      %v1630 = vor.u32 %v1626, %v1629
      %v1632 = vshrl.u32 %v901, 16
      %v1634 = vrot.slane %v1632, 3
      %v1635 = vshll.u32 %v901, 16
      %v1637 = vrot.slane %v1635, 4
      %v1638 = vor.u32 %v1634, %v1637
      %v1639 = vsel %vm903, %v1630, %v1638
      %v1688 = vld [vmem:[%s3] sm:$0xf]
      %v1689 = vld [vmem:[%s3 + $0x4] sm:$0xf]
      %v1690 = vld [vmem:[%s3 + $0x8] sm:$0xf]
      %v1691 = vld [vmem:[%s3 + $0xc] sm:$0xf]
      %v1692 = vld [vmem:[%s3 + $0x10] sm:$0xf]
      %v1693 = vld [vmem:[%s3 + $0x14] sm:$0xf]
      %v1694 = vld [vmem:[%s3 + $0x18] sm:$0xf]
      %v1695 = vld [vmem:[%s3 + $0x1c] sm:$0xf]
      %v1696 = vld [vmem:[%s3 + $0x20] sm:$0xf]
      %v1697 = vld [vmem:[%s3 + $0x24] sm:$0xf]
      %v1698 = vld [vmem:[%s3 + $0x28] sm:$0xf]
      %v1699 = vld [vmem:[%s3 + $0x2c] sm:$0xf]
      %v1700 = vld [vmem:[%s3 + $0x30] sm:$0xf]
      %v1701 = vld [vmem:[%s3 + $0x34] sm:$0xf]
      %v1702 = vld [vmem:[%s3 + $0x38] sm:$0xf]
      %v1703 = vld [vmem:[%s3 + $0x3c] sm:$0xf]
      %v1704 = vld [vmem:[%s3 + $0x40] sm:$0xf]
      %v1705 = vld [vmem:[%s3 + $0x44] sm:$0xf]
      %v1706 = vld [vmem:[%s3 + $0x48] sm:$0xf]
      %v1707 = vld [vmem:[%s3 + $0x4c] sm:$0xf]
      %v1708 = vld [vmem:[%s3 + $0x50] sm:$0xf]
      %v1709 = vld [vmem:[%s3 + $0x54] sm:$0xf]
      %v1710 = vld [vmem:[%s3 + $0x58] sm:$0xf]
      %v1711 = vld [vmem:[%s3 + $0x5c] sm:$0xf]
      %v1712 = vld [vmem:[%s3 + $0x60] sm:$0xf]
      %v1713 = vld [vmem:[%s3 + $0x64] sm:$0xf]
      %v1714 = vld [vmem:[%s3 + $0x68] sm:$0xf]
      %v1715 = vld [vmem:[%s3 + $0x6c] sm:$0xf]
      %v1716 = vld [vmem:[%s3 + $0x70] sm:$0xf]
      %v1717 = vld [vmem:[%s3 + $0x74] sm:$0xf]
      %v1718 = vld [vmem:[%s3 + $0x78] sm:$0xf]
      %v1719 = vld [vmem:[%s3 + $0x7c] sm:$0xf]
      %v1720 = vld [vmem:[%s3 + $0x80] sm:$0xf]
      %v1721 = vld [vmem:[%s3 + $0x84] sm:$0xf]
      %v1722 = vld [vmem:[%s3 + $0x88] sm:$0xf]
      %v1723 = vld [vmem:[%s3 + $0x8c] sm:$0xf]
      %v1724 = vld [vmem:[%s3 + $0x90] sm:$0xf]
      %v1725 = vld [vmem:[%s3 + $0x94] sm:$0xf]
      %v1726 = vld [vmem:[%s3 + $0x98] sm:$0xf]
      %v1727 = vld [vmem:[%s3 + $0x9c] sm:$0xf]
      %v1728 = vld [vmem:[%s3 + $0xa0] sm:$0xf]
      %v1729 = vld [vmem:[%s3 + $0xa4] sm:$0xf]
      %v1730 = vld [vmem:[%s3 + $0xa8] sm:$0xf]
      %v1731 = vld [vmem:[%s3 + $0xac] sm:$0xf]
      %v1732 = vld [vmem:[%s3 + $0xb0] sm:$0xf]
      %v1733 = vld [vmem:[%s3 + $0xb4] sm:$0xf]
      %v1734 = vld [vmem:[%s3 + $0xb8] sm:$0xf]
      %v1735 = vld [vmem:[%s3 + $0xbc] sm:$0xf]
      %v1736 = vld [vmem:[%s484] sm:$0xf8]
      %v1737 = vld [vmem:[%s484 + $0x8] sm:$0xf]
      %v1738 = vld [vmem:[%s484 + $0x10] sm:$0xf8]
      %v1739 = vld [vmem:[%s484 + $0x18] sm:$0xf]
      %v1740 = vld [vmem:[%s484 + $0x20] sm:$0xf8]
      %v1741 = vld [vmem:[%s484 + $0x28] sm:$0xf]
      %v1742 = vld [vmem:[%s484 + $0x30] sm:$0xf8]
      %v1743 = vld [vmem:[%s484 + $0x38] sm:$0xf]
      %v1744 = vld [vmem:[%s484 + $0x40] sm:$0xf8]
      %v1745 = vld [vmem:[%s484 + $0x48] sm:$0xf]
      %v1746 = vld [vmem:[%s484 + $0x50] sm:$0xf8]
      %v1747 = vld [vmem:[%s484 + $0x58] sm:$0xf]
      %v1748 = vld [vmem:[%s484 + $0x60] sm:$0xf8]
      %v1749 = vld [vmem:[%s484 + $0x68] sm:$0xf]
      %v1750 = vld [vmem:[%s484 + $0x70] sm:$0xf8]
      %v1751 = vld [vmem:[%s484 + $0x78] sm:$0xf]
      %v1752 = vld [vmem:[%s484 + $0x80] sm:$0xf8]
      %v1753 = vld [vmem:[%s484 + $0x88] sm:$0xf]
      %v1754 = vld [vmem:[%s484 + $0x90] sm:$0xf8]
      %v1755 = vld [vmem:[%s484 + $0x98] sm:$0xf]
      %v1756 = vld [vmem:[%s484 + $0xa0] sm:$0xf8]
      %v1757 = vld [vmem:[%s484 + $0xa8] sm:$0xf]
      %v1758 = vld [vmem:[%s484 + $0xb0] sm:$0xf8]
      %v1759 = vld [vmem:[%s484 + $0xb8] sm:$0xf]
      %v1760 = vld [vmem:[%s484 + $0xc0] sm:$0xf8]
      %v1761 = vld [vmem:[%s484 + $0xc8] sm:$0xf]
      %v1762 = vld [vmem:[%s484 + $0xd0] sm:$0xf8]
      %v1763 = vld [vmem:[%s484 + $0xd8] sm:$0xf]
      %v1764 = vld [vmem:[%s484 + $0xe0] sm:$0xf8]
      %v1765 = vld [vmem:[%s484 + $0xe8] sm:$0xf]
      %v1766 = vld [vmem:[%s484 + $0xf0] sm:$0xf8]
      %v1767 = vld [vmem:[%s484 + $0xf8] sm:$0xf]
      %v1768 = vld [vmem:[%s484] sm:$0xf0]
      %v1769 = vld [vmem:[%s484 + $0x10] sm:$0xf0]
      %v1770 = vld [vmem:[%s484 + $0x20] sm:$0xf0]
      %v1771 = vld [vmem:[%s484 + $0x30] sm:$0xf0]
      %v1772 = vld [vmem:[%s484 + $0x40] sm:$0xf0]
      %v1773 = vld [vmem:[%s484 + $0x50] sm:$0xf0]
      %v1774 = vld [vmem:[%s484 + $0x60] sm:$0xf0]
      %v1775 = vld [vmem:[%s484 + $0x70] sm:$0xf0]
      %v1776 = vld [vmem:[%s484 + $0x80] sm:$0xf0]
      %v1777 = vld [vmem:[%s484 + $0x90] sm:$0xf0]
      %v1778 = vld [vmem:[%s484 + $0xa0] sm:$0xf0]
      %v1779 = vld [vmem:[%s484 + $0xb0] sm:$0xf0]
      %v1780 = vld [vmem:[%s484 + $0xc0] sm:$0xf0]
      %v1781 = vld [vmem:[%s484 + $0xd0] sm:$0xf0]
      %v1782 = vld [vmem:[%s484 + $0xe0] sm:$0xf0]
      %v1783 = vld [vmem:[%s484 + $0xf0] sm:$0xf0]
      %v1784 = vld [vmem:[%s484 + $0x8] sm:$0x1f]
      %v1785 = vld [vmem:[%s484 + $0x18] sm:$0x1f]
      %v1786 = vld [vmem:[%s484 + $0x28] sm:$0x1f]
      %v1787 = vld [vmem:[%s484 + $0x38] sm:$0x1f]
      %v1788 = vld [vmem:[%s484 + $0x48] sm:$0x1f]
      %v1789 = vld [vmem:[%s484 + $0x58] sm:$0x1f]
      %v1790 = vld [vmem:[%s484 + $0x68] sm:$0x1f]
      %v1791 = vld [vmem:[%s484 + $0x78] sm:$0x1f]
      %v1792 = vld [vmem:[%s484 + $0x88] sm:$0x1f]
      %v1793 = vld [vmem:[%s484 + $0x98] sm:$0x1f]
      %v1794 = vld [vmem:[%s484 + $0xa8] sm:$0x1f]
      %v1795 = vld [vmem:[%s484 + $0xb8] sm:$0x1f]
      %v1796 = vld [vmem:[%s484 + $0xc8] sm:$0x1f]
      %v1797 = vld [vmem:[%s484 + $0xd8] sm:$0x1f]
      %v1798 = vld [vmem:[%s484 + $0xe8] sm:$0x1f]
      %v1799 = vld [vmem:[%s484 + $0xf8] sm:$0x1f]
      %v1801 = vshrl.u32 %v1768, 16
      %v1803 = vshll.u32 %v1768, 16
      %v1805 = vrot.slane %v1803, 1
      %v1806 = vor.u32 %v1801, %v1805
      %v1808 = vshll.u32 %v1737, 16
      %v1810 = vrot.slane %v1808, 1
      %v1811 = vsel %vm581, %v1806, %v1810
      %v1812 = vshrl.u32 %v1737, 16
      %v1814 = vor.u32 %v1812, %v1810
      %v1816 = vshrl.u32 %v1769, 16
      %v1818 = vshll.u32 %v1769, 16
      %v1820 = vrot.slane %v1818, 1
      %v1821 = vor.u32 %v1816, %v1820
      %v1823 = vshll.u32 %v1739, 16
      %v1825 = vrot.slane %v1823, 1
      %v1826 = vsel %vm581, %v1821, %v1825
      %v1827 = vshrl.u32 %v1739, 16
      %v1829 = vor.u32 %v1827, %v1825
      %v1831 = vshrl.u32 %v1770, 16
      %v1833 = vshll.u32 %v1770, 16
      %v1835 = vrot.slane %v1833, 1
      %v1836 = vor.u32 %v1831, %v1835
      %v1838 = vshll.u32 %v1741, 16
      %v1840 = vrot.slane %v1838, 1
      %v1841 = vsel %vm581, %v1836, %v1840
      %v1842 = vshrl.u32 %v1741, 16
      %v1844 = vor.u32 %v1842, %v1840
      %v1846 = vshrl.u32 %v1771, 16
      %v1848 = vshll.u32 %v1771, 16
      %v1850 = vrot.slane %v1848, 1
      %v1851 = vor.u32 %v1846, %v1850
      %v1853 = vshll.u32 %v1743, 16
      %v1855 = vrot.slane %v1853, 1
      %v1856 = vsel %vm581, %v1851, %v1855
      %v1857 = vshrl.u32 %v1743, 16
      %v1859 = vor.u32 %v1857, %v1855
      %v1861 = vshrl.u32 %v1772, 16
      %v1863 = vshll.u32 %v1772, 16
      %v1865 = vrot.slane %v1863, 1
      %v1866 = vor.u32 %v1861, %v1865
      %v1868 = vshll.u32 %v1745, 16
      %v1870 = vrot.slane %v1868, 1
      %v1871 = vsel %vm581, %v1866, %v1870
      %v1872 = vshrl.u32 %v1745, 16
      %v1874 = vor.u32 %v1872, %v1870
      %v1876 = vshrl.u32 %v1773, 16
      %v1878 = vshll.u32 %v1773, 16
      %v1880 = vrot.slane %v1878, 1
      %v1881 = vor.u32 %v1876, %v1880
      %v1883 = vshll.u32 %v1747, 16
      %v1885 = vrot.slane %v1883, 1
      %v1886 = vsel %vm581, %v1881, %v1885
      %v1887 = vshrl.u32 %v1747, 16
      %v1889 = vor.u32 %v1887, %v1885
      %v1891 = vshrl.u32 %v1774, 16
      %v1893 = vshll.u32 %v1774, 16
      %v1895 = vrot.slane %v1893, 1
      %v1896 = vor.u32 %v1891, %v1895
      %v1898 = vshll.u32 %v1749, 16
      %v1900 = vrot.slane %v1898, 1
      %v1901 = vsel %vm581, %v1896, %v1900
      %v1902 = vshrl.u32 %v1749, 16
      %v1904 = vor.u32 %v1902, %v1900
      %v1906 = vshrl.u32 %v1775, 16
      %v1908 = vshll.u32 %v1775, 16
      %v1910 = vrot.slane %v1908, 1
      %v1911 = vor.u32 %v1906, %v1910
      %v1913 = vshll.u32 %v1751, 16
      %v1915 = vrot.slane %v1913, 1
      %v1916 = vsel %vm581, %v1911, %v1915
      %v1917 = vshrl.u32 %v1751, 16
      %v1919 = vor.u32 %v1917, %v1915
      %v1921 = vshrl.u32 %v1776, 16
      %v1923 = vshll.u32 %v1776, 16
      %v1925 = vrot.slane %v1923, 1
      %v1926 = vor.u32 %v1921, %v1925
      %v1928 = vshll.u32 %v1753, 16
      %v1930 = vrot.slane %v1928, 1
      %v1931 = vsel %vm581, %v1926, %v1930
      %v1932 = vshrl.u32 %v1753, 16
      %v1934 = vor.u32 %v1932, %v1930
      %v1936 = vshrl.u32 %v1777, 16
      %v1938 = vshll.u32 %v1777, 16
      %v1940 = vrot.slane %v1938, 1
      %v1941 = vor.u32 %v1936, %v1940
      %v1943 = vshll.u32 %v1755, 16
      %v1945 = vrot.slane %v1943, 1
      %v1946 = vsel %vm581, %v1941, %v1945
      %v1947 = vshrl.u32 %v1755, 16
      %v1949 = vor.u32 %v1947, %v1945
      %v1951 = vshrl.u32 %v1778, 16
      %v1953 = vshll.u32 %v1778, 16
      %v1955 = vrot.slane %v1953, 1
      %v1956 = vor.u32 %v1951, %v1955
      %v1958 = vshll.u32 %v1757, 16
      %v1960 = vrot.slane %v1958, 1
      %v1961 = vsel %vm581, %v1956, %v1960
      %v1962 = vshrl.u32 %v1757, 16
      %v1964 = vor.u32 %v1962, %v1960
      %v1966 = vshrl.u32 %v1779, 16
      %v1968 = vshll.u32 %v1779, 16
      %v1970 = vrot.slane %v1968, 1
      %v1971 = vor.u32 %v1966, %v1970
      %v1973 = vshll.u32 %v1759, 16
      %v1975 = vrot.slane %v1973, 1
      %v1976 = vsel %vm581, %v1971, %v1975
      %v1977 = vshrl.u32 %v1759, 16
      %v1979 = vor.u32 %v1977, %v1975
      %v1981 = vshrl.u32 %v1780, 16
      %v1983 = vshll.u32 %v1780, 16
      %v1985 = vrot.slane %v1983, 1
      %v1986 = vor.u32 %v1981, %v1985
      %v1988 = vshll.u32 %v1761, 16
      %v1990 = vrot.slane %v1988, 1
      %v1991 = vsel %vm581, %v1986, %v1990
      %v1992 = vshrl.u32 %v1761, 16
      %v1994 = vor.u32 %v1992, %v1990
      %v1996 = vshrl.u32 %v1781, 16
      %v1998 = vshll.u32 %v1781, 16
      %v2000 = vrot.slane %v1998, 1
      %v2001 = vor.u32 %v1996, %v2000
      %v2003 = vshll.u32 %v1763, 16
      %v2005 = vrot.slane %v2003, 1
      %v2006 = vsel %vm581, %v2001, %v2005
      %v2007 = vshrl.u32 %v1763, 16
      %v2009 = vor.u32 %v2007, %v2005
      %v2011 = vshrl.u32 %v1782, 16
      %v2013 = vshll.u32 %v1782, 16
      %v2015 = vrot.slane %v2013, 1
      %v2016 = vor.u32 %v2011, %v2015
      %v2018 = vshll.u32 %v1765, 16
      %v2020 = vrot.slane %v2018, 1
      %v2021 = vsel %vm581, %v2016, %v2020
      %v2022 = vshrl.u32 %v1765, 16
      %v2024 = vor.u32 %v2022, %v2020
      %v2026 = vshrl.u32 %v1783, 16
      %v2028 = vshll.u32 %v1783, 16
      %v2030 = vrot.slane %v2028, 1
      %v2031 = vor.u32 %v2026, %v2030
      %v2033 = vshll.u32 %v1767, 16
      %v2035 = vrot.slane %v2033, 1
      %v2036 = vsel %vm581, %v2031, %v2035
      %v2037 = vshrl.u32 %v1767, 16
      %v2039 = vor.u32 %v2037, %v2035
      %v2072 = vrot.slane %v1768, 1
      %v2073 = vrot.slane %v1784, 1
      %v2074 = vsel %vm854, %v2072, %v2073
      %v2075 = vrot.slane %v1769, 1
      %v2076 = vrot.slane %v1785, 1
      %v2077 = vsel %vm854, %v2075, %v2076
      %v2078 = vrot.slane %v1770, 1
      %v2079 = vrot.slane %v1786, 1
      %v2080 = vsel %vm854, %v2078, %v2079
      %v2081 = vrot.slane %v1771, 1
      %v2082 = vrot.slane %v1787, 1
      %v2083 = vsel %vm854, %v2081, %v2082
      %v2084 = vrot.slane %v1772, 1
      %v2085 = vrot.slane %v1788, 1
      %v2086 = vsel %vm854, %v2084, %v2085
      %v2087 = vrot.slane %v1773, 1
      %v2088 = vrot.slane %v1789, 1
      %v2089 = vsel %vm854, %v2087, %v2088
      %v2090 = vrot.slane %v1774, 1
      %v2091 = vrot.slane %v1790, 1
      %v2092 = vsel %vm854, %v2090, %v2091
      %v2093 = vrot.slane %v1775, 1
      %v2094 = vrot.slane %v1791, 1
      %v2095 = vsel %vm854, %v2093, %v2094
      %v2096 = vrot.slane %v1776, 1
      %v2097 = vrot.slane %v1792, 1
      %v2098 = vsel %vm854, %v2096, %v2097
      %v2099 = vrot.slane %v1777, 1
      %v2100 = vrot.slane %v1793, 1
      %v2101 = vsel %vm854, %v2099, %v2100
      %v2102 = vrot.slane %v1778, 1
      %v2103 = vrot.slane %v1794, 1
      %v2104 = vsel %vm854, %v2102, %v2103
      %v2105 = vrot.slane %v1779, 1
      %v2106 = vrot.slane %v1795, 1
      %v2107 = vsel %vm854, %v2105, %v2106
      %v2108 = vrot.slane %v1780, 1
      %v2109 = vrot.slane %v1796, 1
      %v2110 = vsel %vm854, %v2108, %v2109
      %v2111 = vrot.slane %v1781, 1
      %v2112 = vrot.slane %v1797, 1
      %v2113 = vsel %vm854, %v2111, %v2112
      %v2114 = vrot.slane %v1782, 1
      %v2115 = vrot.slane %v1798, 1
      %v2116 = vsel %vm854, %v2114, %v2115
      %v2117 = vrot.slane %v1783, 1
      %v2118 = vrot.slane %v1799, 1
      %v2119 = vsel %vm854, %v2117, %v2118
      %v2121 = vshrl.u32 %v1736, 16
      %v2123 = vrot.slane %v2121, 3
      %v2124 = vshll.u32 %v1736, 16
      %v2126 = vrot.slane %v2124, 4
      %v2127 = vor.u32 %v2123, %v2126
      %v2128 = vrot.slane %v1812, 3
      %v2129 = vrot.slane %v1808, 4
      %v2130 = vor.u32 %v2128, %v2129
      %v2131 = vsel %vm903, %v2127, %v2130
      %v2133 = vshrl.u32 %v1811, 16
      %v2135 = vrot.slane %v2133, 3
      %v2136 = vshll.u32 %v1811, 16
      %v2138 = vrot.slane %v2136, 4
      %v2139 = vor.u32 %v2135, %v2138
      %v2141 = vshrl.u32 %v1814, 16
      %v2143 = vrot.slane %v2141, 3
      %v2144 = vshll.u32 %v1814, 16
      %v2146 = vrot.slane %v2144, 4
      %v2147 = vor.u32 %v2143, %v2146
      %v2148 = vsel %vm903, %v2139, %v2147
      %v2150 = vshrl.u32 %v2074, 16
      %v2152 = vrot.slane %v2150, 3
      %v2153 = vshll.u32 %v2074, 16
      %v2155 = vrot.slane %v2153, 4
      %v2156 = vor.u32 %v2152, %v2155
      %v2158 = vshrl.u32 %v2073, 16
      %v2160 = vrot.slane %v2158, 3
      %v2161 = vshll.u32 %v2073, 16
      %v2163 = vrot.slane %v2161, 4
      %v2164 = vor.u32 %v2160, %v2163
      %v2165 = vsel %vm903, %v2156, %v2164
      %v2167 = vshrl.u32 %v1738, 16
      %v2169 = vrot.slane %v2167, 3
      %v2170 = vshll.u32 %v1738, 16
      %v2172 = vrot.slane %v2170, 4
      %v2173 = vor.u32 %v2169, %v2172
      %v2174 = vrot.slane %v1827, 3
      %v2175 = vrot.slane %v1823, 4
      %v2176 = vor.u32 %v2174, %v2175
      %v2177 = vsel %vm903, %v2173, %v2176
      %v2179 = vshrl.u32 %v1826, 16
      %v2181 = vrot.slane %v2179, 3
      %v2182 = vshll.u32 %v1826, 16
      %v2184 = vrot.slane %v2182, 4
      %v2185 = vor.u32 %v2181, %v2184
      %v2187 = vshrl.u32 %v1829, 16
      %v2189 = vrot.slane %v2187, 3
      %v2190 = vshll.u32 %v1829, 16
      %v2192 = vrot.slane %v2190, 4
      %v2193 = vor.u32 %v2189, %v2192
      %v2194 = vsel %vm903, %v2185, %v2193
      %v2196 = vshrl.u32 %v2077, 16
      %v2198 = vrot.slane %v2196, 3
      %v2199 = vshll.u32 %v2077, 16
      %v2201 = vrot.slane %v2199, 4
      %v2202 = vor.u32 %v2198, %v2201
      %v2204 = vshrl.u32 %v2076, 16
      %v2206 = vrot.slane %v2204, 3
      %v2207 = vshll.u32 %v2076, 16
      %v2209 = vrot.slane %v2207, 4
      %v2210 = vor.u32 %v2206, %v2209
      %v2211 = vsel %vm903, %v2202, %v2210
      %v2213 = vshrl.u32 %v1740, 16
      %v2215 = vrot.slane %v2213, 3
      %v2216 = vshll.u32 %v1740, 16
      %v2218 = vrot.slane %v2216, 4
      %v2219 = vor.u32 %v2215, %v2218
      %v2220 = vrot.slane %v1842, 3
      %v2221 = vrot.slane %v1838, 4
      %v2222 = vor.u32 %v2220, %v2221
      %v2223 = vsel %vm903, %v2219, %v2222
      %v2225 = vshrl.u32 %v1841, 16
      %v2227 = vrot.slane %v2225, 3
      %v2228 = vshll.u32 %v1841, 16
      %v2230 = vrot.slane %v2228, 4
      %v2231 = vor.u32 %v2227, %v2230
      %v2233 = vshrl.u32 %v1844, 16
      %v2235 = vrot.slane %v2233, 3
      %v2236 = vshll.u32 %v1844, 16
      %v2238 = vrot.slane %v2236, 4
      %v2239 = vor.u32 %v2235, %v2238
      %v2240 = vsel %vm903, %v2231, %v2239
      %v2242 = vshrl.u32 %v2080, 16
      %v2244 = vrot.slane %v2242, 3
      %v2245 = vshll.u32 %v2080, 16
      %v2247 = vrot.slane %v2245, 4
      %v2248 = vor.u32 %v2244, %v2247
      %v2250 = vshrl.u32 %v2079, 16
      %v2252 = vrot.slane %v2250, 3
      %v2253 = vshll.u32 %v2079, 16
      %v2255 = vrot.slane %v2253, 4
      %v2256 = vor.u32 %v2252, %v2255
      %v2257 = vsel %vm903, %v2248, %v2256
      %v2259 = vshrl.u32 %v1742, 16
      %v2261 = vrot.slane %v2259, 3
      %v2262 = vshll.u32 %v1742, 16
      %v2264 = vrot.slane %v2262, 4
      %v2265 = vor.u32 %v2261, %v2264
      %v2266 = vrot.slane %v1857, 3
      %v2267 = vrot.slane %v1853, 4
      %v2268 = vor.u32 %v2266, %v2267
      %v2269 = vsel %vm903, %v2265, %v2268
      %v2271 = vshrl.u32 %v1856, 16
      %v2273 = vrot.slane %v2271, 3
      %v2274 = vshll.u32 %v1856, 16
      %v2276 = vrot.slane %v2274, 4
      %v2277 = vor.u32 %v2273, %v2276
      %v2279 = vshrl.u32 %v1859, 16
      %v2281 = vrot.slane %v2279, 3
      %v2282 = vshll.u32 %v1859, 16
      %v2284 = vrot.slane %v2282, 4
      %v2285 = vor.u32 %v2281, %v2284
      %v2286 = vsel %vm903, %v2277, %v2285
      %v2288 = vshrl.u32 %v2083, 16
      %v2290 = vrot.slane %v2288, 3
      %v2291 = vshll.u32 %v2083, 16
      %v2293 = vrot.slane %v2291, 4
      %v2294 = vor.u32 %v2290, %v2293
      %v2296 = vshrl.u32 %v2082, 16
      %v2298 = vrot.slane %v2296, 3
      %v2299 = vshll.u32 %v2082, 16
      %v2301 = vrot.slane %v2299, 4
      %v2302 = vor.u32 %v2298, %v2301
      %v2303 = vsel %vm903, %v2294, %v2302
      %v2305 = vshrl.u32 %v1744, 16
      %v2307 = vrot.slane %v2305, 3
      %v2308 = vshll.u32 %v1744, 16
      %v2310 = vrot.slane %v2308, 4
      %v2311 = vor.u32 %v2307, %v2310
      %v2312 = vrot.slane %v1872, 3
      %v2313 = vrot.slane %v1868, 4
      %v2314 = vor.u32 %v2312, %v2313
      %v2315 = vsel %vm903, %v2311, %v2314
      %v2317 = vshrl.u32 %v1871, 16
      %v2319 = vrot.slane %v2317, 3
      %v2320 = vshll.u32 %v1871, 16
      %v2322 = vrot.slane %v2320, 4
      %v2323 = vor.u32 %v2319, %v2322
      %v2325 = vshrl.u32 %v1874, 16
      %v2327 = vrot.slane %v2325, 3
      %v2328 = vshll.u32 %v1874, 16
      %v2330 = vrot.slane %v2328, 4
      %v2331 = vor.u32 %v2327, %v2330
      %v2332 = vsel %vm903, %v2323, %v2331
      %v2334 = vshrl.u32 %v2086, 16
      %v2336 = vrot.slane %v2334, 3
      %v2337 = vshll.u32 %v2086, 16
      %v2339 = vrot.slane %v2337, 4
      %v2340 = vor.u32 %v2336, %v2339
      %v2342 = vshrl.u32 %v2085, 16
      %v2344 = vrot.slane %v2342, 3
      %v2345 = vshll.u32 %v2085, 16
      %v2347 = vrot.slane %v2345, 4
      %v2348 = vor.u32 %v2344, %v2347
      %v2349 = vsel %vm903, %v2340, %v2348
      %v2351 = vshrl.u32 %v1746, 16
      %v2353 = vrot.slane %v2351, 3
      %v2354 = vshll.u32 %v1746, 16
      %v2356 = vrot.slane %v2354, 4
      %v2357 = vor.u32 %v2353, %v2356
      %v2358 = vrot.slane %v1887, 3
      %v2359 = vrot.slane %v1883, 4
      %v2360 = vor.u32 %v2358, %v2359
      %v2361 = vsel %vm903, %v2357, %v2360
      %v2363 = vshrl.u32 %v1886, 16
      %v2365 = vrot.slane %v2363, 3
      %v2366 = vshll.u32 %v1886, 16
      %v2368 = vrot.slane %v2366, 4
      %v2369 = vor.u32 %v2365, %v2368
      %v2371 = vshrl.u32 %v1889, 16
      %v2373 = vrot.slane %v2371, 3
      %v2374 = vshll.u32 %v1889, 16
      %v2376 = vrot.slane %v2374, 4
      %v2377 = vor.u32 %v2373, %v2376
      %v2378 = vsel %vm903, %v2369, %v2377
      %v2380 = vshrl.u32 %v2089, 16
      %v2382 = vrot.slane %v2380, 3
      %v2383 = vshll.u32 %v2089, 16
      %v2385 = vrot.slane %v2383, 4
      %v2386 = vor.u32 %v2382, %v2385
      %v2388 = vshrl.u32 %v2088, 16
      %v2390 = vrot.slane %v2388, 3
      %v2391 = vshll.u32 %v2088, 16
      %v2393 = vrot.slane %v2391, 4
      %v2394 = vor.u32 %v2390, %v2393
      %v2395 = vsel %vm903, %v2386, %v2394
      %v2397 = vshrl.u32 %v1748, 16
      %v2399 = vrot.slane %v2397, 3
      %v2400 = vshll.u32 %v1748, 16
      %v2402 = vrot.slane %v2400, 4
      %v2403 = vor.u32 %v2399, %v2402
      %v2404 = vrot.slane %v1902, 3
      %v2405 = vrot.slane %v1898, 4
      %v2406 = vor.u32 %v2404, %v2405
      %v2407 = vsel %vm903, %v2403, %v2406
      %v2409 = vshrl.u32 %v1901, 16
      %v2411 = vrot.slane %v2409, 3
      %v2412 = vshll.u32 %v1901, 16
      %v2414 = vrot.slane %v2412, 4
      %v2415 = vor.u32 %v2411, %v2414
      %v2417 = vshrl.u32 %v1904, 16
      %v2419 = vrot.slane %v2417, 3
      %v2420 = vshll.u32 %v1904, 16
      %v2422 = vrot.slane %v2420, 4
      %v2423 = vor.u32 %v2419, %v2422
      %v2424 = vsel %vm903, %v2415, %v2423
      %v2426 = vshrl.u32 %v2092, 16
      %v2428 = vrot.slane %v2426, 3
      %v2429 = vshll.u32 %v2092, 16
      %v2431 = vrot.slane %v2429, 4
      %v2432 = vor.u32 %v2428, %v2431
      %v2434 = vshrl.u32 %v2091, 16
      %v2436 = vrot.slane %v2434, 3
      %v2437 = vshll.u32 %v2091, 16
      %v2439 = vrot.slane %v2437, 4
      %v2440 = vor.u32 %v2436, %v2439
      %v2441 = vsel %vm903, %v2432, %v2440
      %v2443 = vshrl.u32 %v1750, 16
      %v2445 = vrot.slane %v2443, 3
      %v2446 = vshll.u32 %v1750, 16
      %v2448 = vrot.slane %v2446, 4
      %v2449 = vor.u32 %v2445, %v2448
      %v2450 = vrot.slane %v1917, 3
      %v2451 = vrot.slane %v1913, 4
      %v2452 = vor.u32 %v2450, %v2451
      %v2453 = vsel %vm903, %v2449, %v2452
      %v2455 = vshrl.u32 %v1916, 16
      %v2457 = vrot.slane %v2455, 3
      %v2458 = vshll.u32 %v1916, 16
      %v2460 = vrot.slane %v2458, 4
      %v2461 = vor.u32 %v2457, %v2460
      %v2463 = vshrl.u32 %v1919, 16
      %v2465 = vrot.slane %v2463, 3
      %v2466 = vshll.u32 %v1919, 16
      %v2468 = vrot.slane %v2466, 4
      %v2469 = vor.u32 %v2465, %v2468
      %v2470 = vsel %vm903, %v2461, %v2469
      %v2472 = vshrl.u32 %v2095, 16
      %v2474 = vrot.slane %v2472, 3
      %v2475 = vshll.u32 %v2095, 16
      %v2477 = vrot.slane %v2475, 4
      %v2478 = vor.u32 %v2474, %v2477
      %v2480 = vshrl.u32 %v2094, 16
      %v2482 = vrot.slane %v2480, 3
      %v2483 = vshll.u32 %v2094, 16
      %v2485 = vrot.slane %v2483, 4
      %v2486 = vor.u32 %v2482, %v2485
      %v2487 = vsel %vm903, %v2478, %v2486
      %v2489 = vshrl.u32 %v1752, 16
      %v2491 = vrot.slane %v2489, 3
      %v2492 = vshll.u32 %v1752, 16
      %v2494 = vrot.slane %v2492, 4
      %v2495 = vor.u32 %v2491, %v2494
      %v2496 = vrot.slane %v1932, 3
      %v2497 = vrot.slane %v1928, 4
      %v2498 = vor.u32 %v2496, %v2497
      %v2499 = vsel %vm903, %v2495, %v2498
      %v2501 = vshrl.u32 %v1931, 16
      %v2503 = vrot.slane %v2501, 3
      %v2504 = vshll.u32 %v1931, 16
      %v2506 = vrot.slane %v2504, 4
      %v2507 = vor.u32 %v2503, %v2506
      %v2509 = vshrl.u32 %v1934, 16
      %v2511 = vrot.slane %v2509, 3
      %v2512 = vshll.u32 %v1934, 16
      %v2514 = vrot.slane %v2512, 4
      %v2515 = vor.u32 %v2511, %v2514
      %v2516 = vsel %vm903, %v2507, %v2515
      %v2518 = vshrl.u32 %v2098, 16
      %v2520 = vrot.slane %v2518, 3
      %v2521 = vshll.u32 %v2098, 16
      %v2523 = vrot.slane %v2521, 4
      %v2524 = vor.u32 %v2520, %v2523
      %v2526 = vshrl.u32 %v2097, 16
      %v2528 = vrot.slane %v2526, 3
      %v2529 = vshll.u32 %v2097, 16
      %v2531 = vrot.slane %v2529, 4
      %v2532 = vor.u32 %v2528, %v2531
      %v2533 = vsel %vm903, %v2524, %v2532
      %v2535 = vshrl.u32 %v1754, 16
      %v2537 = vrot.slane %v2535, 3
      %v2538 = vshll.u32 %v1754, 16
      %v2540 = vrot.slane %v2538, 4
      %v2541 = vor.u32 %v2537, %v2540
      %v2542 = vrot.slane %v1947, 3
      %v2543 = vrot.slane %v1943, 4
      %v2544 = vor.u32 %v2542, %v2543
      %v2545 = vsel %vm903, %v2541, %v2544
      %v2547 = vshrl.u32 %v1946, 16
      %v2549 = vrot.slane %v2547, 3
      %v2550 = vshll.u32 %v1946, 16
      %v2552 = vrot.slane %v2550, 4
      %v2553 = vor.u32 %v2549, %v2552
      %v2555 = vshrl.u32 %v1949, 16
      %v2557 = vrot.slane %v2555, 3
      %v2558 = vshll.u32 %v1949, 16
      %v2560 = vrot.slane %v2558, 4
      %v2561 = vor.u32 %v2557, %v2560
      %v2562 = vsel %vm903, %v2553, %v2561
      %v2564 = vshrl.u32 %v2101, 16
      %v2566 = vrot.slane %v2564, 3
      %v2567 = vshll.u32 %v2101, 16
      %v2569 = vrot.slane %v2567, 4
      %v2570 = vor.u32 %v2566, %v2569
      %v2572 = vshrl.u32 %v2100, 16
      %v2574 = vrot.slane %v2572, 3
      %v2575 = vshll.u32 %v2100, 16
      %v2577 = vrot.slane %v2575, 4
      %v2578 = vor.u32 %v2574, %v2577
      %v2579 = vsel %vm903, %v2570, %v2578
      %v2581 = vshrl.u32 %v1756, 16
      %v2583 = vrot.slane %v2581, 3
      %v2584 = vshll.u32 %v1756, 16
      %v2586 = vrot.slane %v2584, 4
      %v2587 = vor.u32 %v2583, %v2586
      %v2588 = vrot.slane %v1962, 3
      %v2589 = vrot.slane %v1958, 4
      %v2590 = vor.u32 %v2588, %v2589
      %v2591 = vsel %vm903, %v2587, %v2590
      %v2593 = vshrl.u32 %v1961, 16
      %v2595 = vrot.slane %v2593, 3
      %v2596 = vshll.u32 %v1961, 16
      %v2598 = vrot.slane %v2596, 4
      %v2599 = vor.u32 %v2595, %v2598
      %v2601 = vshrl.u32 %v1964, 16
      %v2603 = vrot.slane %v2601, 3
      %v2604 = vshll.u32 %v1964, 16
      %v2606 = vrot.slane %v2604, 4
      %v2607 = vor.u32 %v2603, %v2606
      %v2608 = vsel %vm903, %v2599, %v2607
      %v2610 = vshrl.u32 %v2104, 16
      %v2612 = vrot.slane %v2610, 3
      %v2613 = vshll.u32 %v2104, 16
      %v2615 = vrot.slane %v2613, 4
      %v2616 = vor.u32 %v2612, %v2615
      %v2618 = vshrl.u32 %v2103, 16
      %v2620 = vrot.slane %v2618, 3
      %v2621 = vshll.u32 %v2103, 16
      %v2623 = vrot.slane %v2621, 4
      %v2624 = vor.u32 %v2620, %v2623
      %v2625 = vsel %vm903, %v2616, %v2624
      %v2627 = vshrl.u32 %v1758, 16
      %v2629 = vrot.slane %v2627, 3
      %v2630 = vshll.u32 %v1758, 16
      %v2632 = vrot.slane %v2630, 4
      %v2633 = vor.u32 %v2629, %v2632
      %v2634 = vrot.slane %v1977, 3
      %v2635 = vrot.slane %v1973, 4
      %v2636 = vor.u32 %v2634, %v2635
      %v2637 = vsel %vm903, %v2633, %v2636
      %v2639 = vshrl.u32 %v1976, 16
      %v2641 = vrot.slane %v2639, 3
      %v2642 = vshll.u32 %v1976, 16
      %v2644 = vrot.slane %v2642, 4
      %v2645 = vor.u32 %v2641, %v2644
      %v2647 = vshrl.u32 %v1979, 16
      %v2649 = vrot.slane %v2647, 3
      %v2650 = vshll.u32 %v1979, 16
      %v2652 = vrot.slane %v2650, 4
      %v2653 = vor.u32 %v2649, %v2652
      %v2654 = vsel %vm903, %v2645, %v2653
      %v2656 = vshrl.u32 %v2107, 16
      %v2658 = vrot.slane %v2656, 3
      %v2659 = vshll.u32 %v2107, 16
      %v2661 = vrot.slane %v2659, 4
      %v2662 = vor.u32 %v2658, %v2661
      %v2664 = vshrl.u32 %v2106, 16
      %v2666 = vrot.slane %v2664, 3
      %v2667 = vshll.u32 %v2106, 16
      %v2669 = vrot.slane %v2667, 4
      %v2670 = vor.u32 %v2666, %v2669
      %v2671 = vsel %vm903, %v2662, %v2670
      %v2673 = vshrl.u32 %v1760, 16
      %v2675 = vrot.slane %v2673, 3
      %v2676 = vshll.u32 %v1760, 16
      %v2678 = vrot.slane %v2676, 4
      %v2679 = vor.u32 %v2675, %v2678
      %v2680 = vrot.slane %v1992, 3
      %v2681 = vrot.slane %v1988, 4
      %v2682 = vor.u32 %v2680, %v2681
      %v2683 = vsel %vm903, %v2679, %v2682
      %v2685 = vshrl.u32 %v1991, 16
      %v2687 = vrot.slane %v2685, 3
      %v2688 = vshll.u32 %v1991, 16
      %v2690 = vrot.slane %v2688, 4
      %v2691 = vor.u32 %v2687, %v2690
      %v2693 = vshrl.u32 %v1994, 16
      %v2695 = vrot.slane %v2693, 3
      %v2696 = vshll.u32 %v1994, 16
      %v2698 = vrot.slane %v2696, 4
      %v2699 = vor.u32 %v2695, %v2698
      %v2700 = vsel %vm903, %v2691, %v2699
      %v2702 = vshrl.u32 %v2110, 16
      %v2704 = vrot.slane %v2702, 3
      %v2705 = vshll.u32 %v2110, 16
      %v2707 = vrot.slane %v2705, 4
      %v2708 = vor.u32 %v2704, %v2707
      %v2710 = vshrl.u32 %v2109, 16
      %v2712 = vrot.slane %v2710, 3
      %v2713 = vshll.u32 %v2109, 16
      %v2715 = vrot.slane %v2713, 4
      %v2716 = vor.u32 %v2712, %v2715
      %v2717 = vsel %vm903, %v2708, %v2716
      %v2719 = vshrl.u32 %v1762, 16
      %v2721 = vrot.slane %v2719, 3
      %v2722 = vshll.u32 %v1762, 16
      %v2724 = vrot.slane %v2722, 4
      %v2725 = vor.u32 %v2721, %v2724
      %v2726 = vrot.slane %v2007, 3
      %v2727 = vrot.slane %v2003, 4
      %v2728 = vor.u32 %v2726, %v2727
      %v2729 = vsel %vm903, %v2725, %v2728
      %v2731 = vshrl.u32 %v2006, 16
      %v2733 = vrot.slane %v2731, 3
      %v2734 = vshll.u32 %v2006, 16
      %v2736 = vrot.slane %v2734, 4
      %v2737 = vor.u32 %v2733, %v2736
      %v2739 = vshrl.u32 %v2009, 16
      %v2741 = vrot.slane %v2739, 3
      %v2742 = vshll.u32 %v2009, 16
      %v2744 = vrot.slane %v2742, 4
      %v2745 = vor.u32 %v2741, %v2744
      %v2746 = vsel %vm903, %v2737, %v2745
      %v2748 = vshrl.u32 %v2113, 16
      %v2750 = vrot.slane %v2748, 3
      %v2751 = vshll.u32 %v2113, 16
      %v2753 = vrot.slane %v2751, 4
      %v2754 = vor.u32 %v2750, %v2753
      %v2756 = vshrl.u32 %v2112, 16
      %v2758 = vrot.slane %v2756, 3
      %v2759 = vshll.u32 %v2112, 16
      %v2761 = vrot.slane %v2759, 4
      %v2762 = vor.u32 %v2758, %v2761
      %v2763 = vsel %vm903, %v2754, %v2762
      %v2765 = vshrl.u32 %v1764, 16
      %v2767 = vrot.slane %v2765, 3
      %v2768 = vshll.u32 %v1764, 16
      %v2770 = vrot.slane %v2768, 4
      %v2771 = vor.u32 %v2767, %v2770
      %v2772 = vrot.slane %v2022, 3
      %v2773 = vrot.slane %v2018, 4
      %v2774 = vor.u32 %v2772, %v2773
      %v2775 = vsel %vm903, %v2771, %v2774
      %v2777 = vshrl.u32 %v2021, 16
      %v2779 = vrot.slane %v2777, 3
      %v2780 = vshll.u32 %v2021, 16
      %v2782 = vrot.slane %v2780, 4
      %v2783 = vor.u32 %v2779, %v2782
      %v2785 = vshrl.u32 %v2024, 16
      %v2787 = vrot.slane %v2785, 3
      %v2788 = vshll.u32 %v2024, 16
      %v2790 = vrot.slane %v2788, 4
      %v2791 = vor.u32 %v2787, %v2790
      %v2792 = vsel %vm903, %v2783, %v2791
      %v2794 = vshrl.u32 %v2116, 16
      %v2796 = vrot.slane %v2794, 3
      %v2797 = vshll.u32 %v2116, 16
      %v2799 = vrot.slane %v2797, 4
      %v2800 = vor.u32 %v2796, %v2799
      %v2802 = vshrl.u32 %v2115, 16
      %v2804 = vrot.slane %v2802, 3
      %v2805 = vshll.u32 %v2115, 16
      %v2807 = vrot.slane %v2805, 4
      %v2808 = vor.u32 %v2804, %v2807
      %v2809 = vsel %vm903, %v2800, %v2808
      %v2811 = vshrl.u32 %v1766, 16
      %v2813 = vrot.slane %v2811, 3
      %v2814 = vshll.u32 %v1766, 16
      %v2816 = vrot.slane %v2814, 4
      %v2817 = vor.u32 %v2813, %v2816
      %v2818 = vrot.slane %v2037, 3
      %v2819 = vrot.slane %v2033, 4
      %v2820 = vor.u32 %v2818, %v2819
      %v2821 = vsel %vm903, %v2817, %v2820
      %v2823 = vshrl.u32 %v2036, 16
      %v2825 = vrot.slane %v2823, 3
      %v2826 = vshll.u32 %v2036, 16
      %v2828 = vrot.slane %v2826, 4
      %v2829 = vor.u32 %v2825, %v2828
      %v2831 = vshrl.u32 %v2039, 16
      %v2833 = vrot.slane %v2831, 3
      %v2834 = vshll.u32 %v2039, 16
      %v2836 = vrot.slane %v2834, 4
      %v2837 = vor.u32 %v2833, %v2836
      %v2838 = vsel %vm903, %v2829, %v2837
      %v2840 = vshrl.u32 %v2119, 16
      %v2842 = vrot.slane %v2840, 3
      %v2843 = vshll.u32 %v2119, 16
      %v2845 = vrot.slane %v2843, 4
      %v2846 = vor.u32 %v2842, %v2845
      %v2848 = vshrl.u32 %v2118, 16
      %v2850 = vrot.slane %v2848, 3
      %v2851 = vshll.u32 %v2118, 16
      %v2853 = vrot.slane %v2851, 4
      %v2854 = vor.u32 %v2850, %v2853
      %v2855 = vsel %vm903, %v2846, %v2854
      %s2904 = scalar_lea.vmem %s3, 192
      %v2905 = vld [vmem:[%s2904] sm:$0xf]
      %v2906 = vld [vmem:[%s2904 + $0x4] sm:$0xf]
      %v2907 = vld [vmem:[%s2904 + $0x8] sm:$0xf]
      %v2908 = vld [vmem:[%s2904 + $0xc] sm:$0xf]
      %v2909 = vld [vmem:[%s2904 + $0x10] sm:$0xf]
      %v2910 = vld [vmem:[%s2904 + $0x14] sm:$0xf]
      %v2911 = vld [vmem:[%s2904 + $0x18] sm:$0xf]
      %v2912 = vld [vmem:[%s2904 + $0x1c] sm:$0xf]
      %v2913 = vld [vmem:[%s2904 + $0x20] sm:$0xf]
      %v2914 = vld [vmem:[%s2904 + $0x24] sm:$0xf]
      %v2915 = vld [vmem:[%s2904 + $0x28] sm:$0xf]
      %v2916 = vld [vmem:[%s2904 + $0x2c] sm:$0xf]
      %v2917 = vld [vmem:[%s2904 + $0x30] sm:$0xf]
      %v2918 = vld [vmem:[%s2904 + $0x34] sm:$0xf]
      %v2919 = vld [vmem:[%s2904 + $0x38] sm:$0xf]
      %v2920 = vld [vmem:[%s2904 + $0x3c] sm:$0xf]
      %v2921 = vld [vmem:[%s2904 + $0x40] sm:$0xf]
      %v2922 = vld [vmem:[%s2904 + $0x44] sm:$0xf]
      %v2923 = vld [vmem:[%s2904 + $0x48] sm:$0xf]
      %v2924 = vld [vmem:[%s2904 + $0x4c] sm:$0xf]
      %v2925 = vld [vmem:[%s2904 + $0x50] sm:$0xf]
      %v2926 = vld [vmem:[%s2904 + $0x54] sm:$0xf]
      %v2927 = vld [vmem:[%s2904 + $0x58] sm:$0xf]
      %v2928 = vld [vmem:[%s2904 + $0x5c] sm:$0xf]
      %v2929 = vld [vmem:[%s2904 + $0x60] sm:$0xf]
      %v2930 = vld [vmem:[%s2904 + $0x64] sm:$0xf]
      %v2931 = vld [vmem:[%s2904 + $0x68] sm:$0xf]
      %v2932 = vld [vmem:[%s2904 + $0x6c] sm:$0xf]
      %v2933 = vld [vmem:[%s2904 + $0x70] sm:$0xf]
      %v2934 = vld [vmem:[%s2904 + $0x74] sm:$0xf]
      %v2935 = vld [vmem:[%s2904 + $0x78] sm:$0xf]
      %v2936 = vld [vmem:[%s2904 + $0x7c] sm:$0xf]
      %v2937 = vld [vmem:[%s2904 + $0x80] sm:$0xf]
      %v2938 = vld [vmem:[%s2904 + $0x84] sm:$0xf]
      %v2939 = vld [vmem:[%s2904 + $0x88] sm:$0xf]
      %v2940 = vld [vmem:[%s2904 + $0x8c] sm:$0xf]
      %v2941 = vld [vmem:[%s2904 + $0x90] sm:$0xf]
      %v2942 = vld [vmem:[%s2904 + $0x94] sm:$0xf]
      %v2943 = vld [vmem:[%s2904 + $0x98] sm:$0xf]
      %v2944 = vld [vmem:[%s2904 + $0x9c] sm:$0xf]
      %v2945 = vld [vmem:[%s2904 + $0xa0] sm:$0xf]
      %v2946 = vld [vmem:[%s2904 + $0xa4] sm:$0xf]
      %v2947 = vld [vmem:[%s2904 + $0xa8] sm:$0xf]
      %v2948 = vld [vmem:[%s2904 + $0xac] sm:$0xf]
      %v2949 = vld [vmem:[%s2904 + $0xb0] sm:$0xf]
      %v2950 = vld [vmem:[%s2904 + $0xb4] sm:$0xf]
      %v2951 = vld [vmem:[%s2904 + $0xb8] sm:$0xf]
      %v2952 = vld [vmem:[%s2904 + $0xbc] sm:$0xf]
      %v3001 = vunpack.c.l.b16 %v2905
      %v3002 = vunpack.c.l.b16 %v2906
      %v3003 = vunpack.c.l.b16 %v2907
      %v3004 = vunpack.c.l.b16 %v2908
      %v3005 = vunpack.c.l.b16 %v2909
      %v3006 = vunpack.c.l.b16 %v2910
      %v3007 = vunpack.c.l.b16 %v2911
      %v3008 = vunpack.c.l.b16 %v2912
      %v3009 = vunpack.c.l.b16 %v2913
      %v3010 = vunpack.c.l.b16 %v2914
      %v3011 = vunpack.c.l.b16 %v2915
      %v3012 = vunpack.c.l.b16 %v2916
      %v3013 = vunpack.c.l.b16 %v2917
      %v3014 = vunpack.c.l.b16 %v2918
      %v3015 = vunpack.c.l.b16 %v2919
      %v3016 = vunpack.c.l.b16 %v2920
      %v3017 = vunpack.c.l.b16 %v2921
      %v3018 = vunpack.c.l.b16 %v2922
      %v3019 = vunpack.c.l.b16 %v2923
      %v3020 = vunpack.c.l.b16 %v2924
      %v3021 = vunpack.c.l.b16 %v2925
      %v3022 = vunpack.c.l.b16 %v2926
      %v3023 = vunpack.c.l.b16 %v2927
      %v3024 = vunpack.c.l.b16 %v2928
      %v3025 = vunpack.c.l.b16 %v2929
      %v3026 = vunpack.c.l.b16 %v2930
      %v3027 = vunpack.c.l.b16 %v2931
      %v3028 = vunpack.c.l.b16 %v2932
      %v3029 = vunpack.c.l.b16 %v2933
      %v3030 = vunpack.c.l.b16 %v2934
      %v3031 = vunpack.c.l.b16 %v2935
      %v3032 = vunpack.c.l.b16 %v2936
      %v3033 = vunpack.c.l.b16 %v2937
      %v3034 = vunpack.c.l.b16 %v2938
      %v3035 = vunpack.c.l.b16 %v2939
      %v3036 = vunpack.c.l.b16 %v2940
      %v3037 = vunpack.c.l.b16 %v2941
      %v3038 = vunpack.c.l.b16 %v2942
      %v3039 = vunpack.c.l.b16 %v2943
      %v3040 = vunpack.c.l.b16 %v2944
      %v3041 = vunpack.c.l.b16 %v2945
      %v3042 = vunpack.c.l.b16 %v2946
      %v3043 = vunpack.c.l.b16 %v2947
      %v3044 = vunpack.c.l.b16 %v2948
      %v3045 = vunpack.c.l.b16 %v2949
      %v3046 = vunpack.c.l.b16 %v2950
      %v3047 = vunpack.c.l.b16 %v2951
      %v3048 = vunpack.c.l.b16 %v2952
      %v3049 = vpack.c.b16 %v3002, %v3001
      %v3050 = vpack.c.b16 %v3004, %v3003
      %v3051 = vpack.c.b16 %v3006, %v3005
      %v3052 = vpack.c.b16 %v3008, %v3007
      %v3053 = vpack.c.b16 %v3010, %v3009
      %v3054 = vpack.c.b16 %v3012, %v3011
      %v3055 = vpack.c.b16 %v3014, %v3013
      %v3056 = vpack.c.b16 %v3016, %v3015
      %v3057 = vpack.c.b16 %v3018, %v3017
      %v3058 = vpack.c.b16 %v3020, %v3019
      %v3059 = vpack.c.b16 %v3022, %v3021
      %v3060 = vpack.c.b16 %v3024, %v3023
      %v3061 = vpack.c.b16 %v3026, %v3025
      %v3062 = vpack.c.b16 %v3028, %v3027
      %v3063 = vpack.c.b16 %v3030, %v3029
      %v3064 = vpack.c.b16 %v3032, %v3031
      %v3065 = vpack.c.b16 %v3034, %v3033
      %v3066 = vpack.c.b16 %v3036, %v3035
      %v3067 = vpack.c.b16 %v3038, %v3037
      %v3068 = vpack.c.b16 %v3040, %v3039
      %v3069 = vpack.c.b16 %v3042, %v3041
      %v3070 = vpack.c.b16 %v3044, %v3043
      %v3071 = vpack.c.b16 %v3046, %v3045
      %v3072 = vpack.c.b16 %v3048, %v3047
      %3097 = vmatprep.subr.bf16.mxu0 0
      %3098 = vmatpush1.bf16.msra.mxu0 %v3049
      %3099 = vmatprep.subr.bf16.mxu0 0
      %3100 = vmatpush1.bf16.msra.mxu0 %v3050
      %3101 = vmatprep.subr.bf16.mxu0 0
      %3102 = vmatpush1.bf16.msra.mxu0 %v3051
      %3103 = vmatprep.subr.bf16.mxu0 0
      %3104 = vmatpush1.bf16.msra.mxu0 %v3052
      %3105 = vmatprep.subr.bf16.mxu0 0
      %3106 = vmatpush1.bf16.msra.mxu0 %v3053
      %3107 = vmatprep.subr.bf16.mxu0 0
      %3108 = vmatpush1.bf16.msra.mxu0 %v3054
      %3109 = vmatprep.subr.bf16.mxu0 0
      %3110 = vmatpush1.bf16.msra.mxu0 %v3055
      %3111 = vmatprep.subr.bf16.mxu0 0
      %3112 = vmatpush1.bf16.msra.mxu0 %v3056
      %3113 = vmatprep.subr.bf16.mxu0 0
      %3114 = vmatpush1.bf16.msra.mxu0 %v3057
      %3115 = vmatprep.subr.bf16.mxu0 0
      %3116 = vmatpush1.bf16.msra.mxu0 %v3058
      %3117 = vmatprep.subr.bf16.mxu0 0
      %3118 = vmatpush1.bf16.msra.mxu0 %v3059
      %3119 = vmatprep.subr.bf16.mxu0 0
      %3120 = vmatpush1.bf16.msra.mxu0 %v3060
      %3121 = vmatprep.subr.bf16.mxu0 0
      %3122 = vmatpush1.bf16.msra.mxu0 %v3061
      %3123 = vmatprep.subr.bf16.mxu0 0
      %3124 = vmatpush1.bf16.msra.mxu0 %v3062
      %3125 = vmatprep.subr.bf16.mxu0 0
      %3126 = vmatpush1.bf16.msra.mxu0 %v3063
      %3127 = vmatprep.subr.bf16.mxu0 0
      %3128 = vmatpush1.bf16.msra.mxu0 %v3064
      %3129 = vmatprep.mubr.bf16.mxu0 %v2148
      %3130 = vmatmul.mubr.bf16.gmra.mrb[0].mxu0 %v2131
      %v3131 = vpop.f32.mrb[0].mxu0
      %v3132 = vadd.f32 0.0, %v3131
      %v3133 = vpop.f32.mrb[0].mxu0
      %v3134 = vpop.f32.mrb[0].mxu0
      %v3135 = vadd.f32 0.0, %v3134
      %v3136 = vpop.f32.mrb[0].mxu0
      %3137 = vmatprep.mubr.bf16.mxu0 %v2194
      %3138 = vmatmul.mubr.bf16.gmra.mrb[0].mxu0 %v2177
      %v3139 = vpop.f32.mrb[0].mxu0
      %v3140 = vadd.f32 0.0, %v3139
      %v3141 = vpop.f32.mrb[0].mxu0
      %v3142 = vpop.f32.mrb[0].mxu0
      %v3143 = vadd.f32 0.0, %v3142
      %v3144 = vpop.f32.mrb[0].mxu0
      %3145 = vmatprep.mubr.bf16.mxu0 %v2240
      %3146 = vmatmul.mubr.bf16.gmra.mrb[0].mxu0 %v2223
      %v3147 = vpop.f32.mrb[0].mxu0
      %v3148 = vadd.f32 0.0, %v3147
      %v3149 = vpop.f32.mrb[0].mxu0
      %v3150 = vpop.f32.mrb[0].mxu0
      %v3151 = vadd.f32 0.0, %v3150
      %v3152 = vpop.f32.mrb[0].mxu0
      %3153 = vmatprep.mubr.bf16.mxu0 %v2286
      %3154 = vmatmul.mubr.bf16.gmra.mrb[0].mxu0 %v2269
      %v3155 = vpop.f32.mrb[0].mxu0
      %v3156 = vadd.f32 0.0, %v3155
      %v3157 = vpop.f32.mrb[0].mxu0
      %v3158 = vpop.f32.mrb[0].mxu0
      %v3159 = vadd.f32 0.0, %v3158
      %v3160 = vpop.f32.mrb[0].mxu0
      %3161 = vmatprep.mubr.bf16.mxu0 %v2332
      %3162 = vmatmul.mubr.bf16.gmra.mrb[0].mxu0 %v2315
      %v3163 = vpop.f32.mrb[0].mxu0
      %v3164 = vadd.f32 0.0, %v3163
      %v3165 = vpop.f32.mrb[0].mxu0
      %v3166 = vpop.f32.mrb[0].mxu0
      %v3167 = vadd.f32 0.0, %v3166
      %v3168 = vpop.f32.mrb[0].mxu0
      %3169 = vmatprep.mubr.bf16.mxu0 %v2378
      %3170 = vmatmul.mubr.bf16.gmra.mrb[0].mxu0 %v2361
      %v3171 = vpop.f32.mrb[0].mxu0
      %v3172 = vadd.f32 0.0, %v3171
      %v3173 = vpop.f32.mrb[0].mxu0
      %v3174 = vpop.f32.mrb[0].mxu0
      %v3175 = vadd.f32 0.0, %v3174
      %v3176 = vpop.f32.mrb[0].mxu0
      %3177 = vmatprep.mubr.bf16.mxu0 %v2424
      %3178 = vmatmul.mubr.bf16.gmra.mrb[0].mxu0 %v2407
      %v3179 = vpop.f32.mrb[0].mxu0
      %v3180 = vadd.f32 0.0, %v3179
      %v3181 = vpop.f32.mrb[0].mxu0
      %v3182 = vpop.f32.mrb[0].mxu0
      %v3183 = vadd.f32 0.0, %v3182
      %v3184 = vpop.f32.mrb[0].mxu0
      %3185 = vmatprep.mubr.bf16.mxu0 %v2470
      %3186 = vmatmul.mubr.bf16.gmra.mrb[0].mxu0 %v2453
      %v3187 = vpop.f32.mrb[0].mxu0
      %v3188 = vadd.f32 0.0, %v3187
      %v3189 = vpop.f32.mrb[0].mxu0
      %v3190 = vpop.f32.mrb[0].mxu0
      %v3191 = vadd.f32 0.0, %v3190
      %v3192 = vpop.f32.mrb[0].mxu0
      %3193 = vmatprep.mubr.bf16.mxu0 %v2516
      %3194 = vmatmul.mubr.bf16.gmra.mrb[0].mxu0 %v2499
      %v3195 = vpop.f32.mrb[0].mxu0
      %v3196 = vadd.f32 0.0, %v3195
      %v3197 = vpop.f32.mrb[0].mxu0
      %v3198 = vpop.f32.mrb[0].mxu0
      %v3199 = vadd.f32 0.0, %v3198
      %v3200 = vpop.f32.mrb[0].mxu0
      %3201 = vmatprep.mubr.bf16.mxu0 %v2562
      %3202 = vmatmul.mubr.bf16.gmra.mrb[0].mxu0 %v2545
      %v3203 = vpop.f32.mrb[0].mxu0
      %v3204 = vadd.f32 0.0, %v3203
      %v3205 = vpop.f32.mrb[0].mxu0
      %v3206 = vpop.f32.mrb[0].mxu0
      %v3207 = vadd.f32 0.0, %v3206
      %v3208 = vpop.f32.mrb[0].mxu0
      %3209 = vmatprep.mubr.bf16.mxu0 %v2608
      %3210 = vmatmul.mubr.bf16.gmra.mrb[0].mxu0 %v2591
      %v3211 = vpop.f32.mrb[0].mxu0
      %v3212 = vadd.f32 0.0, %v3211
      %v3213 = vpop.f32.mrb[0].mxu0
      %v3214 = vpop.f32.mrb[0].mxu0
      %v3215 = vadd.f32 0.0, %v3214
      %v3216 = vpop.f32.mrb[0].mxu0
      %3217 = vmatprep.mubr.bf16.mxu0 %v2654
      %3218 = vmatmul.mubr.bf16.gmra.mrb[0].mxu0 %v2637
      %v3219 = vpop.f32.mrb[0].mxu0
      %v3220 = vadd.f32 0.0, %v3219
      %v3221 = vpop.f32.mrb[0].mxu0
      %v3222 = vpop.f32.mrb[0].mxu0
      %v3223 = vadd.f32 0.0, %v3222
      %v3224 = vpop.f32.mrb[0].mxu0
      %3225 = vmatprep.mubr.bf16.mxu0 %v2700
      %3226 = vmatmul.mubr.bf16.gmra.mrb[0].mxu0 %v2683
      %v3227 = vpop.f32.mrb[0].mxu0
      %v3228 = vadd.f32 0.0, %v3227
      %v3229 = vpop.f32.mrb[0].mxu0
      %v3230 = vpop.f32.mrb[0].mxu0
      %v3231 = vadd.f32 0.0, %v3230
      %v3232 = vpop.f32.mrb[0].mxu0
      %3233 = vmatprep.mubr.bf16.mxu0 %v2746
      %3234 = vmatmul.mubr.bf16.gmra.mrb[0].mxu0 %v2729
      %v3235 = vpop.f32.mrb[0].mxu0
      %v3236 = vadd.f32 0.0, %v3235
      %v3237 = vpop.f32.mrb[0].mxu0
      %v3238 = vpop.f32.mrb[0].mxu0
      %v3239 = vadd.f32 0.0, %v3238
      %v3240 = vpop.f32.mrb[0].mxu0
      %3241 = vmatprep.mubr.bf16.mxu0 %v2792
      %3242 = vmatmul.mubr.bf16.gmra.mrb[0].mxu0 %v2775
      %v3243 = vpop.f32.mrb[0].mxu0
      %v3244 = vadd.f32 0.0, %v3243
      %v3245 = vpop.f32.mrb[0].mxu0
      %v3246 = vpop.f32.mrb[0].mxu0
      %v3247 = vadd.f32 0.0, %v3246
      %v3248 = vpop.f32.mrb[0].mxu0
      %3249 = vmatprep.mubr.bf16.mxu0 %v2838
      %3250 = vmatmul.mubr.bf16.gmra.mrb[0].mxu0 %v2821
      %v3251 = vpop.f32.mrb[0].mxu0
      %v3252 = vadd.f32 0.0, %v3251
      %v3253 = vpop.f32.mrb[0].mxu0
      %v3254 = vpop.f32.mrb[0].mxu0
      %v3255 = vadd.f32 0.0, %v3254
      %v3256 = vpop.f32.mrb[0].mxu0
      %3257 = vdwg.mxu0
      %3258 = vmatprep.subr.bf16.mxu0 0
      %3259 = vmatpush1.bf16.msra.mxu0 %v3065
      %3260 = vmatprep.subr.bf16.mxu0 0
      %3261 = vmatpush1.bf16.msra.mxu0 %v3066
      %3262 = vmatprep.subr.bf16.mxu0 0
      %3263 = vmatpush1.bf16.msra.mxu0 %v3067
      %3264 = vmatprep.subr.bf16.mxu0 0
      %3265 = vmatpush1.bf16.msra.mxu0 %v3068
      %3266 = vmatprep.subr.bf16.mxu0 0
      %3267 = vmatpush1.bf16.msra.mxu0 %v3069
      %3268 = vmatprep.subr.bf16.mxu0 0
      %3269 = vmatpush1.bf16.msra.mxu0 %v3070
      %3270 = vmatprep.subr.bf16.mxu0 0
      %3271 = vmatpush1.bf16.msra.mxu0 %v3071
      %3272 = vmatprep.subr.bf16.mxu0 0
      %3273 = vmatpush1.bf16.msra.mxu0 %v3072
      %3274 = vmatprep.subr.bf16.mxu0 0
      %3275 = vmatpush1.bf16.msra.mxu0 0
      %3276 = vmatprep.subr.bf16.mxu0 0
      %3277 = vmatpush1.bf16.msra.mxu0 0
      %3278 = vmatprep.subr.bf16.mxu0 0
      %3279 = vmatpush1.bf16.msra.mxu0 0
      %3280 = vmatprep.subr.bf16.mxu0 0
      %3281 = vmatpush1.bf16.msra.mxu0 0
      %3282 = vmatprep.subr.bf16.mxu0 0
      %3283 = vmatpush1.bf16.msra.mxu0 0
      %3284 = vmatprep.subr.bf16.mxu0 0
      %3285 = vmatpush1.bf16.msra.mxu0 0
      %3286 = vmatprep.subr.bf16.mxu0 0
      %3287 = vmatpush1.bf16.msra.mxu0 0
      %3288 = vmatprep.subr.bf16.mxu0 0
      %3289 = vmatpush1.bf16.msra.mxu0 0
      %3290 = vmatprep.mubr.bf16.mxu0 0
      %3291 = vmatmul.mubr.bf16.gmra.mrb[0].mxu0 %v2165
      %v3292 = vpop.f32.mrb[0].mxu0
      %v3293 = vadd.f32 %v3132, %v3292
      %v3294 = vpop.f32.mrb[0].mxu0
      %v3295 = vpop.f32.mrb[0].mxu0
      %v3296 = vadd.f32 %v3135, %v3295
      %v3297 = vpop.f32.mrb[0].mxu0
      %3298 = vmatprep.mubr.bf16.mxu0 0
      %3299 = vmatmul.mubr.bf16.gmra.mrb[0].mxu0 %v2211
      %v3300 = vpop.f32.mrb[0].mxu0
      %v3301 = vadd.f32 %v3140, %v3300
      %v3302 = vpop.f32.mrb[0].mxu0
      %v3303 = vpop.f32.mrb[0].mxu0
      %v3304 = vadd.f32 %v3143, %v3303
      %v3305 = vpop.f32.mrb[0].mxu0
      %3306 = vmatprep.mubr.bf16.mxu0 0
      %3307 = vmatmul.mubr.bf16.gmra.mrb[0].mxu0 %v2257
      %v3308 = vpop.f32.mrb[0].mxu0
      %v3309 = vadd.f32 %v3148, %v3308
      %v3310 = vpop.f32.mrb[0].mxu0
      %v3311 = vpop.f32.mrb[0].mxu0
      %v3312 = vadd.f32 %v3151, %v3311
      %v3313 = vpop.f32.mrb[0].mxu0
      %3314 = vmatprep.mubr.bf16.mxu0 0
      %3315 = vmatmul.mubr.bf16.gmra.mrb[0].mxu0 %v2303
      %v3316 = vpop.f32.mrb[0].mxu0
      %v3317 = vadd.f32 %v3156, %v3316
      %v3318 = vpop.f32.mrb[0].mxu0
      %v3319 = vpop.f32.mrb[0].mxu0
      %v3320 = vadd.f32 %v3159, %v3319
      %v3321 = vpop.f32.mrb[0].mxu0
      %3322 = vmatprep.mubr.bf16.mxu0 0
      %3323 = vmatmul.mubr.bf16.gmra.mrb[0].mxu0 %v2349
      %v3324 = vpop.f32.mrb[0].mxu0
      %v3325 = vadd.f32 %v3164, %v3324
      %v3326 = vpop.f32.mrb[0].mxu0
      %v3327 = vpop.f32.mrb[0].mxu0
      %v3328 = vadd.f32 %v3167, %v3327
      %v3329 = vpop.f32.mrb[0].mxu0
      %3330 = vmatprep.mubr.bf16.mxu0 0
      %3331 = vmatmul.mubr.bf16.gmra.mrb[0].mxu0 %v2395
      %v3332 = vpop.f32.mrb[0].mxu0
      %v3333 = vadd.f32 %v3172, %v3332
      %v3334 = vpop.f32.mrb[0].mxu0
      %v3335 = vpop.f32.mrb[0].mxu0
      %v3336 = vadd.f32 %v3175, %v3335
      %v3337 = vpop.f32.mrb[0].mxu0
      %3338 = vmatprep.mubr.bf16.mxu0 0
      %3339 = vmatmul.mubr.bf16.gmra.mrb[0].mxu0 %v2441
      %v3340 = vpop.f32.mrb[0].mxu0
      %v3341 = vadd.f32 %v3180, %v3340
      %v3342 = vpop.f32.mrb[0].mxu0
      %v3343 = vpop.f32.mrb[0].mxu0
      %v3344 = vadd.f32 %v3183, %v3343
      %v3345 = vpop.f32.mrb[0].mxu0
      %3346 = vmatprep.mubr.bf16.mxu0 0
      %3347 = vmatmul.mubr.bf16.gmra.mrb[0].mxu0 %v2487
      %v3348 = vpop.f32.mrb[0].mxu0
      %v3349 = vadd.f32 %v3188, %v3348
      %v3350 = vpop.f32.mrb[0].mxu0
      %v3351 = vpop.f32.mrb[0].mxu0
      %v3352 = vadd.f32 %v3191, %v3351
      %v3353 = vpop.f32.mrb[0].mxu0
      %3354 = vmatprep.mubr.bf16.mxu0 0
      %3355 = vmatmul.mubr.bf16.gmra.mrb[0].mxu0 %v2533
      %v3356 = vpop.f32.mrb[0].mxu0
      %v3357 = vadd.f32 %v3196, %v3356
      %v3358 = vpop.f32.mrb[0].mxu0
      %v3359 = vpop.f32.mrb[0].mxu0
      %v3360 = vadd.f32 %v3199, %v3359
      %v3361 = vpop.f32.mrb[0].mxu0
      %3362 = vmatprep.mubr.bf16.mxu0 0
      %3363 = vmatmul.mubr.bf16.gmra.mrb[0].mxu0 %v2579
      %v3364 = vpop.f32.mrb[0].mxu0
      %v3365 = vadd.f32 %v3204, %v3364
      %v3366 = vpop.f32.mrb[0].mxu0
      %v3367 = vpop.f32.mrb[0].mxu0
      %v3368 = vadd.f32 %v3207, %v3367
      %v3369 = vpop.f32.mrb[0].mxu0
      %3370 = vmatprep.mubr.bf16.mxu0 0
      %3371 = vmatmul.mubr.bf16.gmra.mrb[0].mxu0 %v2625
      %v3372 = vpop.f32.mrb[0].mxu0
      %v3373 = vadd.f32 %v3212, %v3372
      %v3374 = vpop.f32.mrb[0].mxu0
      %v3375 = vpop.f32.mrb[0].mxu0
      %v3376 = vadd.f32 %v3215, %v3375
      %v3377 = vpop.f32.mrb[0].mxu0
      %3378 = vmatprep.mubr.bf16.mxu0 0
      %3379 = vmatmul.mubr.bf16.gmra.mrb[0].mxu0 %v2671
      %v3380 = vpop.f32.mrb[0].mxu0
      %v3381 = vadd.f32 %v3220, %v3380
      %v3382 = vpop.f32.mrb[0].mxu0
      %v3383 = vpop.f32.mrb[0].mxu0
      %v3384 = vadd.f32 %v3223, %v3383
      %v3385 = vpop.f32.mrb[0].mxu0
      %3386 = vmatprep.mubr.bf16.mxu0 0
      %3387 = vmatmul.mubr.bf16.gmra.mrb[0].mxu0 %v2717
      %v3388 = vpop.f32.mrb[0].mxu0
      %v3389 = vadd.f32 %v3228, %v3388
      %v3390 = vpop.f32.mrb[0].mxu0
      %v3391 = vpop.f32.mrb[0].mxu0
      %v3392 = vadd.f32 %v3231, %v3391
      %v3393 = vpop.f32.mrb[0].mxu0
      %3394 = vmatprep.mubr.bf16.mxu0 0
      %3395 = vmatmul.mubr.bf16.gmra.mrb[0].mxu0 %v2763
      %v3396 = vpop.f32.mrb[0].mxu0
      %v3397 = vadd.f32 %v3236, %v3396
      %v3398 = vpop.f32.mrb[0].mxu0
      %v3399 = vpop.f32.mrb[0].mxu0
      %v3400 = vadd.f32 %v3239, %v3399
      %v3401 = vpop.f32.mrb[0].mxu0
      %3402 = vmatprep.mubr.bf16.mxu0 0
      %3403 = vmatmul.mubr.bf16.gmra.mrb[0].mxu0 %v2809
      %v3404 = vpop.f32.mrb[0].mxu0
      %v3405 = vadd.f32 %v3244, %v3404
      %v3406 = vpop.f32.mrb[0].mxu0
      %v3407 = vpop.f32.mrb[0].mxu0
      %v3408 = vadd.f32 %v3247, %v3407
      %v3409 = vpop.f32.mrb[0].mxu0
      %3410 = vmatprep.mubr.bf16.mxu0 0
      %3411 = vmatmul.mubr.bf16.gmra.mrb[0].mxu0 %v2855
      %v3412 = vpop.f32.mrb[0].mxu0
      %v3413 = vadd.f32 %v3252, %v3412
      %v3414 = vpop.f32.mrb[0].mxu0
      %v3415 = vpop.f32.mrb[0].mxu0
      %v3416 = vadd.f32 %v3255, %v3415
      %v3417 = vpop.f32.mrb[0].mxu0
      %3418 = vdwg.mxu0
      %v3467 = vunpack.c.l.b16 %v1688
      %v3468 = vunpack.c.l.b16 %v1689
      %v3469 = vunpack.c.l.b16 %v1690
      %v3470 = vunpack.c.l.b16 %v1691
      %v3471 = vunpack.c.l.b16 %v1692
      %v3472 = vunpack.c.l.b16 %v1693
      %v3473 = vunpack.c.l.b16 %v1694
      %v3474 = vunpack.c.l.b16 %v1695
      %v3475 = vunpack.c.l.b16 %v1696
      %v3476 = vunpack.c.l.b16 %v1697
      %v3477 = vunpack.c.l.b16 %v1698
      %v3478 = vunpack.c.l.b16 %v1699
      %v3479 = vunpack.c.l.b16 %v1700
      %v3480 = vunpack.c.l.b16 %v1701
      %v3481 = vunpack.c.l.b16 %v1702
      %v3482 = vunpack.c.l.b16 %v1703
      %v3483 = vunpack.c.l.b16 %v1704
      %v3484 = vunpack.c.l.b16 %v1705
      %v3485 = vunpack.c.l.b16 %v1706
      %v3486 = vunpack.c.l.b16 %v1707
      %v3487 = vunpack.c.l.b16 %v1708
      %v3488 = vunpack.c.l.b16 %v1709
      %v3489 = vunpack.c.l.b16 %v1710
      %v3490 = vunpack.c.l.b16 %v1711
      %v3491 = vunpack.c.l.b16 %v1712
      %v3492 = vunpack.c.l.b16 %v1713
      %v3493 = vunpack.c.l.b16 %v1714
      %v3494 = vunpack.c.l.b16 %v1715
      %v3495 = vunpack.c.l.b16 %v1716
      %v3496 = vunpack.c.l.b16 %v1717
      %v3497 = vunpack.c.l.b16 %v1718
      %v3498 = vunpack.c.l.b16 %v1719
      %v3499 = vunpack.c.l.b16 %v1720
      %v3500 = vunpack.c.l.b16 %v1721
      %v3501 = vunpack.c.l.b16 %v1722
      %v3502 = vunpack.c.l.b16 %v1723
      %v3503 = vunpack.c.l.b16 %v1724
      %v3504 = vunpack.c.l.b16 %v1725
      %v3505 = vunpack.c.l.b16 %v1726
      %v3506 = vunpack.c.l.b16 %v1727
      %v3507 = vunpack.c.l.b16 %v1728
      %v3508 = vunpack.c.l.b16 %v1729
      %v3509 = vunpack.c.l.b16 %v1730
      %v3510 = vunpack.c.l.b16 %v1731
      %v3511 = vunpack.c.l.b16 %v1732
      %v3512 = vunpack.c.l.b16 %v1733
      %v3513 = vunpack.c.l.b16 %v1734
      %v3514 = vunpack.c.l.b16 %v1735
      %v3515 = vpack.c.b16 %v3468, %v3467
      %v3516 = vpack.c.b16 %v3470, %v3469
      %v3517 = vpack.c.b16 %v3472, %v3471
      %v3518 = vpack.c.b16 %v3474, %v3473
      %v3519 = vpack.c.b16 %v3476, %v3475
      %v3520 = vpack.c.b16 %v3478, %v3477
      %v3521 = vpack.c.b16 %v3480, %v3479
      %v3522 = vpack.c.b16 %v3482, %v3481
      %v3523 = vpack.c.b16 %v3484, %v3483
      %v3524 = vpack.c.b16 %v3486, %v3485
      %v3525 = vpack.c.b16 %v3488, %v3487
      %v3526 = vpack.c.b16 %v3490, %v3489
      %v3527 = vpack.c.b16 %v3492, %v3491
      %v3528 = vpack.c.b16 %v3494, %v3493
      %v3529 = vpack.c.b16 %v3496, %v3495
      %v3530 = vpack.c.b16 %v3498, %v3497
      %v3531 = vpack.c.b16 %v3500, %v3499
      %v3532 = vpack.c.b16 %v3502, %v3501
      %v3533 = vpack.c.b16 %v3504, %v3503
      %v3534 = vpack.c.b16 %v3506, %v3505
      %v3535 = vpack.c.b16 %v3508, %v3507
      %v3536 = vpack.c.b16 %v3510, %v3509
      %v3537 = vpack.c.b16 %v3512, %v3511
      %v3538 = vpack.c.b16 %v3514, %v3513
      %3563 = vmatprep.subr.bf16.mxu0 0
      %3564 = vmatpush1.bf16.msra.mxu0 %v3515
      %3565 = vmatprep.subr.bf16.mxu0 0
      %3566 = vmatpush1.bf16.msra.mxu0 %v3516
      %3567 = vmatprep.subr.bf16.mxu0 0
      %3568 = vmatpush1.bf16.msra.mxu0 %v3517
      %3569 = vmatprep.subr.bf16.mxu0 0
      %3570 = vmatpush1.bf16.msra.mxu0 %v3518
      %3571 = vmatprep.subr.bf16.mxu0 0
      %3572 = vmatpush1.bf16.msra.mxu0 %v3519
      %3573 = vmatprep.subr.bf16.mxu0 0
      %3574 = vmatpush1.bf16.msra.mxu0 %v3520
      %3575 = vmatprep.subr.bf16.mxu0 0
      %3576 = vmatpush1.bf16.msra.mxu0 %v3521
      %3577 = vmatprep.subr.bf16.mxu0 0
      %3578 = vmatpush1.bf16.msra.mxu0 %v3522
      %3579 = vmatprep.subr.bf16.mxu0 0
      %3580 = vmatpush1.bf16.msra.mxu0 %v3523
      %3581 = vmatprep.subr.bf16.mxu0 0
      %3582 = vmatpush1.bf16.msra.mxu0 %v3524
      %3583 = vmatprep.subr.bf16.mxu0 0
      %3584 = vmatpush1.bf16.msra.mxu0 %v3525
      %3585 = vmatprep.subr.bf16.mxu0 0
      %3586 = vmatpush1.bf16.msra.mxu0 %v3526
      %3587 = vmatprep.subr.bf16.mxu0 0
      %3588 = vmatpush1.bf16.msra.mxu0 %v3527
      %3589 = vmatprep.subr.bf16.mxu0 0
      %3590 = vmatpush1.bf16.msra.mxu0 %v3528
      %3591 = vmatprep.subr.bf16.mxu0 0
      %3592 = vmatpush1.bf16.msra.mxu0 %v3529
      %3593 = vmatprep.subr.bf16.mxu0 0
      %3594 = vmatpush1.bf16.msra.mxu0 %v3530
      %3595 = vmatprep.mubr.bf16.mxu0 %v932
      %3596 = vmatmul.mubr.bf16.gmra.mrb[0].mxu0 %v915
      %v3597 = vpop.f32.mrb[0].mxu0
      %v3598 = vadd.f32 %v3293, %v3597
      %v3599 = vpop.f32.mrb[0].mxu0
      %v3600 = vpop.f32.mrb[0].mxu0
      %v3601 = vadd.f32 %v3296, %v3600
      %v3602 = vpop.f32.mrb[0].mxu0
      %3603 = vmatprep.mubr.bf16.mxu0 %v978
      %3604 = vmatmul.mubr.bf16.gmra.mrb[0].mxu0 %v961
      %v3605 = vpop.f32.mrb[0].mxu0
      %v3606 = vadd.f32 %v3301, %v3605
      %v3607 = vpop.f32.mrb[0].mxu0
      %v3608 = vpop.f32.mrb[0].mxu0
      %v3609 = vadd.f32 %v3304, %v3608
      %v3610 = vpop.f32.mrb[0].mxu0
      %3611 = vmatprep.mubr.bf16.mxu0 %v1024
      %3612 = vmatmul.mubr.bf16.gmra.mrb[0].mxu0 %v1007
      %v3613 = vpop.f32.mrb[0].mxu0
      %v3614 = vadd.f32 %v3309, %v3613
      %v3615 = vpop.f32.mrb[0].mxu0
      %v3616 = vpop.f32.mrb[0].mxu0
      %v3617 = vadd.f32 %v3312, %v3616
      %v3618 = vpop.f32.mrb[0].mxu0
      %3619 = vmatprep.mubr.bf16.mxu0 %v1070
      %3620 = vmatmul.mubr.bf16.gmra.mrb[0].mxu0 %v1053
      %v3621 = vpop.f32.mrb[0].mxu0
      %v3622 = vadd.f32 %v3317, %v3621
      %v3623 = vpop.f32.mrb[0].mxu0
      %v3624 = vpop.f32.mrb[0].mxu0
      %v3625 = vadd.f32 %v3320, %v3624
      %v3626 = vpop.f32.mrb[0].mxu0
      %3627 = vmatprep.mubr.bf16.mxu0 %v1116
      %3628 = vmatmul.mubr.bf16.gmra.mrb[0].mxu0 %v1099
      %v3629 = vpop.f32.mrb[0].mxu0
      %v3630 = vadd.f32 %v3325, %v3629
      %v3631 = vpop.f32.mrb[0].mxu0
      %v3632 = vpop.f32.mrb[0].mxu0
      %v3633 = vadd.f32 %v3328, %v3632
      %v3634 = vpop.f32.mrb[0].mxu0
      %3635 = vmatprep.mubr.bf16.mxu0 %v1162
      %3636 = vmatmul.mubr.bf16.gmra.mrb[0].mxu0 %v1145
      %v3637 = vpop.f32.mrb[0].mxu0
      %v3638 = vadd.f32 %v3333, %v3637
      %v3639 = vpop.f32.mrb[0].mxu0
      %v3640 = vpop.f32.mrb[0].mxu0
      %v3641 = vadd.f32 %v3336, %v3640
      %v3642 = vpop.f32.mrb[0].mxu0
      %3643 = vmatprep.mubr.bf16.mxu0 %v1208
      %3644 = vmatmul.mubr.bf16.gmra.mrb[0].mxu0 %v1191
      %v3645 = vpop.f32.mrb[0].mxu0
      %v3646 = vadd.f32 %v3341, %v3645
      %v3647 = vpop.f32.mrb[0].mxu0
      %v3648 = vpop.f32.mrb[0].mxu0
      %v3649 = vadd.f32 %v3344, %v3648
      %v3650 = vpop.f32.mrb[0].mxu0
      %3651 = vmatprep.mubr.bf16.mxu0 %v1254
      %3652 = vmatmul.mubr.bf16.gmra.mrb[0].mxu0 %v1237
      %v3653 = vpop.f32.mrb[0].mxu0
      %v3654 = vadd.f32 %v3349, %v3653
      %v3655 = vpop.f32.mrb[0].mxu0
      %v3656 = vpop.f32.mrb[0].mxu0
      %v3657 = vadd.f32 %v3352, %v3656
      %v3658 = vpop.f32.mrb[0].mxu0
      %3659 = vmatprep.mubr.bf16.mxu0 %v1300
      %3660 = vmatmul.mubr.bf16.gmra.mrb[0].mxu0 %v1283
      %v3661 = vpop.f32.mrb[0].mxu0
      %v3662 = vadd.f32 %v3357, %v3661
      %v3663 = vpop.f32.mrb[0].mxu0
      %v3664 = vpop.f32.mrb[0].mxu0
      %v3665 = vadd.f32 %v3360, %v3664
      %v3666 = vpop.f32.mrb[0].mxu0
      %3667 = vmatprep.mubr.bf16.mxu0 %v1346
      %3668 = vmatmul.mubr.bf16.gmra.mrb[0].mxu0 %v1329
      %v3669 = vpop.f32.mrb[0].mxu0
      %v3670 = vadd.f32 %v3365, %v3669
      %v3671 = vpop.f32.mrb[0].mxu0
      %v3672 = vpop.f32.mrb[0].mxu0
      %v3673 = vadd.f32 %v3368, %v3672
      %v3674 = vpop.f32.mrb[0].mxu0
      %3675 = vmatprep.mubr.bf16.mxu0 %v1392
      %3676 = vmatmul.mubr.bf16.gmra.mrb[0].mxu0 %v1375
      %v3677 = vpop.f32.mrb[0].mxu0
      %v3678 = vadd.f32 %v3373, %v3677
      %v3679 = vpop.f32.mrb[0].mxu0
      %v3680 = vpop.f32.mrb[0].mxu0
      %v3681 = vadd.f32 %v3376, %v3680
      %v3682 = vpop.f32.mrb[0].mxu0
      %3683 = vmatprep.mubr.bf16.mxu0 %v1438
      %3684 = vmatmul.mubr.bf16.gmra.mrb[0].mxu0 %v1421
      %v3685 = vpop.f32.mrb[0].mxu0
      %v3686 = vadd.f32 %v3381, %v3685
      %v3687 = vpop.f32.mrb[0].mxu0
      %v3688 = vpop.f32.mrb[0].mxu0
      %v3689 = vadd.f32 %v3384, %v3688
      %v3690 = vpop.f32.mrb[0].mxu0
      %3691 = vmatprep.mubr.bf16.mxu0 %v1484
      %3692 = vmatmul.mubr.bf16.gmra.mrb[0].mxu0 %v1467
      %v3693 = vpop.f32.mrb[0].mxu0
      %v3694 = vadd.f32 %v3389, %v3693
      %v3695 = vpop.f32.mrb[0].mxu0
      %v3696 = vpop.f32.mrb[0].mxu0
      %v3697 = vadd.f32 %v3392, %v3696
      %v3698 = vpop.f32.mrb[0].mxu0
      %3699 = vmatprep.mubr.bf16.mxu0 %v1530
      %3700 = vmatmul.mubr.bf16.gmra.mrb[0].mxu0 %v1513
      %v3701 = vpop.f32.mrb[0].mxu0
      %v3702 = vadd.f32 %v3397, %v3701
      %v3703 = vpop.f32.mrb[0].mxu0
      %v3704 = vpop.f32.mrb[0].mxu0
      %v3705 = vadd.f32 %v3400, %v3704
      %v3706 = vpop.f32.mrb[0].mxu0
      %3707 = vmatprep.mubr.bf16.mxu0 %v1576
      %3708 = vmatmul.mubr.bf16.gmra.mrb[0].mxu0 %v1559
      %v3709 = vpop.f32.mrb[0].mxu0
      %v3710 = vadd.f32 %v3405, %v3709
      %v3711 = vpop.f32.mrb[0].mxu0
      %v3712 = vpop.f32.mrb[0].mxu0
      %v3713 = vadd.f32 %v3408, %v3712
      %v3714 = vpop.f32.mrb[0].mxu0
      %3715 = vmatprep.mubr.bf16.mxu0 %v1622
      %3716 = vmatmul.mubr.bf16.gmra.mrb[0].mxu0 %v1605
      %v3717 = vpop.f32.mrb[0].mxu0
      %v3718 = vadd.f32 %v3413, %v3717
      %v3719 = vpop.f32.mrb[0].mxu0
      %v3720 = vpop.f32.mrb[0].mxu0
      %v3721 = vadd.f32 %v3416, %v3720
      %v3722 = vpop.f32.mrb[0].mxu0
      %3723 = vdwg.mxu0
      %3724 = vmatprep.subr.bf16.mxu0 0
      %3725 = vmatpush1.bf16.msra.mxu0 %v3531
      %3726 = vmatprep.subr.bf16.mxu0 0
      %3727 = vmatpush1.bf16.msra.mxu0 %v3532
      %3728 = vmatprep.subr.bf16.mxu0 0
      %3729 = vmatpush1.bf16.msra.mxu0 %v3533
      %3730 = vmatprep.subr.bf16.mxu0 0
      %3731 = vmatpush1.bf16.msra.mxu0 %v3534
      %3732 = vmatprep.subr.bf16.mxu0 0
      %3733 = vmatpush1.bf16.msra.mxu0 %v3535
      %3734 = vmatprep.subr.bf16.mxu0 0
      %3735 = vmatpush1.bf16.msra.mxu0 %v3536
      %3736 = vmatprep.subr.bf16.mxu0 0
      %3737 = vmatpush1.bf16.msra.mxu0 %v3537
      %3738 = vmatprep.subr.bf16.mxu0 0
      %3739 = vmatpush1.bf16.msra.mxu0 %v3538
      %3740 = vmatprep.subr.bf16.mxu0 0
      %3741 = vmatpush1.bf16.msra.mxu0 0
      %3742 = vmatprep.subr.bf16.mxu0 0
      %3743 = vmatpush1.bf16.msra.mxu0 0
      %3744 = vmatprep.subr.bf16.mxu0 0
      %3745 = vmatpush1.bf16.msra.mxu0 0
      %3746 = vmatprep.subr.bf16.mxu0 0
      %3747 = vmatpush1.bf16.msra.mxu0 0
      %3748 = vmatprep.subr.bf16.mxu0 0
      %3749 = vmatpush1.bf16.msra.mxu0 0
      %3750 = vmatprep.subr.bf16.mxu0 0
      %3751 = vmatpush1.bf16.msra.mxu0 0
      %3752 = vmatprep.subr.bf16.mxu0 0
      %3753 = vmatpush1.bf16.msra.mxu0 0
      %3754 = vmatprep.subr.bf16.mxu0 0
      %3755 = vmatpush1.bf16.msra.mxu0 0
      %3756 = vmatprep.mubr.bf16.mxu0 0
      %3757 = vmatmul.mubr.bf16.gmra.mrb[0].mxu0 %v949
      %v3758 = vpop.f32.mrb[0].mxu0
      %v3759 = vadd.f32 %v3598, %v3758
      %v3760 = vpop.f32.mrb[0].mxu0
      %v3761 = vpop.f32.mrb[0].mxu0
      %v3762 = vadd.f32 %v3601, %v3761
      %v3763 = vpop.f32.mrb[0].mxu0
      %3764 = vmatprep.mubr.bf16.mxu0 0
      %3765 = vmatmul.mubr.bf16.gmra.mrb[0].mxu0 %v995
      %v3766 = vpop.f32.mrb[0].mxu0
      %v3767 = vadd.f32 %v3606, %v3766
      %v3768 = vpop.f32.mrb[0].mxu0
      %v3769 = vpop.f32.mrb[0].mxu0
      %v3770 = vadd.f32 %v3609, %v3769
      %v3771 = vpop.f32.mrb[0].mxu0
      %3772 = vmatprep.mubr.bf16.mxu0 0
      %3773 = vmatmul.mubr.bf16.gmra.mrb[0].mxu0 %v1041
      %v3774 = vpop.f32.mrb[0].mxu0
      %v3775 = vadd.f32 %v3614, %v3774
      %v3776 = vpop.f32.mrb[0].mxu0
      %v3777 = vpop.f32.mrb[0].mxu0
      %v3778 = vadd.f32 %v3617, %v3777
      %v3779 = vpop.f32.mrb[0].mxu0
      %3780 = vmatprep.mubr.bf16.mxu0 0
      %3781 = vmatmul.mubr.bf16.gmra.mrb[0].mxu0 %v1087
      %v3782 = vpop.f32.mrb[0].mxu0
      %v3783 = vadd.f32 %v3622, %v3782
      %v3784 = vpop.f32.mrb[0].mxu0
      %v3785 = vpop.f32.mrb[0].mxu0
      %v3786 = vadd.f32 %v3625, %v3785
      %v3787 = vpop.f32.mrb[0].mxu0
      %3788 = vmatprep.mubr.bf16.mxu0 0
      %3789 = vmatmul.mubr.bf16.gmra.mrb[0].mxu0 %v1133
      %v3790 = vpop.f32.mrb[0].mxu0
      %v3791 = vadd.f32 %v3630, %v3790
      %v3792 = vpop.f32.mrb[0].mxu0
      %v3793 = vpop.f32.mrb[0].mxu0
      %v3794 = vadd.f32 %v3633, %v3793
      %v3795 = vpop.f32.mrb[0].mxu0
      %3796 = vmatprep.mubr.bf16.mxu0 0
      %3797 = vmatmul.mubr.bf16.gmra.mrb[0].mxu0 %v1179
      %v3798 = vpop.f32.mrb[0].mxu0
      %v3799 = vadd.f32 %v3638, %v3798
      %v3800 = vpop.f32.mrb[0].mxu0
      %v3801 = vpop.f32.mrb[0].mxu0
      %v3802 = vadd.f32 %v3641, %v3801
      %v3803 = vpop.f32.mrb[0].mxu0
      %3804 = vmatprep.mubr.bf16.mxu0 0
      %3805 = vmatmul.mubr.bf16.gmra.mrb[0].mxu0 %v1225
      %v3806 = vpop.f32.mrb[0].mxu0
      %v3807 = vadd.f32 %v3646, %v3806
      %v3808 = vpop.f32.mrb[0].mxu0
      %v3809 = vpop.f32.mrb[0].mxu0
      %v3810 = vadd.f32 %v3649, %v3809
      %v3811 = vpop.f32.mrb[0].mxu0
      %3812 = vmatprep.mubr.bf16.mxu0 0
      %3813 = vmatmul.mubr.bf16.gmra.mrb[0].mxu0 %v1271
      %v3814 = vpop.f32.mrb[0].mxu0
      %v3815 = vadd.f32 %v3654, %v3814
      %v3816 = vpop.f32.mrb[0].mxu0
      %v3817 = vpop.f32.mrb[0].mxu0
      %v3818 = vadd.f32 %v3657, %v3817
      %v3819 = vpop.f32.mrb[0].mxu0
      %3820 = vmatprep.mubr.bf16.mxu0 0
      %3821 = vmatmul.mubr.bf16.gmra.mrb[0].mxu0 %v1317
      %v3822 = vpop.f32.mrb[0].mxu0
      %v3823 = vadd.f32 %v3662, %v3822
      %v3824 = vpop.f32.mrb[0].mxu0
      %v3825 = vpop.f32.mrb[0].mxu0
      %v3826 = vadd.f32 %v3665, %v3825
      %v3827 = vpop.f32.mrb[0].mxu0
      %3828 = vmatprep.mubr.bf16.mxu0 0
      %3829 = vmatmul.mubr.bf16.gmra.mrb[0].mxu0 %v1363
      %v3830 = vpop.f32.mrb[0].mxu0
      %v3831 = vadd.f32 %v3670, %v3830
      %v3832 = vpop.f32.mrb[0].mxu0
      %v3833 = vpop.f32.mrb[0].mxu0
      %v3834 = vadd.f32 %v3673, %v3833
      %v3835 = vpop.f32.mrb[0].mxu0
      %3836 = vmatprep.mubr.bf16.mxu0 0
      %3837 = vmatmul.mubr.bf16.gmra.mrb[0].mxu0 %v1409
      %v3838 = vpop.f32.mrb[0].mxu0
      %v3839 = vadd.f32 %v3678, %v3838
      %v3840 = vpop.f32.mrb[0].mxu0
      %v3841 = vpop.f32.mrb[0].mxu0
      %v3842 = vadd.f32 %v3681, %v3841
      %v3843 = vpop.f32.mrb[0].mxu0
      %3844 = vmatprep.mubr.bf16.mxu0 0
      %3845 = vmatmul.mubr.bf16.gmra.mrb[0].mxu0 %v1455
      %v3846 = vpop.f32.mrb[0].mxu0
      %v3847 = vadd.f32 %v3686, %v3846
      %v3848 = vpop.f32.mrb[0].mxu0
      %v3849 = vpop.f32.mrb[0].mxu0
      %v3850 = vadd.f32 %v3689, %v3849
      %v3851 = vpop.f32.mrb[0].mxu0
      %3852 = vmatprep.mubr.bf16.mxu0 0
      %3853 = vmatmul.mubr.bf16.gmra.mrb[0].mxu0 %v1501
      %v3854 = vpop.f32.mrb[0].mxu0
      %v3855 = vadd.f32 %v3694, %v3854
      %v3856 = vpop.f32.mrb[0].mxu0
      %v3857 = vpop.f32.mrb[0].mxu0
      %v3858 = vadd.f32 %v3697, %v3857
      %v3859 = vpop.f32.mrb[0].mxu0
      %3860 = vmatprep.mubr.bf16.mxu0 0
      %3861 = vmatmul.mubr.bf16.gmra.mrb[0].mxu0 %v1547
      %v3862 = vpop.f32.mrb[0].mxu0
      %v3863 = vadd.f32 %v3702, %v3862
      %v3864 = vpop.f32.mrb[0].mxu0
      %v3865 = vpop.f32.mrb[0].mxu0
      %v3866 = vadd.f32 %v3705, %v3865
      %v3867 = vpop.f32.mrb[0].mxu0
      %3868 = vmatprep.mubr.bf16.mxu0 0
      %3869 = vmatmul.mubr.bf16.gmra.mrb[0].mxu0 %v1593
      %v3870 = vpop.f32.mrb[0].mxu0
      %v3871 = vadd.f32 %v3710, %v3870
      %v3872 = vpop.f32.mrb[0].mxu0
      %v3873 = vpop.f32.mrb[0].mxu0
      %v3874 = vadd.f32 %v3713, %v3873
      %v3875 = vpop.f32.mrb[0].mxu0
      %3876 = vmatprep.mubr.bf16.mxu0 0
      %3877 = vmatmul.mubr.bf16.gmra.mrb[0].mxu0 %v1639
      %v3878 = vpop.f32.mrb[0].mxu0
      %v3879 = vadd.f32 %v3718, %v3878
      %v3880 = vpop.f32.mrb[0].mxu0
      %v3881 = vpop.f32.mrb[0].mxu0
      %v3882 = vadd.f32 %v3721, %v3881
      %v3883 = vpop.f32.mrb[0].mxu0
      %3884 = vdwg.mxu0
      %s3885 = scalar_lea.vmem [#allocation2], 32
      %v3886 = vld [vmem:[%s3885] sm:$0xf8]
      %v3887 = vld [vmem:[%s3885 + $0x8] sm:$0xf]
      %v3888 = vld [vmem:[%s3885 + $0x10] sm:$0xf8]
      %v3889 = vld [vmem:[%s3885 + $0x18] sm:$0xf]
      %v3890 = vld [vmem:[%s3885 + $0x20] sm:$0xf8]
      %v3891 = vld [vmem:[%s3885 + $0x28] sm:$0xf]
      %v3892 = vld [vmem:[%s3885 + $0x30] sm:$0xf8]
      %v3893 = vld [vmem:[%s3885 + $0x38] sm:$0xf]
      %v3894 = vld [vmem:[%s3885 + $0x40] sm:$0xf8]
      %v3895 = vld [vmem:[%s3885 + $0x48] sm:$0xf]
      %v3896 = vld [vmem:[%s3885 + $0x50] sm:$0xf8]
      %v3897 = vld [vmem:[%s3885 + $0x58] sm:$0xf]
      %v3898 = vld [vmem:[%s3885 + $0x60] sm:$0xf8]
      %v3899 = vld [vmem:[%s3885 + $0x68] sm:$0xf]
      %v3900 = vld [vmem:[%s3885 + $0x70] sm:$0xf8]
      %v3901 = vld [vmem:[%s3885 + $0x78] sm:$0xf]
      %v3902 = vld [vmem:[%s3885 + $0x80] sm:$0xf8]
      %v3903 = vld [vmem:[%s3885 + $0x88] sm:$0xf]
      %v3904 = vld [vmem:[%s3885 + $0x90] sm:$0xf8]
      %v3905 = vld [vmem:[%s3885 + $0x98] sm:$0xf]
      %v3906 = vld [vmem:[%s3885 + $0xa0] sm:$0xf8]
      %v3907 = vld [vmem:[%s3885 + $0xa8] sm:$0xf]
      %v3908 = vld [vmem:[%s3885 + $0xb0] sm:$0xf8]
      %v3909 = vld [vmem:[%s3885 + $0xb8] sm:$0xf]
      %v3910 = vld [vmem:[%s3885 + $0xc0] sm:$0xf8]
      %v3911 = vld [vmem:[%s3885 + $0xc8] sm:$0xf]
      %v3912 = vld [vmem:[%s3885 + $0xd0] sm:$0xf8]
      %v3913 = vld [vmem:[%s3885 + $0xd8] sm:$0xf]
      %v3914 = vld [vmem:[%s3885 + $0xe0] sm:$0xf8]
      %v3915 = vld [vmem:[%s3885 + $0xe8] sm:$0xf]
      %v3916 = vld [vmem:[%s3885 + $0xf0] sm:$0xf8]
      %v3917 = vld [vmem:[%s3885 + $0xf8] sm:$0xf]
      %v3918 = vld [vmem:[%s3885] sm:$0xf0]
      %v3919 = vld [vmem:[%s3885 + $0x10] sm:$0xf0]
      %v3920 = vld [vmem:[%s3885 + $0x20] sm:$0xf0]
      %v3921 = vld [vmem:[%s3885 + $0x30] sm:$0xf0]
      %v3922 = vld [vmem:[%s3885 + $0x40] sm:$0xf0]
      %v3923 = vld [vmem:[%s3885 + $0x50] sm:$0xf0]
      %v3924 = vld [vmem:[%s3885 + $0x60] sm:$0xf0]
      %v3925 = vld [vmem:[%s3885 + $0x70] sm:$0xf0]
      %v3926 = vld [vmem:[%s3885 + $0x80] sm:$0xf0]
      %v3927 = vld [vmem:[%s3885 + $0x90] sm:$0xf0]
      %v3928 = vld [vmem:[%s3885 + $0xa0] sm:$0xf0]
      %v3929 = vld [vmem:[%s3885 + $0xb0] sm:$0xf0]
      %v3930 = vld [vmem:[%s3885 + $0xc0] sm:$0xf0]
      %v3931 = vld [vmem:[%s3885 + $0xd0] sm:$0xf0]
      %v3932 = vld [vmem:[%s3885 + $0xe0] sm:$0xf0]
      %v3933 = vld [vmem:[%s3885 + $0xf0] sm:$0xf0]
      %v3934 = vld [vmem:[%s3885 + $0x8] sm:$0x1f]
      %v3935 = vld [vmem:[%s3885 + $0x18] sm:$0x1f]
      %v3936 = vld [vmem:[%s3885 + $0x28] sm:$0x1f]
      %v3937 = vld [vmem:[%s3885 + $0x38] sm:$0x1f]
      %v3938 = vld [vmem:[%s3885 + $0x48] sm:$0x1f]
      %v3939 = vld [vmem:[%s3885 + $0x58] sm:$0x1f]
      %v3940 = vld [vmem:[%s3885 + $0x68] sm:$0x1f]
      %v3941 = vld [vmem:[%s3885 + $0x78] sm:$0x1f]
      %v3942 = vld [vmem:[%s3885 + $0x88] sm:$0x1f]
      %v3943 = vld [vmem:[%s3885 + $0x98] sm:$0x1f]
      %v3944 = vld [vmem:[%s3885 + $0xa8] sm:$0x1f]
      %v3945 = vld [vmem:[%s3885 + $0xb8] sm:$0x1f]
      %v3946 = vld [vmem:[%s3885 + $0xc8] sm:$0x1f]
      %v3947 = vld [vmem:[%s3885 + $0xd8] sm:$0x1f]
      %v3948 = vld [vmem:[%s3885 + $0xe8] sm:$0x1f]
      %v3949 = vld [vmem:[%s3885 + $0xf8] sm:$0x1f]
      %v3951 = vshrl.u32 %v3918, 16
      %v3953 = vshll.u32 %v3918, 16
      %v3955 = vrot.slane %v3953, 1
      %v3956 = vor.u32 %v3951, %v3955
      %v3958 = vshll.u32 %v3887, 16
      %v3960 = vrot.slane %v3958, 1
      %v3961 = vsel %vm581, %v3956, %v3960
      %v3962 = vshrl.u32 %v3887, 16
      %v3964 = vor.u32 %v3962, %v3960
      %v3966 = vshrl.u32 %v3919, 16
      %v3968 = vshll.u32 %v3919, 16
      %v3970 = vrot.slane %v3968, 1
      %v3971 = vor.u32 %v3966, %v3970
      %v3973 = vshll.u32 %v3889, 16
      %v3975 = vrot.slane %v3973, 1
      %v3976 = vsel %vm581, %v3971, %v3975
      %v3977 = vshrl.u32 %v3889, 16
      %v3979 = vor.u32 %v3977, %v3975
      %v3981 = vshrl.u32 %v3920, 16
      %v3983 = vshll.u32 %v3920, 16
      %v3985 = vrot.slane %v3983, 1
      %v3986 = vor.u32 %v3981, %v3985
      %v3988 = vshll.u32 %v3891, 16
      %v3990 = vrot.slane %v3988, 1
      %v3991 = vsel %vm581, %v3986, %v3990
      %v3992 = vshrl.u32 %v3891, 16
      %v3994 = vor.u32 %v3992, %v3990
      %v3996 = vshrl.u32 %v3921, 16
      %v3998 = vshll.u32 %v3921, 16
      %v4000 = vrot.slane %v3998, 1
      %v4001 = vor.u32 %v3996, %v4000
      %v4003 = vshll.u32 %v3893, 16
      %v4005 = vrot.slane %v4003, 1
      %v4006 = vsel %vm581, %v4001, %v4005
      %v4007 = vshrl.u32 %v3893, 16
      %v4009 = vor.u32 %v4007, %v4005
      %v4011 = vshrl.u32 %v3922, 16
      %v4013 = vshll.u32 %v3922, 16
      %v4015 = vrot.slane %v4013, 1
      %v4016 = vor.u32 %v4011, %v4015
      %v4018 = vshll.u32 %v3895, 16
      %v4020 = vrot.slane %v4018, 1
      %v4021 = vsel %vm581, %v4016, %v4020
      %v4022 = vshrl.u32 %v3895, 16
      %v4024 = vor.u32 %v4022, %v4020
      %v4026 = vshrl.u32 %v3923, 16
      %v4028 = vshll.u32 %v3923, 16
      %v4030 = vrot.slane %v4028, 1
      %v4031 = vor.u32 %v4026, %v4030
      %v4033 = vshll.u32 %v3897, 16
      %v4035 = vrot.slane %v4033, 1
      %v4036 = vsel %vm581, %v4031, %v4035
      %v4037 = vshrl.u32 %v3897, 16
      %v4039 = vor.u32 %v4037, %v4035
      %v4041 = vshrl.u32 %v3924, 16
      %v4043 = vshll.u32 %v3924, 16
      %v4045 = vrot.slane %v4043, 1
      %v4046 = vor.u32 %v4041, %v4045
      %v4048 = vshll.u32 %v3899, 16
      %v4050 = vrot.slane %v4048, 1
      %v4051 = vsel %vm581, %v4046, %v4050
      %v4052 = vshrl.u32 %v3899, 16
      %v4054 = vor.u32 %v4052, %v4050
      %v4056 = vshrl.u32 %v3925, 16
      %v4058 = vshll.u32 %v3925, 16
      %v4060 = vrot.slane %v4058, 1
      %v4061 = vor.u32 %v4056, %v4060
      %v4063 = vshll.u32 %v3901, 16
      %v4065 = vrot.slane %v4063, 1
      %v4066 = vsel %vm581, %v4061, %v4065
      %v4067 = vshrl.u32 %v3901, 16
      %v4069 = vor.u32 %v4067, %v4065
      %v4071 = vshrl.u32 %v3926, 16
      %v4073 = vshll.u32 %v3926, 16
      %v4075 = vrot.slane %v4073, 1
      %v4076 = vor.u32 %v4071, %v4075
      %v4078 = vshll.u32 %v3903, 16
      %v4080 = vrot.slane %v4078, 1
      %v4081 = vsel %vm581, %v4076, %v4080
      %v4082 = vshrl.u32 %v3903, 16
      %v4084 = vor.u32 %v4082, %v4080
      %v4086 = vshrl.u32 %v3927, 16
      %v4088 = vshll.u32 %v3927, 16
      %v4090 = vrot.slane %v4088, 1
      %v4091 = vor.u32 %v4086, %v4090
      %v4093 = vshll.u32 %v3905, 16
      %v4095 = vrot.slane %v4093, 1
      %v4096 = vsel %vm581, %v4091, %v4095
      %v4097 = vshrl.u32 %v3905, 16
      %v4099 = vor.u32 %v4097, %v4095
      %v4101 = vshrl.u32 %v3928, 16
      %v4103 = vshll.u32 %v3928, 16
      %v4105 = vrot.slane %v4103, 1
      %v4106 = vor.u32 %v4101, %v4105
      %v4108 = vshll.u32 %v3907, 16
      %v4110 = vrot.slane %v4108, 1
      %v4111 = vsel %vm581, %v4106, %v4110
      %v4112 = vshrl.u32 %v3907, 16
      %v4114 = vor.u32 %v4112, %v4110
      %v4116 = vshrl.u32 %v3929, 16
      %v4118 = vshll.u32 %v3929, 16
      %v4120 = vrot.slane %v4118, 1
      %v4121 = vor.u32 %v4116, %v4120
      %v4123 = vshll.u32 %v3909, 16
      %v4125 = vrot.slane %v4123, 1
      %v4126 = vsel %vm581, %v4121, %v4125
      %v4127 = vshrl.u32 %v3909, 16
      %v4129 = vor.u32 %v4127, %v4125
      %v4131 = vshrl.u32 %v3930, 16
      %v4133 = vshll.u32 %v3930, 16
      %v4135 = vrot.slane %v4133, 1
      %v4136 = vor.u32 %v4131, %v4135
      %v4138 = vshll.u32 %v3911, 16
      %v4140 = vrot.slane %v4138, 1
      %v4141 = vsel %vm581, %v4136, %v4140
      %v4142 = vshrl.u32 %v3911, 16
      %v4144 = vor.u32 %v4142, %v4140
      %v4146 = vshrl.u32 %v3931, 16
      %v4148 = vshll.u32 %v3931, 16
      %v4150 = vrot.slane %v4148, 1
      %v4151 = vor.u32 %v4146, %v4150
      %v4153 = vshll.u32 %v3913, 16
      %v4155 = vrot.slane %v4153, 1
      %v4156 = vsel %vm581, %v4151, %v4155
      %v4157 = vshrl.u32 %v3913, 16
      %v4159 = vor.u32 %v4157, %v4155
      %v4161 = vshrl.u32 %v3932, 16
      %v4163 = vshll.u32 %v3932, 16
      %v4165 = vrot.slane %v4163, 1
      %v4166 = vor.u32 %v4161, %v4165
      %v4168 = vshll.u32 %v3915, 16
      %v4170 = vrot.slane %v4168, 1
      %v4171 = vsel %vm581, %v4166, %v4170
      %v4172 = vshrl.u32 %v3915, 16
      %v4174 = vor.u32 %v4172, %v4170
      %v4176 = vshrl.u32 %v3933, 16
      %v4178 = vshll.u32 %v3933, 16
      %v4180 = vrot.slane %v4178, 1
      %v4181 = vor.u32 %v4176, %v4180
      %v4183 = vshll.u32 %v3917, 16
      %v4185 = vrot.slane %v4183, 1
      %v4186 = vsel %vm581, %v4181, %v4185
      %v4187 = vshrl.u32 %v3917, 16
      %v4189 = vor.u32 %v4187, %v4185
      %v4222 = vrot.slane %v3918, 1
      %v4223 = vrot.slane %v3934, 1
      %v4224 = vsel %vm854, %v4222, %v4223
      %v4225 = vrot.slane %v3919, 1
      %v4226 = vrot.slane %v3935, 1
      %v4227 = vsel %vm854, %v4225, %v4226
      %v4228 = vrot.slane %v3920, 1
      %v4229 = vrot.slane %v3936, 1
      %v4230 = vsel %vm854, %v4228, %v4229
      %v4231 = vrot.slane %v3921, 1
      %v4232 = vrot.slane %v3937, 1
      %v4233 = vsel %vm854, %v4231, %v4232
      %v4234 = vrot.slane %v3922, 1
      %v4235 = vrot.slane %v3938, 1
      %v4236 = vsel %vm854, %v4234, %v4235
      %v4237 = vrot.slane %v3923, 1
      %v4238 = vrot.slane %v3939, 1
      %v4239 = vsel %vm854, %v4237, %v4238
      %v4240 = vrot.slane %v3924, 1
      %v4241 = vrot.slane %v3940, 1
      %v4242 = vsel %vm854, %v4240, %v4241
      %v4243 = vrot.slane %v3925, 1
      %v4244 = vrot.slane %v3941, 1
      %v4245 = vsel %vm854, %v4243, %v4244
      %v4246 = vrot.slane %v3926, 1
      %v4247 = vrot.slane %v3942, 1
      %v4248 = vsel %vm854, %v4246, %v4247
      %v4249 = vrot.slane %v3927, 1
      %v4250 = vrot.slane %v3943, 1
      %v4251 = vsel %vm854, %v4249, %v4250
      %v4252 = vrot.slane %v3928, 1
      %v4253 = vrot.slane %v3944, 1
      %v4254 = vsel %vm854, %v4252, %v4253
      %v4255 = vrot.slane %v3929, 1
      %v4256 = vrot.slane %v3945, 1
      %v4257 = vsel %vm854, %v4255, %v4256
      %v4258 = vrot.slane %v3930, 1
      %v4259 = vrot.slane %v3946, 1
      %v4260 = vsel %vm854, %v4258, %v4259
      %v4261 = vrot.slane %v3931, 1
      %v4262 = vrot.slane %v3947, 1
      %v4263 = vsel %vm854, %v4261, %v4262
      %v4264 = vrot.slane %v3932, 1
      %v4265 = vrot.slane %v3948, 1
      %v4266 = vsel %vm854, %v4264, %v4265
      %v4267 = vrot.slane %v3933, 1
      %v4268 = vrot.slane %v3949, 1
      %v4269 = vsel %vm854, %v4267, %v4268
      %v4271 = vshrl.u32 %v3886, 16
      %v4273 = vrot.slane %v4271, 3
      %v4274 = vshll.u32 %v3886, 16
      %v4276 = vrot.slane %v4274, 4
      %v4277 = vor.u32 %v4273, %v4276
      %v4278 = vrot.slane %v3962, 3
      %v4279 = vrot.slane %v3958, 4
      %v4280 = vor.u32 %v4278, %v4279
      %v4281 = vsel %vm903, %v4277, %v4280
      %v4283 = vshrl.u32 %v3961, 16
      %v4285 = vrot.slane %v4283, 3
      %v4286 = vshll.u32 %v3961, 16
      %v4288 = vrot.slane %v4286, 4
      %v4289 = vor.u32 %v4285, %v4288
      %v4291 = vshrl.u32 %v3964, 16
      %v4293 = vrot.slane %v4291, 3
      %v4294 = vshll.u32 %v3964, 16
      %v4296 = vrot.slane %v4294, 4
      %v4297 = vor.u32 %v4293, %v4296
      %v4298 = vsel %vm903, %v4289, %v4297
      %v4300 = vshrl.u32 %v4224, 16
      %v4302 = vrot.slane %v4300, 3
      %v4303 = vshll.u32 %v4224, 16
      %v4305 = vrot.slane %v4303, 4
      %v4306 = vor.u32 %v4302, %v4305
      %v4308 = vshrl.u32 %v4223, 16
      %v4310 = vrot.slane %v4308, 3
      %v4311 = vshll.u32 %v4223, 16
      %v4313 = vrot.slane %v4311, 4
      %v4314 = vor.u32 %v4310, %v4313
      %v4315 = vsel %vm903, %v4306, %v4314
      %v4317 = vshrl.u32 %v3888, 16
      %v4319 = vrot.slane %v4317, 3
      %v4320 = vshll.u32 %v3888, 16
      %v4322 = vrot.slane %v4320, 4
      %v4323 = vor.u32 %v4319, %v4322
      %v4324 = vrot.slane %v3977, 3
      %v4325 = vrot.slane %v3973, 4
      %v4326 = vor.u32 %v4324, %v4325
      %v4327 = vsel %vm903, %v4323, %v4326
      %v4329 = vshrl.u32 %v3976, 16
      %v4331 = vrot.slane %v4329, 3
      %v4332 = vshll.u32 %v3976, 16
      %v4334 = vrot.slane %v4332, 4
      %v4335 = vor.u32 %v4331, %v4334
      %v4337 = vshrl.u32 %v3979, 16
      %v4339 = vrot.slane %v4337, 3
      %v4340 = vshll.u32 %v3979, 16
      %v4342 = vrot.slane %v4340, 4
      %v4343 = vor.u32 %v4339, %v4342
      %v4344 = vsel %vm903, %v4335, %v4343
      %v4346 = vshrl.u32 %v4227, 16
      %v4348 = vrot.slane %v4346, 3
      %v4349 = vshll.u32 %v4227, 16
      %v4351 = vrot.slane %v4349, 4
      %v4352 = vor.u32 %v4348, %v4351
      %v4354 = vshrl.u32 %v4226, 16
      %v4356 = vrot.slane %v4354, 3
      %v4357 = vshll.u32 %v4226, 16
      %v4359 = vrot.slane %v4357, 4
      %v4360 = vor.u32 %v4356, %v4359
      %v4361 = vsel %vm903, %v4352, %v4360
      %v4363 = vshrl.u32 %v3890, 16
      %v4365 = vrot.slane %v4363, 3
      %v4366 = vshll.u32 %v3890, 16
      %v4368 = vrot.slane %v4366, 4
      %v4369 = vor.u32 %v4365, %v4368
      %v4370 = vrot.slane %v3992, 3
      %v4371 = vrot.slane %v3988, 4
      %v4372 = vor.u32 %v4370, %v4371
      %v4373 = vsel %vm903, %v4369, %v4372
      %v4375 = vshrl.u32 %v3991, 16
      %v4377 = vrot.slane %v4375, 3
      %v4378 = vshll.u32 %v3991, 16
      %v4380 = vrot.slane %v4378, 4
      %v4381 = vor.u32 %v4377, %v4380
      %v4383 = vshrl.u32 %v3994, 16
      %v4385 = vrot.slane %v4383, 3
      %v4386 = vshll.u32 %v3994, 16
      %v4388 = vrot.slane %v4386, 4
      %v4389 = vor.u32 %v4385, %v4388
      %v4390 = vsel %vm903, %v4381, %v4389
      %v4392 = vshrl.u32 %v4230, 16
      %v4394 = vrot.slane %v4392, 3
      %v4395 = vshll.u32 %v4230, 16
      %v4397 = vrot.slane %v4395, 4
      %v4398 = vor.u32 %v4394, %v4397
      %v4400 = vshrl.u32 %v4229, 16
      %v4402 = vrot.slane %v4400, 3
      %v4403 = vshll.u32 %v4229, 16
      %v4405 = vrot.slane %v4403, 4
      %v4406 = vor.u32 %v4402, %v4405
      %v4407 = vsel %vm903, %v4398, %v4406
      %v4409 = vshrl.u32 %v3892, 16
      %v4411 = vrot.slane %v4409, 3
      %v4412 = vshll.u32 %v3892, 16
      %v4414 = vrot.slane %v4412, 4
      %v4415 = vor.u32 %v4411, %v4414
      %v4416 = vrot.slane %v4007, 3
      %v4417 = vrot.slane %v4003, 4
      %v4418 = vor.u32 %v4416, %v4417
      %v4419 = vsel %vm903, %v4415, %v4418
      %v4421 = vshrl.u32 %v4006, 16
      %v4423 = vrot.slane %v4421, 3
      %v4424 = vshll.u32 %v4006, 16
      %v4426 = vrot.slane %v4424, 4
      %v4427 = vor.u32 %v4423, %v4426
      %v4429 = vshrl.u32 %v4009, 16
      %v4431 = vrot.slane %v4429, 3
      %v4432 = vshll.u32 %v4009, 16
      %v4434 = vrot.slane %v4432, 4
      %v4435 = vor.u32 %v4431, %v4434
      %v4436 = vsel %vm903, %v4427, %v4435
      %v4438 = vshrl.u32 %v4233, 16
      %v4440 = vrot.slane %v4438, 3
      %v4441 = vshll.u32 %v4233, 16
      %v4443 = vrot.slane %v4441, 4
      %v4444 = vor.u32 %v4440, %v4443
      %v4446 = vshrl.u32 %v4232, 16
      %v4448 = vrot.slane %v4446, 3
      %v4449 = vshll.u32 %v4232, 16
      %v4451 = vrot.slane %v4449, 4
      %v4452 = vor.u32 %v4448, %v4451
      %v4453 = vsel %vm903, %v4444, %v4452
      %v4455 = vshrl.u32 %v3894, 16
      %v4457 = vrot.slane %v4455, 3
      %v4458 = vshll.u32 %v3894, 16
      %v4460 = vrot.slane %v4458, 4
      %v4461 = vor.u32 %v4457, %v4460
      %v4462 = vrot.slane %v4022, 3
      %v4463 = vrot.slane %v4018, 4
      %v4464 = vor.u32 %v4462, %v4463
      %v4465 = vsel %vm903, %v4461, %v4464
      %v4467 = vshrl.u32 %v4021, 16
      %v4469 = vrot.slane %v4467, 3
      %v4470 = vshll.u32 %v4021, 16
      %v4472 = vrot.slane %v4470, 4
      %v4473 = vor.u32 %v4469, %v4472
      %v4475 = vshrl.u32 %v4024, 16
      %v4477 = vrot.slane %v4475, 3
      %v4478 = vshll.u32 %v4024, 16
      %v4480 = vrot.slane %v4478, 4
      %v4481 = vor.u32 %v4477, %v4480
      %v4482 = vsel %vm903, %v4473, %v4481
      %v4484 = vshrl.u32 %v4236, 16
      %v4486 = vrot.slane %v4484, 3
      %v4487 = vshll.u32 %v4236, 16
      %v4489 = vrot.slane %v4487, 4
      %v4490 = vor.u32 %v4486, %v4489
      %v4492 = vshrl.u32 %v4235, 16
      %v4494 = vrot.slane %v4492, 3
      %v4495 = vshll.u32 %v4235, 16
      %v4497 = vrot.slane %v4495, 4
      %v4498 = vor.u32 %v4494, %v4497
      %v4499 = vsel %vm903, %v4490, %v4498
      %v4501 = vshrl.u32 %v3896, 16
      %v4503 = vrot.slane %v4501, 3
      %v4504 = vshll.u32 %v3896, 16
      %v4506 = vrot.slane %v4504, 4
      %v4507 = vor.u32 %v4503, %v4506
      %v4508 = vrot.slane %v4037, 3
      %v4509 = vrot.slane %v4033, 4
      %v4510 = vor.u32 %v4508, %v4509
      %v4511 = vsel %vm903, %v4507, %v4510
      %v4513 = vshrl.u32 %v4036, 16
      %v4515 = vrot.slane %v4513, 3
      %v4516 = vshll.u32 %v4036, 16
      %v4518 = vrot.slane %v4516, 4
      %v4519 = vor.u32 %v4515, %v4518
      %v4521 = vshrl.u32 %v4039, 16
      %v4523 = vrot.slane %v4521, 3
      %v4524 = vshll.u32 %v4039, 16
      %v4526 = vrot.slane %v4524, 4
      %v4527 = vor.u32 %v4523, %v4526
      %v4528 = vsel %vm903, %v4519, %v4527
      %v4530 = vshrl.u32 %v4239, 16
      %v4532 = vrot.slane %v4530, 3
      %v4533 = vshll.u32 %v4239, 16
      %v4535 = vrot.slane %v4533, 4
      %v4536 = vor.u32 %v4532, %v4535
      %v4538 = vshrl.u32 %v4238, 16
      %v4540 = vrot.slane %v4538, 3
      %v4541 = vshll.u32 %v4238, 16
      %v4543 = vrot.slane %v4541, 4
      %v4544 = vor.u32 %v4540, %v4543
      %v4545 = vsel %vm903, %v4536, %v4544
      %v4547 = vshrl.u32 %v3898, 16
      %v4549 = vrot.slane %v4547, 3
      %v4550 = vshll.u32 %v3898, 16
      %v4552 = vrot.slane %v4550, 4
      %v4553 = vor.u32 %v4549, %v4552
      %v4554 = vrot.slane %v4052, 3
      %v4555 = vrot.slane %v4048, 4
      %v4556 = vor.u32 %v4554, %v4555
      %v4557 = vsel %vm903, %v4553, %v4556
      %v4559 = vshrl.u32 %v4051, 16
      %v4561 = vrot.slane %v4559, 3
      %v4562 = vshll.u32 %v4051, 16
      %v4564 = vrot.slane %v4562, 4
      %v4565 = vor.u32 %v4561, %v4564
      %v4567 = vshrl.u32 %v4054, 16
      %v4569 = vrot.slane %v4567, 3
      %v4570 = vshll.u32 %v4054, 16
      %v4572 = vrot.slane %v4570, 4
      %v4573 = vor.u32 %v4569, %v4572
      %v4574 = vsel %vm903, %v4565, %v4573
      %v4576 = vshrl.u32 %v4242, 16
      %v4578 = vrot.slane %v4576, 3
      %v4579 = vshll.u32 %v4242, 16
      %v4581 = vrot.slane %v4579, 4
      %v4582 = vor.u32 %v4578, %v4581
      %v4584 = vshrl.u32 %v4241, 16
      %v4586 = vrot.slane %v4584, 3
      %v4587 = vshll.u32 %v4241, 16
      %v4589 = vrot.slane %v4587, 4
      %v4590 = vor.u32 %v4586, %v4589
      %v4591 = vsel %vm903, %v4582, %v4590
      %v4593 = vshrl.u32 %v3900, 16
      %v4595 = vrot.slane %v4593, 3
      %v4596 = vshll.u32 %v3900, 16
      %v4598 = vrot.slane %v4596, 4
      %v4599 = vor.u32 %v4595, %v4598
      %v4600 = vrot.slane %v4067, 3
      %v4601 = vrot.slane %v4063, 4
      %v4602 = vor.u32 %v4600, %v4601
      %v4603 = vsel %vm903, %v4599, %v4602
      %v4605 = vshrl.u32 %v4066, 16
      %v4607 = vrot.slane %v4605, 3
      %v4608 = vshll.u32 %v4066, 16
      %v4610 = vrot.slane %v4608, 4
      %v4611 = vor.u32 %v4607, %v4610
      %v4613 = vshrl.u32 %v4069, 16
      %v4615 = vrot.slane %v4613, 3
      %v4616 = vshll.u32 %v4069, 16
      %v4618 = vrot.slane %v4616, 4
      %v4619 = vor.u32 %v4615, %v4618
      %v4620 = vsel %vm903, %v4611, %v4619
      %v4622 = vshrl.u32 %v4245, 16
      %v4624 = vrot.slane %v4622, 3
      %v4625 = vshll.u32 %v4245, 16
      %v4627 = vrot.slane %v4625, 4
      %v4628 = vor.u32 %v4624, %v4627
      %v4630 = vshrl.u32 %v4244, 16
      %v4632 = vrot.slane %v4630, 3
      %v4633 = vshll.u32 %v4244, 16
      %v4635 = vrot.slane %v4633, 4
      %v4636 = vor.u32 %v4632, %v4635
      %v4637 = vsel %vm903, %v4628, %v4636
      %v4639 = vshrl.u32 %v3902, 16
      %v4641 = vrot.slane %v4639, 3
      %v4642 = vshll.u32 %v3902, 16
      %v4644 = vrot.slane %v4642, 4
      %v4645 = vor.u32 %v4641, %v4644
      %v4646 = vrot.slane %v4082, 3
      %v4647 = vrot.slane %v4078, 4
      %v4648 = vor.u32 %v4646, %v4647
      %v4649 = vsel %vm903, %v4645, %v4648
      %v4651 = vshrl.u32 %v4081, 16
      %v4653 = vrot.slane %v4651, 3
      %v4654 = vshll.u32 %v4081, 16
      %v4656 = vrot.slane %v4654, 4
      %v4657 = vor.u32 %v4653, %v4656
      %v4659 = vshrl.u32 %v4084, 16
      %v4661 = vrot.slane %v4659, 3
      %v4662 = vshll.u32 %v4084, 16
      %v4664 = vrot.slane %v4662, 4
      %v4665 = vor.u32 %v4661, %v4664
      %v4666 = vsel %vm903, %v4657, %v4665
      %v4668 = vshrl.u32 %v4248, 16
      %v4670 = vrot.slane %v4668, 3
      %v4671 = vshll.u32 %v4248, 16
      %v4673 = vrot.slane %v4671, 4
      %v4674 = vor.u32 %v4670, %v4673
      %v4676 = vshrl.u32 %v4247, 16
      %v4678 = vrot.slane %v4676, 3
      %v4679 = vshll.u32 %v4247, 16
      %v4681 = vrot.slane %v4679, 4
      %v4682 = vor.u32 %v4678, %v4681
      %v4683 = vsel %vm903, %v4674, %v4682
      %v4685 = vshrl.u32 %v3904, 16
      %v4687 = vrot.slane %v4685, 3
      %v4688 = vshll.u32 %v3904, 16
      %v4690 = vrot.slane %v4688, 4
      %v4691 = vor.u32 %v4687, %v4690
      %v4692 = vrot.slane %v4097, 3
      %v4693 = vrot.slane %v4093, 4
      %v4694 = vor.u32 %v4692, %v4693
      %v4695 = vsel %vm903, %v4691, %v4694
      %v4697 = vshrl.u32 %v4096, 16
      %v4699 = vrot.slane %v4697, 3
      %v4700 = vshll.u32 %v4096, 16
      %v4702 = vrot.slane %v4700, 4
      %v4703 = vor.u32 %v4699, %v4702
      %v4705 = vshrl.u32 %v4099, 16
      %v4707 = vrot.slane %v4705, 3
      %v4708 = vshll.u32 %v4099, 16
      %v4710 = vrot.slane %v4708, 4
      %v4711 = vor.u32 %v4707, %v4710
      %v4712 = vsel %vm903, %v4703, %v4711
      %v4714 = vshrl.u32 %v4251, 16
      %v4716 = vrot.slane %v4714, 3
      %v4717 = vshll.u32 %v4251, 16
      %v4719 = vrot.slane %v4717, 4
      %v4720 = vor.u32 %v4716, %v4719
      %v4722 = vshrl.u32 %v4250, 16
      %v4724 = vrot.slane %v4722, 3
      %v4725 = vshll.u32 %v4250, 16
      %v4727 = vrot.slane %v4725, 4
      %v4728 = vor.u32 %v4724, %v4727
      %v4729 = vsel %vm903, %v4720, %v4728
      %v4731 = vshrl.u32 %v3906, 16
      %v4733 = vrot.slane %v4731, 3
      %v4734 = vshll.u32 %v3906, 16
      %v4736 = vrot.slane %v4734, 4
      %v4737 = vor.u32 %v4733, %v4736
      %v4738 = vrot.slane %v4112, 3
      %v4739 = vrot.slane %v4108, 4
      %v4740 = vor.u32 %v4738, %v4739
      %v4741 = vsel %vm903, %v4737, %v4740
      %v4743 = vshrl.u32 %v4111, 16
      %v4745 = vrot.slane %v4743, 3
      %v4746 = vshll.u32 %v4111, 16
      %v4748 = vrot.slane %v4746, 4
      %v4749 = vor.u32 %v4745, %v4748
      %v4751 = vshrl.u32 %v4114, 16
      %v4753 = vrot.slane %v4751, 3
      %v4754 = vshll.u32 %v4114, 16
      %v4756 = vrot.slane %v4754, 4
      %v4757 = vor.u32 %v4753, %v4756
      %v4758 = vsel %vm903, %v4749, %v4757
      %v4760 = vshrl.u32 %v4254, 16
      %v4762 = vrot.slane %v4760, 3
      %v4763 = vshll.u32 %v4254, 16
      %v4765 = vrot.slane %v4763, 4
      %v4766 = vor.u32 %v4762, %v4765
      %v4768 = vshrl.u32 %v4253, 16
      %v4770 = vrot.slane %v4768, 3
      %v4771 = vshll.u32 %v4253, 16
      %v4773 = vrot.slane %v4771, 4
      %v4774 = vor.u32 %v4770, %v4773
      %v4775 = vsel %vm903, %v4766, %v4774
      %v4777 = vshrl.u32 %v3908, 16
      %v4779 = vrot.slane %v4777, 3
      %v4780 = vshll.u32 %v3908, 16
      %v4782 = vrot.slane %v4780, 4
      %v4783 = vor.u32 %v4779, %v4782
      %v4784 = vrot.slane %v4127, 3
      %v4785 = vrot.slane %v4123, 4
      %v4786 = vor.u32 %v4784, %v4785
      %v4787 = vsel %vm903, %v4783, %v4786
      %v4789 = vshrl.u32 %v4126, 16
      %v4791 = vrot.slane %v4789, 3
      %v4792 = vshll.u32 %v4126, 16
      %v4794 = vrot.slane %v4792, 4
      %v4795 = vor.u32 %v4791, %v4794
      %v4797 = vshrl.u32 %v4129, 16
      %v4799 = vrot.slane %v4797, 3
      %v4800 = vshll.u32 %v4129, 16
      %v4802 = vrot.slane %v4800, 4
      %v4803 = vor.u32 %v4799, %v4802
      %v4804 = vsel %vm903, %v4795, %v4803
      %v4806 = vshrl.u32 %v4257, 16
      %v4808 = vrot.slane %v4806, 3
      %v4809 = vshll.u32 %v4257, 16
      %v4811 = vrot.slane %v4809, 4
      %v4812 = vor.u32 %v4808, %v4811
      %v4814 = vshrl.u32 %v4256, 16
      %v4816 = vrot.slane %v4814, 3
      %v4817 = vshll.u32 %v4256, 16
      %v4819 = vrot.slane %v4817, 4
      %v4820 = vor.u32 %v4816, %v4819
      %v4821 = vsel %vm903, %v4812, %v4820
      %v4823 = vshrl.u32 %v3910, 16
      %v4825 = vrot.slane %v4823, 3
      %v4826 = vshll.u32 %v3910, 16
      %v4828 = vrot.slane %v4826, 4
      %v4829 = vor.u32 %v4825, %v4828
      %v4830 = vrot.slane %v4142, 3
      %v4831 = vrot.slane %v4138, 4
      %v4832 = vor.u32 %v4830, %v4831
      %v4833 = vsel %vm903, %v4829, %v4832
      %v4835 = vshrl.u32 %v4141, 16
      %v4837 = vrot.slane %v4835, 3
      %v4838 = vshll.u32 %v4141, 16
      %v4840 = vrot.slane %v4838, 4
      %v4841 = vor.u32 %v4837, %v4840
      %v4843 = vshrl.u32 %v4144, 16
      %v4845 = vrot.slane %v4843, 3
      %v4846 = vshll.u32 %v4144, 16
      %v4848 = vrot.slane %v4846, 4
      %v4849 = vor.u32 %v4845, %v4848
      %v4850 = vsel %vm903, %v4841, %v4849
      %v4852 = vshrl.u32 %v4260, 16
      %v4854 = vrot.slane %v4852, 3
      %v4855 = vshll.u32 %v4260, 16
      %v4857 = vrot.slane %v4855, 4
      %v4858 = vor.u32 %v4854, %v4857
      %v4860 = vshrl.u32 %v4259, 16
      %v4862 = vrot.slane %v4860, 3
      %v4863 = vshll.u32 %v4259, 16
      %v4865 = vrot.slane %v4863, 4
      %v4866 = vor.u32 %v4862, %v4865
      %v4867 = vsel %vm903, %v4858, %v4866
      %v4869 = vshrl.u32 %v3912, 16
      %v4871 = vrot.slane %v4869, 3
      %v4872 = vshll.u32 %v3912, 16
      %v4874 = vrot.slane %v4872, 4
      %v4875 = vor.u32 %v4871, %v4874
      %v4876 = vrot.slane %v4157, 3
      %v4877 = vrot.slane %v4153, 4
      %v4878 = vor.u32 %v4876, %v4877
      %v4879 = vsel %vm903, %v4875, %v4878
      %v4881 = vshrl.u32 %v4156, 16
      %v4883 = vrot.slane %v4881, 3
      %v4884 = vshll.u32 %v4156, 16
      %v4886 = vrot.slane %v4884, 4
      %v4887 = vor.u32 %v4883, %v4886
      %v4889 = vshrl.u32 %v4159, 16
      %v4891 = vrot.slane %v4889, 3
      %v4892 = vshll.u32 %v4159, 16
      %v4894 = vrot.slane %v4892, 4
      %v4895 = vor.u32 %v4891, %v4894
      %v4896 = vsel %vm903, %v4887, %v4895
      %v4898 = vshrl.u32 %v4263, 16
      %v4900 = vrot.slane %v4898, 3
      %v4901 = vshll.u32 %v4263, 16
      %v4903 = vrot.slane %v4901, 4
      %v4904 = vor.u32 %v4900, %v4903
      %v4906 = vshrl.u32 %v4262, 16
      %v4908 = vrot.slane %v4906, 3
      %v4909 = vshll.u32 %v4262, 16
      %v4911 = vrot.slane %v4909, 4
      %v4912 = vor.u32 %v4908, %v4911
      %v4913 = vsel %vm903, %v4904, %v4912
      %v4915 = vshrl.u32 %v3914, 16
      %v4917 = vrot.slane %v4915, 3
      %v4918 = vshll.u32 %v3914, 16
      %v4920 = vrot.slane %v4918, 4
      %v4921 = vor.u32 %v4917, %v4920
      %v4922 = vrot.slane %v4172, 3
      %v4923 = vrot.slane %v4168, 4
      %v4924 = vor.u32 %v4922, %v4923
      %v4925 = vsel %vm903, %v4921, %v4924
      %v4927 = vshrl.u32 %v4171, 16
      %v4929 = vrot.slane %v4927, 3
      %v4930 = vshll.u32 %v4171, 16
      %v4932 = vrot.slane %v4930, 4
      %v4933 = vor.u32 %v4929, %v4932
      %v4935 = vshrl.u32 %v4174, 16
      %v4937 = vrot.slane %v4935, 3
      %v4938 = vshll.u32 %v4174, 16
      %v4940 = vrot.slane %v4938, 4
      %v4941 = vor.u32 %v4937, %v4940
      %v4942 = vsel %vm903, %v4933, %v4941
      %v4944 = vshrl.u32 %v4266, 16
      %v4946 = vrot.slane %v4944, 3
      %v4947 = vshll.u32 %v4266, 16
      %v4949 = vrot.slane %v4947, 4
      %v4950 = vor.u32 %v4946, %v4949
      %v4952 = vshrl.u32 %v4265, 16
      %v4954 = vrot.slane %v4952, 3
      %v4955 = vshll.u32 %v4265, 16
      %v4957 = vrot.slane %v4955, 4
      %v4958 = vor.u32 %v4954, %v4957
      %v4959 = vsel %vm903, %v4950, %v4958
      %v4961 = vshrl.u32 %v3916, 16
      %v4963 = vrot.slane %v4961, 3
      %v4964 = vshll.u32 %v3916, 16
      %v4966 = vrot.slane %v4964, 4
      %v4967 = vor.u32 %v4963, %v4966
      %v4968 = vrot.slane %v4187, 3
      %v4969 = vrot.slane %v4183, 4
      %v4970 = vor.u32 %v4968, %v4969
      %v4971 = vsel %vm903, %v4967, %v4970
      %v4973 = vshrl.u32 %v4186, 16
      %v4975 = vrot.slane %v4973, 3
      %v4976 = vshll.u32 %v4186, 16
      %v4978 = vrot.slane %v4976, 4
      %v4979 = vor.u32 %v4975, %v4978
      %v4981 = vshrl.u32 %v4189, 16
      %v4983 = vrot.slane %v4981, 3
      %v4984 = vshll.u32 %v4189, 16
      %v4986 = vrot.slane %v4984, 4
      %v4987 = vor.u32 %v4983, %v4986
      %v4988 = vsel %vm903, %v4979, %v4987
      %v4990 = vshrl.u32 %v4269, 16
      %v4992 = vrot.slane %v4990, 3
      %v4993 = vshll.u32 %v4269, 16
      %v4995 = vrot.slane %v4993, 4
      %v4996 = vor.u32 %v4992, %v4995
      %v4998 = vshrl.u32 %v4268, 16
      %v5000 = vrot.slane %v4998, 3
      %v5001 = vshll.u32 %v4268, 16
      %v5003 = vrot.slane %v5001, 4
      %v5004 = vor.u32 %v5000, %v5003
      %v5005 = vsel %vm903, %v4996, %v5004
      %s5054 = scalar_lea.vmem %s3, 384
      %v5055 = vld [vmem:[%s5054] sm:$0xf]
      %v5056 = vld [vmem:[%s5054 + $0x4] sm:$0xf]
      %v5057 = vld [vmem:[%s5054 + $0x8] sm:$0xf]
      %v5058 = vld [vmem:[%s5054 + $0xc] sm:$0xf]
      %v5059 = vld [vmem:[%s5054 + $0x10] sm:$0xf]
      %v5060 = vld [vmem:[%s5054 + $0x14] sm:$0xf]
      %v5061 = vld [vmem:[%s5054 + $0x18] sm:$0xf]
      %v5062 = vld [vmem:[%s5054 + $0x1c] sm:$0xf]
      %v5063 = vld [vmem:[%s5054 + $0x20] sm:$0xf]
      %v5064 = vld [vmem:[%s5054 + $0x24] sm:$0xf]
      %v5065 = vld [vmem:[%s5054 + $0x28] sm:$0xf]
      %v5066 = vld [vmem:[%s5054 + $0x2c] sm:$0xf]
      %v5067 = vld [vmem:[%s5054 + $0x30] sm:$0xf]
      %v5068 = vld [vmem:[%s5054 + $0x34] sm:$0xf]
      %v5069 = vld [vmem:[%s5054 + $0x38] sm:$0xf]
      %v5070 = vld [vmem:[%s5054 + $0x3c] sm:$0xf]
      %v5071 = vld [vmem:[%s5054 + $0x40] sm:$0xf]
      %v5072 = vld [vmem:[%s5054 + $0x44] sm:$0xf]
      %v5073 = vld [vmem:[%s5054 + $0x48] sm:$0xf]
      %v5074 = vld [vmem:[%s5054 + $0x4c] sm:$0xf]
      %v5075 = vld [vmem:[%s5054 + $0x50] sm:$0xf]
      %v5076 = vld [vmem:[%s5054 + $0x54] sm:$0xf]
      %v5077 = vld [vmem:[%s5054 + $0x58] sm:$0xf]
      %v5078 = vld [vmem:[%s5054 + $0x5c] sm:$0xf]
      %v5079 = vld [vmem:[%s5054 + $0x60] sm:$0xf]
      %v5080 = vld [vmem:[%s5054 + $0x64] sm:$0xf]
      %v5081 = vld [vmem:[%s5054 + $0x68] sm:$0xf]
      %v5082 = vld [vmem:[%s5054 + $0x6c] sm:$0xf]
      %v5083 = vld [vmem:[%s5054 + $0x70] sm:$0xf]
      %v5084 = vld [vmem:[%s5054 + $0x74] sm:$0xf]
      %v5085 = vld [vmem:[%s5054 + $0x78] sm:$0xf]
      %v5086 = vld [vmem:[%s5054 + $0x7c] sm:$0xf]
      %v5087 = vld [vmem:[%s5054 + $0x80] sm:$0xf]
      %v5088 = vld [vmem:[%s5054 + $0x84] sm:$0xf]
      %v5089 = vld [vmem:[%s5054 + $0x88] sm:$0xf]
      %v5090 = vld [vmem:[%s5054 + $0x8c] sm:$0xf]
      %v5091 = vld [vmem:[%s5054 + $0x90] sm:$0xf]
      %v5092 = vld [vmem:[%s5054 + $0x94] sm:$0xf]
      %v5093 = vld [vmem:[%s5054 + $0x98] sm:$0xf]
      %v5094 = vld [vmem:[%s5054 + $0x9c] sm:$0xf]
      %v5095 = vld [vmem:[%s5054 + $0xa0] sm:$0xf]
      %v5096 = vld [vmem:[%s5054 + $0xa4] sm:$0xf]
      %v5097 = vld [vmem:[%s5054 + $0xa8] sm:$0xf]
      %v5098 = vld [vmem:[%s5054 + $0xac] sm:$0xf]
      %v5099 = vld [vmem:[%s5054 + $0xb0] sm:$0xf]
      %v5100 = vld [vmem:[%s5054 + $0xb4] sm:$0xf]
      %v5101 = vld [vmem:[%s5054 + $0xb8] sm:$0xf]
      %v5102 = vld [vmem:[%s5054 + $0xbc] sm:$0xf]
      %v5151 = vunpack.c.l.b16 %v5055
      %v5152 = vunpack.c.l.b16 %v5056
      %v5153 = vunpack.c.l.b16 %v5057
      %v5154 = vunpack.c.l.b16 %v5058
      %v5155 = vunpack.c.l.b16 %v5059
      %v5156 = vunpack.c.l.b16 %v5060
      %v5157 = vunpack.c.l.b16 %v5061
      %v5158 = vunpack.c.l.b16 %v5062
      %v5159 = vunpack.c.l.b16 %v5063
      %v5160 = vunpack.c.l.b16 %v5064
      %v5161 = vunpack.c.l.b16 %v5065
      %v5162 = vunpack.c.l.b16 %v5066
      %v5163 = vunpack.c.l.b16 %v5067
      %v5164 = vunpack.c.l.b16 %v5068
      %v5165 = vunpack.c.l.b16 %v5069
      %v5166 = vunpack.c.l.b16 %v5070
      %v5167 = vunpack.c.l.b16 %v5071
      %v5168 = vunpack.c.l.b16 %v5072
      %v5169 = vunpack.c.l.b16 %v5073
      %v5170 = vunpack.c.l.b16 %v5074
      %v5171 = vunpack.c.l.b16 %v5075
      %v5172 = vunpack.c.l.b16 %v5076
      %v5173 = vunpack.c.l.b16 %v5077
      %v5174 = vunpack.c.l.b16 %v5078
      %v5175 = vunpack.c.l.b16 %v5079
      %v5176 = vunpack.c.l.b16 %v5080
      %v5177 = vunpack.c.l.b16 %v5081
      %v5178 = vunpack.c.l.b16 %v5082
      %v5179 = vunpack.c.l.b16 %v5083
      %v5180 = vunpack.c.l.b16 %v5084
      %v5181 = vunpack.c.l.b16 %v5085
      %v5182 = vunpack.c.l.b16 %v5086
      %v5183 = vunpack.c.l.b16 %v5087
      %v5184 = vunpack.c.l.b16 %v5088
      %v5185 = vunpack.c.l.b16 %v5089
      %v5186 = vunpack.c.l.b16 %v5090
      %v5187 = vunpack.c.l.b16 %v5091
      %v5188 = vunpack.c.l.b16 %v5092
      %v5189 = vunpack.c.l.b16 %v5093
      %v5190 = vunpack.c.l.b16 %v5094
      %v5191 = vunpack.c.l.b16 %v5095
      %v5192 = vunpack.c.l.b16 %v5096
      %v5193 = vunpack.c.l.b16 %v5097
      %v5194 = vunpack.c.l.b16 %v5098
      %v5195 = vunpack.c.l.b16 %v5099
      %v5196 = vunpack.c.l.b16 %v5100
      %v5197 = vunpack.c.l.b16 %v5101
      %v5198 = vunpack.c.l.b16 %v5102
      %v5199 = vpack.c.b16 %v5152, %v5151
      %v5200 = vpack.c.b16 %v5154, %v5153
      %v5201 = vpack.c.b16 %v5156, %v5155
      %v5202 = vpack.c.b16 %v5158, %v5157
      %v5203 = vpack.c.b16 %v5160, %v5159
      %v5204 = vpack.c.b16 %v5162, %v5161
      %v5205 = vpack.c.b16 %v5164, %v5163
      %v5206 = vpack.c.b16 %v5166, %v5165
      %v5207 = vpack.c.b16 %v5168, %v5167
      %v5208 = vpack.c.b16 %v5170, %v5169
      %v5209 = vpack.c.b16 %v5172, %v5171
      %v5210 = vpack.c.b16 %v5174, %v5173
      %v5211 = vpack.c.b16 %v5176, %v5175
      %v5212 = vpack.c.b16 %v5178, %v5177
      %v5213 = vpack.c.b16 %v5180, %v5179
      %v5214 = vpack.c.b16 %v5182, %v5181
      %v5215 = vpack.c.b16 %v5184, %v5183
      %v5216 = vpack.c.b16 %v5186, %v5185
      %v5217 = vpack.c.b16 %v5188, %v5187
      %v5218 = vpack.c.b16 %v5190, %v5189
      %v5219 = vpack.c.b16 %v5192, %v5191
      %v5220 = vpack.c.b16 %v5194, %v5193
      %v5221 = vpack.c.b16 %v5196, %v5195
      %v5222 = vpack.c.b16 %v5198, %v5197
      %5247 = vmatprep.subr.bf16.mxu0 0
      %5248 = vmatpush1.bf16.msra.mxu0 %v5199
      %5249 = vmatprep.subr.bf16.mxu0 0
      %5250 = vmatpush1.bf16.msra.mxu0 %v5200
      %5251 = vmatprep.subr.bf16.mxu0 0
      %5252 = vmatpush1.bf16.msra.mxu0 %v5201
      %5253 = vmatprep.subr.bf16.mxu0 0
      %5254 = vmatpush1.bf16.msra.mxu0 %v5202
      %5255 = vmatprep.subr.bf16.mxu0 0
      %5256 = vmatpush1.bf16.msra.mxu0 %v5203
      %5257 = vmatprep.subr.bf16.mxu0 0
      %5258 = vmatpush1.bf16.msra.mxu0 %v5204
      %5259 = vmatprep.subr.bf16.mxu0 0
      %5260 = vmatpush1.bf16.msra.mxu0 %v5205
      %5261 = vmatprep.subr.bf16.mxu0 0
      %5262 = vmatpush1.bf16.msra.mxu0 %v5206
      %5263 = vmatprep.subr.bf16.mxu0 0
      %5264 = vmatpush1.bf16.msra.mxu0 %v5207
      %5265 = vmatprep.subr.bf16.mxu0 0
      %5266 = vmatpush1.bf16.msra.mxu0 %v5208
      %5267 = vmatprep.subr.bf16.mxu0 0
      %5268 = vmatpush1.bf16.msra.mxu0 %v5209
      %5269 = vmatprep.subr.bf16.mxu0 0
      %5270 = vmatpush1.bf16.msra.mxu0 %v5210
      %5271 = vmatprep.subr.bf16.mxu0 0
      %5272 = vmatpush1.bf16.msra.mxu0 %v5211
      %5273 = vmatprep.subr.bf16.mxu0 0
      %5274 = vmatpush1.bf16.msra.mxu0 %v5212
      %5275 = vmatprep.subr.bf16.mxu0 0
      %5276 = vmatpush1.bf16.msra.mxu0 %v5213
      %5277 = vmatprep.subr.bf16.mxu0 0
      %5278 = vmatpush1.bf16.msra.mxu0 %v5214
      %5279 = vmatprep.mubr.bf16.mxu0 %v4298
      %5280 = vmatmul.mubr.bf16.gmra.mrb[0].mxu0 %v4281
      %v5281 = vpop.f32.mrb[0].mxu0
      %v5282 = vadd.f32 0.0, %v5281
      %v5283 = vpop.f32.mrb[0].mxu0
      %v5284 = vpop.f32.mrb[0].mxu0
      %v5285 = vadd.f32 0.0, %v5284
      %v5286 = vpop.f32.mrb[0].mxu0
      %5287 = vmatprep.mubr.bf16.mxu0 %v4344
      %5288 = vmatmul.mubr.bf16.gmra.mrb[0].mxu0 %v4327
      %v5289 = vpop.f32.mrb[0].mxu0
      %v5290 = vadd.f32 0.0, %v5289
      %v5291 = vpop.f32.mrb[0].mxu0
      %v5292 = vpop.f32.mrb[0].mxu0
      %v5293 = vadd.f32 0.0, %v5292
      %v5294 = vpop.f32.mrb[0].mxu0
      %5295 = vmatprep.mubr.bf16.mxu0 %v4390
      %5296 = vmatmul.mubr.bf16.gmra.mrb[0].mxu0 %v4373
      %v5297 = vpop.f32.mrb[0].mxu0
      %v5298 = vadd.f32 0.0, %v5297
      %v5299 = vpop.f32.mrb[0].mxu0
      %v5300 = vpop.f32.mrb[0].mxu0
      %v5301 = vadd.f32 0.0, %v5300
      %v5302 = vpop.f32.mrb[0].mxu0
      %5303 = vmatprep.mubr.bf16.mxu0 %v4436
      %5304 = vmatmul.mubr.bf16.gmra.mrb[0].mxu0 %v4419
      %v5305 = vpop.f32.mrb[0].mxu0
      %v5306 = vadd.f32 0.0, %v5305
      %v5307 = vpop.f32.mrb[0].mxu0
      %v5308 = vpop.f32.mrb[0].mxu0
      %v5309 = vadd.f32 0.0, %v5308
      %v5310 = vpop.f32.mrb[0].mxu0
      %5311 = vmatprep.mubr.bf16.mxu0 %v4482
      %5312 = vmatmul.mubr.bf16.gmra.mrb[0].mxu0 %v4465
      %v5313 = vpop.f32.mrb[0].mxu0
      %v5314 = vadd.f32 0.0, %v5313
      %v5315 = vpop.f32.mrb[0].mxu0
      %v5316 = vpop.f32.mrb[0].mxu0
      %v5317 = vadd.f32 0.0, %v5316
      %v5318 = vpop.f32.mrb[0].mxu0
      %5319 = vmatprep.mubr.bf16.mxu0 %v4528
      %5320 = vmatmul.mubr.bf16.gmra.mrb[0].mxu0 %v4511
      %v5321 = vpop.f32.mrb[0].mxu0
      %v5322 = vadd.f32 0.0, %v5321
      %v5323 = vpop.f32.mrb[0].mxu0
      %v5324 = vpop.f32.mrb[0].mxu0
      %v5325 = vadd.f32 0.0, %v5324
      %v5326 = vpop.f32.mrb[0].mxu0
      %5327 = vmatprep.mubr.bf16.mxu0 %v4574
      %5328 = vmatmul.mubr.bf16.gmra.mrb[0].mxu0 %v4557
      %v5329 = vpop.f32.mrb[0].mxu0
      %v5330 = vadd.f32 0.0, %v5329
      %v5331 = vpop.f32.mrb[0].mxu0
      %v5332 = vpop.f32.mrb[0].mxu0
      %v5333 = vadd.f32 0.0, %v5332
      %v5334 = vpop.f32.mrb[0].mxu0
      %5335 = vmatprep.mubr.bf16.mxu0 %v4620
      %5336 = vmatmul.mubr.bf16.gmra.mrb[0].mxu0 %v4603
      %v5337 = vpop.f32.mrb[0].mxu0
      %v5338 = vadd.f32 0.0, %v5337
      %v5339 = vpop.f32.mrb[0].mxu0
      %v5340 = vpop.f32.mrb[0].mxu0
      %v5341 = vadd.f32 0.0, %v5340
      %v5342 = vpop.f32.mrb[0].mxu0
      %5343 = vmatprep.mubr.bf16.mxu0 %v4666
      %5344 = vmatmul.mubr.bf16.gmra.mrb[0].mxu0 %v4649
      %v5345 = vpop.f32.mrb[0].mxu0
      %v5346 = vadd.f32 0.0, %v5345
      %v5347 = vpop.f32.mrb[0].mxu0
      %v5348 = vpop.f32.mrb[0].mxu0
      %v5349 = vadd.f32 0.0, %v5348
      %v5350 = vpop.f32.mrb[0].mxu0
      %5351 = vmatprep.mubr.bf16.mxu0 %v4712
      %5352 = vmatmul.mubr.bf16.gmra.mrb[0].mxu0 %v4695
      %v5353 = vpop.f32.mrb[0].mxu0
      %v5354 = vadd.f32 0.0, %v5353
      %v5355 = vpop.f32.mrb[0].mxu0
      %v5356 = vpop.f32.mrb[0].mxu0
      %v5357 = vadd.f32 0.0, %v5356
      %v5358 = vpop.f32.mrb[0].mxu0
      %5359 = vmatprep.mubr.bf16.mxu0 %v4758
      %5360 = vmatmul.mubr.bf16.gmra.mrb[0].mxu0 %v4741
      %v5361 = vpop.f32.mrb[0].mxu0
      %v5362 = vadd.f32 0.0, %v5361
      %v5363 = vpop.f32.mrb[0].mxu0
      %v5364 = vpop.f32.mrb[0].mxu0
      %v5365 = vadd.f32 0.0, %v5364
      %v5366 = vpop.f32.mrb[0].mxu0
      %5367 = vmatprep.mubr.bf16.mxu0 %v4804
      %5368 = vmatmul.mubr.bf16.gmra.mrb[0].mxu0 %v4787
      %v5369 = vpop.f32.mrb[0].mxu0
      %v5370 = vadd.f32 0.0, %v5369
      %v5371 = vpop.f32.mrb[0].mxu0
      %v5372 = vpop.f32.mrb[0].mxu0
      %v5373 = vadd.f32 0.0, %v5372
      %v5374 = vpop.f32.mrb[0].mxu0
      %5375 = vmatprep.mubr.bf16.mxu0 %v4850
      %5376 = vmatmul.mubr.bf16.gmra.mrb[0].mxu0 %v4833
      %v5377 = vpop.f32.mrb[0].mxu0
      %v5378 = vadd.f32 0.0, %v5377
      %v5379 = vpop.f32.mrb[0].mxu0
      %v5380 = vpop.f32.mrb[0].mxu0
      %v5381 = vadd.f32 0.0, %v5380
      %v5382 = vpop.f32.mrb[0].mxu0
      %5383 = vmatprep.mubr.bf16.mxu0 %v4896
      %5384 = vmatmul.mubr.bf16.gmra.mrb[0].mxu0 %v4879
      %v5385 = vpop.f32.mrb[0].mxu0
      %v5386 = vadd.f32 0.0, %v5385
      %v5387 = vpop.f32.mrb[0].mxu0
      %v5388 = vpop.f32.mrb[0].mxu0
      %v5389 = vadd.f32 0.0, %v5388
      %v5390 = vpop.f32.mrb[0].mxu0
      %5391 = vmatprep.mubr.bf16.mxu0 %v4942
      %5392 = vmatmul.mubr.bf16.gmra.mrb[0].mxu0 %v4925
      %v5393 = vpop.f32.mrb[0].mxu0
      %v5394 = vadd.f32 0.0, %v5393
      %v5395 = vpop.f32.mrb[0].mxu0
      %v5396 = vpop.f32.mrb[0].mxu0
      %v5397 = vadd.f32 0.0, %v5396
      %v5398 = vpop.f32.mrb[0].mxu0
      %5399 = vmatprep.mubr.bf16.mxu0 %v4988
      %5400 = vmatmul.mubr.bf16.gmra.mrb[0].mxu0 %v4971
      %v5401 = vpop.f32.mrb[0].mxu0
      %v5402 = vadd.f32 0.0, %v5401
      %v5403 = vpop.f32.mrb[0].mxu0
      %v5404 = vpop.f32.mrb[0].mxu0
      %v5405 = vadd.f32 0.0, %v5404
      %v5406 = vpop.f32.mrb[0].mxu0
      %5407 = vdwg.mxu0
      %5408 = vmatprep.subr.bf16.mxu0 0
      %5409 = vmatpush1.bf16.msra.mxu0 %v5215
      %5410 = vmatprep.subr.bf16.mxu0 0
      %5411 = vmatpush1.bf16.msra.mxu0 %v5216
      %5412 = vmatprep.subr.bf16.mxu0 0
      %5413 = vmatpush1.bf16.msra.mxu0 %v5217
      %5414 = vmatprep.subr.bf16.mxu0 0
      %5415 = vmatpush1.bf16.msra.mxu0 %v5218
      %5416 = vmatprep.subr.bf16.mxu0 0
      %5417 = vmatpush1.bf16.msra.mxu0 %v5219
      %5418 = vmatprep.subr.bf16.mxu0 0
      %5419 = vmatpush1.bf16.msra.mxu0 %v5220
      %5420 = vmatprep.subr.bf16.mxu0 0
      %5421 = vmatpush1.bf16.msra.mxu0 %v5221
      %5422 = vmatprep.subr.bf16.mxu0 0
      %5423 = vmatpush1.bf16.msra.mxu0 %v5222
      %5424 = vmatprep.subr.bf16.mxu0 0
      %5425 = vmatpush1.bf16.msra.mxu0 0
      %5426 = vmatprep.subr.bf16.mxu0 0
      %5427 = vmatpush1.bf16.msra.mxu0 0
      %5428 = vmatprep.subr.bf16.mxu0 0
      %5429 = vmatpush1.bf16.msra.mxu0 0
      %5430 = vmatprep.subr.bf16.mxu0 0
      %5431 = vmatpush1.bf16.msra.mxu0 0
      %5432 = vmatprep.subr.bf16.mxu0 0
      %5433 = vmatpush1.bf16.msra.mxu0 0
      %5434 = vmatprep.subr.bf16.mxu0 0
      %5435 = vmatpush1.bf16.msra.mxu0 0
      %5436 = vmatprep.subr.bf16.mxu0 0
      %5437 = vmatpush1.bf16.msra.mxu0 0
      %5438 = vmatprep.subr.bf16.mxu0 0
      %5439 = vmatpush1.bf16.msra.mxu0 0
      %5440 = vmatprep.mubr.bf16.mxu0 0
      %5441 = vmatmul.mubr.bf16.gmra.mrb[0].mxu0 %v4315
      %v5442 = vpop.f32.mrb[0].mxu0
      %v5443 = vadd.f32 %v5282, %v5442
      %v5444 = vpop.f32.mrb[0].mxu0
      %v5445 = vpop.f32.mrb[0].mxu0
      %v5446 = vadd.f32 %v5285, %v5445
      %v5447 = vpop.f32.mrb[0].mxu0
      %5448 = vmatprep.mubr.bf16.mxu0 0
      %5449 = vmatmul.mubr.bf16.gmra.mrb[0].mxu0 %v4361
      %v5450 = vpop.f32.mrb[0].mxu0
      %v5451 = vadd.f32 %v5290, %v5450
      %v5452 = vpop.f32.mrb[0].mxu0
      %v5453 = vpop.f32.mrb[0].mxu0
      %v5454 = vadd.f32 %v5293, %v5453
      %v5455 = vpop.f32.mrb[0].mxu0
      %5456 = vmatprep.mubr.bf16.mxu0 0
      %5457 = vmatmul.mubr.bf16.gmra.mrb[0].mxu0 %v4407
      %v5458 = vpop.f32.mrb[0].mxu0
      %v5459 = vadd.f32 %v5298, %v5458
      %v5460 = vpop.f32.mrb[0].mxu0
      %v5461 = vpop.f32.mrb[0].mxu0
      %v5462 = vadd.f32 %v5301, %v5461
      %v5463 = vpop.f32.mrb[0].mxu0
      %5464 = vmatprep.mubr.bf16.mxu0 0
      %5465 = vmatmul.mubr.bf16.gmra.mrb[0].mxu0 %v4453
      %v5466 = vpop.f32.mrb[0].mxu0
      %v5467 = vadd.f32 %v5306, %v5466
      %v5468 = vpop.f32.mrb[0].mxu0
      %v5469 = vpop.f32.mrb[0].mxu0
      %v5470 = vadd.f32 %v5309, %v5469
      %v5471 = vpop.f32.mrb[0].mxu0
      %5472 = vmatprep.mubr.bf16.mxu0 0
      %5473 = vmatmul.mubr.bf16.gmra.mrb[0].mxu0 %v4499
      %v5474 = vpop.f32.mrb[0].mxu0
      %v5475 = vadd.f32 %v5314, %v5474
      %v5476 = vpop.f32.mrb[0].mxu0
      %v5477 = vpop.f32.mrb[0].mxu0
      %v5478 = vadd.f32 %v5317, %v5477
      %v5479 = vpop.f32.mrb[0].mxu0
      %5480 = vmatprep.mubr.bf16.mxu0 0
      %5481 = vmatmul.mubr.bf16.gmra.mrb[0].mxu0 %v4545
      %v5482 = vpop.f32.mrb[0].mxu0
      %v5483 = vadd.f32 %v5322, %v5482
      %v5484 = vpop.f32.mrb[0].mxu0
      %v5485 = vpop.f32.mrb[0].mxu0
      %v5486 = vadd.f32 %v5325, %v5485
      %v5487 = vpop.f32.mrb[0].mxu0
      %5488 = vmatprep.mubr.bf16.mxu0 0
      %5489 = vmatmul.mubr.bf16.gmra.mrb[0].mxu0 %v4591
      %v5490 = vpop.f32.mrb[0].mxu0
      %v5491 = vadd.f32 %v5330, %v5490
      %v5492 = vpop.f32.mrb[0].mxu0
      %v5493 = vpop.f32.mrb[0].mxu0
      %v5494 = vadd.f32 %v5333, %v5493
      %v5495 = vpop.f32.mrb[0].mxu0
      %5496 = vmatprep.mubr.bf16.mxu0 0
      %5497 = vmatmul.mubr.bf16.gmra.mrb[0].mxu0 %v4637
      %v5498 = vpop.f32.mrb[0].mxu0
      %v5499 = vadd.f32 %v5338, %v5498
      %v5500 = vpop.f32.mrb[0].mxu0
      %v5501 = vpop.f32.mrb[0].mxu0
      %v5502 = vadd.f32 %v5341, %v5501
      %v5503 = vpop.f32.mrb[0].mxu0
      %5504 = vmatprep.mubr.bf16.mxu0 0
      %5505 = vmatmul.mubr.bf16.gmra.mrb[0].mxu0 %v4683
      %v5506 = vpop.f32.mrb[0].mxu0
      %v5507 = vadd.f32 %v5346, %v5506
      %v5508 = vpop.f32.mrb[0].mxu0
      %v5509 = vpop.f32.mrb[0].mxu0
      %v5510 = vadd.f32 %v5349, %v5509
      %v5511 = vpop.f32.mrb[0].mxu0
      %5512 = vmatprep.mubr.bf16.mxu0 0
      %5513 = vmatmul.mubr.bf16.gmra.mrb[0].mxu0 %v4729
      %v5514 = vpop.f32.mrb[0].mxu0
      %v5515 = vadd.f32 %v5354, %v5514
      %v5516 = vpop.f32.mrb[0].mxu0
      %v5517 = vpop.f32.mrb[0].mxu0
      %v5518 = vadd.f32 %v5357, %v5517
      %v5519 = vpop.f32.mrb[0].mxu0
      %5520 = vmatprep.mubr.bf16.mxu0 0
      %5521 = vmatmul.mubr.bf16.gmra.mrb[0].mxu0 %v4775
      %v5522 = vpop.f32.mrb[0].mxu0
      %v5523 = vadd.f32 %v5362, %v5522
      %v5524 = vpop.f32.mrb[0].mxu0
      %v5525 = vpop.f32.mrb[0].mxu0
      %v5526 = vadd.f32 %v5365, %v5525
      %v5527 = vpop.f32.mrb[0].mxu0
      %5528 = vmatprep.mubr.bf16.mxu0 0
      %5529 = vmatmul.mubr.bf16.gmra.mrb[0].mxu0 %v4821
      %v5530 = vpop.f32.mrb[0].mxu0
      %v5531 = vadd.f32 %v5370, %v5530
      %v5532 = vpop.f32.mrb[0].mxu0
      %v5533 = vpop.f32.mrb[0].mxu0
      %v5534 = vadd.f32 %v5373, %v5533
      %v5535 = vpop.f32.mrb[0].mxu0
      %5536 = vmatprep.mubr.bf16.mxu0 0
      %5537 = vmatmul.mubr.bf16.gmra.mrb[0].mxu0 %v4867
      %v5538 = vpop.f32.mrb[0].mxu0
      %v5539 = vadd.f32 %v5378, %v5538
      %v5540 = vpop.f32.mrb[0].mxu0
      %v5541 = vpop.f32.mrb[0].mxu0
      %v5542 = vadd.f32 %v5381, %v5541
      %v5543 = vpop.f32.mrb[0].mxu0
      %5544 = vmatprep.mubr.bf16.mxu0 0
      %5545 = vmatmul.mubr.bf16.gmra.mrb[0].mxu0 %v4913
      %v5546 = vpop.f32.mrb[0].mxu0
      %v5547 = vadd.f32 %v5386, %v5546
      %v5548 = vpop.f32.mrb[0].mxu0
      %v5549 = vpop.f32.mrb[0].mxu0
      %v5550 = vadd.f32 %v5389, %v5549
      %v5551 = vpop.f32.mrb[0].mxu0
      %5552 = vmatprep.mubr.bf16.mxu0 0
      %5553 = vmatmul.mubr.bf16.gmra.mrb[0].mxu0 %v4959
      %v5554 = vpop.f32.mrb[0].mxu0
      %v5555 = vadd.f32 %v5394, %v5554
      %v5556 = vpop.f32.mrb[0].mxu0
      %v5557 = vpop.f32.mrb[0].mxu0
      %v5558 = vadd.f32 %v5397, %v5557
      %v5559 = vpop.f32.mrb[0].mxu0
      %5560 = vmatprep.mubr.bf16.mxu0 0
      %5561 = vmatmul.mubr.bf16.gmra.mrb[0].mxu0 %v5005
      %v5562 = vpop.f32.mrb[0].mxu0
      %v5563 = vadd.f32 %v5402, %v5562
      %v5564 = vpop.f32.mrb[0].mxu0
      %v5565 = vpop.f32.mrb[0].mxu0
      %v5566 = vadd.f32 %v5405, %v5565
      %v5567 = vpop.f32.mrb[0].mxu0
      %5568 = vdwg.mxu0
      %v5569 = vadd.f32 %v3759, %v5443
      %v5570 = vadd.f32 %v3762, %v5446
      %v5571 = vadd.f32 %v3767, %v5451
      %v5572 = vadd.f32 %v3770, %v5454
      %v5573 = vadd.f32 %v3775, %v5459
      %v5574 = vadd.f32 %v3778, %v5462
      %v5575 = vadd.f32 %v3783, %v5467
      %v5576 = vadd.f32 %v3786, %v5470
      %v5577 = vadd.f32 %v3791, %v5475
      %v5578 = vadd.f32 %v3794, %v5478
      %v5579 = vadd.f32 %v3799, %v5483
      %v5580 = vadd.f32 %v3802, %v5486
      %v5581 = vadd.f32 %v3807, %v5491
      %v5582 = vadd.f32 %v3810, %v5494
      %v5583 = vadd.f32 %v3815, %v5499
      %v5584 = vadd.f32 %v3818, %v5502
      %v5585 = vadd.f32 %v3823, %v5507
      %v5586 = vadd.f32 %v3826, %v5510
      %v5587 = vadd.f32 %v3831, %v5515
      %v5588 = vadd.f32 %v3834, %v5518
      %v5589 = vadd.f32 %v3839, %v5523
      %v5590 = vadd.f32 %v3842, %v5526
      %v5591 = vadd.f32 %v3847, %v5531
      %v5592 = vadd.f32 %v3850, %v5534
      %v5593 = vadd.f32 %v3855, %v5539
      %v5594 = vadd.f32 %v3858, %v5542
      %v5595 = vadd.f32 %v3863, %v5547
      %v5596 = vadd.f32 %v3866, %v5550
      %v5597 = vadd.f32 %v3871, %v5555
      %v5598 = vadd.f32 %v3874, %v5558
      %v5599 = vadd.f32 %v3879, %v5563
      %v5600 = vadd.f32 %v3882, %v5566
      %5601 = vst [vmem:[%s231] sm:$0xff] %v5569
      %5602 = vst [vmem:[%s231 + $0x8] sm:$0xff] %v5570
      %5603 = vst [vmem:[%s231 + $0x10] sm:$0xff] %v5571
      %5604 = vst [vmem:[%s231 + $0x18] sm:$0xff] %v5572
      %5605 = vst [vmem:[%s231 + $0x20] sm:$0xff] %v5573
      %5606 = vst [vmem:[%s231 + $0x28] sm:$0xff] %v5574
      %5607 = vst [vmem:[%s231 + $0x30] sm:$0xff] %v5575
      %5608 = vst [vmem:[%s231 + $0x38] sm:$0xff] %v5576
      %5609 = vst [vmem:[%s231 + $0x40] sm:$0xff] %v5577
      %5610 = vst [vmem:[%s231 + $0x48] sm:$0xff] %v5578
      %5611 = vst [vmem:[%s231 + $0x50] sm:$0xff] %v5579
      %5612 = vst [vmem:[%s231 + $0x58] sm:$0xff] %v5580
      %5613 = vst [vmem:[%s231 + $0x60] sm:$0xff] %v5581
      %5614 = vst [vmem:[%s231 + $0x68] sm:$0xff] %v5582
      %5615 = vst [vmem:[%s231 + $0x70] sm:$0xff] %v5583
      %5616 = vst [vmem:[%s231 + $0x78] sm:$0xff] %v5584
      %5617 = vst [vmem:[%s231 + $0x80] sm:$0xff] %v5585
      %5618 = vst [vmem:[%s231 + $0x88] sm:$0xff] %v5586
      %5619 = vst [vmem:[%s231 + $0x90] sm:$0xff] %v5587
      %5620 = vst [vmem:[%s231 + $0x98] sm:$0xff] %v5588
      %5621 = vst [vmem:[%s231 + $0xa0] sm:$0xff] %v5589
      %5622 = vst [vmem:[%s231 + $0xa8] sm:$0xff] %v5590
      %5623 = vst [vmem:[%s231 + $0xb0] sm:$0xff] %v5591
      %5624 = vst [vmem:[%s231 + $0xb8] sm:$0xff] %v5592
      %5625 = vst [vmem:[%s231 + $0xc0] sm:$0xff] %v5593
      %5626 = vst [vmem:[%s231 + $0xc8] sm:$0xff] %v5594
      %5627 = vst [vmem:[%s231 + $0xd0] sm:$0xff] %v5595
      %5628 = vst [vmem:[%s231 + $0xd8] sm:$0xff] %v5596
      %5629 = vst [vmem:[%s231 + $0xe0] sm:$0xff] %v5597
      %5630 = vst [vmem:[%s231 + $0xe8] sm:$0xff] %v5598
      %5631 = vst [vmem:[%s231 + $0xf0] sm:$0xff] %v5599
      %5632 = vst [vmem:[%s231 + $0xf8] sm:$0xff] %v5600
      %v5633 = vadd.f32 %v5569, %v5570
      %v5634 = vadd.f32 %v5633, %v5571
      %v5635 = vadd.f32 %v5634, %v5572
      %v5636 = vadd.f32 %v5635, %v5573
      %v5637 = vadd.f32 %v5636, %v5574
      %v5638 = vadd.f32 %v5637, %v5575
      %v5639 = vadd.f32 %v5638, %v5576
      %v5640 = vadd.f32 %v5639, %v5577
      %v5641 = vadd.f32 %v5640, %v5578
      %v5642 = vadd.f32 %v5641, %v5579
      %v5643 = vadd.f32 %v5642, %v5580
      %v5644 = vadd.f32 %v5643, %v5581
      %v5645 = vadd.f32 %v5644, %v5582
      %v5646 = vadd.f32 %v5645, %v5583
      %v5647 = vadd.f32 %v5646, %v5584
      %v5648 = vadd.f32 %v5647, %v5585
      %v5649 = vadd.f32 %v5648, %v5586
      %v5650 = vadd.f32 %v5649, %v5587
      %v5651 = vadd.f32 %v5650, %v5588
      %v5652 = vadd.f32 %v5651, %v5589
      %v5653 = vadd.f32 %v5652, %v5590
      %v5654 = vadd.f32 %v5653, %v5591
      %v5655 = vadd.f32 %v5654, %v5592
      %v5656 = vadd.f32 %v5655, %v5593
      %v5657 = vadd.f32 %v5656, %v5594
      %v5658 = vadd.f32 %v5657, %v5595
      %v5659 = vadd.f32 %v5658, %v5596
      %v5660 = vadd.f32 %v5659, %v5597
      %v5661 = vadd.f32 %v5660, %v5598
      %v5662 = vadd.f32 %v5661, %v5599
      %v5663 = vadd.f32 %v5662, %v5600
      %v5664 = vrot.slane %v5663, 4
      %v5665 = vadd.f32 %v5663, %v5664
      %v5666 = vrot.slane %v5665, 2
      %v5667 = vadd.f32 %v5665, %v5666
      %v5668 = vrot.slane %v5667, 1
      %v5669 = vadd.f32 %v5667, %v5668
      %v5670 = vmul.f32 %v5569, %v5569
      %v5671 = vmul.f32 %v5570, %v5570
      %v5672 = vmul.f32 %v5571, %v5571
      %v5673 = vmul.f32 %v5572, %v5572
      %v5674 = vmul.f32 %v5573, %v5573
      %v5675 = vmul.f32 %v5574, %v5574
      %v5676 = vmul.f32 %v5575, %v5575
      %v5677 = vmul.f32 %v5576, %v5576
      %v5678 = vmul.f32 %v5577, %v5577
      %v5679 = vmul.f32 %v5578, %v5578
      %v5680 = vmul.f32 %v5579, %v5579
      %v5681 = vmul.f32 %v5580, %v5580
      %v5682 = vmul.f32 %v5581, %v5581
      %v5683 = vmul.f32 %v5582, %v5582
      %v5684 = vmul.f32 %v5583, %v5583
      %v5685 = vmul.f32 %v5584, %v5584
      %v5686 = vmul.f32 %v5585, %v5585
      %v5687 = vmul.f32 %v5586, %v5586
      %v5688 = vmul.f32 %v5587, %v5587
      %v5689 = vmul.f32 %v5588, %v5588
      %v5690 = vmul.f32 %v5589, %v5589
      %v5691 = vmul.f32 %v5590, %v5590
      %v5692 = vmul.f32 %v5591, %v5591
      %v5693 = vmul.f32 %v5592, %v5592
      %v5694 = vmul.f32 %v5593, %v5593
      %v5695 = vmul.f32 %v5594, %v5594
      %v5696 = vmul.f32 %v5595, %v5595
      %v5697 = vmul.f32 %v5596, %v5596
      %v5698 = vmul.f32 %v5597, %v5597
      %v5699 = vmul.f32 %v5598, %v5598
      %v5700 = vmul.f32 %v5599, %v5599
      %v5701 = vmul.f32 %v5600, %v5600
      %v5702 = vadd.f32 %v5670, %v5671
      %v5703 = vadd.f32 %v5702, %v5672
      %v5704 = vadd.f32 %v5703, %v5673
      %v5705 = vadd.f32 %v5704, %v5674
      %v5706 = vadd.f32 %v5705, %v5675
      %v5707 = vadd.f32 %v5706, %v5676
      %v5708 = vadd.f32 %v5707, %v5677
      %v5709 = vadd.f32 %v5708, %v5678
      %v5710 = vadd.f32 %v5709, %v5679
      %v5711 = vadd.f32 %v5710, %v5680
      %v5712 = vadd.f32 %v5711, %v5681
      %v5713 = vadd.f32 %v5712, %v5682
      %v5714 = vadd.f32 %v5713, %v5683
      %v5715 = vadd.f32 %v5714, %v5684
      %v5716 = vadd.f32 %v5715, %v5685
      %v5717 = vadd.f32 %v5716, %v5686
      %v5718 = vadd.f32 %v5717, %v5687
      %v5719 = vadd.f32 %v5718, %v5688
      %v5720 = vadd.f32 %v5719, %v5689
      %v5721 = vadd.f32 %v5720, %v5690
      %v5722 = vadd.f32 %v5721, %v5691
      %v5723 = vadd.f32 %v5722, %v5692
      %v5724 = vadd.f32 %v5723, %v5693
      %v5725 = vadd.f32 %v5724, %v5694
      %v5726 = vadd.f32 %v5725, %v5695
      %v5727 = vadd.f32 %v5726, %v5696
      %v5728 = vadd.f32 %v5727, %v5697
      %v5729 = vadd.f32 %v5728, %v5698
      %v5730 = vadd.f32 %v5729, %v5699
      %v5731 = vadd.f32 %v5730, %v5700
      %v5732 = vadd.f32 %v5731, %v5701
      %v5733 = vrot.slane %v5732, 4
      %v5734 = vadd.f32 %v5732, %v5733
      %v5735 = vrot.slane %v5734, 2
      %v5736 = vadd.f32 %v5734, %v5735
      %v5737 = vrot.slane %v5736, 1
      %v5738 = vadd.f32 %v5736, %v5737
      %vm5739 = vcmask 1040384
      %v5740 = vsel %vm5739, %v5669, %v5738
      %5741 = vst [vmem:[%s235] sm:$0x3] %v5740
      %p5742 = scmp.lt.s32.totalorder %s17, 1
      %s5743 = scalar_select %p5742, %s17, 1
      %s5744 = smul.addr %s5743, 32
      %s5745 = smul.addr %s5744, 8
      %s5746 = scalar_lea.vmem %s4, %s5745
      %p5747 = scmp.lt.s32.totalorder %s17, 1
      %s5748 = scalar_select %p5747, %s17, 1
      %s5749 = smul.addr %s5748, 2
      %s5750 = scalar_lea.vmem %s5, %s5749
      // Predicated region
      $region37: #{basic_block_forward.4} parent=35 // pred_check
        %p5751 = pneg %p124
      $region38: #{basic_block_forward.4} parent=35 // pred_check_branch
        %5753 = sbr.rel (%p5751) target = $region40
      $region39: #{basic_block_forward.4} parent=35 // pred_region
        _
      $region40: #{basic_block_forward.4} parent=35 // pred_fallthru
        _
      // Predicated region
      $region41: #{basic_block_forward.4} parent=35 // pred_check
        %p5754 = pneg %p150
      $region42: #{basic_block_forward.4} parent=35 // pred_check_branch
        %5756 = sbr.rel (%p5754) target = $region44
      $region43: #{basic_block_forward.4} parent=35 // pred_region
        _
      $region44: #{basic_block_forward.4} parent=35 // pred_fallthru
        _
    $region36: #{basic_block_forward.4} parent=5 // pred_fallthru
      _
    %p5757 = scmp.le.s32.totalorder 2, %s12
    // Predicated region
    $region45: #{basic_block_forward.4} parent=5 // pred_check
      %p5758 = pneg %p5757
    $region46: #{basic_block_forward.4} parent=5 // pred_check_branch
      %5760 = sbr.rel (%p5758) target = $region48
    $region47: #{basic_block_forward.4} parent=5 // pred_region
      %s5761 = ssub.s32 %s12, 2
      // Predicated region
      $region49: #{basic_block_forward.4} parent=47 // pred_check
        %p5762 = pneg %p130
      $region50: #{basic_block_forward.4} parent=47 // pred_check_branch
        %5764 = sbr.rel (%p5762) target = $region52
      $region51: #{basic_block_forward.4} parent=47 // pred_region
        %p5765 = scmp.lt.s32.totalorder %s18, 1
        %s5766 = scalar_select %p5765, %s18, 1
        %s5767 = smul.addr %s5766, 32
        %s5768 = smul.addr %s5767, 8
        %s5769 = scalar_lea.vmem %s4, %s5768
      $region52: #{basic_block_forward.4} parent=47 // pred_fallthru
        _
      // Predicated region
      $region53: #{basic_block_forward.4} parent=47 // pred_check
        %p5770 = pneg %p156
      $region54: #{basic_block_forward.4} parent=47 // pred_check_branch
        %5772 = sbr.rel (%p5770) target = $region56
      $region55: #{basic_block_forward.4} parent=47 // pred_region
        %p5773 = scmp.lt.s32.totalorder %s18, 1
        %s5774 = scalar_select %p5773, %s18, 1
        %s5775 = smul.addr %s5774, 2
        %s5776 = scalar_lea.vmem %s5, %s5775
      $region56: #{basic_block_forward.4} parent=47 // pred_fallthru
        _
    $region48: #{basic_block_forward.4} parent=5 // pred_fallthru
      _
  $region6: #{basic_block_forward.4} parent=0 // loop_footer
    %s16 = sadd.s32 1, %s12
  $region7: #{basic_block_forward.4} parent=0 // loop_footer_branch
    %11 = sbr.rel target = $region3
  $region8: #{basic_block_forward.4} parent=0 // loop_exit
    _

// kernel: basic_block_forward.3
$region0: #{basic_block_forward.3}
  #allocation0 [shape = 'u32[]', space=smem, size = 0x4, offset = 0x4, fixed_abs, tag = 'smem constant byte address 0x4 - core index']
  #allocation1 [shape = 'u32[144,128]{1,0:T(1,128)}', space=vmem, size = 0x12000, scoped, tag = 'internal scratch']
  #allocation2 [shape = 'bf16[18,32,128]{2,1,0:T(16,128)(2,1)}', space=vmem, size = 0x24000, scoped, tag = 'scratch operand']
  %s0 = inlined_call_operand.vmem [shape: bf16[2,16,16,128], index: 0, kind: input, shape index: {}]
  %s1 = inlined_call_operand.vmem [shape: bf16[3,384,128], index: 1, kind: input, shape index: {}]
  %s2 = inlined_call_operand.vmem [shape: bf16[128,128], index: 2, kind: input, shape index: {}]
  %s3 = inlined_call_operand.vmem [shape: f32[2,16,16,128], index: 3, kind: output, shape index: {0}]
  %s4 = inlined_call_operand.vmem [shape: f32[2,2,128], index: 4, kind: output, shape index: {1}]
  %s5 = inlined_call_operand.vmem [shape: f32[2,16,16,128], index: 5, kind: output, shape index: {2}]
  %s6 = inlined_call_operand.vmem [shape: f32[2,2,128], index: 6, kind: output, shape index: {3}]
  %7 = xla_tuple %s3, %s4, %s5, %s6
  %s8 = sld [smem:[#allocation0]]
  $region69: #{basic_block_forward.3} parent=0
    _
  %s10 = ssub.s32 1, %s8
  %s11 = scalar_select 0, %s10, %s8
  loop: start=0, step=1, limit=4
  $region2: #{basic_block_forward.3} parent=0 // loop_pre_header
    _
  $region3: #{basic_block_forward.3} parent=0 // loop_header
    %s13 = sphi 0, %s17
    %p14 = scmp.ge.s32.totalorder %s13, 4
    %s23 = sphi 0, %s25
    %s26 = sphi 0, %s23
    %s27 = sphi 0, %s26
    %s43 = sphi 0, %s27
    %s47 = sphi 0, %s47
    %s49 = sphi 0, %s47
    %s50 = sphi 0, %s49
    %s64 = sphi 0, %s50
    %s68 = sphi 0, %s68
    %s70 = sphi 0, %s68
    %s71 = sphi 0, %s70
    %s85 = sphi 0, %s71
    %s91 = sphi 0, %s93
    %s94 = sphi 0, %s91
    %s95 = sphi 0, %s94
    %s111 = sphi 0, %s95
    %s117 = sphi 0, %s119
    %s120 = sphi 0, %s117
    %s121 = sphi 0, %s120
    %s137 = sphi 0, %s121
    %s143 = sphi 0, %s145
    %s146 = sphi 0, %s143
    %s147 = sphi 0, %s146
    %s163 = sphi 0, %s147
    %s169 = sphi 0, %s171
    %s172 = sphi 0, %s169
    %s173 = sphi 0, %s172
    %s189 = sphi 0, %s173
  $region4: #{basic_block_forward.3} parent=0 // loop_header_branch
    %16 = sbr.rel (%p14) target = $region8
  $region5: #{basic_block_forward.3} parent=0 // loop_body
    %s18 = ssub.s32 %s13, 1
    %s19 = ssub.s32 %s13, 2
    %s20 = sadd.s32 %s13, 1
    %s21 = ssub.s32 %s13, %s20
    %p22 = scmp.eq.s32.totalorder %s21, 0
    %s24 = sadd.s32 %s23, 1
    %s25 = scalar_select %p22, %s23, %s24
    %p28 = pneg %p22
    %p29 = scmp.eq.s32.totalorder %s13, 1
    %p30 = por %p28, %p29
    %p31 = scmp.ne.s32.totalorder %s23, %s26
    %p32 = scmp.eq.s32.totalorder %s13, 0
    %p33 = por %p31, %p32
    %p34 = scmp.ne.s32.totalorder %s23, %s26
    %p35 = scmp.eq.s32.totalorder %s18, 1
    %p36 = por %p34, %p35
    %p37 = scmp.ne.s32.totalorder %s26, %s27
    %p38 = scmp.eq.s32.totalorder %s18, 0
    %p39 = por %p37, %p38
    %p40 = scmp.ne.s32.totalorder %s26, %s27
    %p41 = scmp.eq.s32.totalorder %s19, 1
    %p42 = por %p40, %p41
    %p44 = scmp.ne.s32.totalorder %s27, %s43
    %p45 = scmp.eq.s32.totalorder %s19, 0
    %p46 = por %p44, %p45
    %s48 = sadd.s32 %s47, 1
    %p51 = scmp.eq.s32.totalorder %s13, 1
    %p52 = scmp.ne.s32.totalorder %s47, %s49
    %p53 = scmp.eq.s32.totalorder %s13, 0
    %p54 = por %p52, %p53
    %p55 = scmp.ne.s32.totalorder %s47, %s49
    %p56 = scmp.eq.s32.totalorder %s18, 1
    %p57 = por %p55, %p56
    %p58 = scmp.ne.s32.totalorder %s49, %s50
    %p59 = scmp.eq.s32.totalorder %s18, 0
    %p60 = por %p58, %p59
    %p61 = scmp.ne.s32.totalorder %s49, %s50
    %p62 = scmp.eq.s32.totalorder %s19, 1
    %p63 = por %p61, %p62
    %p65 = scmp.ne.s32.totalorder %s50, %s64
    %p66 = scmp.eq.s32.totalorder %s19, 0
    %p67 = por %p65, %p66
    %s69 = sadd.s32 %s68, 1
    %p72 = scmp.eq.s32.totalorder %s13, 1
    %p73 = scmp.ne.s32.totalorder %s68, %s70
    %p74 = scmp.eq.s32.totalorder %s13, 0
    %p75 = por %p73, %p74
    %p76 = scmp.ne.s32.totalorder %s68, %s70
    %p77 = scmp.eq.s32.totalorder %s18, 1
    %p78 = por %p76, %p77
    %p79 = scmp.ne.s32.totalorder %s70, %s71
    %p80 = scmp.eq.s32.totalorder %s18, 0
    %p81 = por %p79, %p80
    %p82 = scmp.ne.s32.totalorder %s70, %s71
    %p83 = scmp.eq.s32.totalorder %s19, 1
    %p84 = por %p82, %p83
    %p86 = scmp.ne.s32.totalorder %s71, %s85
    %p87 = scmp.eq.s32.totalorder %s19, 0
    %p88 = por %p86, %p87
    %s89 = ssub.s32 %s13, %s20
    %p90 = scmp.eq.s32.totalorder %s89, 0
    %s92 = sadd.s32 %s91, 1
    %s93 = scalar_select %p90, %s91, %s92
    %p96 = pneg %p90
    %p97 = scmp.eq.s32.totalorder %s13, 1
    %p98 = por %p96, %p97
    %p99 = scmp.ne.s32.totalorder %s91, %s94
    %p100 = scmp.eq.s32.totalorder %s13, 0
    %p101 = por %p99, %p100
    %p102 = scmp.ne.s32.totalorder %s91, %s94
    %p103 = scmp.eq.s32.totalorder %s18, 1
    %p104 = por %p102, %p103
    %p105 = scmp.ne.s32.totalorder %s94, %s95
    %p106 = scmp.eq.s32.totalorder %s18, 0
    %p107 = por %p105, %p106
    %p108 = scmp.ne.s32.totalorder %s94, %s95
    %p109 = scmp.eq.s32.totalorder %s19, 1
    %p110 = por %p108, %p109
    %p112 = scmp.ne.s32.totalorder %s95, %s111
    %p113 = scmp.eq.s32.totalorder %s19, 0
    %p114 = por %p112, %p113
    %s115 = ssub.s32 %s13, %s20
    %p116 = scmp.eq.s32.totalorder %s115, 0
    %s118 = sadd.s32 %s117, 1
    %s119 = scalar_select %p116, %s117, %s118
    %p122 = pneg %p116
    %p123 = scmp.eq.s32.totalorder %s13, 1
    %p124 = por %p122, %p123
    %p125 = scmp.ne.s32.totalorder %s117, %s120
    %p126 = scmp.eq.s32.totalorder %s13, 0
    %p127 = por %p125, %p126
    %p128 = scmp.ne.s32.totalorder %s117, %s120
    %p129 = scmp.eq.s32.totalorder %s18, 1
    %p130 = por %p128, %p129
    %p131 = scmp.ne.s32.totalorder %s120, %s121
    %p132 = scmp.eq.s32.totalorder %s18, 0
    %p133 = por %p131, %p132
    %p134 = scmp.ne.s32.totalorder %s120, %s121
    %p135 = scmp.eq.s32.totalorder %s19, 1
    %p136 = por %p134, %p135
    %p138 = scmp.ne.s32.totalorder %s121, %s137
    %p139 = scmp.eq.s32.totalorder %s19, 0
    %p140 = por %p138, %p139
    %s141 = ssub.s32 %s13, %s20
    %p142 = scmp.eq.s32.totalorder %s141, 0
    %s144 = sadd.s32 %s143, 1
    %s145 = scalar_select %p142, %s143, %s144
    %p148 = pneg %p142
    %p149 = scmp.eq.s32.totalorder %s13, 1
    %p150 = por %p148, %p149
    %p151 = scmp.ne.s32.totalorder %s143, %s146
    %p152 = scmp.eq.s32.totalorder %s13, 0
    %p153 = por %p151, %p152
    %p154 = scmp.ne.s32.totalorder %s143, %s146
    %p155 = scmp.eq.s32.totalorder %s18, 1
    %p156 = por %p154, %p155
    %p157 = scmp.ne.s32.totalorder %s146, %s147
    %p158 = scmp.eq.s32.totalorder %s18, 0
    %p159 = por %p157, %p158
    %p160 = scmp.ne.s32.totalorder %s146, %s147
    %p161 = scmp.eq.s32.totalorder %s19, 1
    %p162 = por %p160, %p161
    %p164 = scmp.ne.s32.totalorder %s147, %s163
    %p165 = scmp.eq.s32.totalorder %s19, 0
    %p166 = por %p164, %p165
    %s167 = ssub.s32 %s13, %s20
    %p168 = scmp.eq.s32.totalorder %s167, 0
    %s170 = sadd.s32 %s169, 1
    %s171 = scalar_select %p168, %s169, %s170
    %p174 = pneg %p168
    %p175 = scmp.eq.s32.totalorder %s13, 1
    %p176 = por %p174, %p175
    %p177 = scmp.ne.s32.totalorder %s169, %s172
    %p178 = scmp.eq.s32.totalorder %s13, 0
    %p179 = por %p177, %p178
    %p180 = scmp.ne.s32.totalorder %s169, %s172
    %p181 = scmp.eq.s32.totalorder %s18, 1
    %p182 = por %p180, %p181
    %p183 = scmp.ne.s32.totalorder %s172, %s173
    %p184 = scmp.eq.s32.totalorder %s18, 0
    %p185 = por %p183, %p184
    %p186 = scmp.ne.s32.totalorder %s172, %s173
    %p187 = scmp.eq.s32.totalorder %s19, 1
    %p188 = por %p186, %p187
    %p190 = scmp.ne.s32.totalorder %s173, %s189
    %p191 = scmp.eq.s32.totalorder %s19, 0
    %p192 = por %p190, %p191
    %p193 = scmp.le.s32.totalorder 1, %s13
    %p194 = scmp.lt.s32.totalorder %s13, 3
    %p195 = pnand %p193, %p194
    %p196 = pneg %p195
    // Predicated region
    $region9: #{basic_block_forward.3} parent=5 // pred_check
      _
    $region10: #{basic_block_forward.3} parent=5 // pred_check_branch
      %198 = sbr.rel (%p195) target = $region12
    $region11: #{basic_block_forward.3} parent=5 // pred_region
      %s199 = ssub.s32 %s13, 1
      // Predicated region
      $region13: #{basic_block_forward.3} parent=11 // pred_check
        %p200 = pneg %p60
      $region14: #{basic_block_forward.3} parent=11 // pred_check_branch
        %202 = sbr.rel (%p200) target = $region16
      $region15: #{basic_block_forward.3} parent=11 // pred_region
        _
      $region16: #{basic_block_forward.3} parent=11 // pred_fallthru
        _
      // Predicated region
      $region17: #{basic_block_forward.3} parent=11 // pred_check
        %p203 = pneg %p81
      $region18: #{basic_block_forward.3} parent=11 // pred_check_branch
        %205 = sbr.rel (%p203) target = $region20
      $region19: #{basic_block_forward.3} parent=11 // pred_region
        _
      $region20: #{basic_block_forward.3} parent=11 // pred_fallthru
        _
    $region12: #{basic_block_forward.3} parent=5 // pred_fallthru
      _
    %p206 = scmp.lt.s32.totalorder %s13, 2
    // Predicated region
    $region21: #{basic_block_forward.3} parent=5 // pred_check
      %p207 = pneg %p206
    $region22: #{basic_block_forward.3} parent=5 // pred_check_branch
      %209 = sbr.rel (%p207) target = $region24
    $region23: #{basic_block_forward.3} parent=5 // pred_region
      // Predicated region
      $region25: #{basic_block_forward.3} parent=23 // pred_check
        %p210 = pneg %p33
      $region26: #{basic_block_forward.3} parent=23 // pred_check_branch
        %212 = sbr.rel (%p210) target = $region28
      $region27: #{basic_block_forward.3} parent=23 // pred_region
        %p213 = scmp.lt.s32.totalorder %s13, 1
        %s214 = scalar_select %p213, %s13, 1
        %s215 = smul.addr %s214, 32
        %s216 = smul.addr %s215, 4
        %s217 = scalar_lea.vmem %s0, %s216
      $region28: #{basic_block_forward.3} parent=23 // pred_fallthru
        _
    $region24: #{basic_block_forward.3} parent=5 // pred_fallthru
      _
    %p218 = scmp.le.s32.totalorder 1, %s13
    %p219 = scmp.lt.s32.totalorder %s13, 3
    %p220 = pnand %p218, %p219
    %p221 = pneg %p220
    // Predicated region
    $region29: #{basic_block_forward.3} parent=5 // pred_check
      _
    $region30: #{basic_block_forward.3} parent=5 // pred_check_branch
      %223 = sbr.rel (%p220) target = $region32
    $region31: #{basic_block_forward.3} parent=5 // pred_region
      %s224 = ssub.s32 %s13, 1
      %p225 = scmp.lt.s32.totalorder %s18, 1
      %s226 = scalar_select %p225, %s18, 1
      %s227 = smul.addr %s226, 32
      %s228 = smul.addr %s227, 4
      %s229 = scalar_lea.vmem %s0, %s228
      %p230 = pneg %p39
      %p231 = pneg %p36
      %p232 = pneg %p60
      %p233 = pneg %p57
      %p234 = pneg %p81
      %p235 = pneg %p78
      %p236 = pneg %p107
      %p237 = pneg %p104
      %p238 = scmp.lt.s32.totalorder %s18, 1
      %s239 = scalar_select %p238, %s18, 1
      %s240 = smul.addr %s239, 32
      %s241 = smul.addr %s240, 8
      %s242 = scalar_lea.vmem %s3, %s241
      %p243 = pneg %p133
      %p244 = pneg %p130
      %p245 = scmp.lt.s32.totalorder %s18, 1
      %s246 = scalar_select %p245, %s18, 1
      %s247 = smul.addr %s246, 2
      %s248 = scalar_lea.vmem %s4, %s247
      %p249 = pneg %p159
      %p250 = pneg %p156
      %p251 = scmp.lt.s32.totalorder %s18, 1
      %s252 = scalar_select %p251, %s18, 1
      %s253 = smul.addr %s252, 32
      %s254 = smul.addr %s253, 8
      %s255 = scalar_lea.vmem %s5, %s254
      %p256 = pneg %p185
      %p257 = pneg %p182
      %p258 = scmp.lt.s32.totalorder %s18, 1
      %s259 = scalar_select %p258, %s18, 1
      %s260 = smul.addr %s259, 2
      %s261 = scalar_lea.vmem %s6, %s260
      %p262 = scmp.lt.s32.totalorder %s18, 1
      %s263 = scalar_select %p262, %s18, 1
      %s264 = smul.addr %s263, 32
      %s265 = smul.addr %s264, 4
      %s266 = scalar_lea.vmem %s0, %s265
      %p267 = scmp.lt.s32.totalorder %s18, 1
      %s268 = scalar_select %p267, %s18, 1
      %s269 = smul.addr %s268, 32
      %s270 = smul.addr %s269, 8
      %s271 = scalar_lea.vmem %s3, %s270
      %p272 = scmp.lt.s32.totalorder %s18, 1
      %s273 = scalar_select %p272, %s18, 1
      %s274 = smul.addr %s273, 2
      %s275 = scalar_lea.vmem %s4, %s274
      %p276 = scmp.lt.s32.totalorder %s18, 1
      %s277 = scalar_select %p276, %s18, 1
      %s278 = smul.addr %s277, 32
      %s279 = smul.addr %s278, 8
      %s280 = scalar_lea.vmem %s5, %s279
      %p281 = scmp.lt.s32.totalorder %s18, 1
      %s282 = scalar_select %p281, %s18, 1
      %s283 = smul.addr %s282, 2
      %s284 = scalar_lea.vmem %s6, %s283
      %v286 = vld [vmem:[%s266] sm:$0xf]
      %v287 = vld [vmem:[%s266 + $0x4] sm:$0xf]
      %v288 = vld [vmem:[%s266 + $0x8] sm:$0xf]
      %v289 = vld [vmem:[%s266 + $0xc] sm:$0xf]
      %v290 = vld [vmem:[%s266 + $0x10] sm:$0xf]
      %v291 = vld [vmem:[%s266 + $0x14] sm:$0xf]
      %v292 = vld [vmem:[%s266 + $0x18] sm:$0xf]
      %v293 = vld [vmem:[%s266 + $0x1c] sm:$0xf]
      %v294 = vld [vmem:[%s266 + $0x20] sm:$0xf]
      %v295 = vld [vmem:[%s266 + $0x24] sm:$0xf]
      %v296 = vld [vmem:[%s266 + $0x28] sm:$0xf]
      %v297 = vld [vmem:[%s266 + $0x2c] sm:$0xf]
      %v298 = vld [vmem:[%s266 + $0x30] sm:$0xf]
      %v299 = vld [vmem:[%s266 + $0x34] sm:$0xf]
      %v300 = vld [vmem:[%s266 + $0x38] sm:$0xf]
      %v301 = vld [vmem:[%s266 + $0x3c] sm:$0xf]
      %v302 = vld [vmem:[%s266 + $0x40] sm:$0xf]
      %v303 = vld [vmem:[%s266 + $0x44] sm:$0xf]
      %v304 = vld [vmem:[%s266 + $0x48] sm:$0xf]
      %v305 = vld [vmem:[%s266 + $0x4c] sm:$0xf]
      %v306 = vld [vmem:[%s266 + $0x50] sm:$0xf]
      %v307 = vld [vmem:[%s266 + $0x54] sm:$0xf]
      %v308 = vld [vmem:[%s266 + $0x58] sm:$0xf]
      %v309 = vld [vmem:[%s266 + $0x5c] sm:$0xf]
      %v310 = vld [vmem:[%s266 + $0x60] sm:$0xf]
      %v311 = vld [vmem:[%s266 + $0x64] sm:$0xf]
      %v312 = vld [vmem:[%s266 + $0x68] sm:$0xf]
      %v313 = vld [vmem:[%s266 + $0x6c] sm:$0xf]
      %v314 = vld [vmem:[%s266 + $0x70] sm:$0xf]
      %v315 = vld [vmem:[%s266 + $0x74] sm:$0xf]
      %v316 = vld [vmem:[%s266 + $0x78] sm:$0xf]
      %v317 = vld [vmem:[%s266 + $0x7c] sm:$0xf]
      %318 = vst [vmem:[#allocation2] sm:$0xff] 0
      %319 = vst [vmem:[#allocation2 + $0x8] sm:$0xff] 0
      %s320 = scalar_lea.vmem [#allocation2], 272
      %321 = vst [vmem:[%s320] sm:$0xff] 0
      %322 = vst [vmem:[%s320 + $0x8] sm:$0xff] 0
      %323 = vst [vmem:[#allocation2] sm:$0xf] 0
      %324 = vst [vmem:[#allocation2 + $0x10] sm:$0xf] 0
      %325 = vst [vmem:[#allocation2 + $0x20] sm:$0xf] 0
      %326 = vst [vmem:[#allocation2 + $0x30] sm:$0xf] 0
      %327 = vst [vmem:[#allocation2 + $0x40] sm:$0xf] 0
      %328 = vst [vmem:[#allocation2 + $0x50] sm:$0xf] 0
      %329 = vst [vmem:[#allocation2 + $0x60] sm:$0xf] 0
      %330 = vst [vmem:[#allocation2 + $0x70] sm:$0xf] 0
      %331 = vst [vmem:[#allocation2 + $0x80] sm:$0xf] 0
      %332 = vst [vmem:[#allocation2 + $0x90] sm:$0xf] 0
      %333 = vst [vmem:[#allocation2 + $0xa0] sm:$0xf] 0
      %334 = vst [vmem:[#allocation2 + $0xb0] sm:$0xf] 0
      %335 = vst [vmem:[#allocation2 + $0xc0] sm:$0xf] 0
      %336 = vst [vmem:[#allocation2 + $0xd0] sm:$0xf] 0
      %337 = vst [vmem:[#allocation2 + $0xe0] sm:$0xf] 0
      %338 = vst [vmem:[#allocation2 + $0xf0] sm:$0xf] 0
      %339 = vst [vmem:[#allocation2 + $0x100] sm:$0xf] 0
      %340 = vst [vmem:[#allocation2 + $0x110] sm:$0xf] 0
      %341 = vst [vmem:[#allocation2 + $0x8] sm:$0xf0] 0
      %342 = vst [vmem:[#allocation2 + $0x18] sm:$0xf0] 0
      %343 = vst [vmem:[#allocation2 + $0x28] sm:$0xf0] 0
      %344 = vst [vmem:[#allocation2 + $0x38] sm:$0xf0] 0
      %345 = vst [vmem:[#allocation2 + $0x48] sm:$0xf0] 0
      %346 = vst [vmem:[#allocation2 + $0x58] sm:$0xf0] 0
      %347 = vst [vmem:[#allocation2 + $0x68] sm:$0xf0] 0
      %348 = vst [vmem:[#allocation2 + $0x78] sm:$0xf0] 0
      %349 = vst [vmem:[#allocation2 + $0x88] sm:$0xf0] 0
      %350 = vst [vmem:[#allocation2 + $0x98] sm:$0xf0] 0
      %351 = vst [vmem:[#allocation2 + $0xa8] sm:$0xf0] 0
      %352 = vst [vmem:[#allocation2 + $0xb8] sm:$0xf0] 0
      %353 = vst [vmem:[#allocation2 + $0xc8] sm:$0xf0] 0
      %354 = vst [vmem:[#allocation2 + $0xd8] sm:$0xf0] 0
      %355 = vst [vmem:[#allocation2 + $0xe8] sm:$0xf0] 0
      %356 = vst [vmem:[#allocation2 + $0xf8] sm:$0xf0] 0
      %357 = vst [vmem:[#allocation2 + $0x108] sm:$0xf0] 0
      %358 = vst [vmem:[#allocation2 + $0x118] sm:$0xf0] 0
      %v391 = vunpack.c.l.b16 %v286
      %v392 = vunpack.c.l.b16 %v287
      %v393 = vunpack.c.l.b16 %v288
      %v394 = vunpack.c.l.b16 %v289
      %v395 = vunpack.c.l.b16 %v290
      %v396 = vunpack.c.l.b16 %v291
      %v397 = vunpack.c.l.b16 %v292
      %v398 = vunpack.c.l.b16 %v293
      %v399 = vunpack.c.l.b16 %v294
      %v400 = vunpack.c.l.b16 %v295
      %v401 = vunpack.c.l.b16 %v296
      %v402 = vunpack.c.l.b16 %v297
      %v403 = vunpack.c.l.b16 %v298
      %v404 = vunpack.c.l.b16 %v299
      %v405 = vunpack.c.l.b16 %v300
      %v406 = vunpack.c.l.b16 %v301
      %v407 = vunpack.c.l.b16 %v302
      %v408 = vunpack.c.l.b16 %v303
      %v409 = vunpack.c.l.b16 %v304
      %v410 = vunpack.c.l.b16 %v305
      %v411 = vunpack.c.l.b16 %v306
      %v412 = vunpack.c.l.b16 %v307
      %v413 = vunpack.c.l.b16 %v308
      %v414 = vunpack.c.l.b16 %v309
      %v415 = vunpack.c.l.b16 %v310
      %v416 = vunpack.c.l.b16 %v311
      %v417 = vunpack.c.l.b16 %v312
      %v418 = vunpack.c.l.b16 %v313
      %v419 = vunpack.c.l.b16 %v314
      %v420 = vunpack.c.l.b16 %v315
      %v421 = vunpack.c.l.b16 %v316
      %v422 = vunpack.c.l.b16 %v317
      %v423 = vpack.c.b16 %v391, %v391
      %v424 = vpack.c.b16 %v392, %v392
      %v425 = vpack.c.b16 %v393, %v393
      %v426 = vpack.c.b16 %v394, %v394
      %v427 = vpack.c.b16 %v395, %v395
      %v428 = vpack.c.b16 %v396, %v396
      %v429 = vpack.c.b16 %v397, %v397
      %v430 = vpack.c.b16 %v398, %v398
      %v431 = vpack.c.b16 %v399, %v399
      %v432 = vpack.c.b16 %v400, %v400
      %v433 = vpack.c.b16 %v401, %v401
      %v434 = vpack.c.b16 %v402, %v402
      %v435 = vpack.c.b16 %v403, %v403
      %v436 = vpack.c.b16 %v404, %v404
      %v437 = vpack.c.b16 %v405, %v405
      %v438 = vpack.c.b16 %v406, %v406
      %v439 = vpack.c.b16 %v407, %v407
      %v440 = vpack.c.b16 %v408, %v408
      %v441 = vpack.c.b16 %v409, %v409
      %v442 = vpack.c.b16 %v410, %v410
      %v443 = vpack.c.b16 %v411, %v411
      %v444 = vpack.c.b16 %v412, %v412
      %v445 = vpack.c.b16 %v413, %v413
      %v446 = vpack.c.b16 %v414, %v414
      %v447 = vpack.c.b16 %v415, %v415
      %v448 = vpack.c.b16 %v416, %v416
      %v449 = vpack.c.b16 %v417, %v417
      %v450 = vpack.c.b16 %v418, %v418
      %v451 = vpack.c.b16 %v419, %v419
      %v452 = vpack.c.b16 %v420, %v420
      %v453 = vpack.c.b16 %v421, %v421
      %v454 = vpack.c.b16 %v422, %v422
      %s487 = scalar_lea.vmem [#allocation2], 16
      %488 = vst [vmem:[%s487] sm:$0xf0] %v423
      %489 = vst [vmem:[%s487 + $0x8] sm:$0xf] %v424
      %490 = vst [vmem:[%s487 + $0x10] sm:$0xf0] %v425
      %491 = vst [vmem:[%s487 + $0x18] sm:$0xf] %v426
      %492 = vst [vmem:[%s487 + $0x20] sm:$0xf0] %v427
      %493 = vst [vmem:[%s487 + $0x28] sm:$0xf] %v428
      %494 = vst [vmem:[%s487 + $0x30] sm:$0xf0] %v429
      %495 = vst [vmem:[%s487 + $0x38] sm:$0xf] %v430
      %496 = vst [vmem:[%s487 + $0x40] sm:$0xf0] %v431
      %497 = vst [vmem:[%s487 + $0x48] sm:$0xf] %v432
      %498 = vst [vmem:[%s487 + $0x50] sm:$0xf0] %v433
      %499 = vst [vmem:[%s487 + $0x58] sm:$0xf] %v434
      %500 = vst [vmem:[%s487 + $0x60] sm:$0xf0] %v435
      %501 = vst [vmem:[%s487 + $0x68] sm:$0xf] %v436
      %502 = vst [vmem:[%s487 + $0x70] sm:$0xf0] %v437
      %503 = vst [vmem:[%s487 + $0x78] sm:$0xf] %v438
      %504 = vst [vmem:[%s487 + $0x80] sm:$0xf0] %v439
      %505 = vst [vmem:[%s487 + $0x88] sm:$0xf] %v440
      %506 = vst [vmem:[%s487 + $0x90] sm:$0xf0] %v441
      %507 = vst [vmem:[%s487 + $0x98] sm:$0xf] %v442
      %508 = vst [vmem:[%s487 + $0xa0] sm:$0xf0] %v443
      %509 = vst [vmem:[%s487 + $0xa8] sm:$0xf] %v444
      %510 = vst [vmem:[%s487 + $0xb0] sm:$0xf0] %v445
      %511 = vst [vmem:[%s487 + $0xb8] sm:$0xf] %v446
      %512 = vst [vmem:[%s487 + $0xc0] sm:$0xf0] %v447
      %513 = vst [vmem:[%s487 + $0xc8] sm:$0xf] %v448
      %514 = vst [vmem:[%s487 + $0xd0] sm:$0xf0] %v449
      %515 = vst [vmem:[%s487 + $0xd8] sm:$0xf] %v450
      %516 = vst [vmem:[%s487 + $0xe0] sm:$0xf0] %v451
      %517 = vst [vmem:[%s487 + $0xe8] sm:$0xf] %v452
      %518 = vst [vmem:[%s487 + $0xf0] sm:$0xf0] %v453
      %519 = vst [vmem:[%s487 + $0xf8] sm:$0xf] %v454
      %v520 = vld [vmem:[#allocation2] sm:$0xf8]
      %v521 = vld [vmem:[#allocation2 + $0x8] sm:$0xf]
      %v522 = vld [vmem:[#allocation2 + $0x10] sm:$0xf8]
      %v523 = vld [vmem:[#allocation2 + $0x18] sm:$0xf]
      %v524 = vld [vmem:[#allocation2 + $0x20] sm:$0xf8]
      %v525 = vld [vmem:[#allocation2 + $0x28] sm:$0xf]
      %v526 = vld [vmem:[#allocation2 + $0x30] sm:$0xf8]
      %v527 = vld [vmem:[#allocation2 + $0x38] sm:$0xf]
      %v528 = vld [vmem:[#allocation2 + $0x40] sm:$0xf8]
      %v529 = vld [vmem:[#allocation2 + $0x48] sm:$0xf]
      %v530 = vld [vmem:[#allocation2 + $0x50] sm:$0xf8]
      %v531 = vld [vmem:[#allocation2 + $0x58] sm:$0xf]
      %v532 = vld [vmem:[#allocation2 + $0x60] sm:$0xf8]
      %v533 = vld [vmem:[#allocation2 + $0x68] sm:$0xf]
      %v534 = vld [vmem:[#allocation2 + $0x70] sm:$0xf8]
      %v535 = vld [vmem:[#allocation2 + $0x78] sm:$0xf]
      %v536 = vld [vmem:[#allocation2 + $0x80] sm:$0xf8]
      %v537 = vld [vmem:[#allocation2 + $0x88] sm:$0xf]
      %v538 = vld [vmem:[#allocation2 + $0x90] sm:$0xf8]
      %v539 = vld [vmem:[#allocation2 + $0x98] sm:$0xf]
      %v540 = vld [vmem:[#allocation2 + $0xa0] sm:$0xf8]
      %v541 = vld [vmem:[#allocation2 + $0xa8] sm:$0xf]
      %v542 = vld [vmem:[#allocation2 + $0xb0] sm:$0xf8]
      %v543 = vld [vmem:[#allocation2 + $0xb8] sm:$0xf]
      %v544 = vld [vmem:[#allocation2 + $0xc0] sm:$0xf8]
      %v545 = vld [vmem:[#allocation2 + $0xc8] sm:$0xf]
      %v546 = vld [vmem:[#allocation2 + $0xd0] sm:$0xf8]
      %v547 = vld [vmem:[#allocation2 + $0xd8] sm:$0xf]
      %v548 = vld [vmem:[#allocation2 + $0xe0] sm:$0xf8]
      %v549 = vld [vmem:[#allocation2 + $0xe8] sm:$0xf]
      %v550 = vld [vmem:[#allocation2 + $0xf0] sm:$0xf8]
      %v551 = vld [vmem:[#allocation2 + $0xf8] sm:$0xf]
      %v552 = vld [vmem:[#allocation2] sm:$0xf0]
      %v553 = vld [vmem:[#allocation2 + $0x10] sm:$0xf0]
      %v554 = vld [vmem:[#allocation2 + $0x20] sm:$0xf0]
      %v555 = vld [vmem:[#allocation2 + $0x30] sm:$0xf0]
      %v556 = vld [vmem:[#allocation2 + $0x40] sm:$0xf0]
      %v557 = vld [vmem:[#allocation2 + $0x50] sm:$0xf0]
      %v558 = vld [vmem:[#allocation2 + $0x60] sm:$0xf0]
      %v559 = vld [vmem:[#allocation2 + $0x70] sm:$0xf0]
      %v560 = vld [vmem:[#allocation2 + $0x80] sm:$0xf0]
      %v561 = vld [vmem:[#allocation2 + $0x90] sm:$0xf0]
      %v562 = vld [vmem:[#allocation2 + $0xa0] sm:$0xf0]
      %v563 = vld [vmem:[#allocation2 + $0xb0] sm:$0xf0]
      %v564 = vld [vmem:[#allocation2 + $0xc0] sm:$0xf0]
      %v565 = vld [vmem:[#allocation2 + $0xd0] sm:$0xf0]
      %v566 = vld [vmem:[#allocation2 + $0xe0] sm:$0xf0]
      %v567 = vld [vmem:[#allocation2 + $0xf0] sm:$0xf0]
      %v568 = vld [vmem:[#allocation2 + $0x8] sm:$0x1f]
      %v569 = vld [vmem:[#allocation2 + $0x18] sm:$0x1f]
      %v570 = vld [vmem:[#allocation2 + $0x28] sm:$0x1f]
      %v571 = vld [vmem:[#allocation2 + $0x38] sm:$0x1f]
      %v572 = vld [vmem:[#allocation2 + $0x48] sm:$0x1f]
      %v573 = vld [vmem:[#allocation2 + $0x58] sm:$0x1f]
      %v574 = vld [vmem:[#allocation2 + $0x68] sm:$0x1f]
      %v575 = vld [vmem:[#allocation2 + $0x78] sm:$0x1f]
      %v576 = vld [vmem:[#allocation2 + $0x88] sm:$0x1f]
      %v577 = vld [vmem:[#allocation2 + $0x98] sm:$0x1f]
      %v578 = vld [vmem:[#allocation2 + $0xa8] sm:$0x1f]
      %v579 = vld [vmem:[#allocation2 + $0xb8] sm:$0x1f]
      %v580 = vld [vmem:[#allocation2 + $0xc8] sm:$0x1f]
      %v581 = vld [vmem:[#allocation2 + $0xd8] sm:$0x1f]
      %v582 = vld [vmem:[#allocation2 + $0xe8] sm:$0x1f]
      %v583 = vld [vmem:[#allocation2 + $0xf8] sm:$0x1f]
      %vm584 = vsmask.f32 7424
      %v586 = vshrl.u32 %v552, 16
      %v588 = vshll.u32 %v552, 16
      %v590 = vrot.slane %v588, 1
      %v591 = vor.u32 %v586, %v590
      %v593 = vshll.u32 %v521, 16
      %v595 = vrot.slane %v593, 1
      %v596 = vsel %vm584, %v591, %v595
      %v597 = vshrl.u32 %v521, 16
      %v599 = vor.u32 %v597, %v595
      %v601 = vshrl.u32 %v553, 16
      %v603 = vshll.u32 %v553, 16
      %v605 = vrot.slane %v603, 1
      %v606 = vor.u32 %v601, %v605
      %v608 = vshll.u32 %v523, 16
      %v610 = vrot.slane %v608, 1
      %v611 = vsel %vm584, %v606, %v610
      %v612 = vshrl.u32 %v523, 16
      %v614 = vor.u32 %v612, %v610
      %v616 = vshrl.u32 %v554, 16
      %v618 = vshll.u32 %v554, 16
      %v620 = vrot.slane %v618, 1
      %v621 = vor.u32 %v616, %v620
      %v623 = vshll.u32 %v525, 16
      %v625 = vrot.slane %v623, 1
      %v626 = vsel %vm584, %v621, %v625
      %v627 = vshrl.u32 %v525, 16
      %v629 = vor.u32 %v627, %v625
      %v631 = vshrl.u32 %v555, 16
      %v633 = vshll.u32 %v555, 16
      %v635 = vrot.slane %v633, 1
      %v636 = vor.u32 %v631, %v635
      %v638 = vshll.u32 %v527, 16
      %v640 = vrot.slane %v638, 1
      %v641 = vsel %vm584, %v636, %v640
      %v642 = vshrl.u32 %v527, 16
      %v644 = vor.u32 %v642, %v640
      %v646 = vshrl.u32 %v556, 16
      %v648 = vshll.u32 %v556, 16
      %v650 = vrot.slane %v648, 1
      %v651 = vor.u32 %v646, %v650
      %v653 = vshll.u32 %v529, 16
      %v655 = vrot.slane %v653, 1
      %v656 = vsel %vm584, %v651, %v655
      %v657 = vshrl.u32 %v529, 16
      %v659 = vor.u32 %v657, %v655
      %v661 = vshrl.u32 %v557, 16
      %v663 = vshll.u32 %v557, 16
      %v665 = vrot.slane %v663, 1
      %v666 = vor.u32 %v661, %v665
      %v668 = vshll.u32 %v531, 16
      %v670 = vrot.slane %v668, 1
      %v671 = vsel %vm584, %v666, %v670
      %v672 = vshrl.u32 %v531, 16
      %v674 = vor.u32 %v672, %v670
      %v676 = vshrl.u32 %v558, 16
      %v678 = vshll.u32 %v558, 16
      %v680 = vrot.slane %v678, 1
      %v681 = vor.u32 %v676, %v680
      %v683 = vshll.u32 %v533, 16
      %v685 = vrot.slane %v683, 1
      %v686 = vsel %vm584, %v681, %v685
      %v687 = vshrl.u32 %v533, 16
      %v689 = vor.u32 %v687, %v685
      %v691 = vshrl.u32 %v559, 16
      %v693 = vshll.u32 %v559, 16
      %v695 = vrot.slane %v693, 1
      %v696 = vor.u32 %v691, %v695
      %v698 = vshll.u32 %v535, 16
      %v700 = vrot.slane %v698, 1
      %v701 = vsel %vm584, %v696, %v700
      %v702 = vshrl.u32 %v535, 16
      %v704 = vor.u32 %v702, %v700
      %v706 = vshrl.u32 %v560, 16
      %v708 = vshll.u32 %v560, 16
      %v710 = vrot.slane %v708, 1
      %v711 = vor.u32 %v706, %v710
      %v713 = vshll.u32 %v537, 16
      %v715 = vrot.slane %v713, 1
      %v716 = vsel %vm584, %v711, %v715
      %v717 = vshrl.u32 %v537, 16
      %v719 = vor.u32 %v717, %v715
      %v721 = vshrl.u32 %v561, 16
      %v723 = vshll.u32 %v561, 16
      %v725 = vrot.slane %v723, 1
      %v726 = vor.u32 %v721, %v725
      %v728 = vshll.u32 %v539, 16
      %v730 = vrot.slane %v728, 1
      %v731 = vsel %vm584, %v726, %v730
      %v732 = vshrl.u32 %v539, 16
      %v734 = vor.u32 %v732, %v730
      %v736 = vshrl.u32 %v562, 16
      %v738 = vshll.u32 %v562, 16
      %v740 = vrot.slane %v738, 1
      %v741 = vor.u32 %v736, %v740
      %v743 = vshll.u32 %v541, 16
      %v745 = vrot.slane %v743, 1
      %v746 = vsel %vm584, %v741, %v745
      %v747 = vshrl.u32 %v541, 16
      %v749 = vor.u32 %v747, %v745
      %v751 = vshrl.u32 %v563, 16
      %v753 = vshll.u32 %v563, 16
      %v755 = vrot.slane %v753, 1
      %v756 = vor.u32 %v751, %v755
      %v758 = vshll.u32 %v543, 16
      %v760 = vrot.slane %v758, 1
      %v761 = vsel %vm584, %v756, %v760
      %v762 = vshrl.u32 %v543, 16
      %v764 = vor.u32 %v762, %v760
      %v766 = vshrl.u32 %v564, 16
      %v768 = vshll.u32 %v564, 16
      %v770 = vrot.slane %v768, 1
      %v771 = vor.u32 %v766, %v770
      %v773 = vshll.u32 %v545, 16
      %v775 = vrot.slane %v773, 1
      %v776 = vsel %vm584, %v771, %v775
      %v777 = vshrl.u32 %v545, 16
      %v779 = vor.u32 %v777, %v775
      %v781 = vshrl.u32 %v565, 16
      %v783 = vshll.u32 %v565, 16
      %v785 = vrot.slane %v783, 1
      %v786 = vor.u32 %v781, %v785
      %v788 = vshll.u32 %v547, 16
      %v790 = vrot.slane %v788, 1
      %v791 = vsel %vm584, %v786, %v790
      %v792 = vshrl.u32 %v547, 16
      %v794 = vor.u32 %v792, %v790
      %v796 = vshrl.u32 %v566, 16
      %v798 = vshll.u32 %v566, 16
      %v800 = vrot.slane %v798, 1
      %v801 = vor.u32 %v796, %v800
      %v803 = vshll.u32 %v549, 16
      %v805 = vrot.slane %v803, 1
      %v806 = vsel %vm584, %v801, %v805
      %v807 = vshrl.u32 %v549, 16
      %v809 = vor.u32 %v807, %v805
      %v811 = vshrl.u32 %v567, 16
      %v813 = vshll.u32 %v567, 16
      %v815 = vrot.slane %v813, 1
      %v816 = vor.u32 %v811, %v815
      %v818 = vshll.u32 %v551, 16
      %v820 = vrot.slane %v818, 1
      %v821 = vsel %vm584, %v816, %v820
      %v822 = vshrl.u32 %v551, 16
      %v824 = vor.u32 %v822, %v820
      %vm857 = vcmask 1046528
      %v858 = vrot.slane %v552, 1
      %v859 = vrot.slane %v568, 1
      %v860 = vsel %vm857, %v858, %v859
      %v861 = vrot.slane %v553, 1
      %v862 = vrot.slane %v569, 1
      %v863 = vsel %vm857, %v861, %v862
      %v864 = vrot.slane %v554, 1
      %v865 = vrot.slane %v570, 1
      %v866 = vsel %vm857, %v864, %v865
      %v867 = vrot.slane %v555, 1
      %v868 = vrot.slane %v571, 1
      %v869 = vsel %vm857, %v867, %v868
      %v870 = vrot.slane %v556, 1
      %v871 = vrot.slane %v572, 1
      %v872 = vsel %vm857, %v870, %v871
      %v873 = vrot.slane %v557, 1
      %v874 = vrot.slane %v573, 1
      %v875 = vsel %vm857, %v873, %v874
      %v876 = vrot.slane %v558, 1
      %v877 = vrot.slane %v574, 1
      %v878 = vsel %vm857, %v876, %v877
      %v879 = vrot.slane %v559, 1
      %v880 = vrot.slane %v575, 1
      %v881 = vsel %vm857, %v879, %v880
      %v882 = vrot.slane %v560, 1
      %v883 = vrot.slane %v576, 1
      %v884 = vsel %vm857, %v882, %v883
      %v885 = vrot.slane %v561, 1
      %v886 = vrot.slane %v577, 1
      %v887 = vsel %vm857, %v885, %v886
      %v888 = vrot.slane %v562, 1
      %v889 = vrot.slane %v578, 1
      %v890 = vsel %vm857, %v888, %v889
      %v891 = vrot.slane %v563, 1
      %v892 = vrot.slane %v579, 1
      %v893 = vsel %vm857, %v891, %v892
      %v894 = vrot.slane %v564, 1
      %v895 = vrot.slane %v580, 1
      %v896 = vsel %vm857, %v894, %v895
      %v897 = vrot.slane %v565, 1
      %v898 = vrot.slane %v581, 1
      %v899 = vsel %vm857, %v897, %v898
      %v900 = vrot.slane %v566, 1
      %v901 = vrot.slane %v582, 1
      %v902 = vsel %vm857, %v900, %v901
      %v903 = vrot.slane %v567, 1
      %v904 = vrot.slane %v583, 1
      %v905 = vsel %vm857, %v903, %v904
      %vm906 = vsmask.f32 4352
      %v908 = vshrl.u32 %v520, 16
      %v910 = vrot.slane %v908, 3
      %v911 = vshll.u32 %v520, 16
      %v913 = vrot.slane %v911, 4
      %v914 = vor.u32 %v910, %v913
      %v915 = vrot.slane %v597, 3
      %v916 = vrot.slane %v593, 4
      %v917 = vor.u32 %v915, %v916
      %v918 = vsel %vm906, %v914, %v917
      %v920 = vshrl.u32 %v596, 16
      %v922 = vrot.slane %v920, 3
      %v923 = vshll.u32 %v596, 16
      %v925 = vrot.slane %v923, 4
      %v926 = vor.u32 %v922, %v925
      %v928 = vshrl.u32 %v599, 16
      %v930 = vrot.slane %v928, 3
      %v931 = vshll.u32 %v599, 16
      %v933 = vrot.slane %v931, 4
      %v934 = vor.u32 %v930, %v933
      %v935 = vsel %vm906, %v926, %v934
      %v937 = vshrl.u32 %v860, 16
      %v939 = vrot.slane %v937, 3
      %v940 = vshll.u32 %v860, 16
      %v942 = vrot.slane %v940, 4
      %v943 = vor.u32 %v939, %v942
      %v945 = vshrl.u32 %v859, 16
      %v947 = vrot.slane %v945, 3
      %v948 = vshll.u32 %v859, 16
      %v950 = vrot.slane %v948, 4
      %v951 = vor.u32 %v947, %v950
      %v952 = vsel %vm906, %v943, %v951
      %v954 = vshrl.u32 %v522, 16
      %v956 = vrot.slane %v954, 3
      %v957 = vshll.u32 %v522, 16
      %v959 = vrot.slane %v957, 4
      %v960 = vor.u32 %v956, %v959
      %v961 = vrot.slane %v612, 3
      %v962 = vrot.slane %v608, 4
      %v963 = vor.u32 %v961, %v962
      %v964 = vsel %vm906, %v960, %v963
      %v966 = vshrl.u32 %v611, 16
      %v968 = vrot.slane %v966, 3
      %v969 = vshll.u32 %v611, 16
      %v971 = vrot.slane %v969, 4
      %v972 = vor.u32 %v968, %v971
      %v974 = vshrl.u32 %v614, 16
      %v976 = vrot.slane %v974, 3
      %v977 = vshll.u32 %v614, 16
      %v979 = vrot.slane %v977, 4
      %v980 = vor.u32 %v976, %v979
      %v981 = vsel %vm906, %v972, %v980
      %v983 = vshrl.u32 %v863, 16
      %v985 = vrot.slane %v983, 3
      %v986 = vshll.u32 %v863, 16
      %v988 = vrot.slane %v986, 4
      %v989 = vor.u32 %v985, %v988
      %v991 = vshrl.u32 %v862, 16
      %v993 = vrot.slane %v991, 3
      %v994 = vshll.u32 %v862, 16
      %v996 = vrot.slane %v994, 4
      %v997 = vor.u32 %v993, %v996
      %v998 = vsel %vm906, %v989, %v997
      %v1000 = vshrl.u32 %v524, 16
      %v1002 = vrot.slane %v1000, 3
      %v1003 = vshll.u32 %v524, 16
      %v1005 = vrot.slane %v1003, 4
      %v1006 = vor.u32 %v1002, %v1005
      %v1007 = vrot.slane %v627, 3
      %v1008 = vrot.slane %v623, 4
      %v1009 = vor.u32 %v1007, %v1008
      %v1010 = vsel %vm906, %v1006, %v1009
      %v1012 = vshrl.u32 %v626, 16
      %v1014 = vrot.slane %v1012, 3
      %v1015 = vshll.u32 %v626, 16
      %v1017 = vrot.slane %v1015, 4
      %v1018 = vor.u32 %v1014, %v1017
      %v1020 = vshrl.u32 %v629, 16
      %v1022 = vrot.slane %v1020, 3
      %v1023 = vshll.u32 %v629, 16
      %v1025 = vrot.slane %v1023, 4
      %v1026 = vor.u32 %v1022, %v1025
      %v1027 = vsel %vm906, %v1018, %v1026
      %v1029 = vshrl.u32 %v866, 16
      %v1031 = vrot.slane %v1029, 3
      %v1032 = vshll.u32 %v866, 16
      %v1034 = vrot.slane %v1032, 4
      %v1035 = vor.u32 %v1031, %v1034
      %v1037 = vshrl.u32 %v865, 16
      %v1039 = vrot.slane %v1037, 3
      %v1040 = vshll.u32 %v865, 16
      %v1042 = vrot.slane %v1040, 4
      %v1043 = vor.u32 %v1039, %v1042
      %v1044 = vsel %vm906, %v1035, %v1043
      %v1046 = vshrl.u32 %v526, 16
      %v1048 = vrot.slane %v1046, 3
      %v1049 = vshll.u32 %v526, 16
      %v1051 = vrot.slane %v1049, 4
      %v1052 = vor.u32 %v1048, %v1051
      %v1053 = vrot.slane %v642, 3
      %v1054 = vrot.slane %v638, 4
      %v1055 = vor.u32 %v1053, %v1054
      %v1056 = vsel %vm906, %v1052, %v1055
      %v1058 = vshrl.u32 %v641, 16
      %v1060 = vrot.slane %v1058, 3
      %v1061 = vshll.u32 %v641, 16
      %v1063 = vrot.slane %v1061, 4
      %v1064 = vor.u32 %v1060, %v1063
      %v1066 = vshrl.u32 %v644, 16
      %v1068 = vrot.slane %v1066, 3
      %v1069 = vshll.u32 %v644, 16
      %v1071 = vrot.slane %v1069, 4
      %v1072 = vor.u32 %v1068, %v1071
      %v1073 = vsel %vm906, %v1064, %v1072
      %v1075 = vshrl.u32 %v869, 16
      %v1077 = vrot.slane %v1075, 3
      %v1078 = vshll.u32 %v869, 16
      %v1080 = vrot.slane %v1078, 4
      %v1081 = vor.u32 %v1077, %v1080
      %v1083 = vshrl.u32 %v868, 16
      %v1085 = vrot.slane %v1083, 3
      %v1086 = vshll.u32 %v868, 16
      %v1088 = vrot.slane %v1086, 4
      %v1089 = vor.u32 %v1085, %v1088
      %v1090 = vsel %vm906, %v1081, %v1089
      %v1092 = vshrl.u32 %v528, 16
      %v1094 = vrot.slane %v1092, 3
      %v1095 = vshll.u32 %v528, 16
      %v1097 = vrot.slane %v1095, 4
      %v1098 = vor.u32 %v1094, %v1097
      %v1099 = vrot.slane %v657, 3
      %v1100 = vrot.slane %v653, 4
      %v1101 = vor.u32 %v1099, %v1100
      %v1102 = vsel %vm906, %v1098, %v1101
      %v1104 = vshrl.u32 %v656, 16
      %v1106 = vrot.slane %v1104, 3
      %v1107 = vshll.u32 %v656, 16
      %v1109 = vrot.slane %v1107, 4
      %v1110 = vor.u32 %v1106, %v1109
      %v1112 = vshrl.u32 %v659, 16
      %v1114 = vrot.slane %v1112, 3
      %v1115 = vshll.u32 %v659, 16
      %v1117 = vrot.slane %v1115, 4
      %v1118 = vor.u32 %v1114, %v1117
      %v1119 = vsel %vm906, %v1110, %v1118
      %v1121 = vshrl.u32 %v872, 16
      %v1123 = vrot.slane %v1121, 3
      %v1124 = vshll.u32 %v872, 16
      %v1126 = vrot.slane %v1124, 4
      %v1127 = vor.u32 %v1123, %v1126
      %v1129 = vshrl.u32 %v871, 16
      %v1131 = vrot.slane %v1129, 3
      %v1132 = vshll.u32 %v871, 16
      %v1134 = vrot.slane %v1132, 4
      %v1135 = vor.u32 %v1131, %v1134
      %v1136 = vsel %vm906, %v1127, %v1135
      %v1138 = vshrl.u32 %v530, 16
      %v1140 = vrot.slane %v1138, 3
      %v1141 = vshll.u32 %v530, 16
      %v1143 = vrot.slane %v1141, 4
      %v1144 = vor.u32 %v1140, %v1143
      %v1145 = vrot.slane %v672, 3
      %v1146 = vrot.slane %v668, 4
      %v1147 = vor.u32 %v1145, %v1146
      %v1148 = vsel %vm906, %v1144, %v1147
      %v1150 = vshrl.u32 %v671, 16
      %v1152 = vrot.slane %v1150, 3
      %v1153 = vshll.u32 %v671, 16
      %v1155 = vrot.slane %v1153, 4
      %v1156 = vor.u32 %v1152, %v1155
      %v1158 = vshrl.u32 %v674, 16
      %v1160 = vrot.slane %v1158, 3
      %v1161 = vshll.u32 %v674, 16
      %v1163 = vrot.slane %v1161, 4
      %v1164 = vor.u32 %v1160, %v1163
      %v1165 = vsel %vm906, %v1156, %v1164
      %v1167 = vshrl.u32 %v875, 16
      %v1169 = vrot.slane %v1167, 3
      %v1170 = vshll.u32 %v875, 16
      %v1172 = vrot.slane %v1170, 4
      %v1173 = vor.u32 %v1169, %v1172
      %v1175 = vshrl.u32 %v874, 16
      %v1177 = vrot.slane %v1175, 3
      %v1178 = vshll.u32 %v874, 16
      %v1180 = vrot.slane %v1178, 4
      %v1181 = vor.u32 %v1177, %v1180
      %v1182 = vsel %vm906, %v1173, %v1181
      %v1184 = vshrl.u32 %v532, 16
      %v1186 = vrot.slane %v1184, 3
      %v1187 = vshll.u32 %v532, 16
      %v1189 = vrot.slane %v1187, 4
      %v1190 = vor.u32 %v1186, %v1189
      %v1191 = vrot.slane %v687, 3
      %v1192 = vrot.slane %v683, 4
      %v1193 = vor.u32 %v1191, %v1192
      %v1194 = vsel %vm906, %v1190, %v1193
      %v1196 = vshrl.u32 %v686, 16
      %v1198 = vrot.slane %v1196, 3
      %v1199 = vshll.u32 %v686, 16
      %v1201 = vrot.slane %v1199, 4
      %v1202 = vor.u32 %v1198, %v1201
      %v1204 = vshrl.u32 %v689, 16
      %v1206 = vrot.slane %v1204, 3
      %v1207 = vshll.u32 %v689, 16
      %v1209 = vrot.slane %v1207, 4
      %v1210 = vor.u32 %v1206, %v1209
      %v1211 = vsel %vm906, %v1202, %v1210
      %v1213 = vshrl.u32 %v878, 16
      %v1215 = vrot.slane %v1213, 3
      %v1216 = vshll.u32 %v878, 16
      %v1218 = vrot.slane %v1216, 4
      %v1219 = vor.u32 %v1215, %v1218
      %v1221 = vshrl.u32 %v877, 16
      %v1223 = vrot.slane %v1221, 3
      %v1224 = vshll.u32 %v877, 16
      %v1226 = vrot.slane %v1224, 4
      %v1227 = vor.u32 %v1223, %v1226
      %v1228 = vsel %vm906, %v1219, %v1227
      %v1230 = vshrl.u32 %v534, 16
      %v1232 = vrot.slane %v1230, 3
      %v1233 = vshll.u32 %v534, 16
      %v1235 = vrot.slane %v1233, 4
      %v1236 = vor.u32 %v1232, %v1235
      %v1237 = vrot.slane %v702, 3
      %v1238 = vrot.slane %v698, 4
      %v1239 = vor.u32 %v1237, %v1238
      %v1240 = vsel %vm906, %v1236, %v1239
      %v1242 = vshrl.u32 %v701, 16
      %v1244 = vrot.slane %v1242, 3
      %v1245 = vshll.u32 %v701, 16
      %v1247 = vrot.slane %v1245, 4
      %v1248 = vor.u32 %v1244, %v1247
      %v1250 = vshrl.u32 %v704, 16
      %v1252 = vrot.slane %v1250, 3
      %v1253 = vshll.u32 %v704, 16
      %v1255 = vrot.slane %v1253, 4
      %v1256 = vor.u32 %v1252, %v1255
      %v1257 = vsel %vm906, %v1248, %v1256
      %v1259 = vshrl.u32 %v881, 16
      %v1261 = vrot.slane %v1259, 3
      %v1262 = vshll.u32 %v881, 16
      %v1264 = vrot.slane %v1262, 4
      %v1265 = vor.u32 %v1261, %v1264
      %v1267 = vshrl.u32 %v880, 16
      %v1269 = vrot.slane %v1267, 3
      %v1270 = vshll.u32 %v880, 16
      %v1272 = vrot.slane %v1270, 4
      %v1273 = vor.u32 %v1269, %v1272
      %v1274 = vsel %vm906, %v1265, %v1273
      %v1276 = vshrl.u32 %v536, 16
      %v1278 = vrot.slane %v1276, 3
      %v1279 = vshll.u32 %v536, 16
      %v1281 = vrot.slane %v1279, 4
      %v1282 = vor.u32 %v1278, %v1281
      %v1283 = vrot.slane %v717, 3
      %v1284 = vrot.slane %v713, 4
      %v1285 = vor.u32 %v1283, %v1284
      %v1286 = vsel %vm906, %v1282, %v1285
      %v1288 = vshrl.u32 %v716, 16
      %v1290 = vrot.slane %v1288, 3
      %v1291 = vshll.u32 %v716, 16
      %v1293 = vrot.slane %v1291, 4
      %v1294 = vor.u32 %v1290, %v1293
      %v1296 = vshrl.u32 %v719, 16
      %v1298 = vrot.slane %v1296, 3
      %v1299 = vshll.u32 %v719, 16
      %v1301 = vrot.slane %v1299, 4
      %v1302 = vor.u32 %v1298, %v1301
      %v1303 = vsel %vm906, %v1294, %v1302
      %v1305 = vshrl.u32 %v884, 16
      %v1307 = vrot.slane %v1305, 3
      %v1308 = vshll.u32 %v884, 16
      %v1310 = vrot.slane %v1308, 4
      %v1311 = vor.u32 %v1307, %v1310
      %v1313 = vshrl.u32 %v883, 16
      %v1315 = vrot.slane %v1313, 3
      %v1316 = vshll.u32 %v883, 16
      %v1318 = vrot.slane %v1316, 4
      %v1319 = vor.u32 %v1315, %v1318
      %v1320 = vsel %vm906, %v1311, %v1319
      %v1322 = vshrl.u32 %v538, 16
      %v1324 = vrot.slane %v1322, 3
      %v1325 = vshll.u32 %v538, 16
      %v1327 = vrot.slane %v1325, 4
      %v1328 = vor.u32 %v1324, %v1327
      %v1329 = vrot.slane %v732, 3
      %v1330 = vrot.slane %v728, 4
      %v1331 = vor.u32 %v1329, %v1330
      %v1332 = vsel %vm906, %v1328, %v1331
      %v1334 = vshrl.u32 %v731, 16
      %v1336 = vrot.slane %v1334, 3
      %v1337 = vshll.u32 %v731, 16
      %v1339 = vrot.slane %v1337, 4
      %v1340 = vor.u32 %v1336, %v1339
      %v1342 = vshrl.u32 %v734, 16
      %v1344 = vrot.slane %v1342, 3
      %v1345 = vshll.u32 %v734, 16
      %v1347 = vrot.slane %v1345, 4
      %v1348 = vor.u32 %v1344, %v1347
      %v1349 = vsel %vm906, %v1340, %v1348
      %v1351 = vshrl.u32 %v887, 16
      %v1353 = vrot.slane %v1351, 3
      %v1354 = vshll.u32 %v887, 16
      %v1356 = vrot.slane %v1354, 4
      %v1357 = vor.u32 %v1353, %v1356
      %v1359 = vshrl.u32 %v886, 16
      %v1361 = vrot.slane %v1359, 3
      %v1362 = vshll.u32 %v886, 16
      %v1364 = vrot.slane %v1362, 4
      %v1365 = vor.u32 %v1361, %v1364
      %v1366 = vsel %vm906, %v1357, %v1365
      %v1368 = vshrl.u32 %v540, 16
      %v1370 = vrot.slane %v1368, 3
      %v1371 = vshll.u32 %v540, 16
      %v1373 = vrot.slane %v1371, 4
      %v1374 = vor.u32 %v1370, %v1373
      %v1375 = vrot.slane %v747, 3
      %v1376 = vrot.slane %v743, 4
      %v1377 = vor.u32 %v1375, %v1376
      %v1378 = vsel %vm906, %v1374, %v1377
      %v1380 = vshrl.u32 %v746, 16
      %v1382 = vrot.slane %v1380, 3
      %v1383 = vshll.u32 %v746, 16
      %v1385 = vrot.slane %v1383, 4
      %v1386 = vor.u32 %v1382, %v1385
      %v1388 = vshrl.u32 %v749, 16
      %v1390 = vrot.slane %v1388, 3
      %v1391 = vshll.u32 %v749, 16
      %v1393 = vrot.slane %v1391, 4
      %v1394 = vor.u32 %v1390, %v1393
      %v1395 = vsel %vm906, %v1386, %v1394
      %v1397 = vshrl.u32 %v890, 16
      %v1399 = vrot.slane %v1397, 3
      %v1400 = vshll.u32 %v890, 16
      %v1402 = vrot.slane %v1400, 4
      %v1403 = vor.u32 %v1399, %v1402
      %v1405 = vshrl.u32 %v889, 16
      %v1407 = vrot.slane %v1405, 3
      %v1408 = vshll.u32 %v889, 16
      %v1410 = vrot.slane %v1408, 4
      %v1411 = vor.u32 %v1407, %v1410
      %v1412 = vsel %vm906, %v1403, %v1411
      %v1414 = vshrl.u32 %v542, 16
      %v1416 = vrot.slane %v1414, 3
      %v1417 = vshll.u32 %v542, 16
      %v1419 = vrot.slane %v1417, 4
      %v1420 = vor.u32 %v1416, %v1419
      %v1421 = vrot.slane %v762, 3
      %v1422 = vrot.slane %v758, 4
      %v1423 = vor.u32 %v1421, %v1422
      %v1424 = vsel %vm906, %v1420, %v1423
      %v1426 = vshrl.u32 %v761, 16
      %v1428 = vrot.slane %v1426, 3
      %v1429 = vshll.u32 %v761, 16
      %v1431 = vrot.slane %v1429, 4
      %v1432 = vor.u32 %v1428, %v1431
      %v1434 = vshrl.u32 %v764, 16
      %v1436 = vrot.slane %v1434, 3
      %v1437 = vshll.u32 %v764, 16
      %v1439 = vrot.slane %v1437, 4
      %v1440 = vor.u32 %v1436, %v1439
      %v1441 = vsel %vm906, %v1432, %v1440
      %v1443 = vshrl.u32 %v893, 16
      %v1445 = vrot.slane %v1443, 3
      %v1446 = vshll.u32 %v893, 16
      %v1448 = vrot.slane %v1446, 4
      %v1449 = vor.u32 %v1445, %v1448
      %v1451 = vshrl.u32 %v892, 16
      %v1453 = vrot.slane %v1451, 3
      %v1454 = vshll.u32 %v892, 16
      %v1456 = vrot.slane %v1454, 4
      %v1457 = vor.u32 %v1453, %v1456
      %v1458 = vsel %vm906, %v1449, %v1457
      %v1460 = vshrl.u32 %v544, 16
      %v1462 = vrot.slane %v1460, 3
      %v1463 = vshll.u32 %v544, 16
      %v1465 = vrot.slane %v1463, 4
      %v1466 = vor.u32 %v1462, %v1465
      %v1467 = vrot.slane %v777, 3
      %v1468 = vrot.slane %v773, 4
      %v1469 = vor.u32 %v1467, %v1468
      %v1470 = vsel %vm906, %v1466, %v1469
      %v1472 = vshrl.u32 %v776, 16
      %v1474 = vrot.slane %v1472, 3
      %v1475 = vshll.u32 %v776, 16
      %v1477 = vrot.slane %v1475, 4
      %v1478 = vor.u32 %v1474, %v1477
      %v1480 = vshrl.u32 %v779, 16
      %v1482 = vrot.slane %v1480, 3
      %v1483 = vshll.u32 %v779, 16
      %v1485 = vrot.slane %v1483, 4
      %v1486 = vor.u32 %v1482, %v1485
      %v1487 = vsel %vm906, %v1478, %v1486
      %v1489 = vshrl.u32 %v896, 16
      %v1491 = vrot.slane %v1489, 3
      %v1492 = vshll.u32 %v896, 16
      %v1494 = vrot.slane %v1492, 4
      %v1495 = vor.u32 %v1491, %v1494
      %v1497 = vshrl.u32 %v895, 16
      %v1499 = vrot.slane %v1497, 3
      %v1500 = vshll.u32 %v895, 16
      %v1502 = vrot.slane %v1500, 4
      %v1503 = vor.u32 %v1499, %v1502
      %v1504 = vsel %vm906, %v1495, %v1503
      %v1506 = vshrl.u32 %v546, 16
      %v1508 = vrot.slane %v1506, 3
      %v1509 = vshll.u32 %v546, 16
      %v1511 = vrot.slane %v1509, 4
      %v1512 = vor.u32 %v1508, %v1511
      %v1513 = vrot.slane %v792, 3
      %v1514 = vrot.slane %v788, 4
      %v1515 = vor.u32 %v1513, %v1514
      %v1516 = vsel %vm906, %v1512, %v1515
      %v1518 = vshrl.u32 %v791, 16
      %v1520 = vrot.slane %v1518, 3
      %v1521 = vshll.u32 %v791, 16
      %v1523 = vrot.slane %v1521, 4
      %v1524 = vor.u32 %v1520, %v1523
      %v1526 = vshrl.u32 %v794, 16
      %v1528 = vrot.slane %v1526, 3
      %v1529 = vshll.u32 %v794, 16
      %v1531 = vrot.slane %v1529, 4
      %v1532 = vor.u32 %v1528, %v1531
      %v1533 = vsel %vm906, %v1524, %v1532
      %v1535 = vshrl.u32 %v899, 16
      %v1537 = vrot.slane %v1535, 3
      %v1538 = vshll.u32 %v899, 16
      %v1540 = vrot.slane %v1538, 4
      %v1541 = vor.u32 %v1537, %v1540
      %v1543 = vshrl.u32 %v898, 16
      %v1545 = vrot.slane %v1543, 3
      %v1546 = vshll.u32 %v898, 16
      %v1548 = vrot.slane %v1546, 4
      %v1549 = vor.u32 %v1545, %v1548
      %v1550 = vsel %vm906, %v1541, %v1549
      %v1552 = vshrl.u32 %v548, 16
      %v1554 = vrot.slane %v1552, 3
      %v1555 = vshll.u32 %v548, 16
      %v1557 = vrot.slane %v1555, 4
      %v1558 = vor.u32 %v1554, %v1557
      %v1559 = vrot.slane %v807, 3
      %v1560 = vrot.slane %v803, 4
      %v1561 = vor.u32 %v1559, %v1560
      %v1562 = vsel %vm906, %v1558, %v1561
      %v1564 = vshrl.u32 %v806, 16
      %v1566 = vrot.slane %v1564, 3
      %v1567 = vshll.u32 %v806, 16
      %v1569 = vrot.slane %v1567, 4
      %v1570 = vor.u32 %v1566, %v1569
      %v1572 = vshrl.u32 %v809, 16
      %v1574 = vrot.slane %v1572, 3
      %v1575 = vshll.u32 %v809, 16
      %v1577 = vrot.slane %v1575, 4
      %v1578 = vor.u32 %v1574, %v1577
      %v1579 = vsel %vm906, %v1570, %v1578
      %v1581 = vshrl.u32 %v902, 16
      %v1583 = vrot.slane %v1581, 3
      %v1584 = vshll.u32 %v902, 16
      %v1586 = vrot.slane %v1584, 4
      %v1587 = vor.u32 %v1583, %v1586
      %v1589 = vshrl.u32 %v901, 16
      %v1591 = vrot.slane %v1589, 3
      %v1592 = vshll.u32 %v901, 16
      %v1594 = vrot.slane %v1592, 4
      %v1595 = vor.u32 %v1591, %v1594
      %v1596 = vsel %vm906, %v1587, %v1595
      %v1598 = vshrl.u32 %v550, 16
      %v1600 = vrot.slane %v1598, 3
      %v1601 = vshll.u32 %v550, 16
      %v1603 = vrot.slane %v1601, 4
      %v1604 = vor.u32 %v1600, %v1603
      %v1605 = vrot.slane %v822, 3
      %v1606 = vrot.slane %v818, 4
      %v1607 = vor.u32 %v1605, %v1606
      %v1608 = vsel %vm906, %v1604, %v1607
      %v1610 = vshrl.u32 %v821, 16
      %v1612 = vrot.slane %v1610, 3
      %v1613 = vshll.u32 %v821, 16
      %v1615 = vrot.slane %v1613, 4
      %v1616 = vor.u32 %v1612, %v1615
      %v1618 = vshrl.u32 %v824, 16
      %v1620 = vrot.slane %v1618, 3
      %v1621 = vshll.u32 %v824, 16
      %v1623 = vrot.slane %v1621, 4
      %v1624 = vor.u32 %v1620, %v1623
      %v1625 = vsel %vm906, %v1616, %v1624
      %v1627 = vshrl.u32 %v905, 16
      %v1629 = vrot.slane %v1627, 3
      %v1630 = vshll.u32 %v905, 16
      %v1632 = vrot.slane %v1630, 4
      %v1633 = vor.u32 %v1629, %v1632
      %v1635 = vshrl.u32 %v904, 16
      %v1637 = vrot.slane %v1635, 3
      %v1638 = vshll.u32 %v904, 16
      %v1640 = vrot.slane %v1638, 4
      %v1641 = vor.u32 %v1637, %v1640
      %v1642 = vsel %vm906, %v1633, %v1641
      %v1691 = vld [vmem:[%s1] sm:$0xf]
      %v1692 = vld [vmem:[%s1 + $0x4] sm:$0xf]
      %v1693 = vld [vmem:[%s1 + $0x8] sm:$0xf]
      %v1694 = vld [vmem:[%s1 + $0xc] sm:$0xf]
      %v1695 = vld [vmem:[%s1 + $0x10] sm:$0xf]
      %v1696 = vld [vmem:[%s1 + $0x14] sm:$0xf]
      %v1697 = vld [vmem:[%s1 + $0x18] sm:$0xf]
      %v1698 = vld [vmem:[%s1 + $0x1c] sm:$0xf]
      %v1699 = vld [vmem:[%s1 + $0x20] sm:$0xf]
      %v1700 = vld [vmem:[%s1 + $0x24] sm:$0xf]
      %v1701 = vld [vmem:[%s1 + $0x28] sm:$0xf]
      %v1702 = vld [vmem:[%s1 + $0x2c] sm:$0xf]
      %v1703 = vld [vmem:[%s1 + $0x30] sm:$0xf]
      %v1704 = vld [vmem:[%s1 + $0x34] sm:$0xf]
      %v1705 = vld [vmem:[%s1 + $0x38] sm:$0xf]
      %v1706 = vld [vmem:[%s1 + $0x3c] sm:$0xf]
      %v1707 = vld [vmem:[%s1 + $0x40] sm:$0xf]
      %v1708 = vld [vmem:[%s1 + $0x44] sm:$0xf]
      %v1709 = vld [vmem:[%s1 + $0x48] sm:$0xf]
      %v1710 = vld [vmem:[%s1 + $0x4c] sm:$0xf]
      %v1711 = vld [vmem:[%s1 + $0x50] sm:$0xf]
      %v1712 = vld [vmem:[%s1 + $0x54] sm:$0xf]
      %v1713 = vld [vmem:[%s1 + $0x58] sm:$0xf]
      %v1714 = vld [vmem:[%s1 + $0x5c] sm:$0xf]
      %v1715 = vld [vmem:[%s1 + $0x60] sm:$0xf]
      %v1716 = vld [vmem:[%s1 + $0x64] sm:$0xf]
      %v1717 = vld [vmem:[%s1 + $0x68] sm:$0xf]
      %v1718 = vld [vmem:[%s1 + $0x6c] sm:$0xf]
      %v1719 = vld [vmem:[%s1 + $0x70] sm:$0xf]
      %v1720 = vld [vmem:[%s1 + $0x74] sm:$0xf]
      %v1721 = vld [vmem:[%s1 + $0x78] sm:$0xf]
      %v1722 = vld [vmem:[%s1 + $0x7c] sm:$0xf]
      %v1723 = vld [vmem:[%s1 + $0x80] sm:$0xf]
      %v1724 = vld [vmem:[%s1 + $0x84] sm:$0xf]
      %v1725 = vld [vmem:[%s1 + $0x88] sm:$0xf]
      %v1726 = vld [vmem:[%s1 + $0x8c] sm:$0xf]
      %v1727 = vld [vmem:[%s1 + $0x90] sm:$0xf]
      %v1728 = vld [vmem:[%s1 + $0x94] sm:$0xf]
      %v1729 = vld [vmem:[%s1 + $0x98] sm:$0xf]
      %v1730 = vld [vmem:[%s1 + $0x9c] sm:$0xf]
      %v1731 = vld [vmem:[%s1 + $0xa0] sm:$0xf]
      %v1732 = vld [vmem:[%s1 + $0xa4] sm:$0xf]
      %v1733 = vld [vmem:[%s1 + $0xa8] sm:$0xf]
      %v1734 = vld [vmem:[%s1 + $0xac] sm:$0xf]
      %v1735 = vld [vmem:[%s1 + $0xb0] sm:$0xf]
      %v1736 = vld [vmem:[%s1 + $0xb4] sm:$0xf]
      %v1737 = vld [vmem:[%s1 + $0xb8] sm:$0xf]
      %v1738 = vld [vmem:[%s1 + $0xbc] sm:$0xf]
      %v1739 = vld [vmem:[%s487] sm:$0xf8]
      %v1740 = vld [vmem:[%s487 + $0x8] sm:$0xf]
      %v1741 = vld [vmem:[%s487 + $0x10] sm:$0xf8]
      %v1742 = vld [vmem:[%s487 + $0x18] sm:$0xf]
      %v1743 = vld [vmem:[%s487 + $0x20] sm:$0xf8]
      %v1744 = vld [vmem:[%s487 + $0x28] sm:$0xf]
      %v1745 = vld [vmem:[%s487 + $0x30] sm:$0xf8]
      %v1746 = vld [vmem:[%s487 + $0x38] sm:$0xf]
      %v1747 = vld [vmem:[%s487 + $0x40] sm:$0xf8]
      %v1748 = vld [vmem:[%s487 + $0x48] sm:$0xf]
      %v1749 = vld [vmem:[%s487 + $0x50] sm:$0xf8]
      %v1750 = vld [vmem:[%s487 + $0x58] sm:$0xf]
      %v1751 = vld [vmem:[%s487 + $0x60] sm:$0xf8]
      %v1752 = vld [vmem:[%s487 + $0x68] sm:$0xf]
      %v1753 = vld [vmem:[%s487 + $0x70] sm:$0xf8]
      %v1754 = vld [vmem:[%s487 + $0x78] sm:$0xf]
      %v1755 = vld [vmem:[%s487 + $0x80] sm:$0xf8]
      %v1756 = vld [vmem:[%s487 + $0x88] sm:$0xf]
      %v1757 = vld [vmem:[%s487 + $0x90] sm:$0xf8]
      %v1758 = vld [vmem:[%s487 + $0x98] sm:$0xf]
      %v1759 = vld [vmem:[%s487 + $0xa0] sm:$0xf8]
      %v1760 = vld [vmem:[%s487 + $0xa8] sm:$0xf]
      %v1761 = vld [vmem:[%s487 + $0xb0] sm:$0xf8]
      %v1762 = vld [vmem:[%s487 + $0xb8] sm:$0xf]
      %v1763 = vld [vmem:[%s487 + $0xc0] sm:$0xf8]
      %v1764 = vld [vmem:[%s487 + $0xc8] sm:$0xf]
      %v1765 = vld [vmem:[%s487 + $0xd0] sm:$0xf8]
      %v1766 = vld [vmem:[%s487 + $0xd8] sm:$0xf]
      %v1767 = vld [vmem:[%s487 + $0xe0] sm:$0xf8]
      %v1768 = vld [vmem:[%s487 + $0xe8] sm:$0xf]
      %v1769 = vld [vmem:[%s487 + $0xf0] sm:$0xf8]
      %v1770 = vld [vmem:[%s487 + $0xf8] sm:$0xf]
      %v1771 = vld [vmem:[%s487] sm:$0xf0]
      %v1772 = vld [vmem:[%s487 + $0x10] sm:$0xf0]
      %v1773 = vld [vmem:[%s487 + $0x20] sm:$0xf0]
      %v1774 = vld [vmem:[%s487 + $0x30] sm:$0xf0]
      %v1775 = vld [vmem:[%s487 + $0x40] sm:$0xf0]
      %v1776 = vld [vmem:[%s487 + $0x50] sm:$0xf0]
      %v1777 = vld [vmem:[%s487 + $0x60] sm:$0xf0]
      %v1778 = vld [vmem:[%s487 + $0x70] sm:$0xf0]
      %v1779 = vld [vmem:[%s487 + $0x80] sm:$0xf0]
      %v1780 = vld [vmem:[%s487 + $0x90] sm:$0xf0]
      %v1781 = vld [vmem:[%s487 + $0xa0] sm:$0xf0]
      %v1782 = vld [vmem:[%s487 + $0xb0] sm:$0xf0]
      %v1783 = vld [vmem:[%s487 + $0xc0] sm:$0xf0]
      %v1784 = vld [vmem:[%s487 + $0xd0] sm:$0xf0]
      %v1785 = vld [vmem:[%s487 + $0xe0] sm:$0xf0]
      %v1786 = vld [vmem:[%s487 + $0xf0] sm:$0xf0]
      %v1787 = vld [vmem:[%s487 + $0x8] sm:$0x1f]
      %v1788 = vld [vmem:[%s487 + $0x18] sm:$0x1f]
      %v1789 = vld [vmem:[%s487 + $0x28] sm:$0x1f]
      %v1790 = vld [vmem:[%s487 + $0x38] sm:$0x1f]
      %v1791 = vld [vmem:[%s487 + $0x48] sm:$0x1f]
      %v1792 = vld [vmem:[%s487 + $0x58] sm:$0x1f]
      %v1793 = vld [vmem:[%s487 + $0x68] sm:$0x1f]
      %v1794 = vld [vmem:[%s487 + $0x78] sm:$0x1f]
      %v1795 = vld [vmem:[%s487 + $0x88] sm:$0x1f]
      %v1796 = vld [vmem:[%s487 + $0x98] sm:$0x1f]
      %v1797 = vld [vmem:[%s487 + $0xa8] sm:$0x1f]
      %v1798 = vld [vmem:[%s487 + $0xb8] sm:$0x1f]
      %v1799 = vld [vmem:[%s487 + $0xc8] sm:$0x1f]
      %v1800 = vld [vmem:[%s487 + $0xd8] sm:$0x1f]
      %v1801 = vld [vmem:[%s487 + $0xe8] sm:$0x1f]
      %v1802 = vld [vmem:[%s487 + $0xf8] sm:$0x1f]
      %v1804 = vshrl.u32 %v1771, 16
      %v1806 = vshll.u32 %v1771, 16
      %v1808 = vrot.slane %v1806, 1
      %v1809 = vor.u32 %v1804, %v1808
      %v1811 = vshll.u32 %v1740, 16
      %v1813 = vrot.slane %v1811, 1
      %v1814 = vsel %vm584, %v1809, %v1813
      %v1815 = vshrl.u32 %v1740, 16
      %v1817 = vor.u32 %v1815, %v1813
      %v1819 = vshrl.u32 %v1772, 16
      %v1821 = vshll.u32 %v1772, 16
      %v1823 = vrot.slane %v1821, 1
      %v1824 = vor.u32 %v1819, %v1823
      %v1826 = vshll.u32 %v1742, 16
      %v1828 = vrot.slane %v1826, 1
      %v1829 = vsel %vm584, %v1824, %v1828
      %v1830 = vshrl.u32 %v1742, 16
      %v1832 = vor.u32 %v1830, %v1828
      %v1834 = vshrl.u32 %v1773, 16
      %v1836 = vshll.u32 %v1773, 16
      %v1838 = vrot.slane %v1836, 1
      %v1839 = vor.u32 %v1834, %v1838
      %v1841 = vshll.u32 %v1744, 16
      %v1843 = vrot.slane %v1841, 1
      %v1844 = vsel %vm584, %v1839, %v1843
      %v1845 = vshrl.u32 %v1744, 16
      %v1847 = vor.u32 %v1845, %v1843
      %v1849 = vshrl.u32 %v1774, 16
      %v1851 = vshll.u32 %v1774, 16
      %v1853 = vrot.slane %v1851, 1
      %v1854 = vor.u32 %v1849, %v1853
      %v1856 = vshll.u32 %v1746, 16
      %v1858 = vrot.slane %v1856, 1
      %v1859 = vsel %vm584, %v1854, %v1858
      %v1860 = vshrl.u32 %v1746, 16
      %v1862 = vor.u32 %v1860, %v1858
      %v1864 = vshrl.u32 %v1775, 16
      %v1866 = vshll.u32 %v1775, 16
      %v1868 = vrot.slane %v1866, 1
      %v1869 = vor.u32 %v1864, %v1868
      %v1871 = vshll.u32 %v1748, 16
      %v1873 = vrot.slane %v1871, 1
      %v1874 = vsel %vm584, %v1869, %v1873
      %v1875 = vshrl.u32 %v1748, 16
      %v1877 = vor.u32 %v1875, %v1873
      %v1879 = vshrl.u32 %v1776, 16
      %v1881 = vshll.u32 %v1776, 16
      %v1883 = vrot.slane %v1881, 1
      %v1884 = vor.u32 %v1879, %v1883
      %v1886 = vshll.u32 %v1750, 16
      %v1888 = vrot.slane %v1886, 1
      %v1889 = vsel %vm584, %v1884, %v1888
      %v1890 = vshrl.u32 %v1750, 16
      %v1892 = vor.u32 %v1890, %v1888
      %v1894 = vshrl.u32 %v1777, 16
      %v1896 = vshll.u32 %v1777, 16
      %v1898 = vrot.slane %v1896, 1
      %v1899 = vor.u32 %v1894, %v1898
      %v1901 = vshll.u32 %v1752, 16
      %v1903 = vrot.slane %v1901, 1
      %v1904 = vsel %vm584, %v1899, %v1903
      %v1905 = vshrl.u32 %v1752, 16
      %v1907 = vor.u32 %v1905, %v1903
      %v1909 = vshrl.u32 %v1778, 16
      %v1911 = vshll.u32 %v1778, 16
      %v1913 = vrot.slane %v1911, 1
      %v1914 = vor.u32 %v1909, %v1913
      %v1916 = vshll.u32 %v1754, 16
      %v1918 = vrot.slane %v1916, 1
      %v1919 = vsel %vm584, %v1914, %v1918
      %v1920 = vshrl.u32 %v1754, 16
      %v1922 = vor.u32 %v1920, %v1918
      %v1924 = vshrl.u32 %v1779, 16
      %v1926 = vshll.u32 %v1779, 16
      %v1928 = vrot.slane %v1926, 1
      %v1929 = vor.u32 %v1924, %v1928
      %v1931 = vshll.u32 %v1756, 16
      %v1933 = vrot.slane %v1931, 1
      %v1934 = vsel %vm584, %v1929, %v1933
      %v1935 = vshrl.u32 %v1756, 16
      %v1937 = vor.u32 %v1935, %v1933
      %v1939 = vshrl.u32 %v1780, 16
      %v1941 = vshll.u32 %v1780, 16
      %v1943 = vrot.slane %v1941, 1
      %v1944 = vor.u32 %v1939, %v1943
      %v1946 = vshll.u32 %v1758, 16
      %v1948 = vrot.slane %v1946, 1
      %v1949 = vsel %vm584, %v1944, %v1948
      %v1950 = vshrl.u32 %v1758, 16
      %v1952 = vor.u32 %v1950, %v1948
      %v1954 = vshrl.u32 %v1781, 16
      %v1956 = vshll.u32 %v1781, 16
      %v1958 = vrot.slane %v1956, 1
      %v1959 = vor.u32 %v1954, %v1958
      %v1961 = vshll.u32 %v1760, 16
      %v1963 = vrot.slane %v1961, 1
      %v1964 = vsel %vm584, %v1959, %v1963
      %v1965 = vshrl.u32 %v1760, 16
      %v1967 = vor.u32 %v1965, %v1963
      %v1969 = vshrl.u32 %v1782, 16
      %v1971 = vshll.u32 %v1782, 16
      %v1973 = vrot.slane %v1971, 1
      %v1974 = vor.u32 %v1969, %v1973
      %v1976 = vshll.u32 %v1762, 16
      %v1978 = vrot.slane %v1976, 1
      %v1979 = vsel %vm584, %v1974, %v1978
      %v1980 = vshrl.u32 %v1762, 16
      %v1982 = vor.u32 %v1980, %v1978
      %v1984 = vshrl.u32 %v1783, 16
      %v1986 = vshll.u32 %v1783, 16
      %v1988 = vrot.slane %v1986, 1
      %v1989 = vor.u32 %v1984, %v1988
      %v1991 = vshll.u32 %v1764, 16
      %v1993 = vrot.slane %v1991, 1
      %v1994 = vsel %vm584, %v1989, %v1993
      %v1995 = vshrl.u32 %v1764, 16
      %v1997 = vor.u32 %v1995, %v1993
      %v1999 = vshrl.u32 %v1784, 16
      %v2001 = vshll.u32 %v1784, 16
      %v2003 = vrot.slane %v2001, 1
      %v2004 = vor.u32 %v1999, %v2003
      %v2006 = vshll.u32 %v1766, 16
      %v2008 = vrot.slane %v2006, 1
      %v2009 = vsel %vm584, %v2004, %v2008
      %v2010 = vshrl.u32 %v1766, 16
      %v2012 = vor.u32 %v2010, %v2008
      %v2014 = vshrl.u32 %v1785, 16
      %v2016 = vshll.u32 %v1785, 16
      %v2018 = vrot.slane %v2016, 1
      %v2019 = vor.u32 %v2014, %v2018
      %v2021 = vshll.u32 %v1768, 16
      %v2023 = vrot.slane %v2021, 1
      %v2024 = vsel %vm584, %v2019, %v2023
      %v2025 = vshrl.u32 %v1768, 16
      %v2027 = vor.u32 %v2025, %v2023
      %v2029 = vshrl.u32 %v1786, 16
      %v2031 = vshll.u32 %v1786, 16
      %v2033 = vrot.slane %v2031, 1
      %v2034 = vor.u32 %v2029, %v2033
      %v2036 = vshll.u32 %v1770, 16
      %v2038 = vrot.slane %v2036, 1
      %v2039 = vsel %vm584, %v2034, %v2038
      %v2040 = vshrl.u32 %v1770, 16
      %v2042 = vor.u32 %v2040, %v2038
      %v2075 = vrot.slane %v1771, 1
      %v2076 = vrot.slane %v1787, 1
      %v2077 = vsel %vm857, %v2075, %v2076
      %v2078 = vrot.slane %v1772, 1
      %v2079 = vrot.slane %v1788, 1
      %v2080 = vsel %vm857, %v2078, %v2079
      %v2081 = vrot.slane %v1773, 1
      %v2082 = vrot.slane %v1789, 1
      %v2083 = vsel %vm857, %v2081, %v2082
      %v2084 = vrot.slane %v1774, 1
      %v2085 = vrot.slane %v1790, 1
      %v2086 = vsel %vm857, %v2084, %v2085
      %v2087 = vrot.slane %v1775, 1
      %v2088 = vrot.slane %v1791, 1
      %v2089 = vsel %vm857, %v2087, %v2088
      %v2090 = vrot.slane %v1776, 1
      %v2091 = vrot.slane %v1792, 1
      %v2092 = vsel %vm857, %v2090, %v2091
      %v2093 = vrot.slane %v1777, 1
      %v2094 = vrot.slane %v1793, 1
      %v2095 = vsel %vm857, %v2093, %v2094
      %v2096 = vrot.slane %v1778, 1
      %v2097 = vrot.slane %v1794, 1
      %v2098 = vsel %vm857, %v2096, %v2097
      %v2099 = vrot.slane %v1779, 1
      %v2100 = vrot.slane %v1795, 1
      %v2101 = vsel %vm857, %v2099, %v2100
      %v2102 = vrot.slane %v1780, 1
      %v2103 = vrot.slane %v1796, 1
      %v2104 = vsel %vm857, %v2102, %v2103
      %v2105 = vrot.slane %v1781, 1
      %v2106 = vrot.slane %v1797, 1
      %v2107 = vsel %vm857, %v2105, %v2106
      %v2108 = vrot.slane %v1782, 1
      %v2109 = vrot.slane %v1798, 1
      %v2110 = vsel %vm857, %v2108, %v2109
      %v2111 = vrot.slane %v1783, 1
      %v2112 = vrot.slane %v1799, 1
      %v2113 = vsel %vm857, %v2111, %v2112
      %v2114 = vrot.slane %v1784, 1
      %v2115 = vrot.slane %v1800, 1
      %v2116 = vsel %vm857, %v2114, %v2115
      %v2117 = vrot.slane %v1785, 1
      %v2118 = vrot.slane %v1801, 1
      %v2119 = vsel %vm857, %v2117, %v2118
      %v2120 = vrot.slane %v1786, 1
      %v2121 = vrot.slane %v1802, 1
      %v2122 = vsel %vm857, %v2120, %v2121
      %v2124 = vshrl.u32 %v1739, 16
      %v2126 = vrot.slane %v2124, 3
      %v2127 = vshll.u32 %v1739, 16
      %v2129 = vrot.slane %v2127, 4
      %v2130 = vor.u32 %v2126, %v2129
      %v2131 = vrot.slane %v1815, 3
      %v2132 = vrot.slane %v1811, 4
      %v2133 = vor.u32 %v2131, %v2132
      %v2134 = vsel %vm906, %v2130, %v2133
      %v2136 = vshrl.u32 %v1814, 16
      %v2138 = vrot.slane %v2136, 3
      %v2139 = vshll.u32 %v1814, 16
      %v2141 = vrot.slane %v2139, 4
      %v2142 = vor.u32 %v2138, %v2141
      %v2144 = vshrl.u32 %v1817, 16
      %v2146 = vrot.slane %v2144, 3
      %v2147 = vshll.u32 %v1817, 16
      %v2149 = vrot.slane %v2147, 4
      %v2150 = vor.u32 %v2146, %v2149
      %v2151 = vsel %vm906, %v2142, %v2150
      %v2153 = vshrl.u32 %v2077, 16
      %v2155 = vrot.slane %v2153, 3
      %v2156 = vshll.u32 %v2077, 16
      %v2158 = vrot.slane %v2156, 4
      %v2159 = vor.u32 %v2155, %v2158
      %v2161 = vshrl.u32 %v2076, 16
      %v2163 = vrot.slane %v2161, 3
      %v2164 = vshll.u32 %v2076, 16
      %v2166 = vrot.slane %v2164, 4
      %v2167 = vor.u32 %v2163, %v2166
      %v2168 = vsel %vm906, %v2159, %v2167
      %v2170 = vshrl.u32 %v1741, 16
      %v2172 = vrot.slane %v2170, 3
      %v2173 = vshll.u32 %v1741, 16
      %v2175 = vrot.slane %v2173, 4
      %v2176 = vor.u32 %v2172, %v2175
      %v2177 = vrot.slane %v1830, 3
      %v2178 = vrot.slane %v1826, 4
      %v2179 = vor.u32 %v2177, %v2178
      %v2180 = vsel %vm906, %v2176, %v2179
      %v2182 = vshrl.u32 %v1829, 16
      %v2184 = vrot.slane %v2182, 3
      %v2185 = vshll.u32 %v1829, 16
      %v2187 = vrot.slane %v2185, 4
      %v2188 = vor.u32 %v2184, %v2187
      %v2190 = vshrl.u32 %v1832, 16
      %v2192 = vrot.slane %v2190, 3
      %v2193 = vshll.u32 %v1832, 16
      %v2195 = vrot.slane %v2193, 4
      %v2196 = vor.u32 %v2192, %v2195
      %v2197 = vsel %vm906, %v2188, %v2196
      %v2199 = vshrl.u32 %v2080, 16
      %v2201 = vrot.slane %v2199, 3
      %v2202 = vshll.u32 %v2080, 16
      %v2204 = vrot.slane %v2202, 4
      %v2205 = vor.u32 %v2201, %v2204
      %v2207 = vshrl.u32 %v2079, 16
      %v2209 = vrot.slane %v2207, 3
      %v2210 = vshll.u32 %v2079, 16
      %v2212 = vrot.slane %v2210, 4
      %v2213 = vor.u32 %v2209, %v2212
      %v2214 = vsel %vm906, %v2205, %v2213
      %v2216 = vshrl.u32 %v1743, 16
      %v2218 = vrot.slane %v2216, 3
      %v2219 = vshll.u32 %v1743, 16
      %v2221 = vrot.slane %v2219, 4
      %v2222 = vor.u32 %v2218, %v2221
      %v2223 = vrot.slane %v1845, 3
      %v2224 = vrot.slane %v1841, 4
      %v2225 = vor.u32 %v2223, %v2224
      %v2226 = vsel %vm906, %v2222, %v2225
      %v2228 = vshrl.u32 %v1844, 16
      %v2230 = vrot.slane %v2228, 3
      %v2231 = vshll.u32 %v1844, 16
      %v2233 = vrot.slane %v2231, 4
      %v2234 = vor.u32 %v2230, %v2233
      %v2236 = vshrl.u32 %v1847, 16
      %v2238 = vrot.slane %v2236, 3
      %v2239 = vshll.u32 %v1847, 16
      %v2241 = vrot.slane %v2239, 4
      %v2242 = vor.u32 %v2238, %v2241
      %v2243 = vsel %vm906, %v2234, %v2242
      %v2245 = vshrl.u32 %v2083, 16
      %v2247 = vrot.slane %v2245, 3
      %v2248 = vshll.u32 %v2083, 16
      %v2250 = vrot.slane %v2248, 4
      %v2251 = vor.u32 %v2247, %v2250
      %v2253 = vshrl.u32 %v2082, 16
      %v2255 = vrot.slane %v2253, 3
      %v2256 = vshll.u32 %v2082, 16
      %v2258 = vrot.slane %v2256, 4
      %v2259 = vor.u32 %v2255, %v2258
      %v2260 = vsel %vm906, %v2251, %v2259
      %v2262 = vshrl.u32 %v1745, 16
      %v2264 = vrot.slane %v2262, 3
      %v2265 = vshll.u32 %v1745, 16
      %v2267 = vrot.slane %v2265, 4
      %v2268 = vor.u32 %v2264, %v2267
      %v2269 = vrot.slane %v1860, 3
      %v2270 = vrot.slane %v1856, 4
      %v2271 = vor.u32 %v2269, %v2270
      %v2272 = vsel %vm906, %v2268, %v2271
      %v2274 = vshrl.u32 %v1859, 16
      %v2276 = vrot.slane %v2274, 3
      %v2277 = vshll.u32 %v1859, 16
      %v2279 = vrot.slane %v2277, 4
      %v2280 = vor.u32 %v2276, %v2279
      %v2282 = vshrl.u32 %v1862, 16
      %v2284 = vrot.slane %v2282, 3
      %v2285 = vshll.u32 %v1862, 16
      %v2287 = vrot.slane %v2285, 4
      %v2288 = vor.u32 %v2284, %v2287
      %v2289 = vsel %vm906, %v2280, %v2288
      %v2291 = vshrl.u32 %v2086, 16
      %v2293 = vrot.slane %v2291, 3
      %v2294 = vshll.u32 %v2086, 16
      %v2296 = vrot.slane %v2294, 4
      %v2297 = vor.u32 %v2293, %v2296
      %v2299 = vshrl.u32 %v2085, 16
      %v2301 = vrot.slane %v2299, 3
      %v2302 = vshll.u32 %v2085, 16
      %v2304 = vrot.slane %v2302, 4
      %v2305 = vor.u32 %v2301, %v2304
      %v2306 = vsel %vm906, %v2297, %v2305
      %v2308 = vshrl.u32 %v1747, 16
      %v2310 = vrot.slane %v2308, 3
      %v2311 = vshll.u32 %v1747, 16
      %v2313 = vrot.slane %v2311, 4
      %v2314 = vor.u32 %v2310, %v2313
      %v2315 = vrot.slane %v1875, 3
      %v2316 = vrot.slane %v1871, 4
      %v2317 = vor.u32 %v2315, %v2316
      %v2318 = vsel %vm906, %v2314, %v2317
      %v2320 = vshrl.u32 %v1874, 16
      %v2322 = vrot.slane %v2320, 3
      %v2323 = vshll.u32 %v1874, 16
      %v2325 = vrot.slane %v2323, 4
      %v2326 = vor.u32 %v2322, %v2325
      %v2328 = vshrl.u32 %v1877, 16
      %v2330 = vrot.slane %v2328, 3
      %v2331 = vshll.u32 %v1877, 16
      %v2333 = vrot.slane %v2331, 4
      %v2334 = vor.u32 %v2330, %v2333
      %v2335 = vsel %vm906, %v2326, %v2334
      %v2337 = vshrl.u32 %v2089, 16
      %v2339 = vrot.slane %v2337, 3
      %v2340 = vshll.u32 %v2089, 16
      %v2342 = vrot.slane %v2340, 4
      %v2343 = vor.u32 %v2339, %v2342
      %v2345 = vshrl.u32 %v2088, 16
      %v2347 = vrot.slane %v2345, 3
      %v2348 = vshll.u32 %v2088, 16
      %v2350 = vrot.slane %v2348, 4
      %v2351 = vor.u32 %v2347, %v2350
      %v2352 = vsel %vm906, %v2343, %v2351
      %v2354 = vshrl.u32 %v1749, 16
      %v2356 = vrot.slane %v2354, 3
      %v2357 = vshll.u32 %v1749, 16
      %v2359 = vrot.slane %v2357, 4
      %v2360 = vor.u32 %v2356, %v2359
      %v2361 = vrot.slane %v1890, 3
      %v2362 = vrot.slane %v1886, 4
      %v2363 = vor.u32 %v2361, %v2362
      %v2364 = vsel %vm906, %v2360, %v2363
      %v2366 = vshrl.u32 %v1889, 16
      %v2368 = vrot.slane %v2366, 3
      %v2369 = vshll.u32 %v1889, 16
      %v2371 = vrot.slane %v2369, 4
      %v2372 = vor.u32 %v2368, %v2371
      %v2374 = vshrl.u32 %v1892, 16
      %v2376 = vrot.slane %v2374, 3
      %v2377 = vshll.u32 %v1892, 16
      %v2379 = vrot.slane %v2377, 4
      %v2380 = vor.u32 %v2376, %v2379
      %v2381 = vsel %vm906, %v2372, %v2380
      %v2383 = vshrl.u32 %v2092, 16
      %v2385 = vrot.slane %v2383, 3
      %v2386 = vshll.u32 %v2092, 16
      %v2388 = vrot.slane %v2386, 4
      %v2389 = vor.u32 %v2385, %v2388
      %v2391 = vshrl.u32 %v2091, 16
      %v2393 = vrot.slane %v2391, 3
      %v2394 = vshll.u32 %v2091, 16
      %v2396 = vrot.slane %v2394, 4
      %v2397 = vor.u32 %v2393, %v2396
      %v2398 = vsel %vm906, %v2389, %v2397
      %v2400 = vshrl.u32 %v1751, 16
      %v2402 = vrot.slane %v2400, 3
      %v2403 = vshll.u32 %v1751, 16
      %v2405 = vrot.slane %v2403, 4
      %v2406 = vor.u32 %v2402, %v2405
      %v2407 = vrot.slane %v1905, 3
      %v2408 = vrot.slane %v1901, 4
      %v2409 = vor.u32 %v2407, %v2408
      %v2410 = vsel %vm906, %v2406, %v2409
      %v2412 = vshrl.u32 %v1904, 16
      %v2414 = vrot.slane %v2412, 3
      %v2415 = vshll.u32 %v1904, 16
      %v2417 = vrot.slane %v2415, 4
      %v2418 = vor.u32 %v2414, %v2417
      %v2420 = vshrl.u32 %v1907, 16
      %v2422 = vrot.slane %v2420, 3
      %v2423 = vshll.u32 %v1907, 16
      %v2425 = vrot.slane %v2423, 4
      %v2426 = vor.u32 %v2422, %v2425
      %v2427 = vsel %vm906, %v2418, %v2426
      %v2429 = vshrl.u32 %v2095, 16
      %v2431 = vrot.slane %v2429, 3
      %v2432 = vshll.u32 %v2095, 16
      %v2434 = vrot.slane %v2432, 4
      %v2435 = vor.u32 %v2431, %v2434
      %v2437 = vshrl.u32 %v2094, 16
      %v2439 = vrot.slane %v2437, 3
      %v2440 = vshll.u32 %v2094, 16
      %v2442 = vrot.slane %v2440, 4
      %v2443 = vor.u32 %v2439, %v2442
      %v2444 = vsel %vm906, %v2435, %v2443
      %v2446 = vshrl.u32 %v1753, 16
      %v2448 = vrot.slane %v2446, 3
      %v2449 = vshll.u32 %v1753, 16
      %v2451 = vrot.slane %v2449, 4
      %v2452 = vor.u32 %v2448, %v2451
      %v2453 = vrot.slane %v1920, 3
      %v2454 = vrot.slane %v1916, 4
      %v2455 = vor.u32 %v2453, %v2454
      %v2456 = vsel %vm906, %v2452, %v2455
      %v2458 = vshrl.u32 %v1919, 16
      %v2460 = vrot.slane %v2458, 3
      %v2461 = vshll.u32 %v1919, 16
      %v2463 = vrot.slane %v2461, 4
      %v2464 = vor.u32 %v2460, %v2463
      %v2466 = vshrl.u32 %v1922, 16
      %v2468 = vrot.slane %v2466, 3
      %v2469 = vshll.u32 %v1922, 16
      %v2471 = vrot.slane %v2469, 4
      %v2472 = vor.u32 %v2468, %v2471
      %v2473 = vsel %vm906, %v2464, %v2472
      %v2475 = vshrl.u32 %v2098, 16
      %v2477 = vrot.slane %v2475, 3
      %v2478 = vshll.u32 %v2098, 16
      %v2480 = vrot.slane %v2478, 4
      %v2481 = vor.u32 %v2477, %v2480
      %v2483 = vshrl.u32 %v2097, 16
      %v2485 = vrot.slane %v2483, 3
      %v2486 = vshll.u32 %v2097, 16
      %v2488 = vrot.slane %v2486, 4
      %v2489 = vor.u32 %v2485, %v2488
      %v2490 = vsel %vm906, %v2481, %v2489
      %v2492 = vshrl.u32 %v1755, 16
      %v2494 = vrot.slane %v2492, 3
      %v2495 = vshll.u32 %v1755, 16
      %v2497 = vrot.slane %v2495, 4
      %v2498 = vor.u32 %v2494, %v2497
      %v2499 = vrot.slane %v1935, 3
      %v2500 = vrot.slane %v1931, 4
      %v2501 = vor.u32 %v2499, %v2500
      %v2502 = vsel %vm906, %v2498, %v2501
      %v2504 = vshrl.u32 %v1934, 16
      %v2506 = vrot.slane %v2504, 3
      %v2507 = vshll.u32 %v1934, 16
      %v2509 = vrot.slane %v2507, 4
      %v2510 = vor.u32 %v2506, %v2509
      %v2512 = vshrl.u32 %v1937, 16
      %v2514 = vrot.slane %v2512, 3
      %v2515 = vshll.u32 %v1937, 16
      %v2517 = vrot.slane %v2515, 4
      %v2518 = vor.u32 %v2514, %v2517
      %v2519 = vsel %vm906, %v2510, %v2518
      %v2521 = vshrl.u32 %v2101, 16
      %v2523 = vrot.slane %v2521, 3
      %v2524 = vshll.u32 %v2101, 16
      %v2526 = vrot.slane %v2524, 4
      %v2527 = vor.u32 %v2523, %v2526
      %v2529 = vshrl.u32 %v2100, 16
      %v2531 = vrot.slane %v2529, 3
      %v2532 = vshll.u32 %v2100, 16
      %v2534 = vrot.slane %v2532, 4
      %v2535 = vor.u32 %v2531, %v2534
      %v2536 = vsel %vm906, %v2527, %v2535
      %v2538 = vshrl.u32 %v1757, 16
      %v2540 = vrot.slane %v2538, 3
      %v2541 = vshll.u32 %v1757, 16
      %v2543 = vrot.slane %v2541, 4
      %v2544 = vor.u32 %v2540, %v2543
      %v2545 = vrot.slane %v1950, 3
      %v2546 = vrot.slane %v1946, 4
      %v2547 = vor.u32 %v2545, %v2546
      %v2548 = vsel %vm906, %v2544, %v2547
      %v2550 = vshrl.u32 %v1949, 16
      %v2552 = vrot.slane %v2550, 3
      %v2553 = vshll.u32 %v1949, 16
      %v2555 = vrot.slane %v2553, 4
      %v2556 = vor.u32 %v2552, %v2555
      %v2558 = vshrl.u32 %v1952, 16
      %v2560 = vrot.slane %v2558, 3
      %v2561 = vshll.u32 %v1952, 16
      %v2563 = vrot.slane %v2561, 4
      %v2564 = vor.u32 %v2560, %v2563
      %v2565 = vsel %vm906, %v2556, %v2564
      %v2567 = vshrl.u32 %v2104, 16
      %v2569 = vrot.slane %v2567, 3
      %v2570 = vshll.u32 %v2104, 16
      %v2572 = vrot.slane %v2570, 4
      %v2573 = vor.u32 %v2569, %v2572
      %v2575 = vshrl.u32 %v2103, 16
      %v2577 = vrot.slane %v2575, 3
      %v2578 = vshll.u32 %v2103, 16
      %v2580 = vrot.slane %v2578, 4
      %v2581 = vor.u32 %v2577, %v2580
      %v2582 = vsel %vm906, %v2573, %v2581
      %v2584 = vshrl.u32 %v1759, 16
      %v2586 = vrot.slane %v2584, 3
      %v2587 = vshll.u32 %v1759, 16
      %v2589 = vrot.slane %v2587, 4
      %v2590 = vor.u32 %v2586, %v2589
      %v2591 = vrot.slane %v1965, 3
      %v2592 = vrot.slane %v1961, 4
      %v2593 = vor.u32 %v2591, %v2592
      %v2594 = vsel %vm906, %v2590, %v2593
      %v2596 = vshrl.u32 %v1964, 16
      %v2598 = vrot.slane %v2596, 3
      %v2599 = vshll.u32 %v1964, 16
      %v2601 = vrot.slane %v2599, 4
      %v2602 = vor.u32 %v2598, %v2601
      %v2604 = vshrl.u32 %v1967, 16
      %v2606 = vrot.slane %v2604, 3
      %v2607 = vshll.u32 %v1967, 16
      %v2609 = vrot.slane %v2607, 4
      %v2610 = vor.u32 %v2606, %v2609
      %v2611 = vsel %vm906, %v2602, %v2610
      %v2613 = vshrl.u32 %v2107, 16
      %v2615 = vrot.slane %v2613, 3
      %v2616 = vshll.u32 %v2107, 16
      %v2618 = vrot.slane %v2616, 4
      %v2619 = vor.u32 %v2615, %v2618
      %v2621 = vshrl.u32 %v2106, 16
      %v2623 = vrot.slane %v2621, 3
      %v2624 = vshll.u32 %v2106, 16
      %v2626 = vrot.slane %v2624, 4
      %v2627 = vor.u32 %v2623, %v2626
      %v2628 = vsel %vm906, %v2619, %v2627
      %v2630 = vshrl.u32 %v1761, 16
      %v2632 = vrot.slane %v2630, 3
      %v2633 = vshll.u32 %v1761, 16
      %v2635 = vrot.slane %v2633, 4
      %v2636 = vor.u32 %v2632, %v2635
      %v2637 = vrot.slane %v1980, 3
      %v2638 = vrot.slane %v1976, 4
      %v2639 = vor.u32 %v2637, %v2638
      %v2640 = vsel %vm906, %v2636, %v2639
      %v2642 = vshrl.u32 %v1979, 16
      %v2644 = vrot.slane %v2642, 3
      %v2645 = vshll.u32 %v1979, 16
      %v2647 = vrot.slane %v2645, 4
      %v2648 = vor.u32 %v2644, %v2647
      %v2650 = vshrl.u32 %v1982, 16
      %v2652 = vrot.slane %v2650, 3
      %v2653 = vshll.u32 %v1982, 16
      %v2655 = vrot.slane %v2653, 4
      %v2656 = vor.u32 %v2652, %v2655
      %v2657 = vsel %vm906, %v2648, %v2656
      %v2659 = vshrl.u32 %v2110, 16
      %v2661 = vrot.slane %v2659, 3
      %v2662 = vshll.u32 %v2110, 16
      %v2664 = vrot.slane %v2662, 4
      %v2665 = vor.u32 %v2661, %v2664
      %v2667 = vshrl.u32 %v2109, 16
      %v2669 = vrot.slane %v2667, 3
      %v2670 = vshll.u32 %v2109, 16
      %v2672 = vrot.slane %v2670, 4
      %v2673 = vor.u32 %v2669, %v2672
      %v2674 = vsel %vm906, %v2665, %v2673
      %v2676 = vshrl.u32 %v1763, 16
      %v2678 = vrot.slane %v2676, 3
      %v2679 = vshll.u32 %v1763, 16
      %v2681 = vrot.slane %v2679, 4
      %v2682 = vor.u32 %v2678, %v2681
      %v2683 = vrot.slane %v1995, 3
      %v2684 = vrot.slane %v1991, 4
      %v2685 = vor.u32 %v2683, %v2684
      %v2686 = vsel %vm906, %v2682, %v2685
      %v2688 = vshrl.u32 %v1994, 16
      %v2690 = vrot.slane %v2688, 3
      %v2691 = vshll.u32 %v1994, 16
      %v2693 = vrot.slane %v2691, 4
      %v2694 = vor.u32 %v2690, %v2693
      %v2696 = vshrl.u32 %v1997, 16
      %v2698 = vrot.slane %v2696, 3
      %v2699 = vshll.u32 %v1997, 16
      %v2701 = vrot.slane %v2699, 4
      %v2702 = vor.u32 %v2698, %v2701
      %v2703 = vsel %vm906, %v2694, %v2702
      %v2705 = vshrl.u32 %v2113, 16
      %v2707 = vrot.slane %v2705, 3
      %v2708 = vshll.u32 %v2113, 16
      %v2710 = vrot.slane %v2708, 4
      %v2711 = vor.u32 %v2707, %v2710
      %v2713 = vshrl.u32 %v2112, 16
      %v2715 = vrot.slane %v2713, 3
      %v2716 = vshll.u32 %v2112, 16
      %v2718 = vrot.slane %v2716, 4
      %v2719 = vor.u32 %v2715, %v2718
      %v2720 = vsel %vm906, %v2711, %v2719
      %v2722 = vshrl.u32 %v1765, 16
      %v2724 = vrot.slane %v2722, 3
      %v2725 = vshll.u32 %v1765, 16
      %v2727 = vrot.slane %v2725, 4
      %v2728 = vor.u32 %v2724, %v2727
      %v2729 = vrot.slane %v2010, 3
      %v2730 = vrot.slane %v2006, 4
      %v2731 = vor.u32 %v2729, %v2730
      %v2732 = vsel %vm906, %v2728, %v2731
      %v2734 = vshrl.u32 %v2009, 16
      %v2736 = vrot.slane %v2734, 3
      %v2737 = vshll.u32 %v2009, 16
      %v2739 = vrot.slane %v2737, 4
      %v2740 = vor.u32 %v2736, %v2739
      %v2742 = vshrl.u32 %v2012, 16
      %v2744 = vrot.slane %v2742, 3
      %v2745 = vshll.u32 %v2012, 16
      %v2747 = vrot.slane %v2745, 4
      %v2748 = vor.u32 %v2744, %v2747
      %v2749 = vsel %vm906, %v2740, %v2748
      %v2751 = vshrl.u32 %v2116, 16
      %v2753 = vrot.slane %v2751, 3
      %v2754 = vshll.u32 %v2116, 16
      %v2756 = vrot.slane %v2754, 4
      %v2757 = vor.u32 %v2753, %v2756
      %v2759 = vshrl.u32 %v2115, 16
      %v2761 = vrot.slane %v2759, 3
      %v2762 = vshll.u32 %v2115, 16
      %v2764 = vrot.slane %v2762, 4
      %v2765 = vor.u32 %v2761, %v2764
      %v2766 = vsel %vm906, %v2757, %v2765
      %v2768 = vshrl.u32 %v1767, 16
      %v2770 = vrot.slane %v2768, 3
      %v2771 = vshll.u32 %v1767, 16
      %v2773 = vrot.slane %v2771, 4
      %v2774 = vor.u32 %v2770, %v2773
      %v2775 = vrot.slane %v2025, 3
      %v2776 = vrot.slane %v2021, 4
      %v2777 = vor.u32 %v2775, %v2776
      %v2778 = vsel %vm906, %v2774, %v2777
      %v2780 = vshrl.u32 %v2024, 16
      %v2782 = vrot.slane %v2780, 3
      %v2783 = vshll.u32 %v2024, 16
      %v2785 = vrot.slane %v2783, 4
      %v2786 = vor.u32 %v2782, %v2785
      %v2788 = vshrl.u32 %v2027, 16
      %v2790 = vrot.slane %v2788, 3
      %v2791 = vshll.u32 %v2027, 16
      %v2793 = vrot.slane %v2791, 4
      %v2794 = vor.u32 %v2790, %v2793
      %v2795 = vsel %vm906, %v2786, %v2794
      %v2797 = vshrl.u32 %v2119, 16
      %v2799 = vrot.slane %v2797, 3
      %v2800 = vshll.u32 %v2119, 16
      %v2802 = vrot.slane %v2800, 4
      %v2803 = vor.u32 %v2799, %v2802
      %v2805 = vshrl.u32 %v2118, 16
      %v2807 = vrot.slane %v2805, 3
      %v2808 = vshll.u32 %v2118, 16
      %v2810 = vrot.slane %v2808, 4
      %v2811 = vor.u32 %v2807, %v2810
      %v2812 = vsel %vm906, %v2803, %v2811
      %v2814 = vshrl.u32 %v1769, 16
      %v2816 = vrot.slane %v2814, 3
      %v2817 = vshll.u32 %v1769, 16
      %v2819 = vrot.slane %v2817, 4
      %v2820 = vor.u32 %v2816, %v2819
      %v2821 = vrot.slane %v2040, 3
      %v2822 = vrot.slane %v2036, 4
      %v2823 = vor.u32 %v2821, %v2822
      %v2824 = vsel %vm906, %v2820, %v2823
      %v2826 = vshrl.u32 %v2039, 16
      %v2828 = vrot.slane %v2826, 3
      %v2829 = vshll.u32 %v2039, 16
      %v2831 = vrot.slane %v2829, 4
      %v2832 = vor.u32 %v2828, %v2831
      %v2834 = vshrl.u32 %v2042, 16
      %v2836 = vrot.slane %v2834, 3
      %v2837 = vshll.u32 %v2042, 16
      %v2839 = vrot.slane %v2837, 4
      %v2840 = vor.u32 %v2836, %v2839
      %v2841 = vsel %vm906, %v2832, %v2840
      %v2843 = vshrl.u32 %v2122, 16
      %v2845 = vrot.slane %v2843, 3
      %v2846 = vshll.u32 %v2122, 16
      %v2848 = vrot.slane %v2846, 4
      %v2849 = vor.u32 %v2845, %v2848
      %v2851 = vshrl.u32 %v2121, 16
      %v2853 = vrot.slane %v2851, 3
      %v2854 = vshll.u32 %v2121, 16
      %v2856 = vrot.slane %v2854, 4
      %v2857 = vor.u32 %v2853, %v2856
      %v2858 = vsel %vm906, %v2849, %v2857
      %s2907 = scalar_lea.vmem %s1, 192
      %v2908 = vld [vmem:[%s2907] sm:$0xf]
      %v2909 = vld [vmem:[%s2907 + $0x4] sm:$0xf]
      %v2910 = vld [vmem:[%s2907 + $0x8] sm:$0xf]
      %v2911 = vld [vmem:[%s2907 + $0xc] sm:$0xf]
      %v2912 = vld [vmem:[%s2907 + $0x10] sm:$0xf]
      %v2913 = vld [vmem:[%s2907 + $0x14] sm:$0xf]
      %v2914 = vld [vmem:[%s2907 + $0x18] sm:$0xf]
      %v2915 = vld [vmem:[%s2907 + $0x1c] sm:$0xf]
      %v2916 = vld [vmem:[%s2907 + $0x20] sm:$0xf]
      %v2917 = vld [vmem:[%s2907 + $0x24] sm:$0xf]
      %v2918 = vld [vmem:[%s2907 + $0x28] sm:$0xf]
      %v2919 = vld [vmem:[%s2907 + $0x2c] sm:$0xf]
      %v2920 = vld [vmem:[%s2907 + $0x30] sm:$0xf]
      %v2921 = vld [vmem:[%s2907 + $0x34] sm:$0xf]
      %v2922 = vld [vmem:[%s2907 + $0x38] sm:$0xf]
      %v2923 = vld [vmem:[%s2907 + $0x3c] sm:$0xf]
      %v2924 = vld [vmem:[%s2907 + $0x40] sm:$0xf]
      %v2925 = vld [vmem:[%s2907 + $0x44] sm:$0xf]
      %v2926 = vld [vmem:[%s2907 + $0x48] sm:$0xf]
      %v2927 = vld [vmem:[%s2907 + $0x4c] sm:$0xf]
      %v2928 = vld [vmem:[%s2907 + $0x50] sm:$0xf]
      %v2929 = vld [vmem:[%s2907 + $0x54] sm:$0xf]
      %v2930 = vld [vmem:[%s2907 + $0x58] sm:$0xf]
      %v2931 = vld [vmem:[%s2907 + $0x5c] sm:$0xf]
      %v2932 = vld [vmem:[%s2907 + $0x60] sm:$0xf]
      %v2933 = vld [vmem:[%s2907 + $0x64] sm:$0xf]
      %v2934 = vld [vmem:[%s2907 + $0x68] sm:$0xf]
      %v2935 = vld [vmem:[%s2907 + $0x6c] sm:$0xf]
      %v2936 = vld [vmem:[%s2907 + $0x70] sm:$0xf]
      %v2937 = vld [vmem:[%s2907 + $0x74] sm:$0xf]
      %v2938 = vld [vmem:[%s2907 + $0x78] sm:$0xf]
      %v2939 = vld [vmem:[%s2907 + $0x7c] sm:$0xf]
      %v2940 = vld [vmem:[%s2907 + $0x80] sm:$0xf]
      %v2941 = vld [vmem:[%s2907 + $0x84] sm:$0xf]
      %v2942 = vld [vmem:[%s2907 + $0x88] sm:$0xf]
      %v2943 = vld [vmem:[%s2907 + $0x8c] sm:$0xf]
      %v2944 = vld [vmem:[%s2907 + $0x90] sm:$0xf]
      %v2945 = vld [vmem:[%s2907 + $0x94] sm:$0xf]
      %v2946 = vld [vmem:[%s2907 + $0x98] sm:$0xf]
      %v2947 = vld [vmem:[%s2907 + $0x9c] sm:$0xf]
      %v2948 = vld [vmem:[%s2907 + $0xa0] sm:$0xf]
      %v2949 = vld [vmem:[%s2907 + $0xa4] sm:$0xf]
      %v2950 = vld [vmem:[%s2907 + $0xa8] sm:$0xf]
      %v2951 = vld [vmem:[%s2907 + $0xac] sm:$0xf]
      %v2952 = vld [vmem:[%s2907 + $0xb0] sm:$0xf]
      %v2953 = vld [vmem:[%s2907 + $0xb4] sm:$0xf]
      %v2954 = vld [vmem:[%s2907 + $0xb8] sm:$0xf]
      %v2955 = vld [vmem:[%s2907 + $0xbc] sm:$0xf]
      %v3004 = vunpack.c.l.b16 %v2908
      %v3005 = vunpack.c.l.b16 %v2909
      %v3006 = vunpack.c.l.b16 %v2910
      %v3007 = vunpack.c.l.b16 %v2911
      %v3008 = vunpack.c.l.b16 %v2912
      %v3009 = vunpack.c.l.b16 %v2913
      %v3010 = vunpack.c.l.b16 %v2914
      %v3011 = vunpack.c.l.b16 %v2915
      %v3012 = vunpack.c.l.b16 %v2916
      %v3013 = vunpack.c.l.b16 %v2917
      %v3014 = vunpack.c.l.b16 %v2918
      %v3015 = vunpack.c.l.b16 %v2919
      %v3016 = vunpack.c.l.b16 %v2920
      %v3017 = vunpack.c.l.b16 %v2921
      %v3018 = vunpack.c.l.b16 %v2922
      %v3019 = vunpack.c.l.b16 %v2923
      %v3020 = vunpack.c.l.b16 %v2924
      %v3021 = vunpack.c.l.b16 %v2925
      %v3022 = vunpack.c.l.b16 %v2926
      %v3023 = vunpack.c.l.b16 %v2927
      %v3024 = vunpack.c.l.b16 %v2928
      %v3025 = vunpack.c.l.b16 %v2929
      %v3026 = vunpack.c.l.b16 %v2930
      %v3027 = vunpack.c.l.b16 %v2931
      %v3028 = vunpack.c.l.b16 %v2932
      %v3029 = vunpack.c.l.b16 %v2933
      %v3030 = vunpack.c.l.b16 %v2934
      %v3031 = vunpack.c.l.b16 %v2935
      %v3032 = vunpack.c.l.b16 %v2936
      %v3033 = vunpack.c.l.b16 %v2937
      %v3034 = vunpack.c.l.b16 %v2938
      %v3035 = vunpack.c.l.b16 %v2939
      %v3036 = vunpack.c.l.b16 %v2940
      %v3037 = vunpack.c.l.b16 %v2941
      %v3038 = vunpack.c.l.b16 %v2942
      %v3039 = vunpack.c.l.b16 %v2943
      %v3040 = vunpack.c.l.b16 %v2944
      %v3041 = vunpack.c.l.b16 %v2945
      %v3042 = vunpack.c.l.b16 %v2946
      %v3043 = vunpack.c.l.b16 %v2947
      %v3044 = vunpack.c.l.b16 %v2948
      %v3045 = vunpack.c.l.b16 %v2949
      %v3046 = vunpack.c.l.b16 %v2950
      %v3047 = vunpack.c.l.b16 %v2951
      %v3048 = vunpack.c.l.b16 %v2952
      %v3049 = vunpack.c.l.b16 %v2953
      %v3050 = vunpack.c.l.b16 %v2954
      %v3051 = vunpack.c.l.b16 %v2955
      %v3052 = vpack.c.b16 %v3005, %v3004
      %v3053 = vpack.c.b16 %v3007, %v3006
      %v3054 = vpack.c.b16 %v3009, %v3008
      %v3055 = vpack.c.b16 %v3011, %v3010
      %v3056 = vpack.c.b16 %v3013, %v3012
      %v3057 = vpack.c.b16 %v3015, %v3014
      %v3058 = vpack.c.b16 %v3017, %v3016
      %v3059 = vpack.c.b16 %v3019, %v3018
      %v3060 = vpack.c.b16 %v3021, %v3020
      %v3061 = vpack.c.b16 %v3023, %v3022
      %v3062 = vpack.c.b16 %v3025, %v3024
      %v3063 = vpack.c.b16 %v3027, %v3026
      %v3064 = vpack.c.b16 %v3029, %v3028
      %v3065 = vpack.c.b16 %v3031, %v3030
      %v3066 = vpack.c.b16 %v3033, %v3032
      %v3067 = vpack.c.b16 %v3035, %v3034
      %v3068 = vpack.c.b16 %v3037, %v3036
      %v3069 = vpack.c.b16 %v3039, %v3038
      %v3070 = vpack.c.b16 %v3041, %v3040
      %v3071 = vpack.c.b16 %v3043, %v3042
      %v3072 = vpack.c.b16 %v3045, %v3044
      %v3073 = vpack.c.b16 %v3047, %v3046
      %v3074 = vpack.c.b16 %v3049, %v3048
      %v3075 = vpack.c.b16 %v3051, %v3050
      %3100 = vmatprep.subr.bf16.mxu0 0
      %3101 = vmatpush1.bf16.msra.mxu0 %v3052
      %3102 = vmatprep.subr.bf16.mxu0 0
      %3103 = vmatpush1.bf16.msra.mxu0 %v3053
      %3104 = vmatprep.subr.bf16.mxu0 0
      %3105 = vmatpush1.bf16.msra.mxu0 %v3054
      %3106 = vmatprep.subr.bf16.mxu0 0
      %3107 = vmatpush1.bf16.msra.mxu0 %v3055
      %3108 = vmatprep.subr.bf16.mxu0 0
      %3109 = vmatpush1.bf16.msra.mxu0 %v3056
      %3110 = vmatprep.subr.bf16.mxu0 0
      %3111 = vmatpush1.bf16.msra.mxu0 %v3057
      %3112 = vmatprep.subr.bf16.mxu0 0
      %3113 = vmatpush1.bf16.msra.mxu0 %v3058
      %3114 = vmatprep.subr.bf16.mxu0 0
      %3115 = vmatpush1.bf16.msra.mxu0 %v3059
      %3116 = vmatprep.subr.bf16.mxu0 0
      %3117 = vmatpush1.bf16.msra.mxu0 %v3060
      %3118 = vmatprep.subr.bf16.mxu0 0
      %3119 = vmatpush1.bf16.msra.mxu0 %v3061
      %3120 = vmatprep.subr.bf16.mxu0 0
      %3121 = vmatpush1.bf16.msra.mxu0 %v3062
      %3122 = vmatprep.subr.bf16.mxu0 0
      %3123 = vmatpush1.bf16.msra.mxu0 %v3063
      %3124 = vmatprep.subr.bf16.mxu0 0
      %3125 = vmatpush1.bf16.msra.mxu0 %v3064
      %3126 = vmatprep.subr.bf16.mxu0 0
      %3127 = vmatpush1.bf16.msra.mxu0 %v3065
      %3128 = vmatprep.subr.bf16.mxu0 0
      %3129 = vmatpush1.bf16.msra.mxu0 %v3066
      %3130 = vmatprep.subr.bf16.mxu0 0
      %3131 = vmatpush1.bf16.msra.mxu0 %v3067
      %3132 = vmatprep.mubr.bf16.mxu0 %v2151
      %3133 = vmatmul.mubr.bf16.gmra.mrb[0].mxu0 %v2134
      %v3134 = vpop.f32.mrb[0].mxu0
      %v3135 = vadd.f32 0.0, %v3134
      %v3136 = vpop.f32.mrb[0].mxu0
      %v3137 = vpop.f32.mrb[0].mxu0
      %v3138 = vadd.f32 0.0, %v3137
      %v3139 = vpop.f32.mrb[0].mxu0
      %3140 = vmatprep.mubr.bf16.mxu0 %v2197
      %3141 = vmatmul.mubr.bf16.gmra.mrb[0].mxu0 %v2180
      %v3142 = vpop.f32.mrb[0].mxu0
      %v3143 = vadd.f32 0.0, %v3142
      %v3144 = vpop.f32.mrb[0].mxu0
      %v3145 = vpop.f32.mrb[0].mxu0
      %v3146 = vadd.f32 0.0, %v3145
      %v3147 = vpop.f32.mrb[0].mxu0
      %3148 = vmatprep.mubr.bf16.mxu0 %v2243
      %3149 = vmatmul.mubr.bf16.gmra.mrb[0].mxu0 %v2226
      %v3150 = vpop.f32.mrb[0].mxu0
      %v3151 = vadd.f32 0.0, %v3150
      %v3152 = vpop.f32.mrb[0].mxu0
      %v3153 = vpop.f32.mrb[0].mxu0
      %v3154 = vadd.f32 0.0, %v3153
      %v3155 = vpop.f32.mrb[0].mxu0
      %3156 = vmatprep.mubr.bf16.mxu0 %v2289
      %3157 = vmatmul.mubr.bf16.gmra.mrb[0].mxu0 %v2272
      %v3158 = vpop.f32.mrb[0].mxu0
      %v3159 = vadd.f32 0.0, %v3158
      %v3160 = vpop.f32.mrb[0].mxu0
      %v3161 = vpop.f32.mrb[0].mxu0
      %v3162 = vadd.f32 0.0, %v3161
      %v3163 = vpop.f32.mrb[0].mxu0
      %3164 = vmatprep.mubr.bf16.mxu0 %v2335
      %3165 = vmatmul.mubr.bf16.gmra.mrb[0].mxu0 %v2318
      %v3166 = vpop.f32.mrb[0].mxu0
      %v3167 = vadd.f32 0.0, %v3166
      %v3168 = vpop.f32.mrb[0].mxu0
      %v3169 = vpop.f32.mrb[0].mxu0
      %v3170 = vadd.f32 0.0, %v3169
      %v3171 = vpop.f32.mrb[0].mxu0
      %3172 = vmatprep.mubr.bf16.mxu0 %v2381
      %3173 = vmatmul.mubr.bf16.gmra.mrb[0].mxu0 %v2364
      %v3174 = vpop.f32.mrb[0].mxu0
      %v3175 = vadd.f32 0.0, %v3174
      %v3176 = vpop.f32.mrb[0].mxu0
      %v3177 = vpop.f32.mrb[0].mxu0
      %v3178 = vadd.f32 0.0, %v3177
      %v3179 = vpop.f32.mrb[0].mxu0
      %3180 = vmatprep.mubr.bf16.mxu0 %v2427
      %3181 = vmatmul.mubr.bf16.gmra.mrb[0].mxu0 %v2410
      %v3182 = vpop.f32.mrb[0].mxu0
      %v3183 = vadd.f32 0.0, %v3182
      %v3184 = vpop.f32.mrb[0].mxu0
      %v3185 = vpop.f32.mrb[0].mxu0
      %v3186 = vadd.f32 0.0, %v3185
      %v3187 = vpop.f32.mrb[0].mxu0
      %3188 = vmatprep.mubr.bf16.mxu0 %v2473
      %3189 = vmatmul.mubr.bf16.gmra.mrb[0].mxu0 %v2456
      %v3190 = vpop.f32.mrb[0].mxu0
      %v3191 = vadd.f32 0.0, %v3190
      %v3192 = vpop.f32.mrb[0].mxu0
      %v3193 = vpop.f32.mrb[0].mxu0
      %v3194 = vadd.f32 0.0, %v3193
      %v3195 = vpop.f32.mrb[0].mxu0
      %3196 = vmatprep.mubr.bf16.mxu0 %v2519
      %3197 = vmatmul.mubr.bf16.gmra.mrb[0].mxu0 %v2502
      %v3198 = vpop.f32.mrb[0].mxu0
      %v3199 = vadd.f32 0.0, %v3198
      %v3200 = vpop.f32.mrb[0].mxu0
      %v3201 = vpop.f32.mrb[0].mxu0
      %v3202 = vadd.f32 0.0, %v3201
      %v3203 = vpop.f32.mrb[0].mxu0
      %3204 = vmatprep.mubr.bf16.mxu0 %v2565
      %3205 = vmatmul.mubr.bf16.gmra.mrb[0].mxu0 %v2548
      %v3206 = vpop.f32.mrb[0].mxu0
      %v3207 = vadd.f32 0.0, %v3206
      %v3208 = vpop.f32.mrb[0].mxu0
      %v3209 = vpop.f32.mrb[0].mxu0
      %v3210 = vadd.f32 0.0, %v3209
      %v3211 = vpop.f32.mrb[0].mxu0
      %3212 = vmatprep.mubr.bf16.mxu0 %v2611
      %3213 = vmatmul.mubr.bf16.gmra.mrb[0].mxu0 %v2594
      %v3214 = vpop.f32.mrb[0].mxu0
      %v3215 = vadd.f32 0.0, %v3214
      %v3216 = vpop.f32.mrb[0].mxu0
      %v3217 = vpop.f32.mrb[0].mxu0
      %v3218 = vadd.f32 0.0, %v3217
      %v3219 = vpop.f32.mrb[0].mxu0
      %3220 = vmatprep.mubr.bf16.mxu0 %v2657
      %3221 = vmatmul.mubr.bf16.gmra.mrb[0].mxu0 %v2640
      %v3222 = vpop.f32.mrb[0].mxu0
      %v3223 = vadd.f32 0.0, %v3222
      %v3224 = vpop.f32.mrb[0].mxu0
      %v3225 = vpop.f32.mrb[0].mxu0
      %v3226 = vadd.f32 0.0, %v3225
      %v3227 = vpop.f32.mrb[0].mxu0
      %3228 = vmatprep.mubr.bf16.mxu0 %v2703
      %3229 = vmatmul.mubr.bf16.gmra.mrb[0].mxu0 %v2686
      %v3230 = vpop.f32.mrb[0].mxu0
      %v3231 = vadd.f32 0.0, %v3230
      %v3232 = vpop.f32.mrb[0].mxu0
      %v3233 = vpop.f32.mrb[0].mxu0
      %v3234 = vadd.f32 0.0, %v3233
      %v3235 = vpop.f32.mrb[0].mxu0
      %3236 = vmatprep.mubr.bf16.mxu0 %v2749
      %3237 = vmatmul.mubr.bf16.gmra.mrb[0].mxu0 %v2732
      %v3238 = vpop.f32.mrb[0].mxu0
      %v3239 = vadd.f32 0.0, %v3238
      %v3240 = vpop.f32.mrb[0].mxu0
      %v3241 = vpop.f32.mrb[0].mxu0
      %v3242 = vadd.f32 0.0, %v3241
      %v3243 = vpop.f32.mrb[0].mxu0
      %3244 = vmatprep.mubr.bf16.mxu0 %v2795
      %3245 = vmatmul.mubr.bf16.gmra.mrb[0].mxu0 %v2778
      %v3246 = vpop.f32.mrb[0].mxu0
      %v3247 = vadd.f32 0.0, %v3246
      %v3248 = vpop.f32.mrb[0].mxu0
      %v3249 = vpop.f32.mrb[0].mxu0
      %v3250 = vadd.f32 0.0, %v3249
      %v3251 = vpop.f32.mrb[0].mxu0
      %3252 = vmatprep.mubr.bf16.mxu0 %v2841
      %3253 = vmatmul.mubr.bf16.gmra.mrb[0].mxu0 %v2824
      %v3254 = vpop.f32.mrb[0].mxu0
      %v3255 = vadd.f32 0.0, %v3254
      %v3256 = vpop.f32.mrb[0].mxu0
      %v3257 = vpop.f32.mrb[0].mxu0
      %v3258 = vadd.f32 0.0, %v3257
      %v3259 = vpop.f32.mrb[0].mxu0
      %3260 = vdwg.mxu0
      %3261 = vmatprep.subr.bf16.mxu0 0
      %3262 = vmatpush1.bf16.msra.mxu0 %v3068
      %3263 = vmatprep.subr.bf16.mxu0 0
      %3264 = vmatpush1.bf16.msra.mxu0 %v3069
      %3265 = vmatprep.subr.bf16.mxu0 0
      %3266 = vmatpush1.bf16.msra.mxu0 %v3070
      %3267 = vmatprep.subr.bf16.mxu0 0
      %3268 = vmatpush1.bf16.msra.mxu0 %v3071
      %3269 = vmatprep.subr.bf16.mxu0 0
      %3270 = vmatpush1.bf16.msra.mxu0 %v3072
      %3271 = vmatprep.subr.bf16.mxu0 0
      %3272 = vmatpush1.bf16.msra.mxu0 %v3073
      %3273 = vmatprep.subr.bf16.mxu0 0
      %3274 = vmatpush1.bf16.msra.mxu0 %v3074
      %3275 = vmatprep.subr.bf16.mxu0 0
      %3276 = vmatpush1.bf16.msra.mxu0 %v3075
      %3277 = vmatprep.subr.bf16.mxu0 0
      %3278 = vmatpush1.bf16.msra.mxu0 0
      %3279 = vmatprep.subr.bf16.mxu0 0
      %3280 = vmatpush1.bf16.msra.mxu0 0
      %3281 = vmatprep.subr.bf16.mxu0 0
      %3282 = vmatpush1.bf16.msra.mxu0 0
      %3283 = vmatprep.subr.bf16.mxu0 0
      %3284 = vmatpush1.bf16.msra.mxu0 0
      %3285 = vmatprep.subr.bf16.mxu0 0
      %3286 = vmatpush1.bf16.msra.mxu0 0
      %3287 = vmatprep.subr.bf16.mxu0 0
      %3288 = vmatpush1.bf16.msra.mxu0 0
      %3289 = vmatprep.subr.bf16.mxu0 0
      %3290 = vmatpush1.bf16.msra.mxu0 0
      %3291 = vmatprep.subr.bf16.mxu0 0
      %3292 = vmatpush1.bf16.msra.mxu0 0
      %3293 = vmatprep.mubr.bf16.mxu0 0
      %3294 = vmatmul.mubr.bf16.gmra.mrb[0].mxu0 %v2168
      %v3295 = vpop.f32.mrb[0].mxu0
      %v3296 = vadd.f32 %v3135, %v3295
      %v3297 = vpop.f32.mrb[0].mxu0
      %v3298 = vpop.f32.mrb[0].mxu0
      %v3299 = vadd.f32 %v3138, %v3298
      %v3300 = vpop.f32.mrb[0].mxu0
      %3301 = vmatprep.mubr.bf16.mxu0 0
      %3302 = vmatmul.mubr.bf16.gmra.mrb[0].mxu0 %v2214
      %v3303 = vpop.f32.mrb[0].mxu0
      %v3304 = vadd.f32 %v3143, %v3303
      %v3305 = vpop.f32.mrb[0].mxu0
      %v3306 = vpop.f32.mrb[0].mxu0
      %v3307 = vadd.f32 %v3146, %v3306
      %v3308 = vpop.f32.mrb[0].mxu0
      %3309 = vmatprep.mubr.bf16.mxu0 0
      %3310 = vmatmul.mubr.bf16.gmra.mrb[0].mxu0 %v2260
      %v3311 = vpop.f32.mrb[0].mxu0
      %v3312 = vadd.f32 %v3151, %v3311
      %v3313 = vpop.f32.mrb[0].mxu0
      %v3314 = vpop.f32.mrb[0].mxu0
      %v3315 = vadd.f32 %v3154, %v3314
      %v3316 = vpop.f32.mrb[0].mxu0
      %3317 = vmatprep.mubr.bf16.mxu0 0
      %3318 = vmatmul.mubr.bf16.gmra.mrb[0].mxu0 %v2306
      %v3319 = vpop.f32.mrb[0].mxu0
      %v3320 = vadd.f32 %v3159, %v3319
      %v3321 = vpop.f32.mrb[0].mxu0
      %v3322 = vpop.f32.mrb[0].mxu0
      %v3323 = vadd.f32 %v3162, %v3322
      %v3324 = vpop.f32.mrb[0].mxu0
      %3325 = vmatprep.mubr.bf16.mxu0 0
      %3326 = vmatmul.mubr.bf16.gmra.mrb[0].mxu0 %v2352
      %v3327 = vpop.f32.mrb[0].mxu0
      %v3328 = vadd.f32 %v3167, %v3327
      %v3329 = vpop.f32.mrb[0].mxu0
      %v3330 = vpop.f32.mrb[0].mxu0
      %v3331 = vadd.f32 %v3170, %v3330
      %v3332 = vpop.f32.mrb[0].mxu0
      %3333 = vmatprep.mubr.bf16.mxu0 0
      %3334 = vmatmul.mubr.bf16.gmra.mrb[0].mxu0 %v2398
      %v3335 = vpop.f32.mrb[0].mxu0
      %v3336 = vadd.f32 %v3175, %v3335
      %v3337 = vpop.f32.mrb[0].mxu0
      %v3338 = vpop.f32.mrb[0].mxu0
      %v3339 = vadd.f32 %v3178, %v3338
      %v3340 = vpop.f32.mrb[0].mxu0
      %3341 = vmatprep.mubr.bf16.mxu0 0
      %3342 = vmatmul.mubr.bf16.gmra.mrb[0].mxu0 %v2444
      %v3343 = vpop.f32.mrb[0].mxu0
      %v3344 = vadd.f32 %v3183, %v3343
      %v3345 = vpop.f32.mrb[0].mxu0
      %v3346 = vpop.f32.mrb[0].mxu0
      %v3347 = vadd.f32 %v3186, %v3346
      %v3348 = vpop.f32.mrb[0].mxu0
      %3349 = vmatprep.mubr.bf16.mxu0 0
      %3350 = vmatmul.mubr.bf16.gmra.mrb[0].mxu0 %v2490
      %v3351 = vpop.f32.mrb[0].mxu0
      %v3352 = vadd.f32 %v3191, %v3351
      %v3353 = vpop.f32.mrb[0].mxu0
      %v3354 = vpop.f32.mrb[0].mxu0
      %v3355 = vadd.f32 %v3194, %v3354
      %v3356 = vpop.f32.mrb[0].mxu0
      %3357 = vmatprep.mubr.bf16.mxu0 0
      %3358 = vmatmul.mubr.bf16.gmra.mrb[0].mxu0 %v2536
      %v3359 = vpop.f32.mrb[0].mxu0
      %v3360 = vadd.f32 %v3199, %v3359
      %v3361 = vpop.f32.mrb[0].mxu0
      %v3362 = vpop.f32.mrb[0].mxu0
      %v3363 = vadd.f32 %v3202, %v3362
      %v3364 = vpop.f32.mrb[0].mxu0
      %3365 = vmatprep.mubr.bf16.mxu0 0
      %3366 = vmatmul.mubr.bf16.gmra.mrb[0].mxu0 %v2582
      %v3367 = vpop.f32.mrb[0].mxu0
      %v3368 = vadd.f32 %v3207, %v3367
      %v3369 = vpop.f32.mrb[0].mxu0
      %v3370 = vpop.f32.mrb[0].mxu0
      %v3371 = vadd.f32 %v3210, %v3370
      %v3372 = vpop.f32.mrb[0].mxu0
      %3373 = vmatprep.mubr.bf16.mxu0 0
      %3374 = vmatmul.mubr.bf16.gmra.mrb[0].mxu0 %v2628
      %v3375 = vpop.f32.mrb[0].mxu0
      %v3376 = vadd.f32 %v3215, %v3375
      %v3377 = vpop.f32.mrb[0].mxu0
      %v3378 = vpop.f32.mrb[0].mxu0
      %v3379 = vadd.f32 %v3218, %v3378
      %v3380 = vpop.f32.mrb[0].mxu0
      %3381 = vmatprep.mubr.bf16.mxu0 0
      %3382 = vmatmul.mubr.bf16.gmra.mrb[0].mxu0 %v2674
      %v3383 = vpop.f32.mrb[0].mxu0
      %v3384 = vadd.f32 %v3223, %v3383
      %v3385 = vpop.f32.mrb[0].mxu0
      %v3386 = vpop.f32.mrb[0].mxu0
      %v3387 = vadd.f32 %v3226, %v3386
      %v3388 = vpop.f32.mrb[0].mxu0
      %3389 = vmatprep.mubr.bf16.mxu0 0
      %3390 = vmatmul.mubr.bf16.gmra.mrb[0].mxu0 %v2720
      %v3391 = vpop.f32.mrb[0].mxu0
      %v3392 = vadd.f32 %v3231, %v3391
      %v3393 = vpop.f32.mrb[0].mxu0
      %v3394 = vpop.f32.mrb[0].mxu0
      %v3395 = vadd.f32 %v3234, %v3394
      %v3396 = vpop.f32.mrb[0].mxu0
      %3397 = vmatprep.mubr.bf16.mxu0 0
      %3398 = vmatmul.mubr.bf16.gmra.mrb[0].mxu0 %v2766
      %v3399 = vpop.f32.mrb[0].mxu0
      %v3400 = vadd.f32 %v3239, %v3399
      %v3401 = vpop.f32.mrb[0].mxu0
      %v3402 = vpop.f32.mrb[0].mxu0
      %v3403 = vadd.f32 %v3242, %v3402
      %v3404 = vpop.f32.mrb[0].mxu0
      %3405 = vmatprep.mubr.bf16.mxu0 0
      %3406 = vmatmul.mubr.bf16.gmra.mrb[0].mxu0 %v2812
      %v3407 = vpop.f32.mrb[0].mxu0
      %v3408 = vadd.f32 %v3247, %v3407
      %v3409 = vpop.f32.mrb[0].mxu0
      %v3410 = vpop.f32.mrb[0].mxu0
      %v3411 = vadd.f32 %v3250, %v3410
      %v3412 = vpop.f32.mrb[0].mxu0
      %3413 = vmatprep.mubr.bf16.mxu0 0
      %3414 = vmatmul.mubr.bf16.gmra.mrb[0].mxu0 %v2858
      %v3415 = vpop.f32.mrb[0].mxu0
      %v3416 = vadd.f32 %v3255, %v3415
      %v3417 = vpop.f32.mrb[0].mxu0
      %v3418 = vpop.f32.mrb[0].mxu0
      %v3419 = vadd.f32 %v3258, %v3418
      %v3420 = vpop.f32.mrb[0].mxu0
      %3421 = vdwg.mxu0
      %v3470 = vunpack.c.l.b16 %v1691
      %v3471 = vunpack.c.l.b16 %v1692
      %v3472 = vunpack.c.l.b16 %v1693
      %v3473 = vunpack.c.l.b16 %v1694
      %v3474 = vunpack.c.l.b16 %v1695
      %v3475 = vunpack.c.l.b16 %v1696
      %v3476 = vunpack.c.l.b16 %v1697
      %v3477 = vunpack.c.l.b16 %v1698
      %v3478 = vunpack.c.l.b16 %v1699
      %v3479 = vunpack.c.l.b16 %v1700
      %v3480 = vunpack.c.l.b16 %v1701
      %v3481 = vunpack.c.l.b16 %v1702
      %v3482 = vunpack.c.l.b16 %v1703
      %v3483 = vunpack.c.l.b16 %v1704
      %v3484 = vunpack.c.l.b16 %v1705
      %v3485 = vunpack.c.l.b16 %v1706
      %v3486 = vunpack.c.l.b16 %v1707
      %v3487 = vunpack.c.l.b16 %v1708
      %v3488 = vunpack.c.l.b16 %v1709
      %v3489 = vunpack.c.l.b16 %v1710
      %v3490 = vunpack.c.l.b16 %v1711
      %v3491 = vunpack.c.l.b16 %v1712
      %v3492 = vunpack.c.l.b16 %v1713
      %v3493 = vunpack.c.l.b16 %v1714
      %v3494 = vunpack.c.l.b16 %v1715
      %v3495 = vunpack.c.l.b16 %v1716
      %v3496 = vunpack.c.l.b16 %v1717
      %v3497 = vunpack.c.l.b16 %v1718
      %v3498 = vunpack.c.l.b16 %v1719
      %v3499 = vunpack.c.l.b16 %v1720
      %v3500 = vunpack.c.l.b16 %v1721
      %v3501 = vunpack.c.l.b16 %v1722
      %v3502 = vunpack.c.l.b16 %v1723
      %v3503 = vunpack.c.l.b16 %v1724
      %v3504 = vunpack.c.l.b16 %v1725
      %v3505 = vunpack.c.l.b16 %v1726
      %v3506 = vunpack.c.l.b16 %v1727
      %v3507 = vunpack.c.l.b16 %v1728
      %v3508 = vunpack.c.l.b16 %v1729
      %v3509 = vunpack.c.l.b16 %v1730
      %v3510 = vunpack.c.l.b16 %v1731
      %v3511 = vunpack.c.l.b16 %v1732
      %v3512 = vunpack.c.l.b16 %v1733
      %v3513 = vunpack.c.l.b16 %v1734
      %v3514 = vunpack.c.l.b16 %v1735
      %v3515 = vunpack.c.l.b16 %v1736
      %v3516 = vunpack.c.l.b16 %v1737
      %v3517 = vunpack.c.l.b16 %v1738
      %v3518 = vpack.c.b16 %v3471, %v3470
      %v3519 = vpack.c.b16 %v3473, %v3472
      %v3520 = vpack.c.b16 %v3475, %v3474
      %v3521 = vpack.c.b16 %v3477, %v3476
      %v3522 = vpack.c.b16 %v3479, %v3478
      %v3523 = vpack.c.b16 %v3481, %v3480
      %v3524 = vpack.c.b16 %v3483, %v3482
      %v3525 = vpack.c.b16 %v3485, %v3484
      %v3526 = vpack.c.b16 %v3487, %v3486
      %v3527 = vpack.c.b16 %v3489, %v3488
      %v3528 = vpack.c.b16 %v3491, %v3490
      %v3529 = vpack.c.b16 %v3493, %v3492
      %v3530 = vpack.c.b16 %v3495, %v3494
      %v3531 = vpack.c.b16 %v3497, %v3496
      %v3532 = vpack.c.b16 %v3499, %v3498
      %v3533 = vpack.c.b16 %v3501, %v3500
      %v3534 = vpack.c.b16 %v3503, %v3502
      %v3535 = vpack.c.b16 %v3505, %v3504
      %v3536 = vpack.c.b16 %v3507, %v3506
      %v3537 = vpack.c.b16 %v3509, %v3508
      %v3538 = vpack.c.b16 %v3511, %v3510
      %v3539 = vpack.c.b16 %v3513, %v3512
      %v3540 = vpack.c.b16 %v3515, %v3514
      %v3541 = vpack.c.b16 %v3517, %v3516
      %3566 = vmatprep.subr.bf16.mxu0 0
      %3567 = vmatpush1.bf16.msra.mxu0 %v3518
      %3568 = vmatprep.subr.bf16.mxu0 0
      %3569 = vmatpush1.bf16.msra.mxu0 %v3519
      %3570 = vmatprep.subr.bf16.mxu0 0
      %3571 = vmatpush1.bf16.msra.mxu0 %v3520
      %3572 = vmatprep.subr.bf16.mxu0 0
      %3573 = vmatpush1.bf16.msra.mxu0 %v3521
      %3574 = vmatprep.subr.bf16.mxu0 0
      %3575 = vmatpush1.bf16.msra.mxu0 %v3522
      %3576 = vmatprep.subr.bf16.mxu0 0
      %3577 = vmatpush1.bf16.msra.mxu0 %v3523
      %3578 = vmatprep.subr.bf16.mxu0 0
      %3579 = vmatpush1.bf16.msra.mxu0 %v3524
      %3580 = vmatprep.subr.bf16.mxu0 0
      %3581 = vmatpush1.bf16.msra.mxu0 %v3525
      %3582 = vmatprep.subr.bf16.mxu0 0
      %3583 = vmatpush1.bf16.msra.mxu0 %v3526
      %3584 = vmatprep.subr.bf16.mxu0 0
      %3585 = vmatpush1.bf16.msra.mxu0 %v3527
      %3586 = vmatprep.subr.bf16.mxu0 0
      %3587 = vmatpush1.bf16.msra.mxu0 %v3528
      %3588 = vmatprep.subr.bf16.mxu0 0
      %3589 = vmatpush1.bf16.msra.mxu0 %v3529
      %3590 = vmatprep.subr.bf16.mxu0 0
      %3591 = vmatpush1.bf16.msra.mxu0 %v3530
      %3592 = vmatprep.subr.bf16.mxu0 0
      %3593 = vmatpush1.bf16.msra.mxu0 %v3531
      %3594 = vmatprep.subr.bf16.mxu0 0
      %3595 = vmatpush1.bf16.msra.mxu0 %v3532
      %3596 = vmatprep.subr.bf16.mxu0 0
      %3597 = vmatpush1.bf16.msra.mxu0 %v3533
      %3598 = vmatprep.mubr.bf16.mxu0 %v935
      %3599 = vmatmul.mubr.bf16.gmra.mrb[0].mxu0 %v918
      %v3600 = vpop.f32.mrb[0].mxu0
      %v3601 = vadd.f32 %v3296, %v3600
      %v3602 = vpop.f32.mrb[0].mxu0
      %v3603 = vpop.f32.mrb[0].mxu0
      %v3604 = vadd.f32 %v3299, %v3603
      %v3605 = vpop.f32.mrb[0].mxu0
      %3606 = vmatprep.mubr.bf16.mxu0 %v981
      %3607 = vmatmul.mubr.bf16.gmra.mrb[0].mxu0 %v964
      %v3608 = vpop.f32.mrb[0].mxu0
      %v3609 = vadd.f32 %v3304, %v3608
      %v3610 = vpop.f32.mrb[0].mxu0
      %v3611 = vpop.f32.mrb[0].mxu0
      %v3612 = vadd.f32 %v3307, %v3611
      %v3613 = vpop.f32.mrb[0].mxu0
      %3614 = vmatprep.mubr.bf16.mxu0 %v1027
      %3615 = vmatmul.mubr.bf16.gmra.mrb[0].mxu0 %v1010
      %v3616 = vpop.f32.mrb[0].mxu0
      %v3617 = vadd.f32 %v3312, %v3616
      %v3618 = vpop.f32.mrb[0].mxu0
      %v3619 = vpop.f32.mrb[0].mxu0
      %v3620 = vadd.f32 %v3315, %v3619
      %v3621 = vpop.f32.mrb[0].mxu0
      %3622 = vmatprep.mubr.bf16.mxu0 %v1073
      %3623 = vmatmul.mubr.bf16.gmra.mrb[0].mxu0 %v1056
      %v3624 = vpop.f32.mrb[0].mxu0
      %v3625 = vadd.f32 %v3320, %v3624
      %v3626 = vpop.f32.mrb[0].mxu0
      %v3627 = vpop.f32.mrb[0].mxu0
      %v3628 = vadd.f32 %v3323, %v3627
      %v3629 = vpop.f32.mrb[0].mxu0
      %3630 = vmatprep.mubr.bf16.mxu0 %v1119
      %3631 = vmatmul.mubr.bf16.gmra.mrb[0].mxu0 %v1102
      %v3632 = vpop.f32.mrb[0].mxu0
      %v3633 = vadd.f32 %v3328, %v3632
      %v3634 = vpop.f32.mrb[0].mxu0
      %v3635 = vpop.f32.mrb[0].mxu0
      %v3636 = vadd.f32 %v3331, %v3635
      %v3637 = vpop.f32.mrb[0].mxu0
      %3638 = vmatprep.mubr.bf16.mxu0 %v1165
      %3639 = vmatmul.mubr.bf16.gmra.mrb[0].mxu0 %v1148
      %v3640 = vpop.f32.mrb[0].mxu0
      %v3641 = vadd.f32 %v3336, %v3640
      %v3642 = vpop.f32.mrb[0].mxu0
      %v3643 = vpop.f32.mrb[0].mxu0
      %v3644 = vadd.f32 %v3339, %v3643
      %v3645 = vpop.f32.mrb[0].mxu0
      %3646 = vmatprep.mubr.bf16.mxu0 %v1211
      %3647 = vmatmul.mubr.bf16.gmra.mrb[0].mxu0 %v1194
      %v3648 = vpop.f32.mrb[0].mxu0
      %v3649 = vadd.f32 %v3344, %v3648
      %v3650 = vpop.f32.mrb[0].mxu0
      %v3651 = vpop.f32.mrb[0].mxu0
      %v3652 = vadd.f32 %v3347, %v3651
      %v3653 = vpop.f32.mrb[0].mxu0
      %3654 = vmatprep.mubr.bf16.mxu0 %v1257
      %3655 = vmatmul.mubr.bf16.gmra.mrb[0].mxu0 %v1240
      %v3656 = vpop.f32.mrb[0].mxu0
      %v3657 = vadd.f32 %v3352, %v3656
      %v3658 = vpop.f32.mrb[0].mxu0
      %v3659 = vpop.f32.mrb[0].mxu0
      %v3660 = vadd.f32 %v3355, %v3659
      %v3661 = vpop.f32.mrb[0].mxu0
      %3662 = vmatprep.mubr.bf16.mxu0 %v1303
      %3663 = vmatmul.mubr.bf16.gmra.mrb[0].mxu0 %v1286
      %v3664 = vpop.f32.mrb[0].mxu0
      %v3665 = vadd.f32 %v3360, %v3664
      %v3666 = vpop.f32.mrb[0].mxu0
      %v3667 = vpop.f32.mrb[0].mxu0
      %v3668 = vadd.f32 %v3363, %v3667
      %v3669 = vpop.f32.mrb[0].mxu0
      %3670 = vmatprep.mubr.bf16.mxu0 %v1349
      %3671 = vmatmul.mubr.bf16.gmra.mrb[0].mxu0 %v1332
      %v3672 = vpop.f32.mrb[0].mxu0
      %v3673 = vadd.f32 %v3368, %v3672
      %v3674 = vpop.f32.mrb[0].mxu0
      %v3675 = vpop.f32.mrb[0].mxu0
      %v3676 = vadd.f32 %v3371, %v3675
      %v3677 = vpop.f32.mrb[0].mxu0
      %3678 = vmatprep.mubr.bf16.mxu0 %v1395
      %3679 = vmatmul.mubr.bf16.gmra.mrb[0].mxu0 %v1378
      %v3680 = vpop.f32.mrb[0].mxu0
      %v3681 = vadd.f32 %v3376, %v3680
      %v3682 = vpop.f32.mrb[0].mxu0
      %v3683 = vpop.f32.mrb[0].mxu0
      %v3684 = vadd.f32 %v3379, %v3683
      %v3685 = vpop.f32.mrb[0].mxu0
      %3686 = vmatprep.mubr.bf16.mxu0 %v1441
      %3687 = vmatmul.mubr.bf16.gmra.mrb[0].mxu0 %v1424
      %v3688 = vpop.f32.mrb[0].mxu0
      %v3689 = vadd.f32 %v3384, %v3688
      %v3690 = vpop.f32.mrb[0].mxu0
      %v3691 = vpop.f32.mrb[0].mxu0
      %v3692 = vadd.f32 %v3387, %v3691
      %v3693 = vpop.f32.mrb[0].mxu0
      %3694 = vmatprep.mubr.bf16.mxu0 %v1487
      %3695 = vmatmul.mubr.bf16.gmra.mrb[0].mxu0 %v1470
      %v3696 = vpop.f32.mrb[0].mxu0
      %v3697 = vadd.f32 %v3392, %v3696
      %v3698 = vpop.f32.mrb[0].mxu0
      %v3699 = vpop.f32.mrb[0].mxu0
      %v3700 = vadd.f32 %v3395, %v3699
      %v3701 = vpop.f32.mrb[0].mxu0
      %3702 = vmatprep.mubr.bf16.mxu0 %v1533
      %3703 = vmatmul.mubr.bf16.gmra.mrb[0].mxu0 %v1516
      %v3704 = vpop.f32.mrb[0].mxu0
      %v3705 = vadd.f32 %v3400, %v3704
      %v3706 = vpop.f32.mrb[0].mxu0
      %v3707 = vpop.f32.mrb[0].mxu0
      %v3708 = vadd.f32 %v3403, %v3707
      %v3709 = vpop.f32.mrb[0].mxu0
      %3710 = vmatprep.mubr.bf16.mxu0 %v1579
      %3711 = vmatmul.mubr.bf16.gmra.mrb[0].mxu0 %v1562
      %v3712 = vpop.f32.mrb[0].mxu0
      %v3713 = vadd.f32 %v3408, %v3712
      %v3714 = vpop.f32.mrb[0].mxu0
      %v3715 = vpop.f32.mrb[0].mxu0
      %v3716 = vadd.f32 %v3411, %v3715
      %v3717 = vpop.f32.mrb[0].mxu0
      %3718 = vmatprep.mubr.bf16.mxu0 %v1625
      %3719 = vmatmul.mubr.bf16.gmra.mrb[0].mxu0 %v1608
      %v3720 = vpop.f32.mrb[0].mxu0
      %v3721 = vadd.f32 %v3416, %v3720
      %v3722 = vpop.f32.mrb[0].mxu0
      %v3723 = vpop.f32.mrb[0].mxu0
      %v3724 = vadd.f32 %v3419, %v3723
      %v3725 = vpop.f32.mrb[0].mxu0
      %3726 = vdwg.mxu0
      %3727 = vmatprep.subr.bf16.mxu0 0
      %3728 = vmatpush1.bf16.msra.mxu0 %v3534
      %3729 = vmatprep.subr.bf16.mxu0 0
      %3730 = vmatpush1.bf16.msra.mxu0 %v3535
      %3731 = vmatprep.subr.bf16.mxu0 0
      %3732 = vmatpush1.bf16.msra.mxu0 %v3536
      %3733 = vmatprep.subr.bf16.mxu0 0
      %3734 = vmatpush1.bf16.msra.mxu0 %v3537
      %3735 = vmatprep.subr.bf16.mxu0 0
      %3736 = vmatpush1.bf16.msra.mxu0 %v3538
      %3737 = vmatprep.subr.bf16.mxu0 0
      %3738 = vmatpush1.bf16.msra.mxu0 %v3539
      %3739 = vmatprep.subr.bf16.mxu0 0
      %3740 = vmatpush1.bf16.msra.mxu0 %v3540
      %3741 = vmatprep.subr.bf16.mxu0 0
      %3742 = vmatpush1.bf16.msra.mxu0 %v3541
      %3743 = vmatprep.subr.bf16.mxu0 0
      %3744 = vmatpush1.bf16.msra.mxu0 0
      %3745 = vmatprep.subr.bf16.mxu0 0
      %3746 = vmatpush1.bf16.msra.mxu0 0
      %3747 = vmatprep.subr.bf16.mxu0 0
      %3748 = vmatpush1.bf16.msra.mxu0 0
      %3749 = vmatprep.subr.bf16.mxu0 0
      %3750 = vmatpush1.bf16.msra.mxu0 0
      %3751 = vmatprep.subr.bf16.mxu0 0
      %3752 = vmatpush1.bf16.msra.mxu0 0
      %3753 = vmatprep.subr.bf16.mxu0 0
      %3754 = vmatpush1.bf16.msra.mxu0 0
      %3755 = vmatprep.subr.bf16.mxu0 0
      %3756 = vmatpush1.bf16.msra.mxu0 0
      %3757 = vmatprep.subr.bf16.mxu0 0
      %3758 = vmatpush1.bf16.msra.mxu0 0
      %3759 = vmatprep.mubr.bf16.mxu0 0
      %3760 = vmatmul.mubr.bf16.gmra.mrb[0].mxu0 %v952
      %v3761 = vpop.f32.mrb[0].mxu0
      %v3762 = vadd.f32 %v3601, %v3761
      %v3763 = vpop.f32.mrb[0].mxu0
      %v3764 = vpop.f32.mrb[0].mxu0
      %v3765 = vadd.f32 %v3604, %v3764
      %v3766 = vpop.f32.mrb[0].mxu0
      %3767 = vmatprep.mubr.bf16.mxu0 0
      %3768 = vmatmul.mubr.bf16.gmra.mrb[0].mxu0 %v998
      %v3769 = vpop.f32.mrb[0].mxu0
      %v3770 = vadd.f32 %v3609, %v3769
      %v3771 = vpop.f32.mrb[0].mxu0
      %v3772 = vpop.f32.mrb[0].mxu0
      %v3773 = vadd.f32 %v3612, %v3772
      %v3774 = vpop.f32.mrb[0].mxu0
      %3775 = vmatprep.mubr.bf16.mxu0 0
      %3776 = vmatmul.mubr.bf16.gmra.mrb[0].mxu0 %v1044
      %v3777 = vpop.f32.mrb[0].mxu0
      %v3778 = vadd.f32 %v3617, %v3777
      %v3779 = vpop.f32.mrb[0].mxu0
      %v3780 = vpop.f32.mrb[0].mxu0
      %v3781 = vadd.f32 %v3620, %v3780
      %v3782 = vpop.f32.mrb[0].mxu0
      %3783 = vmatprep.mubr.bf16.mxu0 0
      %3784 = vmatmul.mubr.bf16.gmra.mrb[0].mxu0 %v1090
      %v3785 = vpop.f32.mrb[0].mxu0
      %v3786 = vadd.f32 %v3625, %v3785
      %v3787 = vpop.f32.mrb[0].mxu0
      %v3788 = vpop.f32.mrb[0].mxu0
      %v3789 = vadd.f32 %v3628, %v3788
      %v3790 = vpop.f32.mrb[0].mxu0
      %3791 = vmatprep.mubr.bf16.mxu0 0
      %3792 = vmatmul.mubr.bf16.gmra.mrb[0].mxu0 %v1136
      %v3793 = vpop.f32.mrb[0].mxu0
      %v3794 = vadd.f32 %v3633, %v3793
      %v3795 = vpop.f32.mrb[0].mxu0
      %v3796 = vpop.f32.mrb[0].mxu0
      %v3797 = vadd.f32 %v3636, %v3796
      %v3798 = vpop.f32.mrb[0].mxu0
      %3799 = vmatprep.mubr.bf16.mxu0 0
      %3800 = vmatmul.mubr.bf16.gmra.mrb[0].mxu0 %v1182
      %v3801 = vpop.f32.mrb[0].mxu0
      %v3802 = vadd.f32 %v3641, %v3801
      %v3803 = vpop.f32.mrb[0].mxu0
      %v3804 = vpop.f32.mrb[0].mxu0
      %v3805 = vadd.f32 %v3644, %v3804
      %v3806 = vpop.f32.mrb[0].mxu0
      %3807 = vmatprep.mubr.bf16.mxu0 0
      %3808 = vmatmul.mubr.bf16.gmra.mrb[0].mxu0 %v1228
      %v3809 = vpop.f32.mrb[0].mxu0
      %v3810 = vadd.f32 %v3649, %v3809
      %v3811 = vpop.f32.mrb[0].mxu0
      %v3812 = vpop.f32.mrb[0].mxu0
      %v3813 = vadd.f32 %v3652, %v3812
      %v3814 = vpop.f32.mrb[0].mxu0
      %3815 = vmatprep.mubr.bf16.mxu0 0
      %3816 = vmatmul.mubr.bf16.gmra.mrb[0].mxu0 %v1274
      %v3817 = vpop.f32.mrb[0].mxu0
      %v3818 = vadd.f32 %v3657, %v3817
      %v3819 = vpop.f32.mrb[0].mxu0
      %v3820 = vpop.f32.mrb[0].mxu0
      %v3821 = vadd.f32 %v3660, %v3820
      %v3822 = vpop.f32.mrb[0].mxu0
      %3823 = vmatprep.mubr.bf16.mxu0 0
      %3824 = vmatmul.mubr.bf16.gmra.mrb[0].mxu0 %v1320
      %v3825 = vpop.f32.mrb[0].mxu0
      %v3826 = vadd.f32 %v3665, %v3825
      %v3827 = vpop.f32.mrb[0].mxu0
      %v3828 = vpop.f32.mrb[0].mxu0
      %v3829 = vadd.f32 %v3668, %v3828
      %v3830 = vpop.f32.mrb[0].mxu0
      %3831 = vmatprep.mubr.bf16.mxu0 0
      %3832 = vmatmul.mubr.bf16.gmra.mrb[0].mxu0 %v1366
      %v3833 = vpop.f32.mrb[0].mxu0
      %v3834 = vadd.f32 %v3673, %v3833
      %v3835 = vpop.f32.mrb[0].mxu0
      %v3836 = vpop.f32.mrb[0].mxu0
      %v3837 = vadd.f32 %v3676, %v3836
      %v3838 = vpop.f32.mrb[0].mxu0
      %3839 = vmatprep.mubr.bf16.mxu0 0
      %3840 = vmatmul.mubr.bf16.gmra.mrb[0].mxu0 %v1412
      %v3841 = vpop.f32.mrb[0].mxu0
      %v3842 = vadd.f32 %v3681, %v3841
      %v3843 = vpop.f32.mrb[0].mxu0
      %v3844 = vpop.f32.mrb[0].mxu0
      %v3845 = vadd.f32 %v3684, %v3844
      %v3846 = vpop.f32.mrb[0].mxu0
      %3847 = vmatprep.mubr.bf16.mxu0 0
      %3848 = vmatmul.mubr.bf16.gmra.mrb[0].mxu0 %v1458
      %v3849 = vpop.f32.mrb[0].mxu0
      %v3850 = vadd.f32 %v3689, %v3849
      %v3851 = vpop.f32.mrb[0].mxu0
      %v3852 = vpop.f32.mrb[0].mxu0
      %v3853 = vadd.f32 %v3692, %v3852
      %v3854 = vpop.f32.mrb[0].mxu0
      %3855 = vmatprep.mubr.bf16.mxu0 0
      %3856 = vmatmul.mubr.bf16.gmra.mrb[0].mxu0 %v1504
      %v3857 = vpop.f32.mrb[0].mxu0
      %v3858 = vadd.f32 %v3697, %v3857
      %v3859 = vpop.f32.mrb[0].mxu0
      %v3860 = vpop.f32.mrb[0].mxu0
      %v3861 = vadd.f32 %v3700, %v3860
      %v3862 = vpop.f32.mrb[0].mxu0
      %3863 = vmatprep.mubr.bf16.mxu0 0
      %3864 = vmatmul.mubr.bf16.gmra.mrb[0].mxu0 %v1550
      %v3865 = vpop.f32.mrb[0].mxu0
      %v3866 = vadd.f32 %v3705, %v3865
      %v3867 = vpop.f32.mrb[0].mxu0
      %v3868 = vpop.f32.mrb[0].mxu0
      %v3869 = vadd.f32 %v3708, %v3868
      %v3870 = vpop.f32.mrb[0].mxu0
      %3871 = vmatprep.mubr.bf16.mxu0 0
      %3872 = vmatmul.mubr.bf16.gmra.mrb[0].mxu0 %v1596
      %v3873 = vpop.f32.mrb[0].mxu0
      %v3874 = vadd.f32 %v3713, %v3873
      %v3875 = vpop.f32.mrb[0].mxu0
      %v3876 = vpop.f32.mrb[0].mxu0
      %v3877 = vadd.f32 %v3716, %v3876
      %v3878 = vpop.f32.mrb[0].mxu0
      %3879 = vmatprep.mubr.bf16.mxu0 0
      %3880 = vmatmul.mubr.bf16.gmra.mrb[0].mxu0 %v1642
      %v3881 = vpop.f32.mrb[0].mxu0
      %v3882 = vadd.f32 %v3721, %v3881
      %v3883 = vpop.f32.mrb[0].mxu0
      %v3884 = vpop.f32.mrb[0].mxu0
      %v3885 = vadd.f32 %v3724, %v3884
      %v3886 = vpop.f32.mrb[0].mxu0
      %3887 = vdwg.mxu0
      %s3888 = scalar_lea.vmem [#allocation2], 32
      %v3889 = vld [vmem:[%s3888] sm:$0xf8]
      %v3890 = vld [vmem:[%s3888 + $0x8] sm:$0xf]
      %v3891 = vld [vmem:[%s3888 + $0x10] sm:$0xf8]
      %v3892 = vld [vmem:[%s3888 + $0x18] sm:$0xf]
      %v3893 = vld [vmem:[%s3888 + $0x20] sm:$0xf8]
      %v3894 = vld [vmem:[%s3888 + $0x28] sm:$0xf]
      %v3895 = vld [vmem:[%s3888 + $0x30] sm:$0xf8]
      %v3896 = vld [vmem:[%s3888 + $0x38] sm:$0xf]
      %v3897 = vld [vmem:[%s3888 + $0x40] sm:$0xf8]
      %v3898 = vld [vmem:[%s3888 + $0x48] sm:$0xf]
      %v3899 = vld [vmem:[%s3888 + $0x50] sm:$0xf8]
      %v3900 = vld [vmem:[%s3888 + $0x58] sm:$0xf]
      %v3901 = vld [vmem:[%s3888 + $0x60] sm:$0xf8]
      %v3902 = vld [vmem:[%s3888 + $0x68] sm:$0xf]
      %v3903 = vld [vmem:[%s3888 + $0x70] sm:$0xf8]
      %v3904 = vld [vmem:[%s3888 + $0x78] sm:$0xf]
      %v3905 = vld [vmem:[%s3888 + $0x80] sm:$0xf8]
      %v3906 = vld [vmem:[%s3888 + $0x88] sm:$0xf]
      %v3907 = vld [vmem:[%s3888 + $0x90] sm:$0xf8]
      %v3908 = vld [vmem:[%s3888 + $0x98] sm:$0xf]
      %v3909 = vld [vmem:[%s3888 + $0xa0] sm:$0xf8]
      %v3910 = vld [vmem:[%s3888 + $0xa8] sm:$0xf]
      %v3911 = vld [vmem:[%s3888 + $0xb0] sm:$0xf8]
      %v3912 = vld [vmem:[%s3888 + $0xb8] sm:$0xf]
      %v3913 = vld [vmem:[%s3888 + $0xc0] sm:$0xf8]
      %v3914 = vld [vmem:[%s3888 + $0xc8] sm:$0xf]
      %v3915 = vld [vmem:[%s3888 + $0xd0] sm:$0xf8]
      %v3916 = vld [vmem:[%s3888 + $0xd8] sm:$0xf]
      %v3917 = vld [vmem:[%s3888 + $0xe0] sm:$0xf8]
      %v3918 = vld [vmem:[%s3888 + $0xe8] sm:$0xf]
      %v3919 = vld [vmem:[%s3888 + $0xf0] sm:$0xf8]
      %v3920 = vld [vmem:[%s3888 + $0xf8] sm:$0xf]
      %v3921 = vld [vmem:[%s3888] sm:$0xf0]
      %v3922 = vld [vmem:[%s3888 + $0x10] sm:$0xf0]
      %v3923 = vld [vmem:[%s3888 + $0x20] sm:$0xf0]
      %v3924 = vld [vmem:[%s3888 + $0x30] sm:$0xf0]
      %v3925 = vld [vmem:[%s3888 + $0x40] sm:$0xf0]
      %v3926 = vld [vmem:[%s3888 + $0x50] sm:$0xf0]
      %v3927 = vld [vmem:[%s3888 + $0x60] sm:$0xf0]
      %v3928 = vld [vmem:[%s3888 + $0x70] sm:$0xf0]
      %v3929 = vld [vmem:[%s3888 + $0x80] sm:$0xf0]
      %v3930 = vld [vmem:[%s3888 + $0x90] sm:$0xf0]
      %v3931 = vld [vmem:[%s3888 + $0xa0] sm:$0xf0]
      %v3932 = vld [vmem:[%s3888 + $0xb0] sm:$0xf0]
      %v3933 = vld [vmem:[%s3888 + $0xc0] sm:$0xf0]
      %v3934 = vld [vmem:[%s3888 + $0xd0] sm:$0xf0]
      %v3935 = vld [vmem:[%s3888 + $0xe0] sm:$0xf0]
      %v3936 = vld [vmem:[%s3888 + $0xf0] sm:$0xf0]
      %v3937 = vld [vmem:[%s3888 + $0x8] sm:$0x1f]
      %v3938 = vld [vmem:[%s3888 + $0x18] sm:$0x1f]
      %v3939 = vld [vmem:[%s3888 + $0x28] sm:$0x1f]
      %v3940 = vld [vmem:[%s3888 + $0x38] sm:$0x1f]
      %v3941 = vld [vmem:[%s3888 + $0x48] sm:$0x1f]
      %v3942 = vld [vmem:[%s3888 + $0x58] sm:$0x1f]
      %v3943 = vld [vmem:[%s3888 + $0x68] sm:$0x1f]
      %v3944 = vld [vmem:[%s3888 + $0x78] sm:$0x1f]
      %v3945 = vld [vmem:[%s3888 + $0x88] sm:$0x1f]
      %v3946 = vld [vmem:[%s3888 + $0x98] sm:$0x1f]
      %v3947 = vld [vmem:[%s3888 + $0xa8] sm:$0x1f]
      %v3948 = vld [vmem:[%s3888 + $0xb8] sm:$0x1f]
      %v3949 = vld [vmem:[%s3888 + $0xc8] sm:$0x1f]
      %v3950 = vld [vmem:[%s3888 + $0xd8] sm:$0x1f]
      %v3951 = vld [vmem:[%s3888 + $0xe8] sm:$0x1f]
      %v3952 = vld [vmem:[%s3888 + $0xf8] sm:$0x1f]
      %v3954 = vshrl.u32 %v3921, 16
      %v3956 = vshll.u32 %v3921, 16
      %v3958 = vrot.slane %v3956, 1
      %v3959 = vor.u32 %v3954, %v3958
      %v3961 = vshll.u32 %v3890, 16
      %v3963 = vrot.slane %v3961, 1
      %v3964 = vsel %vm584, %v3959, %v3963
      %v3965 = vshrl.u32 %v3890, 16
      %v3967 = vor.u32 %v3965, %v3963
      %v3969 = vshrl.u32 %v3922, 16
      %v3971 = vshll.u32 %v3922, 16
      %v3973 = vrot.slane %v3971, 1
      %v3974 = vor.u32 %v3969, %v3973
      %v3976 = vshll.u32 %v3892, 16
      %v3978 = vrot.slane %v3976, 1
      %v3979 = vsel %vm584, %v3974, %v3978
      %v3980 = vshrl.u32 %v3892, 16
      %v3982 = vor.u32 %v3980, %v3978
      %v3984 = vshrl.u32 %v3923, 16
      %v3986 = vshll.u32 %v3923, 16
      %v3988 = vrot.slane %v3986, 1
      %v3989 = vor.u32 %v3984, %v3988
      %v3991 = vshll.u32 %v3894, 16
      %v3993 = vrot.slane %v3991, 1
      %v3994 = vsel %vm584, %v3989, %v3993
      %v3995 = vshrl.u32 %v3894, 16
      %v3997 = vor.u32 %v3995, %v3993
      %v3999 = vshrl.u32 %v3924, 16
      %v4001 = vshll.u32 %v3924, 16
      %v4003 = vrot.slane %v4001, 1
      %v4004 = vor.u32 %v3999, %v4003
      %v4006 = vshll.u32 %v3896, 16
      %v4008 = vrot.slane %v4006, 1
      %v4009 = vsel %vm584, %v4004, %v4008
      %v4010 = vshrl.u32 %v3896, 16
      %v4012 = vor.u32 %v4010, %v4008
      %v4014 = vshrl.u32 %v3925, 16
      %v4016 = vshll.u32 %v3925, 16
      %v4018 = vrot.slane %v4016, 1
      %v4019 = vor.u32 %v4014, %v4018
      %v4021 = vshll.u32 %v3898, 16
      %v4023 = vrot.slane %v4021, 1
      %v4024 = vsel %vm584, %v4019, %v4023
      %v4025 = vshrl.u32 %v3898, 16
      %v4027 = vor.u32 %v4025, %v4023
      %v4029 = vshrl.u32 %v3926, 16
      %v4031 = vshll.u32 %v3926, 16
      %v4033 = vrot.slane %v4031, 1
      %v4034 = vor.u32 %v4029, %v4033
      %v4036 = vshll.u32 %v3900, 16
      %v4038 = vrot.slane %v4036, 1
      %v4039 = vsel %vm584, %v4034, %v4038
      %v4040 = vshrl.u32 %v3900, 16
      %v4042 = vor.u32 %v4040, %v4038
      %v4044 = vshrl.u32 %v3927, 16
      %v4046 = vshll.u32 %v3927, 16
      %v4048 = vrot.slane %v4046, 1
      %v4049 = vor.u32 %v4044, %v4048
      %v4051 = vshll.u32 %v3902, 16
      %v4053 = vrot.slane %v4051, 1
      %v4054 = vsel %vm584, %v4049, %v4053
      %v4055 = vshrl.u32 %v3902, 16
      %v4057 = vor.u32 %v4055, %v4053
      %v4059 = vshrl.u32 %v3928, 16
      %v4061 = vshll.u32 %v3928, 16
      %v4063 = vrot.slane %v4061, 1
      %v4064 = vor.u32 %v4059, %v4063
      %v4066 = vshll.u32 %v3904, 16
      %v4068 = vrot.slane %v4066, 1
      %v4069 = vsel %vm584, %v4064, %v4068
      %v4070 = vshrl.u32 %v3904, 16
      %v4072 = vor.u32 %v4070, %v4068
      %v4074 = vshrl.u32 %v3929, 16
      %v4076 = vshll.u32 %v3929, 16
      %v4078 = vrot.slane %v4076, 1
      %v4079 = vor.u32 %v4074, %v4078
      %v4081 = vshll.u32 %v3906, 16
      %v4083 = vrot.slane %v4081, 1
      %v4084 = vsel %vm584, %v4079, %v4083
      %v4085 = vshrl.u32 %v3906, 16
      %v4087 = vor.u32 %v4085, %v4083
      %v4089 = vshrl.u32 %v3930, 16
      %v4091 = vshll.u32 %v3930, 16
      %v4093 = vrot.slane %v4091, 1
      %v4094 = vor.u32 %v4089, %v4093
      %v4096 = vshll.u32 %v3908, 16
      %v4098 = vrot.slane %v4096, 1
      %v4099 = vsel %vm584, %v4094, %v4098
      %v4100 = vshrl.u32 %v3908, 16
      %v4102 = vor.u32 %v4100, %v4098
      %v4104 = vshrl.u32 %v3931, 16
      %v4106 = vshll.u32 %v3931, 16
      %v4108 = vrot.slane %v4106, 1
      %v4109 = vor.u32 %v4104, %v4108
      %v4111 = vshll.u32 %v3910, 16
      %v4113 = vrot.slane %v4111, 1
      %v4114 = vsel %vm584, %v4109, %v4113
      %v4115 = vshrl.u32 %v3910, 16
      %v4117 = vor.u32 %v4115, %v4113
      %v4119 = vshrl.u32 %v3932, 16
      %v4121 = vshll.u32 %v3932, 16
      %v4123 = vrot.slane %v4121, 1
      %v4124 = vor.u32 %v4119, %v4123
      %v4126 = vshll.u32 %v3912, 16
      %v4128 = vrot.slane %v4126, 1
      %v4129 = vsel %vm584, %v4124, %v4128
      %v4130 = vshrl.u32 %v3912, 16
      %v4132 = vor.u32 %v4130, %v4128
      %v4134 = vshrl.u32 %v3933, 16
      %v4136 = vshll.u32 %v3933, 16
      %v4138 = vrot.slane %v4136, 1
      %v4139 = vor.u32 %v4134, %v4138
      %v4141 = vshll.u32 %v3914, 16
      %v4143 = vrot.slane %v4141, 1
      %v4144 = vsel %vm584, %v4139, %v4143
      %v4145 = vshrl.u32 %v3914, 16
      %v4147 = vor.u32 %v4145, %v4143
      %v4149 = vshrl.u32 %v3934, 16
      %v4151 = vshll.u32 %v3934, 16
      %v4153 = vrot.slane %v4151, 1
      %v4154 = vor.u32 %v4149, %v4153
      %v4156 = vshll.u32 %v3916, 16
      %v4158 = vrot.slane %v4156, 1
      %v4159 = vsel %vm584, %v4154, %v4158
      %v4160 = vshrl.u32 %v3916, 16
      %v4162 = vor.u32 %v4160, %v4158
      %v4164 = vshrl.u32 %v3935, 16
      %v4166 = vshll.u32 %v3935, 16
      %v4168 = vrot.slane %v4166, 1
      %v4169 = vor.u32 %v4164, %v4168
      %v4171 = vshll.u32 %v3918, 16
      %v4173 = vrot.slane %v4171, 1
      %v4174 = vsel %vm584, %v4169, %v4173
      %v4175 = vshrl.u32 %v3918, 16
      %v4177 = vor.u32 %v4175, %v4173
      %v4179 = vshrl.u32 %v3936, 16
      %v4181 = vshll.u32 %v3936, 16
      %v4183 = vrot.slane %v4181, 1
      %v4184 = vor.u32 %v4179, %v4183
      %v4186 = vshll.u32 %v3920, 16
      %v4188 = vrot.slane %v4186, 1
      %v4189 = vsel %vm584, %v4184, %v4188
      %v4190 = vshrl.u32 %v3920, 16
      %v4192 = vor.u32 %v4190, %v4188
      %v4225 = vrot.slane %v3921, 1
      %v4226 = vrot.slane %v3937, 1
      %v4227 = vsel %vm857, %v4225, %v4226
      %v4228 = vrot.slane %v3922, 1
      %v4229 = vrot.slane %v3938, 1
      %v4230 = vsel %vm857, %v4228, %v4229
      %v4231 = vrot.slane %v3923, 1
      %v4232 = vrot.slane %v3939, 1
      %v4233 = vsel %vm857, %v4231, %v4232
      %v4234 = vrot.slane %v3924, 1
      %v4235 = vrot.slane %v3940, 1
      %v4236 = vsel %vm857, %v4234, %v4235
      %v4237 = vrot.slane %v3925, 1
      %v4238 = vrot.slane %v3941, 1
      %v4239 = vsel %vm857, %v4237, %v4238
      %v4240 = vrot.slane %v3926, 1
      %v4241 = vrot.slane %v3942, 1
      %v4242 = vsel %vm857, %v4240, %v4241
      %v4243 = vrot.slane %v3927, 1
      %v4244 = vrot.slane %v3943, 1
      %v4245 = vsel %vm857, %v4243, %v4244
      %v4246 = vrot.slane %v3928, 1
      %v4247 = vrot.slane %v3944, 1
      %v4248 = vsel %vm857, %v4246, %v4247
      %v4249 = vrot.slane %v3929, 1
      %v4250 = vrot.slane %v3945, 1
      %v4251 = vsel %vm857, %v4249, %v4250
      %v4252 = vrot.slane %v3930, 1
      %v4253 = vrot.slane %v3946, 1
      %v4254 = vsel %vm857, %v4252, %v4253
      %v4255 = vrot.slane %v3931, 1
      %v4256 = vrot.slane %v3947, 1
      %v4257 = vsel %vm857, %v4255, %v4256
      %v4258 = vrot.slane %v3932, 1
      %v4259 = vrot.slane %v3948, 1
      %v4260 = vsel %vm857, %v4258, %v4259
      %v4261 = vrot.slane %v3933, 1
      %v4262 = vrot.slane %v3949, 1
      %v4263 = vsel %vm857, %v4261, %v4262
      %v4264 = vrot.slane %v3934, 1
      %v4265 = vrot.slane %v3950, 1
      %v4266 = vsel %vm857, %v4264, %v4265
      %v4267 = vrot.slane %v3935, 1
      %v4268 = vrot.slane %v3951, 1
      %v4269 = vsel %vm857, %v4267, %v4268
      %v4270 = vrot.slane %v3936, 1
      %v4271 = vrot.slane %v3952, 1
      %v4272 = vsel %vm857, %v4270, %v4271
      %v4274 = vshrl.u32 %v3889, 16
      %v4276 = vrot.slane %v4274, 3
      %v4277 = vshll.u32 %v3889, 16
      %v4279 = vrot.slane %v4277, 4
      %v4280 = vor.u32 %v4276, %v4279
      %v4281 = vrot.slane %v3965, 3
      %v4282 = vrot.slane %v3961, 4
      %v4283 = vor.u32 %v4281, %v4282
      %v4284 = vsel %vm906, %v4280, %v4283
      %v4286 = vshrl.u32 %v3964, 16
      %v4288 = vrot.slane %v4286, 3
      %v4289 = vshll.u32 %v3964, 16
      %v4291 = vrot.slane %v4289, 4
      %v4292 = vor.u32 %v4288, %v4291
      %v4294 = vshrl.u32 %v3967, 16
      %v4296 = vrot.slane %v4294, 3
      %v4297 = vshll.u32 %v3967, 16
      %v4299 = vrot.slane %v4297, 4
      %v4300 = vor.u32 %v4296, %v4299
      %v4301 = vsel %vm906, %v4292, %v4300
      %v4303 = vshrl.u32 %v4227, 16
      %v4305 = vrot.slane %v4303, 3
      %v4306 = vshll.u32 %v4227, 16
      %v4308 = vrot.slane %v4306, 4
      %v4309 = vor.u32 %v4305, %v4308
      %v4311 = vshrl.u32 %v4226, 16
      %v4313 = vrot.slane %v4311, 3
      %v4314 = vshll.u32 %v4226, 16
      %v4316 = vrot.slane %v4314, 4
      %v4317 = vor.u32 %v4313, %v4316
      %v4318 = vsel %vm906, %v4309, %v4317
      %v4320 = vshrl.u32 %v3891, 16
      %v4322 = vrot.slane %v4320, 3
      %v4323 = vshll.u32 %v3891, 16
      %v4325 = vrot.slane %v4323, 4
      %v4326 = vor.u32 %v4322, %v4325
      %v4327 = vrot.slane %v3980, 3
      %v4328 = vrot.slane %v3976, 4
      %v4329 = vor.u32 %v4327, %v4328
      %v4330 = vsel %vm906, %v4326, %v4329
      %v4332 = vshrl.u32 %v3979, 16
      %v4334 = vrot.slane %v4332, 3
      %v4335 = vshll.u32 %v3979, 16
      %v4337 = vrot.slane %v4335, 4
      %v4338 = vor.u32 %v4334, %v4337
      %v4340 = vshrl.u32 %v3982, 16
      %v4342 = vrot.slane %v4340, 3
      %v4343 = vshll.u32 %v3982, 16
      %v4345 = vrot.slane %v4343, 4
      %v4346 = vor.u32 %v4342, %v4345
      %v4347 = vsel %vm906, %v4338, %v4346
      %v4349 = vshrl.u32 %v4230, 16
      %v4351 = vrot.slane %v4349, 3
      %v4352 = vshll.u32 %v4230, 16
      %v4354 = vrot.slane %v4352, 4
      %v4355 = vor.u32 %v4351, %v4354
      %v4357 = vshrl.u32 %v4229, 16
      %v4359 = vrot.slane %v4357, 3
      %v4360 = vshll.u32 %v4229, 16
      %v4362 = vrot.slane %v4360, 4
      %v4363 = vor.u32 %v4359, %v4362
      %v4364 = vsel %vm906, %v4355, %v4363
      %v4366 = vshrl.u32 %v3893, 16
      %v4368 = vrot.slane %v4366, 3
      %v4369 = vshll.u32 %v3893, 16
      %v4371 = vrot.slane %v4369, 4
      %v4372 = vor.u32 %v4368, %v4371
      %v4373 = vrot.slane %v3995, 3
      %v4374 = vrot.slane %v3991, 4
      %v4375 = vor.u32 %v4373, %v4374
      %v4376 = vsel %vm906, %v4372, %v4375
      %v4378 = vshrl.u32 %v3994, 16
      %v4380 = vrot.slane %v4378, 3
      %v4381 = vshll.u32 %v3994, 16
      %v4383 = vrot.slane %v4381, 4
      %v4384 = vor.u32 %v4380, %v4383
      %v4386 = vshrl.u32 %v3997, 16
      %v4388 = vrot.slane %v4386, 3
      %v4389 = vshll.u32 %v3997, 16
      %v4391 = vrot.slane %v4389, 4
      %v4392 = vor.u32 %v4388, %v4391
      %v4393 = vsel %vm906, %v4384, %v4392
      %v4395 = vshrl.u32 %v4233, 16
      %v4397 = vrot.slane %v4395, 3
      %v4398 = vshll.u32 %v4233, 16
      %v4400 = vrot.slane %v4398, 4
      %v4401 = vor.u32 %v4397, %v4400
      %v4403 = vshrl.u32 %v4232, 16
      %v4405 = vrot.slane %v4403, 3
      %v4406 = vshll.u32 %v4232, 16
      %v4408 = vrot.slane %v4406, 4
      %v4409 = vor.u32 %v4405, %v4408
      %v4410 = vsel %vm906, %v4401, %v4409
      %v4412 = vshrl.u32 %v3895, 16
      %v4414 = vrot.slane %v4412, 3
      %v4415 = vshll.u32 %v3895, 16
      %v4417 = vrot.slane %v4415, 4
      %v4418 = vor.u32 %v4414, %v4417
      %v4419 = vrot.slane %v4010, 3
      %v4420 = vrot.slane %v4006, 4
      %v4421 = vor.u32 %v4419, %v4420
      %v4422 = vsel %vm906, %v4418, %v4421
      %v4424 = vshrl.u32 %v4009, 16
      %v4426 = vrot.slane %v4424, 3
      %v4427 = vshll.u32 %v4009, 16
      %v4429 = vrot.slane %v4427, 4
      %v4430 = vor.u32 %v4426, %v4429
      %v4432 = vshrl.u32 %v4012, 16
      %v4434 = vrot.slane %v4432, 3
      %v4435 = vshll.u32 %v4012, 16
      %v4437 = vrot.slane %v4435, 4
      %v4438 = vor.u32 %v4434, %v4437
      %v4439 = vsel %vm906, %v4430, %v4438
      %v4441 = vshrl.u32 %v4236, 16
      %v4443 = vrot.slane %v4441, 3
      %v4444 = vshll.u32 %v4236, 16
      %v4446 = vrot.slane %v4444, 4
      %v4447 = vor.u32 %v4443, %v4446
      %v4449 = vshrl.u32 %v4235, 16
      %v4451 = vrot.slane %v4449, 3
      %v4452 = vshll.u32 %v4235, 16
      %v4454 = vrot.slane %v4452, 4
      %v4455 = vor.u32 %v4451, %v4454
      %v4456 = vsel %vm906, %v4447, %v4455
      %v4458 = vshrl.u32 %v3897, 16
      %v4460 = vrot.slane %v4458, 3
      %v4461 = vshll.u32 %v3897, 16
      %v4463 = vrot.slane %v4461, 4
      %v4464 = vor.u32 %v4460, %v4463
      %v4465 = vrot.slane %v4025, 3
      %v4466 = vrot.slane %v4021, 4
      %v4467 = vor.u32 %v4465, %v4466
      %v4468 = vsel %vm906, %v4464, %v4467
      %v4470 = vshrl.u32 %v4024, 16
      %v4472 = vrot.slane %v4470, 3
      %v4473 = vshll.u32 %v4024, 16
      %v4475 = vrot.slane %v4473, 4
      %v4476 = vor.u32 %v4472, %v4475
      %v4478 = vshrl.u32 %v4027, 16
      %v4480 = vrot.slane %v4478, 3
      %v4481 = vshll.u32 %v4027, 16
      %v4483 = vrot.slane %v4481, 4
      %v4484 = vor.u32 %v4480, %v4483
      %v4485 = vsel %vm906, %v4476, %v4484
      %v4487 = vshrl.u32 %v4239, 16
      %v4489 = vrot.slane %v4487, 3
      %v4490 = vshll.u32 %v4239, 16
      %v4492 = vrot.slane %v4490, 4
      %v4493 = vor.u32 %v4489, %v4492
      %v4495 = vshrl.u32 %v4238, 16
      %v4497 = vrot.slane %v4495, 3
      %v4498 = vshll.u32 %v4238, 16
      %v4500 = vrot.slane %v4498, 4
      %v4501 = vor.u32 %v4497, %v4500
      %v4502 = vsel %vm906, %v4493, %v4501
      %v4504 = vshrl.u32 %v3899, 16
      %v4506 = vrot.slane %v4504, 3
      %v4507 = vshll.u32 %v3899, 16
      %v4509 = vrot.slane %v4507, 4
      %v4510 = vor.u32 %v4506, %v4509
      %v4511 = vrot.slane %v4040, 3
      %v4512 = vrot.slane %v4036, 4
      %v4513 = vor.u32 %v4511, %v4512
      %v4514 = vsel %vm906, %v4510, %v4513
      %v4516 = vshrl.u32 %v4039, 16
      %v4518 = vrot.slane %v4516, 3
      %v4519 = vshll.u32 %v4039, 16
      %v4521 = vrot.slane %v4519, 4
      %v4522 = vor.u32 %v4518, %v4521
      %v4524 = vshrl.u32 %v4042, 16
      %v4526 = vrot.slane %v4524, 3
      %v4527 = vshll.u32 %v4042, 16
      %v4529 = vrot.slane %v4527, 4
      %v4530 = vor.u32 %v4526, %v4529
      %v4531 = vsel %vm906, %v4522, %v4530
      %v4533 = vshrl.u32 %v4242, 16
      %v4535 = vrot.slane %v4533, 3
      %v4536 = vshll.u32 %v4242, 16
      %v4538 = vrot.slane %v4536, 4
      %v4539 = vor.u32 %v4535, %v4538
      %v4541 = vshrl.u32 %v4241, 16
      %v4543 = vrot.slane %v4541, 3
      %v4544 = vshll.u32 %v4241, 16
      %v4546 = vrot.slane %v4544, 4
      %v4547 = vor.u32 %v4543, %v4546
      %v4548 = vsel %vm906, %v4539, %v4547
      %v4550 = vshrl.u32 %v3901, 16
      %v4552 = vrot.slane %v4550, 3
      %v4553 = vshll.u32 %v3901, 16
      %v4555 = vrot.slane %v4553, 4
      %v4556 = vor.u32 %v4552, %v4555
      %v4557 = vrot.slane %v4055, 3
      %v4558 = vrot.slane %v4051, 4
      %v4559 = vor.u32 %v4557, %v4558
      %v4560 = vsel %vm906, %v4556, %v4559
      %v4562 = vshrl.u32 %v4054, 16
      %v4564 = vrot.slane %v4562, 3
      %v4565 = vshll.u32 %v4054, 16
      %v4567 = vrot.slane %v4565, 4
      %v4568 = vor.u32 %v4564, %v4567
      %v4570 = vshrl.u32 %v4057, 16
      %v4572 = vrot.slane %v4570, 3
      %v4573 = vshll.u32 %v4057, 16
      %v4575 = vrot.slane %v4573, 4
      %v4576 = vor.u32 %v4572, %v4575
      %v4577 = vsel %vm906, %v4568, %v4576
      %v4579 = vshrl.u32 %v4245, 16
      %v4581 = vrot.slane %v4579, 3
      %v4582 = vshll.u32 %v4245, 16
      %v4584 = vrot.slane %v4582, 4
      %v4585 = vor.u32 %v4581, %v4584
      %v4587 = vshrl.u32 %v4244, 16
      %v4589 = vrot.slane %v4587, 3
      %v4590 = vshll.u32 %v4244, 16
      %v4592 = vrot.slane %v4590, 4
      %v4593 = vor.u32 %v4589, %v4592
      %v4594 = vsel %vm906, %v4585, %v4593
      %v4596 = vshrl.u32 %v3903, 16
      %v4598 = vrot.slane %v4596, 3
      %v4599 = vshll.u32 %v3903, 16
      %v4601 = vrot.slane %v4599, 4
      %v4602 = vor.u32 %v4598, %v4601
      %v4603 = vrot.slane %v4070, 3
      %v4604 = vrot.slane %v4066, 4
      %v4605 = vor.u32 %v4603, %v4604
      %v4606 = vsel %vm906, %v4602, %v4605
      %v4608 = vshrl.u32 %v4069, 16
      %v4610 = vrot.slane %v4608, 3
      %v4611 = vshll.u32 %v4069, 16
      %v4613 = vrot.slane %v4611, 4
      %v4614 = vor.u32 %v4610, %v4613
      %v4616 = vshrl.u32 %v4072, 16
      %v4618 = vrot.slane %v4616, 3
      %v4619 = vshll.u32 %v4072, 16
      %v4621 = vrot.slane %v4619, 4
      %v4622 = vor.u32 %v4618, %v4621
      %v4623 = vsel %vm906, %v4614, %v4622
      %v4625 = vshrl.u32 %v4248, 16
      %v4627 = vrot.slane %v4625, 3
      %v4628 = vshll.u32 %v4248, 16
      %v4630 = vrot.slane %v4628, 4
      %v4631 = vor.u32 %v4627, %v4630
      %v4633 = vshrl.u32 %v4247, 16
      %v4635 = vrot.slane %v4633, 3
      %v4636 = vshll.u32 %v4247, 16
      %v4638 = vrot.slane %v4636, 4
      %v4639 = vor.u32 %v4635, %v4638
      %v4640 = vsel %vm906, %v4631, %v4639
      %v4642 = vshrl.u32 %v3905, 16
      %v4644 = vrot.slane %v4642, 3
      %v4645 = vshll.u32 %v3905, 16
      %v4647 = vrot.slane %v4645, 4
      %v4648 = vor.u32 %v4644, %v4647
      %v4649 = vrot.slane %v4085, 3
      %v4650 = vrot.slane %v4081, 4
      %v4651 = vor.u32 %v4649, %v4650
      %v4652 = vsel %vm906, %v4648, %v4651
      %v4654 = vshrl.u32 %v4084, 16
      %v4656 = vrot.slane %v4654, 3
      %v4657 = vshll.u32 %v4084, 16
      %v4659 = vrot.slane %v4657, 4
      %v4660 = vor.u32 %v4656, %v4659
      %v4662 = vshrl.u32 %v4087, 16
      %v4664 = vrot.slane %v4662, 3
      %v4665 = vshll.u32 %v4087, 16
      %v4667 = vrot.slane %v4665, 4
      %v4668 = vor.u32 %v4664, %v4667
      %v4669 = vsel %vm906, %v4660, %v4668
      %v4671 = vshrl.u32 %v4251, 16
      %v4673 = vrot.slane %v4671, 3
      %v4674 = vshll.u32 %v4251, 16
      %v4676 = vrot.slane %v4674, 4
      %v4677 = vor.u32 %v4673, %v4676
      %v4679 = vshrl.u32 %v4250, 16
      %v4681 = vrot.slane %v4679, 3
      %v4682 = vshll.u32 %v4250, 16
      %v4684 = vrot.slane %v4682, 4
      %v4685 = vor.u32 %v4681, %v4684
      %v4686 = vsel %vm906, %v4677, %v4685
      %v4688 = vshrl.u32 %v3907, 16
      %v4690 = vrot.slane %v4688, 3
      %v4691 = vshll.u32 %v3907, 16
      %v4693 = vrot.slane %v4691, 4
      %v4694 = vor.u32 %v4690, %v4693
      %v4695 = vrot.slane %v4100, 3
      %v4696 = vrot.slane %v4096, 4
      %v4697 = vor.u32 %v4695, %v4696
      %v4698 = vsel %vm906, %v4694, %v4697
      %v4700 = vshrl.u32 %v4099, 16
      %v4702 = vrot.slane %v4700, 3
      %v4703 = vshll.u32 %v4099, 16
      %v4705 = vrot.slane %v4703, 4
      %v4706 = vor.u32 %v4702, %v4705
      %v4708 = vshrl.u32 %v4102, 16
      %v4710 = vrot.slane %v4708, 3
      %v4711 = vshll.u32 %v4102, 16
      %v4713 = vrot.slane %v4711, 4
      %v4714 = vor.u32 %v4710, %v4713
      %v4715 = vsel %vm906, %v4706, %v4714
      %v4717 = vshrl.u32 %v4254, 16
      %v4719 = vrot.slane %v4717, 3
      %v4720 = vshll.u32 %v4254, 16
      %v4722 = vrot.slane %v4720, 4
      %v4723 = vor.u32 %v4719, %v4722
      %v4725 = vshrl.u32 %v4253, 16
      %v4727 = vrot.slane %v4725, 3
      %v4728 = vshll.u32 %v4253, 16
      %v4730 = vrot.slane %v4728, 4
      %v4731 = vor.u32 %v4727, %v4730
      %v4732 = vsel %vm906, %v4723, %v4731
      %v4734 = vshrl.u32 %v3909, 16
      %v4736 = vrot.slane %v4734, 3
      %v4737 = vshll.u32 %v3909, 16
      %v4739 = vrot.slane %v4737, 4
      %v4740 = vor.u32 %v4736, %v4739
      %v4741 = vrot.slane %v4115, 3
      %v4742 = vrot.slane %v4111, 4
      %v4743 = vor.u32 %v4741, %v4742
      %v4744 = vsel %vm906, %v4740, %v4743
      %v4746 = vshrl.u32 %v4114, 16
      %v4748 = vrot.slane %v4746, 3
      %v4749 = vshll.u32 %v4114, 16
      %v4751 = vrot.slane %v4749, 4
      %v4752 = vor.u32 %v4748, %v4751
      %v4754 = vshrl.u32 %v4117, 16
      %v4756 = vrot.slane %v4754, 3
      %v4757 = vshll.u32 %v4117, 16
      %v4759 = vrot.slane %v4757, 4
      %v4760 = vor.u32 %v4756, %v4759
      %v4761 = vsel %vm906, %v4752, %v4760
      %v4763 = vshrl.u32 %v4257, 16
      %v4765 = vrot.slane %v4763, 3
      %v4766 = vshll.u32 %v4257, 16
      %v4768 = vrot.slane %v4766, 4
      %v4769 = vor.u32 %v4765, %v4768
      %v4771 = vshrl.u32 %v4256, 16
      %v4773 = vrot.slane %v4771, 3
      %v4774 = vshll.u32 %v4256, 16
      %v4776 = vrot.slane %v4774, 4
      %v4777 = vor.u32 %v4773, %v4776
      %v4778 = vsel %vm906, %v4769, %v4777
      %v4780 = vshrl.u32 %v3911, 16
      %v4782 = vrot.slane %v4780, 3
      %v4783 = vshll.u32 %v3911, 16
      %v4785 = vrot.slane %v4783, 4
      %v4786 = vor.u32 %v4782, %v4785
      %v4787 = vrot.slane %v4130, 3
      %v4788 = vrot.slane %v4126, 4
      %v4789 = vor.u32 %v4787, %v4788
      %v4790 = vsel %vm906, %v4786, %v4789
      %v4792 = vshrl.u32 %v4129, 16
      %v4794 = vrot.slane %v4792, 3
      %v4795 = vshll.u32 %v4129, 16
      %v4797 = vrot.slane %v4795, 4
      %v4798 = vor.u32 %v4794, %v4797
      %v4800 = vshrl.u32 %v4132, 16
      %v4802 = vrot.slane %v4800, 3
      %v4803 = vshll.u32 %v4132, 16
      %v4805 = vrot.slane %v4803, 4
      %v4806 = vor.u32 %v4802, %v4805
      %v4807 = vsel %vm906, %v4798, %v4806
      %v4809 = vshrl.u32 %v4260, 16
      %v4811 = vrot.slane %v4809, 3
      %v4812 = vshll.u32 %v4260, 16
      %v4814 = vrot.slane %v4812, 4
      %v4815 = vor.u32 %v4811, %v4814
      %v4817 = vshrl.u32 %v4259, 16
      %v4819 = vrot.slane %v4817, 3
      %v4820 = vshll.u32 %v4259, 16
      %v4822 = vrot.slane %v4820, 4
      %v4823 = vor.u32 %v4819, %v4822
      %v4824 = vsel %vm906, %v4815, %v4823
      %v4826 = vshrl.u32 %v3913, 16
      %v4828 = vrot.slane %v4826, 3
      %v4829 = vshll.u32 %v3913, 16
      %v4831 = vrot.slane %v4829, 4
      %v4832 = vor.u32 %v4828, %v4831
      %v4833 = vrot.slane %v4145, 3
      %v4834 = vrot.slane %v4141, 4
      %v4835 = vor.u32 %v4833, %v4834
      %v4836 = vsel %vm906, %v4832, %v4835
      %v4838 = vshrl.u32 %v4144, 16
      %v4840 = vrot.slane %v4838, 3
      %v4841 = vshll.u32 %v4144, 16
      %v4843 = vrot.slane %v4841, 4
      %v4844 = vor.u32 %v4840, %v4843
      %v4846 = vshrl.u32 %v4147, 16
      %v4848 = vrot.slane %v4846, 3
      %v4849 = vshll.u32 %v4147, 16
      %v4851 = vrot.slane %v4849, 4
      %v4852 = vor.u32 %v4848, %v4851
      %v4853 = vsel %vm906, %v4844, %v4852
      %v4855 = vshrl.u32 %v4263, 16
      %v4857 = vrot.slane %v4855, 3
      %v4858 = vshll.u32 %v4263, 16
      %v4860 = vrot.slane %v4858, 4
      %v4861 = vor.u32 %v4857, %v4860
      %v4863 = vshrl.u32 %v4262, 16
      %v4865 = vrot.slane %v4863, 3
      %v4866 = vshll.u32 %v4262, 16
      %v4868 = vrot.slane %v4866, 4
      %v4869 = vor.u32 %v4865, %v4868
      %v4870 = vsel %vm906, %v4861, %v4869
      %v4872 = vshrl.u32 %v3915, 16
      %v4874 = vrot.slane %v4872, 3
      %v4875 = vshll.u32 %v3915, 16
      %v4877 = vrot.slane %v4875, 4
      %v4878 = vor.u32 %v4874, %v4877
      %v4879 = vrot.slane %v4160, 3
      %v4880 = vrot.slane %v4156, 4
      %v4881 = vor.u32 %v4879, %v4880
      %v4882 = vsel %vm906, %v4878, %v4881
      %v4884 = vshrl.u32 %v4159, 16
      %v4886 = vrot.slane %v4884, 3
      %v4887 = vshll.u32 %v4159, 16
      %v4889 = vrot.slane %v4887, 4
      %v4890 = vor.u32 %v4886, %v4889
      %v4892 = vshrl.u32 %v4162, 16
      %v4894 = vrot.slane %v4892, 3
      %v4895 = vshll.u32 %v4162, 16
      %v4897 = vrot.slane %v4895, 4
      %v4898 = vor.u32 %v4894, %v4897
      %v4899 = vsel %vm906, %v4890, %v4898
      %v4901 = vshrl.u32 %v4266, 16
      %v4903 = vrot.slane %v4901, 3
      %v4904 = vshll.u32 %v4266, 16
      %v4906 = vrot.slane %v4904, 4
      %v4907 = vor.u32 %v4903, %v4906
      %v4909 = vshrl.u32 %v4265, 16
      %v4911 = vrot.slane %v4909, 3
      %v4912 = vshll.u32 %v4265, 16
      %v4914 = vrot.slane %v4912, 4
      %v4915 = vor.u32 %v4911, %v4914
      %v4916 = vsel %vm906, %v4907, %v4915
      %v4918 = vshrl.u32 %v3917, 16
      %v4920 = vrot.slane %v4918, 3
      %v4921 = vshll.u32 %v3917, 16
      %v4923 = vrot.slane %v4921, 4
      %v4924 = vor.u32 %v4920, %v4923
      %v4925 = vrot.slane %v4175, 3
      %v4926 = vrot.slane %v4171, 4
      %v4927 = vor.u32 %v4925, %v4926
      %v4928 = vsel %vm906, %v4924, %v4927
      %v4930 = vshrl.u32 %v4174, 16
      %v4932 = vrot.slane %v4930, 3
      %v4933 = vshll.u32 %v4174, 16
      %v4935 = vrot.slane %v4933, 4
      %v4936 = vor.u32 %v4932, %v4935
      %v4938 = vshrl.u32 %v4177, 16
      %v4940 = vrot.slane %v4938, 3
      %v4941 = vshll.u32 %v4177, 16
      %v4943 = vrot.slane %v4941, 4
      %v4944 = vor.u32 %v4940, %v4943
      %v4945 = vsel %vm906, %v4936, %v4944
      %v4947 = vshrl.u32 %v4269, 16
      %v4949 = vrot.slane %v4947, 3
      %v4950 = vshll.u32 %v4269, 16
      %v4952 = vrot.slane %v4950, 4
      %v4953 = vor.u32 %v4949, %v4952
      %v4955 = vshrl.u32 %v4268, 16
      %v4957 = vrot.slane %v4955, 3
      %v4958 = vshll.u32 %v4268, 16
      %v4960 = vrot.slane %v4958, 4
      %v4961 = vor.u32 %v4957, %v4960
      %v4962 = vsel %vm906, %v4953, %v4961
      %v4964 = vshrl.u32 %v3919, 16
      %v4966 = vrot.slane %v4964, 3
      %v4967 = vshll.u32 %v3919, 16
      %v4969 = vrot.slane %v4967, 4
      %v4970 = vor.u32 %v4966, %v4969
      %v4971 = vrot.slane %v4190, 3
      %v4972 = vrot.slane %v4186, 4
      %v4973 = vor.u32 %v4971, %v4972
      %v4974 = vsel %vm906, %v4970, %v4973
      %v4976 = vshrl.u32 %v4189, 16
      %v4978 = vrot.slane %v4976, 3
      %v4979 = vshll.u32 %v4189, 16
      %v4981 = vrot.slane %v4979, 4
      %v4982 = vor.u32 %v4978, %v4981
      %v4984 = vshrl.u32 %v4192, 16
      %v4986 = vrot.slane %v4984, 3
      %v4987 = vshll.u32 %v4192, 16
      %v4989 = vrot.slane %v4987, 4
      %v4990 = vor.u32 %v4986, %v4989
      %v4991 = vsel %vm906, %v4982, %v4990
      %v4993 = vshrl.u32 %v4272, 16
      %v4995 = vrot.slane %v4993, 3
      %v4996 = vshll.u32 %v4272, 16
      %v4998 = vrot.slane %v4996, 4
      %v4999 = vor.u32 %v4995, %v4998
      %v5001 = vshrl.u32 %v4271, 16
      %v5003 = vrot.slane %v5001, 3
      %v5004 = vshll.u32 %v4271, 16
      %v5006 = vrot.slane %v5004, 4
      %v5007 = vor.u32 %v5003, %v5006
      %v5008 = vsel %vm906, %v4999, %v5007
      %s5057 = scalar_lea.vmem %s1, 384
      %v5058 = vld [vmem:[%s5057] sm:$0xf]
      %v5059 = vld [vmem:[%s5057 + $0x4] sm:$0xf]
      %v5060 = vld [vmem:[%s5057 + $0x8] sm:$0xf]
      %v5061 = vld [vmem:[%s5057 + $0xc] sm:$0xf]
      %v5062 = vld [vmem:[%s5057 + $0x10] sm:$0xf]
      %v5063 = vld [vmem:[%s5057 + $0x14] sm:$0xf]
      %v5064 = vld [vmem:[%s5057 + $0x18] sm:$0xf]
      %v5065 = vld [vmem:[%s5057 + $0x1c] sm:$0xf]
      %v5066 = vld [vmem:[%s5057 + $0x20] sm:$0xf]
      %v5067 = vld [vmem:[%s5057 + $0x24] sm:$0xf]
      %v5068 = vld [vmem:[%s5057 + $0x28] sm:$0xf]
      %v5069 = vld [vmem:[%s5057 + $0x2c] sm:$0xf]
      %v5070 = vld [vmem:[%s5057 + $0x30] sm:$0xf]
      %v5071 = vld [vmem:[%s5057 + $0x34] sm:$0xf]
      %v5072 = vld [vmem:[%s5057 + $0x38] sm:$0xf]
      %v5073 = vld [vmem:[%s5057 + $0x3c] sm:$0xf]
      %v5074 = vld [vmem:[%s5057 + $0x40] sm:$0xf]
      %v5075 = vld [vmem:[%s5057 + $0x44] sm:$0xf]
      %v5076 = vld [vmem:[%s5057 + $0x48] sm:$0xf]
      %v5077 = vld [vmem:[%s5057 + $0x4c] sm:$0xf]
      %v5078 = vld [vmem:[%s5057 + $0x50] sm:$0xf]
      %v5079 = vld [vmem:[%s5057 + $0x54] sm:$0xf]
      %v5080 = vld [vmem:[%s5057 + $0x58] sm:$0xf]
      %v5081 = vld [vmem:[%s5057 + $0x5c] sm:$0xf]
      %v5082 = vld [vmem:[%s5057 + $0x60] sm:$0xf]
      %v5083 = vld [vmem:[%s5057 + $0x64] sm:$0xf]
      %v5084 = vld [vmem:[%s5057 + $0x68] sm:$0xf]
      %v5085 = vld [vmem:[%s5057 + $0x6c] sm:$0xf]
      %v5086 = vld [vmem:[%s5057 + $0x70] sm:$0xf]
      %v5087 = vld [vmem:[%s5057 + $0x74] sm:$0xf]
      %v5088 = vld [vmem:[%s5057 + $0x78] sm:$0xf]
      %v5089 = vld [vmem:[%s5057 + $0x7c] sm:$0xf]
      %v5090 = vld [vmem:[%s5057 + $0x80] sm:$0xf]
      %v5091 = vld [vmem:[%s5057 + $0x84] sm:$0xf]
      %v5092 = vld [vmem:[%s5057 + $0x88] sm:$0xf]
      %v5093 = vld [vmem:[%s5057 + $0x8c] sm:$0xf]
      %v5094 = vld [vmem:[%s5057 + $0x90] sm:$0xf]
      %v5095 = vld [vmem:[%s5057 + $0x94] sm:$0xf]
      %v5096 = vld [vmem:[%s5057 + $0x98] sm:$0xf]
      %v5097 = vld [vmem:[%s5057 + $0x9c] sm:$0xf]
      %v5098 = vld [vmem:[%s5057 + $0xa0] sm:$0xf]
      %v5099 = vld [vmem:[%s5057 + $0xa4] sm:$0xf]
      %v5100 = vld [vmem:[%s5057 + $0xa8] sm:$0xf]
      %v5101 = vld [vmem:[%s5057 + $0xac] sm:$0xf]
      %v5102 = vld [vmem:[%s5057 + $0xb0] sm:$0xf]
      %v5103 = vld [vmem:[%s5057 + $0xb4] sm:$0xf]
      %v5104 = vld [vmem:[%s5057 + $0xb8] sm:$0xf]
      %v5105 = vld [vmem:[%s5057 + $0xbc] sm:$0xf]
      %v5154 = vunpack.c.l.b16 %v5058
      %v5155 = vunpack.c.l.b16 %v5059
      %v5156 = vunpack.c.l.b16 %v5060
      %v5157 = vunpack.c.l.b16 %v5061
      %v5158 = vunpack.c.l.b16 %v5062
      %v5159 = vunpack.c.l.b16 %v5063
      %v5160 = vunpack.c.l.b16 %v5064
      %v5161 = vunpack.c.l.b16 %v5065
      %v5162 = vunpack.c.l.b16 %v5066
      %v5163 = vunpack.c.l.b16 %v5067
      %v5164 = vunpack.c.l.b16 %v5068
      %v5165 = vunpack.c.l.b16 %v5069
      %v5166 = vunpack.c.l.b16 %v5070
      %v5167 = vunpack.c.l.b16 %v5071
      %v5168 = vunpack.c.l.b16 %v5072
      %v5169 = vunpack.c.l.b16 %v5073
      %v5170 = vunpack.c.l.b16 %v5074
      %v5171 = vunpack.c.l.b16 %v5075
      %v5172 = vunpack.c.l.b16 %v5076
      %v5173 = vunpack.c.l.b16 %v5077
      %v5174 = vunpack.c.l.b16 %v5078
      %v5175 = vunpack.c.l.b16 %v5079
      %v5176 = vunpack.c.l.b16 %v5080
      %v5177 = vunpack.c.l.b16 %v5081
      %v5178 = vunpack.c.l.b16 %v5082
      %v5179 = vunpack.c.l.b16 %v5083
      %v5180 = vunpack.c.l.b16 %v5084
      %v5181 = vunpack.c.l.b16 %v5085
      %v5182 = vunpack.c.l.b16 %v5086
      %v5183 = vunpack.c.l.b16 %v5087
      %v5184 = vunpack.c.l.b16 %v5088
      %v5185 = vunpack.c.l.b16 %v5089
      %v5186 = vunpack.c.l.b16 %v5090
      %v5187 = vunpack.c.l.b16 %v5091
      %v5188 = vunpack.c.l.b16 %v5092
      %v5189 = vunpack.c.l.b16 %v5093
      %v5190 = vunpack.c.l.b16 %v5094
      %v5191 = vunpack.c.l.b16 %v5095
      %v5192 = vunpack.c.l.b16 %v5096
      %v5193 = vunpack.c.l.b16 %v5097
      %v5194 = vunpack.c.l.b16 %v5098
      %v5195 = vunpack.c.l.b16 %v5099
      %v5196 = vunpack.c.l.b16 %v5100
      %v5197 = vunpack.c.l.b16 %v5101
      %v5198 = vunpack.c.l.b16 %v5102
      %v5199 = vunpack.c.l.b16 %v5103
      %v5200 = vunpack.c.l.b16 %v5104
      %v5201 = vunpack.c.l.b16 %v5105
      %v5202 = vpack.c.b16 %v5155, %v5154
      %v5203 = vpack.c.b16 %v5157, %v5156
      %v5204 = vpack.c.b16 %v5159, %v5158
      %v5205 = vpack.c.b16 %v5161, %v5160
      %v5206 = vpack.c.b16 %v5163, %v5162
      %v5207 = vpack.c.b16 %v5165, %v5164
      %v5208 = vpack.c.b16 %v5167, %v5166
      %v5209 = vpack.c.b16 %v5169, %v5168
      %v5210 = vpack.c.b16 %v5171, %v5170
      %v5211 = vpack.c.b16 %v5173, %v5172
      %v5212 = vpack.c.b16 %v5175, %v5174
      %v5213 = vpack.c.b16 %v5177, %v5176
      %v5214 = vpack.c.b16 %v5179, %v5178
      %v5215 = vpack.c.b16 %v5181, %v5180
      %v5216 = vpack.c.b16 %v5183, %v5182
      %v5217 = vpack.c.b16 %v5185, %v5184
      %v5218 = vpack.c.b16 %v5187, %v5186
      %v5219 = vpack.c.b16 %v5189, %v5188
      %v5220 = vpack.c.b16 %v5191, %v5190
      %v5221 = vpack.c.b16 %v5193, %v5192
      %v5222 = vpack.c.b16 %v5195, %v5194
      %v5223 = vpack.c.b16 %v5197, %v5196
      %v5224 = vpack.c.b16 %v5199, %v5198
      %v5225 = vpack.c.b16 %v5201, %v5200
      %5250 = vmatprep.subr.bf16.mxu0 0
      %5251 = vmatpush1.bf16.msra.mxu0 %v5202
      %5252 = vmatprep.subr.bf16.mxu0 0
      %5253 = vmatpush1.bf16.msra.mxu0 %v5203
      %5254 = vmatprep.subr.bf16.mxu0 0
      %5255 = vmatpush1.bf16.msra.mxu0 %v5204
      %5256 = vmatprep.subr.bf16.mxu0 0
      %5257 = vmatpush1.bf16.msra.mxu0 %v5205
      %5258 = vmatprep.subr.bf16.mxu0 0
      %5259 = vmatpush1.bf16.msra.mxu0 %v5206
      %5260 = vmatprep.subr.bf16.mxu0 0
      %5261 = vmatpush1.bf16.msra.mxu0 %v5207
      %5262 = vmatprep.subr.bf16.mxu0 0
      %5263 = vmatpush1.bf16.msra.mxu0 %v5208
      %5264 = vmatprep.subr.bf16.mxu0 0
      %5265 = vmatpush1.bf16.msra.mxu0 %v5209
      %5266 = vmatprep.subr.bf16.mxu0 0
      %5267 = vmatpush1.bf16.msra.mxu0 %v5210
      %5268 = vmatprep.subr.bf16.mxu0 0
      %5269 = vmatpush1.bf16.msra.mxu0 %v5211
      %5270 = vmatprep.subr.bf16.mxu0 0
      %5271 = vmatpush1.bf16.msra.mxu0 %v5212
      %5272 = vmatprep.subr.bf16.mxu0 0
      %5273 = vmatpush1.bf16.msra.mxu0 %v5213
      %5274 = vmatprep.subr.bf16.mxu0 0
      %5275 = vmatpush1.bf16.msra.mxu0 %v5214
      %5276 = vmatprep.subr.bf16.mxu0 0
      %5277 = vmatpush1.bf16.msra.mxu0 %v5215
      %5278 = vmatprep.subr.bf16.mxu0 0
      %5279 = vmatpush1.bf16.msra.mxu0 %v5216
      %5280 = vmatprep.subr.bf16.mxu0 0
      %5281 = vmatpush1.bf16.msra.mxu0 %v5217
      %5282 = vmatprep.mubr.bf16.mxu0 %v4301
      %5283 = vmatmul.mubr.bf16.gmra.mrb[0].mxu0 %v4284
      %v5284 = vpop.f32.mrb[0].mxu0
      %v5285 = vadd.f32 0.0, %v5284
      %v5286 = vpop.f32.mrb[0].mxu0
      %v5287 = vpop.f32.mrb[0].mxu0
      %v5288 = vadd.f32 0.0, %v5287
      %v5289 = vpop.f32.mrb[0].mxu0
      %5290 = vmatprep.mubr.bf16.mxu0 %v4347
      %5291 = vmatmul.mubr.bf16.gmra.mrb[0].mxu0 %v4330
      %v5292 = vpop.f32.mrb[0].mxu0
      %v5293 = vadd.f32 0.0, %v5292
      %v5294 = vpop.f32.mrb[0].mxu0
      %v5295 = vpop.f32.mrb[0].mxu0
      %v5296 = vadd.f32 0.0, %v5295
      %v5297 = vpop.f32.mrb[0].mxu0
      %5298 = vmatprep.mubr.bf16.mxu0 %v4393
      %5299 = vmatmul.mubr.bf16.gmra.mrb[0].mxu0 %v4376
      %v5300 = vpop.f32.mrb[0].mxu0
      %v5301 = vadd.f32 0.0, %v5300
      %v5302 = vpop.f32.mrb[0].mxu0
      %v5303 = vpop.f32.mrb[0].mxu0
      %v5304 = vadd.f32 0.0, %v5303
      %v5305 = vpop.f32.mrb[0].mxu0
      %5306 = vmatprep.mubr.bf16.mxu0 %v4439
      %5307 = vmatmul.mubr.bf16.gmra.mrb[0].mxu0 %v4422
      %v5308 = vpop.f32.mrb[0].mxu0
      %v5309 = vadd.f32 0.0, %v5308
      %v5310 = vpop.f32.mrb[0].mxu0
      %v5311 = vpop.f32.mrb[0].mxu0
      %v5312 = vadd.f32 0.0, %v5311
      %v5313 = vpop.f32.mrb[0].mxu0
      %5314 = vmatprep.mubr.bf16.mxu0 %v4485
      %5315 = vmatmul.mubr.bf16.gmra.mrb[0].mxu0 %v4468
      %v5316 = vpop.f32.mrb[0].mxu0
      %v5317 = vadd.f32 0.0, %v5316
      %v5318 = vpop.f32.mrb[0].mxu0
      %v5319 = vpop.f32.mrb[0].mxu0
      %v5320 = vadd.f32 0.0, %v5319
      %v5321 = vpop.f32.mrb[0].mxu0
      %5322 = vmatprep.mubr.bf16.mxu0 %v4531
      %5323 = vmatmul.mubr.bf16.gmra.mrb[0].mxu0 %v4514
      %v5324 = vpop.f32.mrb[0].mxu0
      %v5325 = vadd.f32 0.0, %v5324
      %v5326 = vpop.f32.mrb[0].mxu0
      %v5327 = vpop.f32.mrb[0].mxu0
      %v5328 = vadd.f32 0.0, %v5327
      %v5329 = vpop.f32.mrb[0].mxu0
      %5330 = vmatprep.mubr.bf16.mxu0 %v4577
      %5331 = vmatmul.mubr.bf16.gmra.mrb[0].mxu0 %v4560
      %v5332 = vpop.f32.mrb[0].mxu0
      %v5333 = vadd.f32 0.0, %v5332
      %v5334 = vpop.f32.mrb[0].mxu0
      %v5335 = vpop.f32.mrb[0].mxu0
      %v5336 = vadd.f32 0.0, %v5335
      %v5337 = vpop.f32.mrb[0].mxu0
      %5338 = vmatprep.mubr.bf16.mxu0 %v4623
      %5339 = vmatmul.mubr.bf16.gmra.mrb[0].mxu0 %v4606
      %v5340 = vpop.f32.mrb[0].mxu0
      %v5341 = vadd.f32 0.0, %v5340
      %v5342 = vpop.f32.mrb[0].mxu0
      %v5343 = vpop.f32.mrb[0].mxu0
      %v5344 = vadd.f32 0.0, %v5343
      %v5345 = vpop.f32.mrb[0].mxu0
      %5346 = vmatprep.mubr.bf16.mxu0 %v4669
      %5347 = vmatmul.mubr.bf16.gmra.mrb[0].mxu0 %v4652
      %v5348 = vpop.f32.mrb[0].mxu0
      %v5349 = vadd.f32 0.0, %v5348
      %v5350 = vpop.f32.mrb[0].mxu0
      %v5351 = vpop.f32.mrb[0].mxu0
      %v5352 = vadd.f32 0.0, %v5351
      %v5353 = vpop.f32.mrb[0].mxu0
      %5354 = vmatprep.mubr.bf16.mxu0 %v4715
      %5355 = vmatmul.mubr.bf16.gmra.mrb[0].mxu0 %v4698
      %v5356 = vpop.f32.mrb[0].mxu0
      %v5357 = vadd.f32 0.0, %v5356
      %v5358 = vpop.f32.mrb[0].mxu0
      %v5359 = vpop.f32.mrb[0].mxu0
      %v5360 = vadd.f32 0.0, %v5359
      %v5361 = vpop.f32.mrb[0].mxu0
      %5362 = vmatprep.mubr.bf16.mxu0 %v4761
      %5363 = vmatmul.mubr.bf16.gmra.mrb[0].mxu0 %v4744
      %v5364 = vpop.f32.mrb[0].mxu0
      %v5365 = vadd.f32 0.0, %v5364
      %v5366 = vpop.f32.mrb[0].mxu0
      %v5367 = vpop.f32.mrb[0].mxu0
      %v5368 = vadd.f32 0.0, %v5367
      %v5369 = vpop.f32.mrb[0].mxu0
      %5370 = vmatprep.mubr.bf16.mxu0 %v4807
      %5371 = vmatmul.mubr.bf16.gmra.mrb[0].mxu0 %v4790
      %v5372 = vpop.f32.mrb[0].mxu0
      %v5373 = vadd.f32 0.0, %v5372
      %v5374 = vpop.f32.mrb[0].mxu0
      %v5375 = vpop.f32.mrb[0].mxu0
      %v5376 = vadd.f32 0.0, %v5375
      %v5377 = vpop.f32.mrb[0].mxu0
      %5378 = vmatprep.mubr.bf16.mxu0 %v4853
      %5379 = vmatmul.mubr.bf16.gmra.mrb[0].mxu0 %v4836
      %v5380 = vpop.f32.mrb[0].mxu0
      %v5381 = vadd.f32 0.0, %v5380
      %v5382 = vpop.f32.mrb[0].mxu0
      %v5383 = vpop.f32.mrb[0].mxu0
      %v5384 = vadd.f32 0.0, %v5383
      %v5385 = vpop.f32.mrb[0].mxu0
      %5386 = vmatprep.mubr.bf16.mxu0 %v4899
      %5387 = vmatmul.mubr.bf16.gmra.mrb[0].mxu0 %v4882
      %v5388 = vpop.f32.mrb[0].mxu0
      %v5389 = vadd.f32 0.0, %v5388
      %v5390 = vpop.f32.mrb[0].mxu0
      %v5391 = vpop.f32.mrb[0].mxu0
      %v5392 = vadd.f32 0.0, %v5391
      %v5393 = vpop.f32.mrb[0].mxu0
      %5394 = vmatprep.mubr.bf16.mxu0 %v4945
      %5395 = vmatmul.mubr.bf16.gmra.mrb[0].mxu0 %v4928
      %v5396 = vpop.f32.mrb[0].mxu0
      %v5397 = vadd.f32 0.0, %v5396
      %v5398 = vpop.f32.mrb[0].mxu0
      %v5399 = vpop.f32.mrb[0].mxu0
      %v5400 = vadd.f32 0.0, %v5399
      %v5401 = vpop.f32.mrb[0].mxu0
      %5402 = vmatprep.mubr.bf16.mxu0 %v4991
      %5403 = vmatmul.mubr.bf16.gmra.mrb[0].mxu0 %v4974
      %v5404 = vpop.f32.mrb[0].mxu0
      %v5405 = vadd.f32 0.0, %v5404
      %v5406 = vpop.f32.mrb[0].mxu0
      %v5407 = vpop.f32.mrb[0].mxu0
      %v5408 = vadd.f32 0.0, %v5407
      %v5409 = vpop.f32.mrb[0].mxu0
      %5410 = vdwg.mxu0
      %5411 = vmatprep.subr.bf16.mxu0 0
      %5412 = vmatpush1.bf16.msra.mxu0 %v5218
      %5413 = vmatprep.subr.bf16.mxu0 0
      %5414 = vmatpush1.bf16.msra.mxu0 %v5219
      %5415 = vmatprep.subr.bf16.mxu0 0
      %5416 = vmatpush1.bf16.msra.mxu0 %v5220
      %5417 = vmatprep.subr.bf16.mxu0 0
      %5418 = vmatpush1.bf16.msra.mxu0 %v5221
      %5419 = vmatprep.subr.bf16.mxu0 0
      %5420 = vmatpush1.bf16.msra.mxu0 %v5222
      %5421 = vmatprep.subr.bf16.mxu0 0
      %5422 = vmatpush1.bf16.msra.mxu0 %v5223
      %5423 = vmatprep.subr.bf16.mxu0 0
      %5424 = vmatpush1.bf16.msra.mxu0 %v5224
      %5425 = vmatprep.subr.bf16.mxu0 0
      %5426 = vmatpush1.bf16.msra.mxu0 %v5225
      %5427 = vmatprep.subr.bf16.mxu0 0
      %5428 = vmatpush1.bf16.msra.mxu0 0
      %5429 = vmatprep.subr.bf16.mxu0 0
      %5430 = vmatpush1.bf16.msra.mxu0 0
      %5431 = vmatprep.subr.bf16.mxu0 0
      %5432 = vmatpush1.bf16.msra.mxu0 0
      %5433 = vmatprep.subr.bf16.mxu0 0
      %5434 = vmatpush1.bf16.msra.mxu0 0
      %5435 = vmatprep.subr.bf16.mxu0 0
      %5436 = vmatpush1.bf16.msra.mxu0 0
      %5437 = vmatprep.subr.bf16.mxu0 0
      %5438 = vmatpush1.bf16.msra.mxu0 0
      %5439 = vmatprep.subr.bf16.mxu0 0
      %5440 = vmatpush1.bf16.msra.mxu0 0
      %5441 = vmatprep.subr.bf16.mxu0 0
      %5442 = vmatpush1.bf16.msra.mxu0 0
      %5443 = vmatprep.mubr.bf16.mxu0 0
      %5444 = vmatmul.mubr.bf16.gmra.mrb[0].mxu0 %v4318
      %v5445 = vpop.f32.mrb[0].mxu0
      %v5446 = vadd.f32 %v5285, %v5445
      %v5447 = vpop.f32.mrb[0].mxu0
      %v5448 = vpop.f32.mrb[0].mxu0
      %v5449 = vadd.f32 %v5288, %v5448
      %v5450 = vpop.f32.mrb[0].mxu0
      %5451 = vmatprep.mubr.bf16.mxu0 0
      %5452 = vmatmul.mubr.bf16.gmra.mrb[0].mxu0 %v4364
      %v5453 = vpop.f32.mrb[0].mxu0
      %v5454 = vadd.f32 %v5293, %v5453
      %v5455 = vpop.f32.mrb[0].mxu0
      %v5456 = vpop.f32.mrb[0].mxu0
      %v5457 = vadd.f32 %v5296, %v5456
      %v5458 = vpop.f32.mrb[0].mxu0
      %5459 = vmatprep.mubr.bf16.mxu0 0
      %5460 = vmatmul.mubr.bf16.gmra.mrb[0].mxu0 %v4410
      %v5461 = vpop.f32.mrb[0].mxu0
      %v5462 = vadd.f32 %v5301, %v5461
      %v5463 = vpop.f32.mrb[0].mxu0
      %v5464 = vpop.f32.mrb[0].mxu0
      %v5465 = vadd.f32 %v5304, %v5464
      %v5466 = vpop.f32.mrb[0].mxu0
      %5467 = vmatprep.mubr.bf16.mxu0 0
      %5468 = vmatmul.mubr.bf16.gmra.mrb[0].mxu0 %v4456
      %v5469 = vpop.f32.mrb[0].mxu0
      %v5470 = vadd.f32 %v5309, %v5469
      %v5471 = vpop.f32.mrb[0].mxu0
      %v5472 = vpop.f32.mrb[0].mxu0
      %v5473 = vadd.f32 %v5312, %v5472
      %v5474 = vpop.f32.mrb[0].mxu0
      %5475 = vmatprep.mubr.bf16.mxu0 0
      %5476 = vmatmul.mubr.bf16.gmra.mrb[0].mxu0 %v4502
      %v5477 = vpop.f32.mrb[0].mxu0
      %v5478 = vadd.f32 %v5317, %v5477
      %v5479 = vpop.f32.mrb[0].mxu0
      %v5480 = vpop.f32.mrb[0].mxu0
      %v5481 = vadd.f32 %v5320, %v5480
      %v5482 = vpop.f32.mrb[0].mxu0
      %5483 = vmatprep.mubr.bf16.mxu0 0
      %5484 = vmatmul.mubr.bf16.gmra.mrb[0].mxu0 %v4548
      %v5485 = vpop.f32.mrb[0].mxu0
      %v5486 = vadd.f32 %v5325, %v5485
      %v5487 = vpop.f32.mrb[0].mxu0
      %v5488 = vpop.f32.mrb[0].mxu0
      %v5489 = vadd.f32 %v5328, %v5488
      %v5490 = vpop.f32.mrb[0].mxu0
      %5491 = vmatprep.mubr.bf16.mxu0 0
      %5492 = vmatmul.mubr.bf16.gmra.mrb[0].mxu0 %v4594
      %v5493 = vpop.f32.mrb[0].mxu0
      %v5494 = vadd.f32 %v5333, %v5493
      %v5495 = vpop.f32.mrb[0].mxu0
      %v5496 = vpop.f32.mrb[0].mxu0
      %v5497 = vadd.f32 %v5336, %v5496
      %v5498 = vpop.f32.mrb[0].mxu0
      %5499 = vmatprep.mubr.bf16.mxu0 0
      %5500 = vmatmul.mubr.bf16.gmra.mrb[0].mxu0 %v4640
      %v5501 = vpop.f32.mrb[0].mxu0
      %v5502 = vadd.f32 %v5341, %v5501
      %v5503 = vpop.f32.mrb[0].mxu0
      %v5504 = vpop.f32.mrb[0].mxu0
      %v5505 = vadd.f32 %v5344, %v5504
      %v5506 = vpop.f32.mrb[0].mxu0
      %5507 = vmatprep.mubr.bf16.mxu0 0
      %5508 = vmatmul.mubr.bf16.gmra.mrb[0].mxu0 %v4686
      %v5509 = vpop.f32.mrb[0].mxu0
      %v5510 = vadd.f32 %v5349, %v5509
      %v5511 = vpop.f32.mrb[0].mxu0
      %v5512 = vpop.f32.mrb[0].mxu0
      %v5513 = vadd.f32 %v5352, %v5512
      %v5514 = vpop.f32.mrb[0].mxu0
      %5515 = vmatprep.mubr.bf16.mxu0 0
      %5516 = vmatmul.mubr.bf16.gmra.mrb[0].mxu0 %v4732
      %v5517 = vpop.f32.mrb[0].mxu0
      %v5518 = vadd.f32 %v5357, %v5517
      %v5519 = vpop.f32.mrb[0].mxu0
      %v5520 = vpop.f32.mrb[0].mxu0
      %v5521 = vadd.f32 %v5360, %v5520
      %v5522 = vpop.f32.mrb[0].mxu0
      %5523 = vmatprep.mubr.bf16.mxu0 0
      %5524 = vmatmul.mubr.bf16.gmra.mrb[0].mxu0 %v4778
      %v5525 = vpop.f32.mrb[0].mxu0
      %v5526 = vadd.f32 %v5365, %v5525
      %v5527 = vpop.f32.mrb[0].mxu0
      %v5528 = vpop.f32.mrb[0].mxu0
      %v5529 = vadd.f32 %v5368, %v5528
      %v5530 = vpop.f32.mrb[0].mxu0
      %5531 = vmatprep.mubr.bf16.mxu0 0
      %5532 = vmatmul.mubr.bf16.gmra.mrb[0].mxu0 %v4824
      %v5533 = vpop.f32.mrb[0].mxu0
      %v5534 = vadd.f32 %v5373, %v5533
      %v5535 = vpop.f32.mrb[0].mxu0
      %v5536 = vpop.f32.mrb[0].mxu0
      %v5537 = vadd.f32 %v5376, %v5536
      %v5538 = vpop.f32.mrb[0].mxu0
      %5539 = vmatprep.mubr.bf16.mxu0 0
      %5540 = vmatmul.mubr.bf16.gmra.mrb[0].mxu0 %v4870
      %v5541 = vpop.f32.mrb[0].mxu0
      %v5542 = vadd.f32 %v5381, %v5541
      %v5543 = vpop.f32.mrb[0].mxu0
      %v5544 = vpop.f32.mrb[0].mxu0
      %v5545 = vadd.f32 %v5384, %v5544
      %v5546 = vpop.f32.mrb[0].mxu0
      %5547 = vmatprep.mubr.bf16.mxu0 0
      %5548 = vmatmul.mubr.bf16.gmra.mrb[0].mxu0 %v4916
      %v5549 = vpop.f32.mrb[0].mxu0
      %v5550 = vadd.f32 %v5389, %v5549
      %v5551 = vpop.f32.mrb[0].mxu0
      %v5552 = vpop.f32.mrb[0].mxu0
      %v5553 = vadd.f32 %v5392, %v5552
      %v5554 = vpop.f32.mrb[0].mxu0
      %5555 = vmatprep.mubr.bf16.mxu0 0
      %5556 = vmatmul.mubr.bf16.gmra.mrb[0].mxu0 %v4962
      %v5557 = vpop.f32.mrb[0].mxu0
      %v5558 = vadd.f32 %v5397, %v5557
      %v5559 = vpop.f32.mrb[0].mxu0
      %v5560 = vpop.f32.mrb[0].mxu0
      %v5561 = vadd.f32 %v5400, %v5560
      %v5562 = vpop.f32.mrb[0].mxu0
      %5563 = vmatprep.mubr.bf16.mxu0 0
      %5564 = vmatmul.mubr.bf16.gmra.mrb[0].mxu0 %v5008
      %v5565 = vpop.f32.mrb[0].mxu0
      %v5566 = vadd.f32 %v5405, %v5565
      %v5567 = vpop.f32.mrb[0].mxu0
      %v5568 = vpop.f32.mrb[0].mxu0
      %v5569 = vadd.f32 %v5408, %v5568
      %v5570 = vpop.f32.mrb[0].mxu0
      %5571 = vdwg.mxu0
      %v5572 = vadd.f32 %v3762, %v5446
      %v5573 = vadd.f32 %v3765, %v5449
      %v5574 = vadd.f32 %v3770, %v5454
      %v5575 = vadd.f32 %v3773, %v5457
      %v5576 = vadd.f32 %v3778, %v5462
      %v5577 = vadd.f32 %v3781, %v5465
      %v5578 = vadd.f32 %v3786, %v5470
      %v5579 = vadd.f32 %v3789, %v5473
      %v5580 = vadd.f32 %v3794, %v5478
      %v5581 = vadd.f32 %v3797, %v5481
      %v5582 = vadd.f32 %v3802, %v5486
      %v5583 = vadd.f32 %v3805, %v5489
      %v5584 = vadd.f32 %v3810, %v5494
      %v5585 = vadd.f32 %v3813, %v5497
      %v5586 = vadd.f32 %v3818, %v5502
      %v5587 = vadd.f32 %v3821, %v5505
      %v5588 = vadd.f32 %v3826, %v5510
      %v5589 = vadd.f32 %v3829, %v5513
      %v5590 = vadd.f32 %v3834, %v5518
      %v5591 = vadd.f32 %v3837, %v5521
      %v5592 = vadd.f32 %v3842, %v5526
      %v5593 = vadd.f32 %v3845, %v5529
      %v5594 = vadd.f32 %v3850, %v5534
      %v5595 = vadd.f32 %v3853, %v5537
      %v5596 = vadd.f32 %v3858, %v5542
      %v5597 = vadd.f32 %v3861, %v5545
      %v5598 = vadd.f32 %v3866, %v5550
      %v5599 = vadd.f32 %v3869, %v5553
      %v5600 = vadd.f32 %v3874, %v5558
      %v5601 = vadd.f32 %v3877, %v5561
      %v5602 = vadd.f32 %v3882, %v5566
      %v5603 = vadd.f32 %v3885, %v5569
      %5604 = vst [vmem:[%s271] sm:$0xff] %v5572
      %5605 = vst [vmem:[%s271 + $0x8] sm:$0xff] %v5573
      %5606 = vst [vmem:[%s271 + $0x10] sm:$0xff] %v5574
      %5607 = vst [vmem:[%s271 + $0x18] sm:$0xff] %v5575
      %5608 = vst [vmem:[%s271 + $0x20] sm:$0xff] %v5576
      %5609 = vst [vmem:[%s271 + $0x28] sm:$0xff] %v5577
      %5610 = vst [vmem:[%s271 + $0x30] sm:$0xff] %v5578
      %5611 = vst [vmem:[%s271 + $0x38] sm:$0xff] %v5579
      %5612 = vst [vmem:[%s271 + $0x40] sm:$0xff] %v5580
      %5613 = vst [vmem:[%s271 + $0x48] sm:$0xff] %v5581
      %5614 = vst [vmem:[%s271 + $0x50] sm:$0xff] %v5582
      %5615 = vst [vmem:[%s271 + $0x58] sm:$0xff] %v5583
      %5616 = vst [vmem:[%s271 + $0x60] sm:$0xff] %v5584
      %5617 = vst [vmem:[%s271 + $0x68] sm:$0xff] %v5585
      %5618 = vst [vmem:[%s271 + $0x70] sm:$0xff] %v5586
      %5619 = vst [vmem:[%s271 + $0x78] sm:$0xff] %v5587
      %5620 = vst [vmem:[%s271 + $0x80] sm:$0xff] %v5588
      %5621 = vst [vmem:[%s271 + $0x88] sm:$0xff] %v5589
      %5622 = vst [vmem:[%s271 + $0x90] sm:$0xff] %v5590
      %5623 = vst [vmem:[%s271 + $0x98] sm:$0xff] %v5591
      %5624 = vst [vmem:[%s271 + $0xa0] sm:$0xff] %v5592
      %5625 = vst [vmem:[%s271 + $0xa8] sm:$0xff] %v5593
      %5626 = vst [vmem:[%s271 + $0xb0] sm:$0xff] %v5594
      %5627 = vst [vmem:[%s271 + $0xb8] sm:$0xff] %v5595
      %5628 = vst [vmem:[%s271 + $0xc0] sm:$0xff] %v5596
      %5629 = vst [vmem:[%s271 + $0xc8] sm:$0xff] %v5597
      %5630 = vst [vmem:[%s271 + $0xd0] sm:$0xff] %v5598
      %5631 = vst [vmem:[%s271 + $0xd8] sm:$0xff] %v5599
      %5632 = vst [vmem:[%s271 + $0xe0] sm:$0xff] %v5600
      %5633 = vst [vmem:[%s271 + $0xe8] sm:$0xff] %v5601
      %5634 = vst [vmem:[%s271 + $0xf0] sm:$0xff] %v5602
      %5635 = vst [vmem:[%s271 + $0xf8] sm:$0xff] %v5603
      %v5636 = vadd.f32 %v5572, %v5573
      %v5637 = vadd.f32 %v5636, %v5574
      %v5638 = vadd.f32 %v5637, %v5575
      %v5639 = vadd.f32 %v5638, %v5576
      %v5640 = vadd.f32 %v5639, %v5577
      %v5641 = vadd.f32 %v5640, %v5578
      %v5642 = vadd.f32 %v5641, %v5579
      %v5643 = vadd.f32 %v5642, %v5580
      %v5644 = vadd.f32 %v5643, %v5581
      %v5645 = vadd.f32 %v5644, %v5582
      %v5646 = vadd.f32 %v5645, %v5583
      %v5647 = vadd.f32 %v5646, %v5584
      %v5648 = vadd.f32 %v5647, %v5585
      %v5649 = vadd.f32 %v5648, %v5586
      %v5650 = vadd.f32 %v5649, %v5587
      %v5651 = vadd.f32 %v5650, %v5588
      %v5652 = vadd.f32 %v5651, %v5589
      %v5653 = vadd.f32 %v5652, %v5590
      %v5654 = vadd.f32 %v5653, %v5591
      %v5655 = vadd.f32 %v5654, %v5592
      %v5656 = vadd.f32 %v5655, %v5593
      %v5657 = vadd.f32 %v5656, %v5594
      %v5658 = vadd.f32 %v5657, %v5595
      %v5659 = vadd.f32 %v5658, %v5596
      %v5660 = vadd.f32 %v5659, %v5597
      %v5661 = vadd.f32 %v5660, %v5598
      %v5662 = vadd.f32 %v5661, %v5599
      %v5663 = vadd.f32 %v5662, %v5600
      %v5664 = vadd.f32 %v5663, %v5601
      %v5665 = vadd.f32 %v5664, %v5602
      %v5666 = vadd.f32 %v5665, %v5603
      %v5667 = vrot.slane %v5666, 4
      %v5668 = vadd.f32 %v5666, %v5667
      %v5669 = vrot.slane %v5668, 2
      %v5670 = vadd.f32 %v5668, %v5669
      %v5671 = vrot.slane %v5670, 1
      %v5672 = vadd.f32 %v5670, %v5671
      %v5673 = vmul.f32 %v5572, %v5572
      %v5674 = vmul.f32 %v5573, %v5573
      %v5675 = vmul.f32 %v5574, %v5574
      %v5676 = vmul.f32 %v5575, %v5575
      %v5677 = vmul.f32 %v5576, %v5576
      %v5678 = vmul.f32 %v5577, %v5577
      %v5679 = vmul.f32 %v5578, %v5578
      %v5680 = vmul.f32 %v5579, %v5579
      %v5681 = vmul.f32 %v5580, %v5580
      %v5682 = vmul.f32 %v5581, %v5581
      %v5683 = vmul.f32 %v5582, %v5582
      %v5684 = vmul.f32 %v5583, %v5583
      %v5685 = vmul.f32 %v5584, %v5584
      %v5686 = vmul.f32 %v5585, %v5585
      %v5687 = vmul.f32 %v5586, %v5586
      %v5688 = vmul.f32 %v5587, %v5587
      %v5689 = vmul.f32 %v5588, %v5588
      %v5690 = vmul.f32 %v5589, %v5589
      %v5691 = vmul.f32 %v5590, %v5590
      %v5692 = vmul.f32 %v5591, %v5591
      %v5693 = vmul.f32 %v5592, %v5592
      %v5694 = vmul.f32 %v5593, %v5593
      %v5695 = vmul.f32 %v5594, %v5594
      %v5696 = vmul.f32 %v5595, %v5595
      %v5697 = vmul.f32 %v5596, %v5596
      %v5698 = vmul.f32 %v5597, %v5597
      %v5699 = vmul.f32 %v5598, %v5598
      %v5700 = vmul.f32 %v5599, %v5599
      %v5701 = vmul.f32 %v5600, %v5600
      %v5702 = vmul.f32 %v5601, %v5601
      %v5703 = vmul.f32 %v5602, %v5602
      %v5704 = vmul.f32 %v5603, %v5603
      %v5705 = vadd.f32 %v5673, %v5674
      %v5706 = vadd.f32 %v5705, %v5675
      %v5707 = vadd.f32 %v5706, %v5676
      %v5708 = vadd.f32 %v5707, %v5677
      %v5709 = vadd.f32 %v5708, %v5678
      %v5710 = vadd.f32 %v5709, %v5679
      %v5711 = vadd.f32 %v5710, %v5680
      %v5712 = vadd.f32 %v5711, %v5681
      %v5713 = vadd.f32 %v5712, %v5682
      %v5714 = vadd.f32 %v5713, %v5683
      %v5715 = vadd.f32 %v5714, %v5684
      %v5716 = vadd.f32 %v5715, %v5685
      %v5717 = vadd.f32 %v5716, %v5686
      %v5718 = vadd.f32 %v5717, %v5687
      %v5719 = vadd.f32 %v5718, %v5688
      %v5720 = vadd.f32 %v5719, %v5689
      %v5721 = vadd.f32 %v5720, %v5690
      %v5722 = vadd.f32 %v5721, %v5691
      %v5723 = vadd.f32 %v5722, %v5692
      %v5724 = vadd.f32 %v5723, %v5693
      %v5725 = vadd.f32 %v5724, %v5694
      %v5726 = vadd.f32 %v5725, %v5695
      %v5727 = vadd.f32 %v5726, %v5696
      %v5728 = vadd.f32 %v5727, %v5697
      %v5729 = vadd.f32 %v5728, %v5698
      %v5730 = vadd.f32 %v5729, %v5699
      %v5731 = vadd.f32 %v5730, %v5700
      %v5732 = vadd.f32 %v5731, %v5701
      %v5733 = vadd.f32 %v5732, %v5702
      %v5734 = vadd.f32 %v5733, %v5703
      %v5735 = vadd.f32 %v5734, %v5704
      %v5736 = vrot.slane %v5735, 4
      %v5737 = vadd.f32 %v5735, %v5736
      %v5738 = vrot.slane %v5737, 2
      %v5739 = vadd.f32 %v5737, %v5738
      %v5740 = vrot.slane %v5739, 1
      %v5741 = vadd.f32 %v5739, %v5740
      %vm5742 = vcmask 1040384
      %v5743 = vsel %vm5742, %v5672, %v5741
      %5744 = vst [vmem:[%s275] sm:$0x3] %v5743
      %v5745 = vld [vmem:[%s2] sm:$0xf]
      %v5746 = vld [vmem:[%s2 + $0x4] sm:$0xf]
      %v5747 = vld [vmem:[%s2 + $0x8] sm:$0xf]
      %v5748 = vld [vmem:[%s2 + $0xc] sm:$0xf]
      %v5749 = vld [vmem:[%s2 + $0x10] sm:$0xf]
      %v5750 = vld [vmem:[%s2 + $0x14] sm:$0xf]
      %v5751 = vld [vmem:[%s2 + $0x18] sm:$0xf]
      %v5752 = vld [vmem:[%s2 + $0x1c] sm:$0xf]
      %v5753 = vld [vmem:[%s2 + $0x20] sm:$0xf]
      %v5754 = vld [vmem:[%s2 + $0x24] sm:$0xf]
      %v5755 = vld [vmem:[%s2 + $0x28] sm:$0xf]
      %v5756 = vld [vmem:[%s2 + $0x2c] sm:$0xf]
      %v5757 = vld [vmem:[%s2 + $0x30] sm:$0xf]
      %v5758 = vld [vmem:[%s2 + $0x34] sm:$0xf]
      %v5759 = vld [vmem:[%s2 + $0x38] sm:$0xf]
      %v5760 = vld [vmem:[%s2 + $0x3c] sm:$0xf]
      %v5761 = vpack.c.b16 %v392, %v391
      %v5762 = vpack.c.b16 %v394, %v393
      %v5763 = vpack.c.b16 %v396, %v395
      %v5764 = vpack.c.b16 %v398, %v397
      %v5765 = vpack.c.b16 %v400, %v399
      %v5766 = vpack.c.b16 %v402, %v401
      %v5767 = vpack.c.b16 %v404, %v403
      %v5768 = vpack.c.b16 %v406, %v405
      %v5769 = vpack.c.b16 %v408, %v407
      %v5770 = vpack.c.b16 %v410, %v409
      %v5771 = vpack.c.b16 %v412, %v411
      %v5772 = vpack.c.b16 %v414, %v413
      %v5773 = vpack.c.b16 %v416, %v415
      %v5774 = vpack.c.b16 %v418, %v417
      %v5775 = vpack.c.b16 %v420, %v419
      %v5776 = vpack.c.b16 %v422, %v421
      %v5809 = vunpack.c.l.b16 %v5745
      %v5810 = vunpack.c.l.b16 %v5746
      %v5811 = vunpack.c.l.b16 %v5747
      %v5812 = vunpack.c.l.b16 %v5748
      %v5813 = vunpack.c.l.b16 %v5749
      %v5814 = vunpack.c.l.b16 %v5750
      %v5815 = vunpack.c.l.b16 %v5751
      %v5816 = vunpack.c.l.b16 %v5752
      %v5817 = vunpack.c.l.b16 %v5753
      %v5818 = vunpack.c.l.b16 %v5754
      %v5819 = vunpack.c.l.b16 %v5755
      %v5820 = vunpack.c.l.b16 %v5756
      %v5821 = vunpack.c.l.b16 %v5757
      %v5822 = vunpack.c.l.b16 %v5758
      %v5823 = vunpack.c.l.b16 %v5759
      %v5824 = vunpack.c.l.b16 %v5760
      %v5825 = vpack.c.b16 %v5810, %v5809
      %v5826 = vpack.c.b16 %v5812, %v5811
      %v5827 = vpack.c.b16 %v5814, %v5813
      %v5828 = vpack.c.b16 %v5816, %v5815
      %v5829 = vpack.c.b16 %v5818, %v5817
      %v5830 = vpack.c.b16 %v5820, %v5819
      %v5831 = vpack.c.b16 %v5822, %v5821
      %v5832 = vpack.c.b16 %v5824, %v5823
      %5841 = vmatprep.subr.bf16.mxu0 0
      %5842 = vmatpush1.bf16.msra.mxu0 %v5825
      %5843 = vmatprep.subr.bf16.mxu0 0
      %5844 = vmatpush1.bf16.msra.mxu0 %v5826
      %5845 = vmatprep.subr.bf16.mxu0 0
      %5846 = vmatpush1.bf16.msra.mxu0 %v5827
      %5847 = vmatprep.subr.bf16.mxu0 0
      %5848 = vmatpush1.bf16.msra.mxu0 %v5828
      %5849 = vmatprep.subr.bf16.mxu0 0
      %5850 = vmatpush1.bf16.msra.mxu0 %v5829
      %5851 = vmatprep.subr.bf16.mxu0 0
      %5852 = vmatpush1.bf16.msra.mxu0 %v5830
      %5853 = vmatprep.subr.bf16.mxu0 0
      %5854 = vmatpush1.bf16.msra.mxu0 %v5831
      %5855 = vmatprep.subr.bf16.mxu0 0
      %5856 = vmatpush1.bf16.msra.mxu0 %v5832
      %5857 = vmatprep.subr.bf16.mxu0 0
      %5858 = vmatpush1.bf16.msra.mxu0 0
      %5859 = vmatprep.subr.bf16.mxu0 0
      %5860 = vmatpush1.bf16.msra.mxu0 0
      %5861 = vmatprep.subr.bf16.mxu0 0
      %5862 = vmatpush1.bf16.msra.mxu0 0
      %5863 = vmatprep.subr.bf16.mxu0 0
      %5864 = vmatpush1.bf16.msra.mxu0 0
      %5865 = vmatprep.subr.bf16.mxu0 0
      %5866 = vmatpush1.bf16.msra.mxu0 0
      %5867 = vmatprep.subr.bf16.mxu0 0
      %5868 = vmatpush1.bf16.msra.mxu0 0
      %5869 = vmatprep.subr.bf16.mxu0 0
      %5870 = vmatpush1.bf16.msra.mxu0 0
      %5871 = vmatprep.subr.bf16.mxu0 0
      %5872 = vmatpush1.bf16.msra.mxu0 0
      %5873 = vmatprep.mubr.bf16.mxu0 0
      %5874 = vmatmul.mubr.bf16.gmra.mrb[0].mxu0 %v5761
      %v5875 = vpop.f32.mrb[0].mxu0
      %v5876 = vadd.f32 0.0, %v5875
      %v5877 = vpop.f32.mrb[0].mxu0
      %v5878 = vpop.f32.mrb[0].mxu0
      %v5879 = vadd.f32 0.0, %v5878
      %v5880 = vpop.f32.mrb[0].mxu0
      %5881 = vmatprep.mubr.bf16.mxu0 0
      %5882 = vmatmul.mubr.bf16.gmra.mrb[0].mxu0 %v5762
      %v5883 = vpop.f32.mrb[0].mxu0
      %v5884 = vadd.f32 0.0, %v5883
      %v5885 = vpop.f32.mrb[0].mxu0
      %v5886 = vpop.f32.mrb[0].mxu0
      %v5887 = vadd.f32 0.0, %v5886
      %v5888 = vpop.f32.mrb[0].mxu0
      %5889 = vmatprep.mubr.bf16.mxu0 0
      %5890 = vmatmul.mubr.bf16.gmra.mrb[0].mxu0 %v5763
      %v5891 = vpop.f32.mrb[0].mxu0
      %v5892 = vadd.f32 0.0, %v5891
      %v5893 = vpop.f32.mrb[0].mxu0
      %v5894 = vpop.f32.mrb[0].mxu0
      %v5895 = vadd.f32 0.0, %v5894
      %v5896 = vpop.f32.mrb[0].mxu0
      %5897 = vmatprep.mubr.bf16.mxu0 0
      %5898 = vmatmul.mubr.bf16.gmra.mrb[0].mxu0 %v5764
      %v5899 = vpop.f32.mrb[0].mxu0
      %v5900 = vadd.f32 0.0, %v5899
      %v5901 = vpop.f32.mrb[0].mxu0
      %v5902 = vpop.f32.mrb[0].mxu0
      %v5903 = vadd.f32 0.0, %v5902
      %v5904 = vpop.f32.mrb[0].mxu0
      %5905 = vmatprep.mubr.bf16.mxu0 0
      %5906 = vmatmul.mubr.bf16.gmra.mrb[0].mxu0 %v5765
      %v5907 = vpop.f32.mrb[0].mxu0
      %v5908 = vadd.f32 0.0, %v5907
      %v5909 = vpop.f32.mrb[0].mxu0
      %v5910 = vpop.f32.mrb[0].mxu0
      %v5911 = vadd.f32 0.0, %v5910
      %v5912 = vpop.f32.mrb[0].mxu0
      %5913 = vmatprep.mubr.bf16.mxu0 0
      %5914 = vmatmul.mubr.bf16.gmra.mrb[0].mxu0 %v5766
      %v5915 = vpop.f32.mrb[0].mxu0
      %v5916 = vadd.f32 0.0, %v5915
      %v5917 = vpop.f32.mrb[0].mxu0
      %v5918 = vpop.f32.mrb[0].mxu0
      %v5919 = vadd.f32 0.0, %v5918
      %v5920 = vpop.f32.mrb[0].mxu0
      %5921 = vmatprep.mubr.bf16.mxu0 0
      %5922 = vmatmul.mubr.bf16.gmra.mrb[0].mxu0 %v5767
      %v5923 = vpop.f32.mrb[0].mxu0
      %v5924 = vadd.f32 0.0, %v5923
      %v5925 = vpop.f32.mrb[0].mxu0
      %v5926 = vpop.f32.mrb[0].mxu0
      %v5927 = vadd.f32 0.0, %v5926
      %v5928 = vpop.f32.mrb[0].mxu0
      %5929 = vmatprep.mubr.bf16.mxu0 0
      %5930 = vmatmul.mubr.bf16.gmra.mrb[0].mxu0 %v5768
      %v5931 = vpop.f32.mrb[0].mxu0
      %v5932 = vadd.f32 0.0, %v5931
      %v5933 = vpop.f32.mrb[0].mxu0
      %v5934 = vpop.f32.mrb[0].mxu0
      %v5935 = vadd.f32 0.0, %v5934
      %v5936 = vpop.f32.mrb[0].mxu0
      %5937 = vmatprep.mubr.bf16.mxu0 0
      %5938 = vmatmul.mubr.bf16.gmra.mrb[0].mxu0 %v5769
      %v5939 = vpop.f32.mrb[0].mxu0
      %v5940 = vadd.f32 0.0, %v5939
      %v5941 = vpop.f32.mrb[0].mxu0
      %v5942 = vpop.f32.mrb[0].mxu0
      %v5943 = vadd.f32 0.0, %v5942
      %v5944 = vpop.f32.mrb[0].mxu0
      %5945 = vmatprep.mubr.bf16.mxu0 0
      %5946 = vmatmul.mubr.bf16.gmra.mrb[0].mxu0 %v5770
      %v5947 = vpop.f32.mrb[0].mxu0
      %v5948 = vadd.f32 0.0, %v5947
      %v5949 = vpop.f32.mrb[0].mxu0
      %v5950 = vpop.f32.mrb[0].mxu0
      %v5951 = vadd.f32 0.0, %v5950
      %v5952 = vpop.f32.mrb[0].mxu0
      %5953 = vmatprep.mubr.bf16.mxu0 0
      %5954 = vmatmul.mubr.bf16.gmra.mrb[0].mxu0 %v5771
      %v5955 = vpop.f32.mrb[0].mxu0
      %v5956 = vadd.f32 0.0, %v5955
      %v5957 = vpop.f32.mrb[0].mxu0
      %v5958 = vpop.f32.mrb[0].mxu0
      %v5959 = vadd.f32 0.0, %v5958
      %v5960 = vpop.f32.mrb[0].mxu0
      %5961 = vmatprep.mubr.bf16.mxu0 0
      %5962 = vmatmul.mubr.bf16.gmra.mrb[0].mxu0 %v5772
      %v5963 = vpop.f32.mrb[0].mxu0
      %v5964 = vadd.f32 0.0, %v5963
      %v5965 = vpop.f32.mrb[0].mxu0
      %v5966 = vpop.f32.mrb[0].mxu0
      %v5967 = vadd.f32 0.0, %v5966
      %v5968 = vpop.f32.mrb[0].mxu0
      %5969 = vmatprep.mubr.bf16.mxu0 0
      %5970 = vmatmul.mubr.bf16.gmra.mrb[0].mxu0 %v5773
      %v5971 = vpop.f32.mrb[0].mxu0
      %v5972 = vadd.f32 0.0, %v5971
      %v5973 = vpop.f32.mrb[0].mxu0
      %v5974 = vpop.f32.mrb[0].mxu0
      %v5975 = vadd.f32 0.0, %v5974
      %v5976 = vpop.f32.mrb[0].mxu0
      %5977 = vmatprep.mubr.bf16.mxu0 0
      %5978 = vmatmul.mubr.bf16.gmra.mrb[0].mxu0 %v5774
      %v5979 = vpop.f32.mrb[0].mxu0
      %v5980 = vadd.f32 0.0, %v5979
      %v5981 = vpop.f32.mrb[0].mxu0
      %v5982 = vpop.f32.mrb[0].mxu0
      %v5983 = vadd.f32 0.0, %v5982
      %v5984 = vpop.f32.mrb[0].mxu0
      %5985 = vmatprep.mubr.bf16.mxu0 0
      %5986 = vmatmul.mubr.bf16.gmra.mrb[0].mxu0 %v5775
      %v5987 = vpop.f32.mrb[0].mxu0
      %v5988 = vadd.f32 0.0, %v5987
      %v5989 = vpop.f32.mrb[0].mxu0
      %v5990 = vpop.f32.mrb[0].mxu0
      %v5991 = vadd.f32 0.0, %v5990
      %v5992 = vpop.f32.mrb[0].mxu0
      %5993 = vmatprep.mubr.bf16.mxu0 0
      %5994 = vmatmul.mubr.bf16.gmra.mrb[0].mxu0 %v5776
      %v5995 = vpop.f32.mrb[0].mxu0
      %v5996 = vadd.f32 0.0, %v5995
      %v5997 = vpop.f32.mrb[0].mxu0
      %v5998 = vpop.f32.mrb[0].mxu0
      %v5999 = vadd.f32 0.0, %v5998
      %v6000 = vpop.f32.mrb[0].mxu0
      %6001 = vdwg.mxu0
      %6002 = vst [vmem:[%s280] sm:$0xff] %v5876
      %6003 = vst [vmem:[%s280 + $0x8] sm:$0xff] %v5879
      %6004 = vst [vmem:[%s280 + $0x10] sm:$0xff] %v5884
      %6005 = vst [vmem:[%s280 + $0x18] sm:$0xff] %v5887
      %6006 = vst [vmem:[%s280 + $0x20] sm:$0xff] %v5892
      %6007 = vst [vmem:[%s280 + $0x28] sm:$0xff] %v5895
      %6008 = vst [vmem:[%s280 + $0x30] sm:$0xff] %v5900
      %6009 = vst [vmem:[%s280 + $0x38] sm:$0xff] %v5903
      %6010 = vst [vmem:[%s280 + $0x40] sm:$0xff] %v5908
      %6011 = vst [vmem:[%s280 + $0x48] sm:$0xff] %v5911
      %6012 = vst [vmem:[%s280 + $0x50] sm:$0xff] %v5916
      %6013 = vst [vmem:[%s280 + $0x58] sm:$0xff] %v5919
      %6014 = vst [vmem:[%s280 + $0x60] sm:$0xff] %v5924
      %6015 = vst [vmem:[%s280 + $0x68] sm:$0xff] %v5927
      %6016 = vst [vmem:[%s280 + $0x70] sm:$0xff] %v5932
      %6017 = vst [vmem:[%s280 + $0x78] sm:$0xff] %v5935
      %6018 = vst [vmem:[%s280 + $0x80] sm:$0xff] %v5940
      %6019 = vst [vmem:[%s280 + $0x88] sm:$0xff] %v5943
      %6020 = vst [vmem:[%s280 + $0x90] sm:$0xff] %v5948
      %6021 = vst [vmem:[%s280 + $0x98] sm:$0xff] %v5951
      %6022 = vst [vmem:[%s280 + $0xa0] sm:$0xff] %v5956
      %6023 = vst [vmem:[%s280 + $0xa8] sm:$0xff] %v5959
      %6024 = vst [vmem:[%s280 + $0xb0] sm:$0xff] %v5964
      %6025 = vst [vmem:[%s280 + $0xb8] sm:$0xff] %v5967
      %6026 = vst [vmem:[%s280 + $0xc0] sm:$0xff] %v5972
      %6027 = vst [vmem:[%s280 + $0xc8] sm:$0xff] %v5975
      %6028 = vst [vmem:[%s280 + $0xd0] sm:$0xff] %v5980
      %6029 = vst [vmem:[%s280 + $0xd8] sm:$0xff] %v5983
      %6030 = vst [vmem:[%s280 + $0xe0] sm:$0xff] %v5988
      %6031 = vst [vmem:[%s280 + $0xe8] sm:$0xff] %v5991
      %6032 = vst [vmem:[%s280 + $0xf0] sm:$0xff] %v5996
      %6033 = vst [vmem:[%s280 + $0xf8] sm:$0xff] %v5999
      %v6034 = vadd.f32 %v5876, %v5879
      %v6035 = vadd.f32 %v6034, %v5884
      %v6036 = vadd.f32 %v6035, %v5887
      %v6037 = vadd.f32 %v6036, %v5892
      %v6038 = vadd.f32 %v6037, %v5895
      %v6039 = vadd.f32 %v6038, %v5900
      %v6040 = vadd.f32 %v6039, %v5903
      %v6041 = vadd.f32 %v6040, %v5908
      %v6042 = vadd.f32 %v6041, %v5911
      %v6043 = vadd.f32 %v6042, %v5916
      %v6044 = vadd.f32 %v6043, %v5919
      %v6045 = vadd.f32 %v6044, %v5924
      %v6046 = vadd.f32 %v6045, %v5927
      %v6047 = vadd.f32 %v6046, %v5932
      %v6048 = vadd.f32 %v6047, %v5935
      %v6049 = vadd.f32 %v6048, %v5940
      %v6050 = vadd.f32 %v6049, %v5943
      %v6051 = vadd.f32 %v6050, %v5948
      %v6052 = vadd.f32 %v6051, %v5951
      %v6053 = vadd.f32 %v6052, %v5956
      %v6054 = vadd.f32 %v6053, %v5959
      %v6055 = vadd.f32 %v6054, %v5964
      %v6056 = vadd.f32 %v6055, %v5967
      %v6057 = vadd.f32 %v6056, %v5972
      %v6058 = vadd.f32 %v6057, %v5975
      %v6059 = vadd.f32 %v6058, %v5980
      %v6060 = vadd.f32 %v6059, %v5983
      %v6061 = vadd.f32 %v6060, %v5988
      %v6062 = vadd.f32 %v6061, %v5991
      %v6063 = vadd.f32 %v6062, %v5996
      %v6064 = vadd.f32 %v6063, %v5999
      %v6065 = vrot.slane %v6064, 4
      %v6066 = vadd.f32 %v6064, %v6065
      %v6067 = vrot.slane %v6066, 2
      %v6068 = vadd.f32 %v6066, %v6067
      %v6069 = vrot.slane %v6068, 1
      %v6070 = vadd.f32 %v6068, %v6069
      %v6071 = vmul.f32 %v5876, %v5876
      %v6072 = vmul.f32 %v5879, %v5879
      %v6073 = vmul.f32 %v5884, %v5884
      %v6074 = vmul.f32 %v5887, %v5887
      %v6075 = vmul.f32 %v5892, %v5892
      %v6076 = vmul.f32 %v5895, %v5895
      %v6077 = vmul.f32 %v5900, %v5900
      %v6078 = vmul.f32 %v5903, %v5903
      %v6079 = vmul.f32 %v5908, %v5908
      %v6080 = vmul.f32 %v5911, %v5911
      %v6081 = vmul.f32 %v5916, %v5916
      %v6082 = vmul.f32 %v5919, %v5919
      %v6083 = vmul.f32 %v5924, %v5924
      %v6084 = vmul.f32 %v5927, %v5927
      %v6085 = vmul.f32 %v5932, %v5932
      %v6086 = vmul.f32 %v5935, %v5935
      %v6087 = vmul.f32 %v5940, %v5940
      %v6088 = vmul.f32 %v5943, %v5943
      %v6089 = vmul.f32 %v5948, %v5948
      %v6090 = vmul.f32 %v5951, %v5951
      %v6091 = vmul.f32 %v5956, %v5956
      %v6092 = vmul.f32 %v5959, %v5959
      %v6093 = vmul.f32 %v5964, %v5964
      %v6094 = vmul.f32 %v5967, %v5967
      %v6095 = vmul.f32 %v5972, %v5972
      %v6096 = vmul.f32 %v5975, %v5975
      %v6097 = vmul.f32 %v5980, %v5980
      %v6098 = vmul.f32 %v5983, %v5983
      %v6099 = vmul.f32 %v5988, %v5988
      %v6100 = vmul.f32 %v5991, %v5991
      %v6101 = vmul.f32 %v5996, %v5996
      %v6102 = vmul.f32 %v5999, %v5999
      %v6103 = vadd.f32 %v6071, %v6072
      %v6104 = vadd.f32 %v6103, %v6073
      %v6105 = vadd.f32 %v6104, %v6074
      %v6106 = vadd.f32 %v6105, %v6075
      %v6107 = vadd.f32 %v6106, %v6076
      %v6108 = vadd.f32 %v6107, %v6077
      %v6109 = vadd.f32 %v6108, %v6078
      %v6110 = vadd.f32 %v6109, %v6079
      %v6111 = vadd.f32 %v6110, %v6080
      %v6112 = vadd.f32 %v6111, %v6081
      %v6113 = vadd.f32 %v6112, %v6082
      %v6114 = vadd.f32 %v6113, %v6083
      %v6115 = vadd.f32 %v6114, %v6084
      %v6116 = vadd.f32 %v6115, %v6085
      %v6117 = vadd.f32 %v6116, %v6086
      %v6118 = vadd.f32 %v6117, %v6087
      %v6119 = vadd.f32 %v6118, %v6088
      %v6120 = vadd.f32 %v6119, %v6089
      %v6121 = vadd.f32 %v6120, %v6090
      %v6122 = vadd.f32 %v6121, %v6091
      %v6123 = vadd.f32 %v6122, %v6092
      %v6124 = vadd.f32 %v6123, %v6093
      %v6125 = vadd.f32 %v6124, %v6094
      %v6126 = vadd.f32 %v6125, %v6095
      %v6127 = vadd.f32 %v6126, %v6096
      %v6128 = vadd.f32 %v6127, %v6097
      %v6129 = vadd.f32 %v6128, %v6098
      %v6130 = vadd.f32 %v6129, %v6099
      %v6131 = vadd.f32 %v6130, %v6100
      %v6132 = vadd.f32 %v6131, %v6101
      %v6133 = vadd.f32 %v6132, %v6102
      %v6134 = vrot.slane %v6133, 4
      %v6135 = vadd.f32 %v6133, %v6134
      %v6136 = vrot.slane %v6135, 2
      %v6137 = vadd.f32 %v6135, %v6136
      %v6138 = vrot.slane %v6137, 1
      %v6139 = vadd.f32 %v6137, %v6138
      %v6140 = vsel %vm5742, %v6070, %v6139
      %6141 = vst [vmem:[%s284] sm:$0x3] %v6140
      %p6142 = scmp.lt.s32.totalorder %s18, 1
      %s6143 = scalar_select %p6142, %s18, 1
      %s6144 = smul.addr %s6143, 32
      %s6145 = smul.addr %s6144, 8
      %s6146 = scalar_lea.vmem %s3, %s6145
      %p6147 = scmp.lt.s32.totalorder %s18, 1
      %s6148 = scalar_select %p6147, %s18, 1
      %s6149 = smul.addr %s6148, 2
      %s6150 = scalar_lea.vmem %s4, %s6149
      %p6151 = scmp.lt.s32.totalorder %s18, 1
      %s6152 = scalar_select %p6151, %s18, 1
      %s6153 = smul.addr %s6152, 32
      %s6154 = smul.addr %s6153, 8
      %s6155 = scalar_lea.vmem %s5, %s6154
      %p6156 = scmp.lt.s32.totalorder %s18, 1
      %s6157 = scalar_select %p6156, %s18, 1
      %s6158 = smul.addr %s6157, 2
      %s6159 = scalar_lea.vmem %s6, %s6158
      // Predicated region
      $region33: #{basic_block_forward.3} parent=31 // pred_check
        %p6160 = pneg %p104
      $region34: #{basic_block_forward.3} parent=31 // pred_check_branch
        %6162 = sbr.rel (%p6160) target = $region36
      $region35: #{basic_block_forward.3} parent=31 // pred_region
        _
      $region36: #{basic_block_forward.3} parent=31 // pred_fallthru
        _
      // Predicated region
      $region37: #{basic_block_forward.3} parent=31 // pred_check
        %p6163 = pneg %p130
      $region38: #{basic_block_forward.3} parent=31 // pred_check_branch
        %6165 = sbr.rel (%p6163) target = $region40
      $region39: #{basic_block_forward.3} parent=31 // pred_region
        _
      $region40: #{basic_block_forward.3} parent=31 // pred_fallthru
        _
      // Predicated region
      $region41: #{basic_block_forward.3} parent=31 // pred_check
        %p6166 = pneg %p156
      $region42: #{basic_block_forward.3} parent=31 // pred_check_branch
        %6168 = sbr.rel (%p6166) target = $region44
      $region43: #{basic_block_forward.3} parent=31 // pred_region
        _
      $region44: #{basic_block_forward.3} parent=31 // pred_fallthru
        _
      // Predicated region
      $region45: #{basic_block_forward.3} parent=31 // pred_check
        %p6169 = pneg %p182
      $region46: #{basic_block_forward.3} parent=31 // pred_check_branch
        %6171 = sbr.rel (%p6169) target = $region48
      $region47: #{basic_block_forward.3} parent=31 // pred_region
        _
      $region48: #{basic_block_forward.3} parent=31 // pred_fallthru
        _
    $region32: #{basic_block_forward.3} parent=5 // pred_fallthru
      _
    %p6172 = scmp.le.s32.totalorder 2, %s13
    // Predicated region
    $region49: #{basic_block_forward.3} parent=5 // pred_check
      %p6173 = pneg %p6172
    $region50: #{basic_block_forward.3} parent=5 // pred_check_branch
      %6175 = sbr.rel (%p6173) target = $region52
    $region51: #{basic_block_forward.3} parent=5 // pred_region
      %s6176 = ssub.s32 %s13, 2
      // Predicated region
      $region53: #{basic_block_forward.3} parent=51 // pred_check
        %p6177 = pneg %p110
      $region54: #{basic_block_forward.3} parent=51 // pred_check_branch
        %6179 = sbr.rel (%p6177) target = $region56
      $region55: #{basic_block_forward.3} parent=51 // pred_region
        %p6180 = scmp.lt.s32.totalorder %s19, 1
        %s6181 = scalar_select %p6180, %s19, 1
        %s6182 = smul.addr %s6181, 32
        %s6183 = smul.addr %s6182, 8
        %s6184 = scalar_lea.vmem %s3, %s6183
      $region56: #{basic_block_forward.3} parent=51 // pred_fallthru
        _
      // Predicated region
      $region57: #{basic_block_forward.3} parent=51 // pred_check
        %p6185 = pneg %p136
      $region58: #{basic_block_forward.3} parent=51 // pred_check_branch
        %6187 = sbr.rel (%p6185) target = $region60
      $region59: #{basic_block_forward.3} parent=51 // pred_region
        %p6188 = scmp.lt.s32.totalorder %s19, 1
        %s6189 = scalar_select %p6188, %s19, 1
        %s6190 = smul.addr %s6189, 2
        %s6191 = scalar_lea.vmem %s4, %s6190
      $region60: #{basic_block_forward.3} parent=51 // pred_fallthru
        _
      // Predicated region
      $region61: #{basic_block_forward.3} parent=51 // pred_check
        %p6192 = pneg %p162
      $region62: #{basic_block_forward.3} parent=51 // pred_check_branch
        %6194 = sbr.rel (%p6192) target = $region64
      $region63: #{basic_block_forward.3} parent=51 // pred_region
        %p6195 = scmp.lt.s32.totalorder %s19, 1
        %s6196 = scalar_select %p6195, %s19, 1
        %s6197 = smul.addr %s6196, 32
        %s6198 = smul.addr %s6197, 8
        %s6199 = scalar_lea.vmem %s5, %s6198
      $region64: #{basic_block_forward.3} parent=51 // pred_fallthru
        _
      // Predicated region
      $region65: #{basic_block_forward.3} parent=51 // pred_check
        %p6200 = pneg %p188
      $region66: #{basic_block_forward.3} parent=51 // pred_check_branch
        %6202 = sbr.rel (%p6200) target = $region68
      $region67: #{basic_block_forward.3} parent=51 // pred_region
        %p6203 = scmp.lt.s32.totalorder %s19, 1
        %s6204 = scalar_select %p6203, %s19, 1
        %s6205 = smul.addr %s6204, 2
        %s6206 = scalar_lea.vmem %s6, %s6205
      $region68: #{basic_block_forward.3} parent=51 // pred_fallthru
        _
    $region52: #{basic_block_forward.3} parent=5 // pred_fallthru
      _
  $region6: #{basic_block_forward.3} parent=0 // loop_footer
    %s17 = sadd.s32 1, %s13
  $region7: #{basic_block_forward.3} parent=0 // loop_footer_branch
    %12 = sbr.rel target = $region3
  $region8: #{basic_block_forward.3} parent=0 // loop_exit
    _

</llo_original>
